<compile_context>
chip_gen: v6e
topology: v6e:2x2x1
jax: 0.10.0
libtpu: 0.0.40
codegen_flags: <defaults>
</compile_context>

<pallas_src>
import functools
import math

import jax
import jax.numpy as jnp
from jax import lax
from jax.experimental import pallas as pl
from jax.experimental.pallas import tpu as pltpu

LN_EPS = 1e-5          # PyTorch nn.LayerNorm default eps
_NEG_INF = -1e30


def _layernorm(x, gamma, beta):
    mu = jnp.mean(x, axis=-1, keepdims=True)
    xc = x - mu
    var = jnp.mean(xc * xc, axis=-1, keepdims=True)
    return xc * lax.rsqrt(var + LN_EPS) * gamma + beta


def _gelu_exact(x):
    # nn.GELU default = exact erf formulation (kept for PyTorch parity).
    return 0.5 * x * (1.0 + lax.erf(x * 0.7071067811865476))


def _block_kernel(x_ref, merged_ref, xpos_ref, kpos_ref,
                  g1_ref, b1_ref, wq_ref, wk_ref, wv_ref, wp_ref, bp_ref,
                  g2_ref, b2_ref, w1_ref, bf1_ref, w2_ref, bf2_ref,
                  out_ref, *, num_heads, z_len, n_real, approx_recip):
    f32, bf16 = jnp.float32, jnp.bfloat16
    H = num_heads
    bb, Lx, C = x_ref.shape                     # bb batch rows per grid step
    N_pad = merged_ref.shape[1]
    hd = C // H

    merged = merged_ref[...].astype(f32)                          # (bb, N_pad, C)
    mn = _layernorm(merged, g1_ref[...], b1_ref[...])             # norm1(merged)

    # Fold batch into rows; matmul inputs in bf16, everything elementwise stays f32.
    q_in = (mn[:, z_len:z_len + Lx, :] + xpos_ref[...].astype(f32)
            ).reshape(bb * Lx, C).astype(bf16)                    # (bb*Lx, C)
    k_in = (mn + kpos_ref[...].astype(f32)).reshape(bb * N_pad, C).astype(bf16)
    v_in = mn.reshape(bb * N_pad, C).astype(bf16)

    # Lane-dense projections (K = C contraction depth, 128-wide outputs); scale in Wq.
    q = jnp.dot(q_in, wq_ref[...], preferred_element_type=f32).astype(bf16)
    k = jnp.dot(k_in, wk_ref[...], preferred_element_type=f32).astype(bf16)
    v = jnp.dot(v_in, wv_ref[...], preferred_element_type=f32).astype(bf16)

    # Split heads only now: (bb*H, L, hd) stacks feed the small batched attention einsums.
    qh = jnp.stack([q[b * Lx:(b + 1) * Lx, h * hd:(h + 1) * hd]
                    for b in range(bb) for h in range(H)], axis=0)          # (bb*H, Lx, hd)
    kh = jnp.stack([k[b * N_pad:(b + 1) * N_pad, h * hd:(h + 1) * hd]
                    for b in range(bb) for h in range(H)], axis=0)          # (bb*H, N_pad, hd)
    vh = jnp.stack([v[b * N_pad:(b + 1) * N_pad, h * hd:(h + 1) * hd]
                    for b in range(bb) for h in range(H)], axis=0)

    # TODO(synk): flash-style online softmax over N tiles for production merged lengths.
    s = jnp.einsum('bqd,bkd->bqk', qh, kh, preferred_element_type=f32)      # (bb*H, Lx, N_pad)
    if n_real < N_pad:                                    # static: mask padded keys
        valid = lax.broadcasted_iota(jnp.int32, (1, 1, N_pad), 2) < n_real
        s = jnp.where(valid, s, _NEG_INF)
    s = s - jnp.max(s, axis=-1, keepdims=True)
    p = jnp.exp(s)
    denom = jnp.sum(p, axis=-1, keepdims=True)
    if approx_recip:
        p = p * pl.reciprocal(denom, approx=True)         # EUP reciprocal (VALU-free)
    else:
        p = p / denom

    o = jnp.einsum('bqk,bkd->bqd', p.astype(bf16), vh,
                   preferred_element_type=f32).astype(bf16)                 # (bb*H, Lx, hd)

    # Re-assemble channel-major contexts and do ONE lane-dense K=C output projection.
    ctx = jnp.concatenate(
        [jnp.concatenate([o[b * H + h] for h in range(H)], axis=-1)         # (Lx, C)
         for b in range(bb)], axis=0)                                       # (bb*Lx, C)
    proj = jnp.dot(ctx, wp_ref[...], preferred_element_type=f32) + bp_ref[...]

    x1 = x_ref[...].astype(f32).reshape(bb * Lx, C) + proj                  # residual 1

    # MLP: norm2 -> fc1 -> GELU -> fc2 (matmuls bf16, elementwise f32).
    x1n = _layernorm(x1, g2_ref[...], b2_ref[...])
    h1 = jnp.dot(x1n.astype(bf16), w1_ref[...], preferred_element_type=f32) + bf1_ref[...]
    h1 = _gelu_exact(h1)
    mlp = jnp.dot(h1.astype(bf16), w2_ref[...], preferred_element_type=f32) + bf2_ref[...]

    out_ref[...] = (x1 + mlp).reshape(bb, Lx, C).astype(out_ref.dtype)      # residual 2


def _num_tensorcores_per_device():
    try:
        kind = jax.devices()[0].device_kind.lower()
    except Exception:
        return 1
    return 2 if any(t in kind for t in ("v7", "7x", "v4", "v5p")) else 1


def _nbytes(shape, dtype):
    return math.prod(shape) * jnp.dtype(dtype).itemsize


def merged_cross_attention_block(x, merged, z_H, z_W, x_H, x_W,
                                 x_pos, merged_k_pos, params, num_heads,
                                 qk_scale=None, sr_ratio=1,
                                 batch_groups=None, approx_softmax_recip=True):
    if sr_ratio != 1:
        # TODO(synk): sr_ratio > 1 spatial-reduction path not implemented.
        raise NotImplementedError("sr_ratio > 1 spatial-reduction path is not implemented")

    B, Lx, C = x.shape
    N = merged.shape[1]
    z_len = z_H * z_W
    assert Lx == x_H * x_W and N == z_len + Lx and C % num_heads == 0
    hd = C // num_heads
    scale = qk_scale if qk_scale is not None else hd ** -0.5
    Hm = params["w1"].shape[1]
    f32, bf16 = jnp.float32, jnp.bfloat16

    # Lane-dense key axis: pad merged tokens to a multiple of 128; padded keys are
    # masked with -inf inside the kernel (they contribute exactly zero probability).
    N_pad = max(128, ((N + 127) // 128) * 128)
    if N_pad != N:
        pad = ((0, 0), (0, N_pad - N), (0, 0))
        merged_p = jnp.pad(merged, pad)
        kpos_p = jnp.pad(merged_k_pos, pad)
    else:
        merged_p, kpos_p = merged, merged_k_pos

    # Host-side weight prep (plain XLA): softmax scale folded into Wq (one extra bf16
    # rounding of the scaled weights), bf16 weights halve DMA / resident VMEM.
    wq = (params["wq"] * scale).astype(bf16)
    wk = params["wk"].astype(bf16)
    wv = params["wv"].astype(bf16)
    wp = params["wp"].astype(bf16)
    w1 = params["w1"].astype(bf16)
    w2 = params["w2"].astype(bf16)

    # Batch folding: single-TC chips (v5e/v6e) fold the whole batch into matmul rows
    # (grid=(1,)); dual-TC chips (v7x / megacore) split the batch across a parallel axis.
    if batch_groups is None:
        n_tc = _num_tensorcores_per_device()
        batch_groups = n_tc if (n_tc > 1 and B % n_tc == 0) else 1
    assert B % batch_groups == 0
    bb = B // batch_groups

    kernel = functools.partial(_block_kernel, num_heads=num_heads, z_len=z_len,
                               n_real=N, approx_recip=approx_softmax_recip)

    def act_spec(L):
        return pl.BlockSpec((bb, L, C), lambda g: (g, 0, 0))

    def w_spec(shape, single_buffer):
        nd = len(shape)
        imap = lambda g, _nd=nd: (0,) * _nd
        if single_buffer and hasattr(pl, "Buffered"):
            # Grid-invariant weights: no need for double-buffered VMEM.
            return pl.BlockSpec(shape, imap, pipeline_mode=pl.Buffered(1))
        return pl.BlockSpec(shape, imap)

    def run(single_buffer_weights):
        sb = single_buffer_weights
        in_specs = [
            act_spec(Lx),                                # x
            act_spec(N_pad),                             # merged (padded)
            act_spec(Lx),                                # x_pos
            act_spec(N_pad),                             # merged_k_pos (padded)
            w_spec((1, C), sb), w_spec((1, C), sb),      # norm1 gamma / beta
            w_spec((C, C), sb),                          # Wq (scale folded in)
            w_spec((C, C), sb),                          # Wk
            w_spec((C, C), sb),                          # Wv
            w_spec((C, C), sb),                          # Wproj
            w_spec((1, C), sb),                          # bproj
            w_spec((1, C), sb), w_spec((1, C), sb),      # norm2 gamma / beta
            w_spec((C, Hm), sb), w_spec((1, Hm), sb),    # mlp fc1 W / b
            w_spec((Hm, C), sb), w_spec((1, C), sb),     # mlp fc2 W / b
        ]
        out_spec = pl.BlockSpec((bb, Lx, C), lambda g: (g, 0, 0))

        # Right-sized VMEM limit from the actual block / working-set bytes (clamped).
        act_bytes = sum(_nbytes(s, f32) for s in
                        [(bb, Lx, C), (bb, N_pad, C), (bb, Lx, C), (bb, N_pad, C), (bb, Lx, C)])
        weight_bytes = (4 * _nbytes((C, C), bf16) + _nbytes((C, Hm), bf16)
                        + _nbytes((Hm, C), bf16) + 6 * _nbytes((1, C), f32)
                        + _nbytes((1, Hm), f32))
        work_bytes = (3 * _nbytes((bb * num_heads, Lx, N_pad), f32)   # scores / probs / temps
                      + 3 * _nbytes((bb * N_pad, C), f32)             # q / k / v
                      + 2 * _nbytes((bb * Lx, Hm), f32)               # mlp hidden
                      + 4 * _nbytes((bb * Lx, C), f32))               # ctx / proj / x1 / out
        est = 2 * act_bytes + (1 if sb else 2) * weight_bytes + work_bytes
        vmem_limit = int(min(64 * 1024 * 1024, max(16 * 1024 * 1024, 2 * est)))

        return pl.pallas_call(
            kernel,
            out_shape=jax.ShapeDtypeStruct((B, Lx, C), x.dtype),
            grid_spec=pltpu.PrefetchScalarGridSpec(
                num_scalar_prefetch=0,
                grid=(batch_groups,),
                in_specs=in_specs,
                out_specs=out_spec,
            ),
            compiler_params=pltpu.CompilerParams(
                dimension_semantics=("parallel",),
                vmem_limit_bytes=vmem_limit,
            ),
        )(x, merged_p, x_pos, kpos_p,
          params["g1"], params["b1"], wq, wk, wv, wp, params["bp"],
          params["g2"], params["b2"], w1, params["bf1"], w2, params["bf2"])

    try:
        return run(True)
    except Exception:
        # Fallback if this JAX build rejects single-buffered (Buffered(1)) BlockSpecs.
        return run(False)


def _reference(x, merged, z_len, x_pos, k_pos, params, num_heads, scale):
    """Pure-JAX f32 reference with identical math (for verification)."""
    B, N, C = merged.shape
    hd = C // num_heads
    mn = _layernorm(merged, params["g1"], params["b1"])
    q = (mn[:, z_len:, :] + x_pos) @ params["wq"]
    k = (mn + k_pos) @ params["wk"]
    v = mn @ params["wv"]

    def split(t):
        return t.reshape(B, -1, num_heads, hd).transpose(0, 2, 1, 3)

    qh, kh, vh = split(q), split(k), split(v)
    s = jnp.einsum("bhqd,bhkd->bhqk", qh, kh) * scale
    p = jax.nn.softmax(s, axis=-1)
    ao = jnp.einsum("bhqk,bhkd->bhqd", p, vh).transpose(0, 2, 1, 3).reshape(B, -1, C)
    x1 = x + (ao @ params["wp"] + params["bp"])
    x1n = _layernorm(x1, params["g2"], params["b2"])
    h1 = _gelu_exact(x1n @ params["w1"] + params["bf1"])
    return x1 + (h1 @ params["w2"] + params["bf2"])


if __name__ == "__main__":
    key = jax.random.PRNGKey(0)
    B, C, num_heads = 2, 128, 4          # lane-dense channel dim (C % 128 == 0)
    z_H = z_W = 4
    x_H = x_W = 8
    Lz, Lx = z_H * z_W, x_H * x_W
    N = Lz + Lx                          # 80 -> padded to 128 inside the wrapper
    mlp_ratio = 4.0
    Hm = int(C * mlp_ratio)

    ks = jax.random.split(key, 12)
    x = jax.random.normal(ks[0], (B, Lx, C), jnp.float32)
    merged = jax.random.normal(ks[1], (B, N, C), jnp.float32)
    x_pos = 0.1 * jax.random.normal(ks[2], (B, Lx, C), jnp.float32)
    merged_k_pos = 0.1 * jax.random.normal(ks[3], (B, N, C), jnp.float32)

    # deterministic synthetic parameters (qkv_bias=False -> no q/k/v bias)
    params = dict(
        g1=jnp.ones((1, C), jnp.float32), b1=jnp.zeros((1, C), jnp.float32),
        wq=0.05 * jax.random.normal(ks[4], (C, C), jnp.float32),
        wk=0.05 * jax.random.normal(ks[5], (C, C), jnp.float32),
        wv=0.05 * jax.random.normal(ks[6], (C, C), jnp.float32),
        wp=0.05 * jax.random.normal(ks[7], (C, C), jnp.float32),
        bp=jnp.zeros((1, C), jnp.float32),
        g2=jnp.ones((1, C), jnp.float32), b2=jnp.zeros((1, C), jnp.float32),
        w1=0.05 * jax.random.normal(ks[8], (C, Hm), jnp.float32),
        bf1=jnp.zeros((1, Hm), jnp.float32),
        w2=0.05 * jax.random.normal(ks[9], (Hm, C), jnp.float32),
        bf2=jnp.zeros((1, C), jnp.float32),
    )

    out = merged_cross_attention_block(x, merged, z_H, z_W, x_H, x_W,
                                       x_pos, merged_k_pos, params, num_heads)
    out = jax.block_until_ready(out)

    ref = _reference(x, merged, Lz, x_pos, merged_k_pos, params, num_heads,
                     (C // num_heads) ** -0.5)
    assert out.shape == (B, Lx, C)
    max_err = float(jnp.max(jnp.abs(out - ref)))
    # bf16 matmul operands (f32 accumulation) + approx reciprocal vs. an f32 reference.
    assert jnp.allclose(out, ref, atol=2e-2, rtol=2e-2), f"mismatch, max abs err {max_err}"
    print("KERNEL_OK")
</pallas_src>

<mosaic_0001>
module attributes {stable_mosaic.version = 11 : i64} {
  func.func @_block_kernel(%arg0: i32, %arg1: memref<2x64x128xf32, #tpu.memory_space<vmem>>, %arg2: memref<2x128x128xf32, #tpu.memory_space<vmem>>, %arg3: memref<2x64x128xf32, #tpu.memory_space<vmem>>, %arg4: memref<2x128x128xf32, #tpu.memory_space<vmem>>, %arg5: memref<1x128xf32, #tpu.memory_space<vmem>>, %arg6: memref<1x128xf32, #tpu.memory_space<vmem>>, %arg7: memref<128x128xbf16, #tpu.memory_space<vmem>>, %arg8: memref<128x128xbf16, #tpu.memory_space<vmem>>, %arg9: memref<128x128xbf16, #tpu.memory_space<vmem>>, %arg10: memref<128x128xbf16, #tpu.memory_space<vmem>>, %arg11: memref<1x128xf32, #tpu.memory_space<vmem>>, %arg12: memref<1x128xf32, #tpu.memory_space<vmem>>, %arg13: memref<1x128xf32, #tpu.memory_space<vmem>>, %arg14: memref<128x512xbf16, #tpu.memory_space<vmem>>, %arg15: memref<1x512xf32, #tpu.memory_space<vmem>>, %arg16: memref<512x128xbf16, #tpu.memory_space<vmem>>, %arg17: memref<1x128xf32, #tpu.memory_space<vmem>>, %arg18: memref<2x64x128xf32, #tpu.memory_space<vmem>>) attributes {dimension_semantics = [#tpu.dimension_semantics<parallel>], iteration_bounds = array<i64: 1>, scalar_prefetch = 0 : i64, scratch_operands = 0 : i64, tpu.core_type = #tpu.core_type<tc>, window_params = [{transform_indices = @transform_0, window_bounds = array<i64: 2, 64, 128>}, {transform_indices = @transform_1, window_bounds = array<i64: 2, 128, 128>}, {transform_indices = @transform_2, window_bounds = array<i64: 2, 64, 128>}, {transform_indices = @transform_3, window_bounds = array<i64: 2, 128, 128>}, {pipeline_mode = #tpu.pipeline_mode<synchronous>, transform_indices = @transform_4, window_bounds = array<i64: 1, 128>}, {pipeline_mode = #tpu.pipeline_mode<synchronous>, transform_indices = @transform_5, window_bounds = array<i64: 1, 128>}, {pipeline_mode = #tpu.pipeline_mode<synchronous>, transform_indices = @transform_6, window_bounds = array<i64: 128, 128>}, {pipeline_mode = #tpu.pipeline_mode<synchronous>, transform_indices = @transform_7, window_bounds = array<i64: 128, 128>}, {pipeline_mode = #tpu.pipeline_mode<synchronous>, transform_indices = @transform_8, window_bounds = array<i64: 128, 128>}, {pipeline_mode = #tpu.pipeline_mode<synchronous>, transform_indices = @transform_9, window_bounds = array<i64: 128, 128>}, {pipeline_mode = #tpu.pipeline_mode<synchronous>, transform_indices = @transform_10, window_bounds = array<i64: 1, 128>}, {pipeline_mode = #tpu.pipeline_mode<synchronous>, transform_indices = @transform_11, window_bounds = array<i64: 1, 128>}, {pipeline_mode = #tpu.pipeline_mode<synchronous>, transform_indices = @transform_12, window_bounds = array<i64: 1, 128>}, {pipeline_mode = #tpu.pipeline_mode<synchronous>, transform_indices = @transform_13, window_bounds = array<i64: 128, 512>}, {pipeline_mode = #tpu.pipeline_mode<synchronous>, transform_indices = @transform_14, window_bounds = array<i64: 1, 512>}, {pipeline_mode = #tpu.pipeline_mode<synchronous>, transform_indices = @transform_15, window_bounds = array<i64: 512, 128>}, {pipeline_mode = #tpu.pipeline_mode<synchronous>, transform_indices = @transform_16, window_bounds = array<i64: 1, 128>}, {transform_indices = @transform_17, window_bounds = array<i64: 2, 64, 128>}]} {
    %c0 = arith.constant 0 : index
    %c0_0 = arith.constant 0 : index
    %c0_1 = arith.constant 0 : index
    %0 = vector.load %arg2[%c0, %c0_0, %c0_1] : memref<2x128x128xf32, #tpu.memory_space<vmem>>, vector<2x128x128xf32>
    %c0_2 = arith.constant 0 : index
    %c0_3 = arith.constant 0 : index
    %1 = vector.load %arg5[%c0_2, %c0_3] : memref<1x128xf32, #tpu.memory_space<vmem>>, vector<1x128xf32>
    %c0_4 = arith.constant 0 : index
    %c0_5 = arith.constant 0 : index
    %2 = vector.load %arg6[%c0_4, %c0_5] : memref<1x128xf32, #tpu.memory_space<vmem>>, vector<1x128xf32>
    %cst = arith.constant dense<0.000000e+00> : vector<2x128xf32>
    %3 = vector.multi_reduction <add>, %0, %cst [2] : vector<2x128x128xf32> to vector<2x128xf32>
    %4 = vector.shape_cast %3 : vector<2x128xf32> to vector<2x128x1xf32>
    %cst_6 = arith.constant 1.280000e+02 : f32
    %5 = vector.broadcast %cst_6 : f32 to vector<2x128x1xf32>
    %6 = arith.divf %4, %5 : vector<2x128x1xf32>
    %7 = vector.broadcast %6 : vector<2x128x1xf32> to vector<2x128x128xf32>
    %8 = arith.subf %0, %7 : vector<2x128x128xf32>
    %9 = arith.mulf %8, %8 : vector<2x128x128xf32>
    %cst_7 = arith.constant dense<0.000000e+00> : vector<2x128xf32>
    %10 = vector.multi_reduction <add>, %9, %cst_7 [2] : vector<2x128x128xf32> to vector<2x128xf32>
    %11 = vector.shape_cast %10 : vector<2x128xf32> to vector<2x128x1xf32>
    %cst_8 = arith.constant 1.280000e+02 : f32
    %12 = vector.broadcast %cst_8 : f32 to vector<2x128x1xf32>
    %13 = arith.divf %11, %12 : vector<2x128x1xf32>
    %cst_9 = arith.constant 9.99999974E-6 : f32
    %14 = vector.broadcast %cst_9 : f32 to vector<2x128x1xf32>
    %15 = arith.addf %13, %14 : vector<2x128x1xf32>
    %16 = math.rsqrt %15 : vector<2x128x1xf32>
    %17 = vector.broadcast %16 : vector<2x128x1xf32> to vector<2x128x128xf32>
    %18 = arith.mulf %8, %17 : vector<2x128x128xf32>
    %19 = vector.shape_cast %1 : vector<1x128xf32> to vector<1x1x128xf32>
    %20 = vector.broadcast %19 : vector<1x1x128xf32> to vector<2x128x128xf32>
    %21 = arith.mulf %18, %20 : vector<2x128x128xf32>
    %22 = vector.shape_cast %2 : vector<1x128xf32> to vector<1x1x128xf32>
    %23 = vector.broadcast %22 : vector<1x1x128xf32> to vector<2x128x128xf32>
    %24 = arith.addf %21, %23 : vector<2x128x128xf32>
    %25 = vector.extract_strided_slice %24 {offsets = [0, 16, 0], sizes = [2, 64, 128], strides = [1, 1, 1]} : vector<2x128x128xf32> to vector<2x64x128xf32>
    %c0_10 = arith.constant 0 : index
    %c0_11 = arith.constant 0 : index
    %c0_12 = arith.constant 0 : index
    %26 = vector.load %arg3[%c0_10, %c0_11, %c0_12] : memref<2x64x128xf32, #tpu.memory_space<vmem>>, vector<2x64x128xf32>
    %27 = arith.addf %25, %26 : vector<2x64x128xf32>
    %28 = vector.shape_cast %27 : vector<2x64x128xf32> to vector<128x128xf32>
    %29 = arith.truncf %28 : vector<128x128xf32> to vector<128x128xbf16>
    %c0_13 = arith.constant 0 : index
    %c0_14 = arith.constant 0 : index
    %c0_15 = arith.constant 0 : index
    %30 = vector.load %arg4[%c0_13, %c0_14, %c0_15] : memref<2x128x128xf32, #tpu.memory_space<vmem>>, vector<2x128x128xf32>
    %31 = arith.addf %24, %30 : vector<2x128x128xf32>
    %32 = vector.shape_cast %31 : vector<2x128x128xf32> to vector<256x128xf32>
    %33 = arith.truncf %32 : vector<256x128xf32> to vector<256x128xbf16>
    %34 = vector.shape_cast %24 : vector<2x128x128xf32> to vector<256x128xf32>
    %35 = arith.truncf %34 : vector<256x128xf32> to vector<256x128xbf16>
    %c0_16 = arith.constant 0 : index
    %c0_17 = arith.constant 0 : index
    %36 = vector.load %arg7[%c0_16, %c0_17] : memref<128x128xbf16, #tpu.memory_space<vmem>>, vector<128x128xbf16>
    %cst_18 = arith.constant dense<0.000000e+00> : vector<128x128xf32>
    %37 = tpu.matmul %29, %36, %cst_18 {dimension_numbers = #tpu.dot_dimension_numbers<[1], [0], [0], [1], [0, 0, 1, 1], [], []>} : vector<128x128xbf16>, vector<128x128xbf16>, vector<128x128xf32> -> vector<128x128xf32>
    %38 = arith.truncf %37 : vector<128x128xf32> to vector<128x128xbf16>
    %c0_19 = arith.constant 0 : index
    %c0_20 = arith.constant 0 : index
    %39 = vector.load %arg8[%c0_19, %c0_20] : memref<128x128xbf16, #tpu.memory_space<vmem>>, vector<128x128xbf16>
    %cst_21 = arith.constant dense<0.000000e+00> : vector<256x128xf32>
    %40 = tpu.matmul %33, %39, %cst_21 {dimension_numbers = #tpu.dot_dimension_numbers<[1], [0], [0], [1], [0, 0, 1, 1], [], []>} : vector<256x128xbf16>, vector<128x128xbf16>, vector<256x128xf32> -> vector<256x128xf32>
    %41 = arith.truncf %40 : vector<256x128xf32> to vector<256x128xbf16>
    %c0_22 = arith.constant 0 : index
    %c0_23 = arith.constant 0 : index
    %42 = vector.load %arg9[%c0_22, %c0_23] : memref<128x128xbf16, #tpu.memory_space<vmem>>, vector<128x128xbf16>
    %cst_24 = arith.constant dense<0.000000e+00> : vector<256x128xf32>
    %43 = tpu.matmul %35, %42, %cst_24 {dimension_numbers = #tpu.dot_dimension_numbers<[1], [0], [0], [1], [0, 0, 1, 1], [], []>} : vector<256x128xbf16>, vector<128x128xbf16>, vector<256x128xf32> -> vector<256x128xf32>
    %44 = arith.truncf %43 : vector<256x128xf32> to vector<256x128xbf16>
    %45 = vector.extract_strided_slice %38 {offsets = [0, 0], sizes = [64, 32], strides = [1, 1]} : vector<128x128xbf16> to vector<64x32xbf16>
    %46 = vector.extract_strided_slice %38 {offsets = [0, 32], sizes = [64, 32], strides = [1, 1]} : vector<128x128xbf16> to vector<64x32xbf16>
    %47 = vector.extract_strided_slice %38 {offsets = [0, 64], sizes = [64, 32], strides = [1, 1]} : vector<128x128xbf16> to vector<64x32xbf16>
    %48 = vector.extract_strided_slice %38 {offsets = [0, 96], sizes = [64, 32], strides = [1, 1]} : vector<128x128xbf16> to vector<64x32xbf16>
    %49 = vector.extract_strided_slice %38 {offsets = [64, 0], sizes = [64, 32], strides = [1, 1]} : vector<128x128xbf16> to vector<64x32xbf16>
    %50 = vector.extract_strided_slice %38 {offsets = [64, 32], sizes = [64, 32], strides = [1, 1]} : vector<128x128xbf16> to vector<64x32xbf16>
    %51 = vector.extract_strided_slice %38 {offsets = [64, 64], sizes = [64, 32], strides = [1, 1]} : vector<128x128xbf16> to vector<64x32xbf16>
    %52 = vector.extract_strided_slice %38 {offsets = [64, 96], sizes = [64, 32], strides = [1, 1]} : vector<128x128xbf16> to vector<64x32xbf16>
    %53 = vector.shape_cast %45 : vector<64x32xbf16> to vector<1x64x32xbf16>
    %54 = vector.shape_cast %46 : vector<64x32xbf16> to vector<1x64x32xbf16>
    %55 = vector.shape_cast %47 : vector<64x32xbf16> to vector<1x64x32xbf16>
    %56 = vector.shape_cast %48 : vector<64x32xbf16> to vector<1x64x32xbf16>
    %57 = vector.shape_cast %49 : vector<64x32xbf16> to vector<1x64x32xbf16>
    %58 = vector.shape_cast %50 : vector<64x32xbf16> to vector<1x64x32xbf16>
    %59 = vector.shape_cast %51 : vector<64x32xbf16> to vector<1x64x32xbf16>
    %60 = vector.shape_cast %52 : vector<64x32xbf16> to vector<1x64x32xbf16>
    %61 = tpu.concatenate %53, %54, %55, %56, %57, %58, %59, %60 in 0 : vector<1x64x32xbf16>, vector<1x64x32xbf16>, vector<1x64x32xbf16>, vector<1x64x32xbf16>, vector<1x64x32xbf16>, vector<1x64x32xbf16>, vector<1x64x32xbf16>, vector<1x64x32xbf16> -> vector<8x64x32xbf16>
    %62 = vector.extract_strided_slice %41 {offsets = [0, 0], sizes = [128, 32], strides = [1, 1]} : vector<256x128xbf16> to vector<128x32xbf16>
    %63 = vector.extract_strided_slice %41 {offsets = [0, 32], sizes = [128, 32], strides = [1, 1]} : vector<256x128xbf16> to vector<128x32xbf16>
    %64 = vector.extract_strided_slice %41 {offsets = [0, 64], sizes = [128, 32], strides = [1, 1]} : vector<256x128xbf16> to vector<128x32xbf16>
    %65 = vector.extract_strided_slice %41 {offsets = [0, 96], sizes = [128, 32], strides = [1, 1]} : vector<256x128xbf16> to vector<128x32xbf16>
    %66 = vector.extract_strided_slice %41 {offsets = [128, 0], sizes = [128, 32], strides = [1, 1]} : vector<256x128xbf16> to vector<128x32xbf16>
    %67 = vector.extract_strided_slice %41 {offsets = [128, 32], sizes = [128, 32], strides = [1, 1]} : vector<256x128xbf16> to vector<128x32xbf16>
    %68 = vector.extract_strided_slice %41 {offsets = [128, 64], sizes = [128, 32], strides = [1, 1]} : vector<256x128xbf16> to vector<128x32xbf16>
    %69 = vector.extract_strided_slice %41 {offsets = [128, 96], sizes = [128, 32], strides = [1, 1]} : vector<256x128xbf16> to vector<128x32xbf16>
    %70 = vector.shape_cast %62 : vector<128x32xbf16> to vector<1x128x32xbf16>
    %71 = vector.shape_cast %63 : vector<128x32xbf16> to vector<1x128x32xbf16>
    %72 = vector.shape_cast %64 : vector<128x32xbf16> to vector<1x128x32xbf16>
    %73 = vector.shape_cast %65 : vector<128x32xbf16> to vector<1x128x32xbf16>
    %74 = vector.shape_cast %66 : vector<128x32xbf16> to vector<1x128x32xbf16>
    %75 = vector.shape_cast %67 : vector<128x32xbf16> to vector<1x128x32xbf16>
    %76 = vector.shape_cast %68 : vector<128x32xbf16> to vector<1x128x32xbf16>
    %77 = vector.shape_cast %69 : vector<128x32xbf16> to vector<1x128x32xbf16>
    %78 = tpu.concatenate %70, %71, %72, %73, %74, %75, %76, %77 in 0 : vector<1x128x32xbf16>, vector<1x128x32xbf16>, vector<1x128x32xbf16>, vector<1x128x32xbf16>, vector<1x128x32xbf16>, vector<1x128x32xbf16>, vector<1x128x32xbf16>, vector<1x128x32xbf16> -> vector<8x128x32xbf16>
    %79 = vector.extract_strided_slice %44 {offsets = [0, 0], sizes = [128, 32], strides = [1, 1]} : vector<256x128xbf16> to vector<128x32xbf16>
    %80 = vector.extract_strided_slice %44 {offsets = [0, 32], sizes = [128, 32], strides = [1, 1]} : vector<256x128xbf16> to vector<128x32xbf16>
    %81 = vector.extract_strided_slice %44 {offsets = [0, 64], sizes = [128, 32], strides = [1, 1]} : vector<256x128xbf16> to vector<128x32xbf16>
    %82 = vector.extract_strided_slice %44 {offsets = [0, 96], sizes = [128, 32], strides = [1, 1]} : vector<256x128xbf16> to vector<128x32xbf16>
    %83 = vector.extract_strided_slice %44 {offsets = [128, 0], sizes = [128, 32], strides = [1, 1]} : vector<256x128xbf16> to vector<128x32xbf16>
    %84 = vector.extract_strided_slice %44 {offsets = [128, 32], sizes = [128, 32], strides = [1, 1]} : vector<256x128xbf16> to vector<128x32xbf16>
    %85 = vector.extract_strided_slice %44 {offsets = [128, 64], sizes = [128, 32], strides = [1, 1]} : vector<256x128xbf16> to vector<128x32xbf16>
    %86 = vector.extract_strided_slice %44 {offsets = [128, 96], sizes = [128, 32], strides = [1, 1]} : vector<256x128xbf16> to vector<128x32xbf16>
    %87 = vector.shape_cast %79 : vector<128x32xbf16> to vector<1x128x32xbf16>
    %88 = vector.shape_cast %80 : vector<128x32xbf16> to vector<1x128x32xbf16>
    %89 = vector.shape_cast %81 : vector<128x32xbf16> to vector<1x128x32xbf16>
    %90 = vector.shape_cast %82 : vector<128x32xbf16> to vector<1x128x32xbf16>
    %91 = vector.shape_cast %83 : vector<128x32xbf16> to vector<1x128x32xbf16>
    %92 = vector.shape_cast %84 : vector<128x32xbf16> to vector<1x128x32xbf16>
    %93 = vector.shape_cast %85 : vector<128x32xbf16> to vector<1x128x32xbf16>
    %94 = vector.shape_cast %86 : vector<128x32xbf16> to vector<1x128x32xbf16>
    %95 = tpu.concatenate %87, %88, %89, %90, %91, %92, %93, %94 in 0 : vector<1x128x32xbf16>, vector<1x128x32xbf16>, vector<1x128x32xbf16>, vector<1x128x32xbf16>, vector<1x128x32xbf16>, vector<1x128x32xbf16>, vector<1x128x32xbf16>, vector<1x128x32xbf16> -> vector<8x128x32xbf16>
    "tpu.trace_start"() <{level = 10 : i32, message = "bqd,bkd->bqk"}> : () -> ()
    %cst_25 = arith.constant dense<0.000000e+00> : vector<8x64x128xf32>
    %96 = tpu.matmul %61, %78, %cst_25 {dimension_numbers = #tpu.dot_dimension_numbers<[2], [2], [1], [1], [0, 0, 0, 1, 1, 1], [0], [0]>} : vector<8x64x32xbf16>, vector<8x128x32xbf16>, vector<8x64x128xf32> -> vector<8x64x128xf32>
    "tpu.trace_stop"() : () -> ()
    %97 = tpu.iota {dimensions = array<i32: 2>} : vector<1x1x128xi32>
    %c80_i32 = arith.constant 80 : i32
    %98 = vector.broadcast %c80_i32 : i32 to vector<1x1x128xi32>
    %99 = arith.cmpi slt, %97, %98 : vector<1x1x128xi32>
    %cst_26 = arith.constant -1.000000e+30 : f32
    %100 = vector.shape_cast %99 : vector<1x1x128xi1> to vector<1x1x128xi1>
    %101 = vector.broadcast %100 : vector<1x1x128xi1> to vector<8x64x128xi1>
    %102 = vector.broadcast %cst_26 : f32 to vector<8x64x128xf32>
    %103 = arith.select %101, %96, %102 : vector<8x64x128xi1>, vector<8x64x128xf32>
    %cst_27 = arith.constant dense<0xFF800000> : vector<8x64xf32>
    %104 = vector.multi_reduction <maximumf>, %103, %cst_27 [2] : vector<8x64x128xf32> to vector<8x64xf32>
    %105 = vector.shape_cast %104 : vector<8x64xf32> to vector<8x64x1xf32>
    %106 = vector.broadcast %105 : vector<8x64x1xf32> to vector<8x64x128xf32>
    %107 = arith.subf %103, %106 : vector<8x64x128xf32>
    %108 = math.exp %107 : vector<8x64x128xf32>
    %cst_28 = arith.constant dense<0.000000e+00> : vector<8x64xf32>
    %109 = vector.multi_reduction <add>, %108, %cst_28 [2] : vector<8x64x128xf32> to vector<8x64xf32>
    %110 = vector.shape_cast %109 : vector<8x64xf32> to vector<8x64x1xf32>
    %111 = tpu.reciprocal %110 {approx = true} : vector<8x64x1xf32> -> vector<8x64x1xf32>
    %112 = vector.broadcast %111 : vector<8x64x1xf32> to vector<8x64x128xf32>
    %113 = arith.mulf %108, %112 : vector<8x64x128xf32>
    %114 = arith.truncf %113 : vector<8x64x128xf32> to vector<8x64x128xbf16>
    "tpu.trace_start"() <{level = 10 : i32, message = "bqk,bkd->bqd"}> : () -> ()
    %cst_29 = arith.constant dense<0.000000e+00> : vector<8x64x32xf32>
    %115 = tpu.matmul %114, %95, %cst_29 {dimension_numbers = #tpu.dot_dimension_numbers<[2], [1], [1], [2], [0, 0, 0, 1, 1, 2], [0], [0]>} : vector<8x64x128xbf16>, vector<8x128x32xbf16>, vector<8x64x32xf32> -> vector<8x64x32xf32>
    "tpu.trace_stop"() : () -> ()
    %116 = arith.truncf %115 : vector<8x64x32xf32> to vector<8x64x32xbf16>
    %117 = vector.extract_strided_slice %116 {offsets = [0, 0, 0], sizes = [1, 64, 32], strides = [1, 1, 1]} : vector<8x64x32xbf16> to vector<1x64x32xbf16>
    %118 = vector.shape_cast %117 : vector<1x64x32xbf16> to vector<64x32xbf16>
    %119 = vector.extract_strided_slice %116 {offsets = [1, 0, 0], sizes = [1, 64, 32], strides = [1, 1, 1]} : vector<8x64x32xbf16> to vector<1x64x32xbf16>
    %120 = vector.shape_cast %119 : vector<1x64x32xbf16> to vector<64x32xbf16>
    %121 = vector.extract_strided_slice %116 {offsets = [2, 0, 0], sizes = [1, 64, 32], strides = [1, 1, 1]} : vector<8x64x32xbf16> to vector<1x64x32xbf16>
    %122 = vector.shape_cast %121 : vector<1x64x32xbf16> to vector<64x32xbf16>
    %123 = vector.extract_strided_slice %116 {offsets = [3, 0, 0], sizes = [1, 64, 32], strides = [1, 1, 1]} : vector<8x64x32xbf16> to vector<1x64x32xbf16>
    %124 = vector.shape_cast %123 : vector<1x64x32xbf16> to vector<64x32xbf16>
    %125 = tpu.concatenate %118, %120, %122, %124 in 1 : vector<64x32xbf16>, vector<64x32xbf16>, vector<64x32xbf16>, vector<64x32xbf16> -> vector<64x128xbf16>
    %126 = vector.extract_strided_slice %116 {offsets = [4, 0, 0], sizes = [1, 64, 32], strides = [1, 1, 1]} : vector<8x64x32xbf16> to vector<1x64x32xbf16>
    %127 = vector.shape_cast %126 : vector<1x64x32xbf16> to vector<64x32xbf16>
    %128 = vector.extract_strided_slice %116 {offsets = [5, 0, 0], sizes = [1, 64, 32], strides = [1, 1, 1]} : vector<8x64x32xbf16> to vector<1x64x32xbf16>
    %129 = vector.shape_cast %128 : vector<1x64x32xbf16> to vector<64x32xbf16>
    %130 = vector.extract_strided_slice %116 {offsets = [6, 0, 0], sizes = [1, 64, 32], strides = [1, 1, 1]} : vector<8x64x32xbf16> to vector<1x64x32xbf16>
    %131 = vector.shape_cast %130 : vector<1x64x32xbf16> to vector<64x32xbf16>
    %132 = vector.extract_strided_slice %116 {offsets = [7, 0, 0], sizes = [1, 64, 32], strides = [1, 1, 1]} : vector<8x64x32xbf16> to vector<1x64x32xbf16>
    %133 = vector.shape_cast %132 : vector<1x64x32xbf16> to vector<64x32xbf16>
    %134 = tpu.concatenate %127, %129, %131, %133 in 1 : vector<64x32xbf16>, vector<64x32xbf16>, vector<64x32xbf16>, vector<64x32xbf16> -> vector<64x128xbf16>
    %135 = tpu.concatenate %125, %134 in 0 : vector<64x128xbf16>, vector<64x128xbf16> -> vector<128x128xbf16>
    %c0_30 = arith.constant 0 : index
    %c0_31 = arith.constant 0 : index
    %136 = vector.load %arg10[%c0_30, %c0_31] : memref<128x128xbf16, #tpu.memory_space<vmem>>, vector<128x128xbf16>
    %cst_32 = arith.constant dense<0.000000e+00> : vector<128x128xf32>
    %137 = tpu.matmul %135, %136, %cst_32 {dimension_numbers = #tpu.dot_dimension_numbers<[1], [0], [0], [1], [0, 0, 1, 1], [], []>} : vector<128x128xbf16>, vector<128x128xbf16>, vector<128x128xf32> -> vector<128x128xf32>
    %c0_33 = arith.constant 0 : index
    %c0_34 = arith.constant 0 : index
    %138 = vector.load %arg11[%c0_33, %c0_34] : memref<1x128xf32, #tpu.memory_space<vmem>>, vector<1x128xf32>
    %139 = vector.broadcast %138 : vector<1x128xf32> to vector<128x128xf32>
    %140 = arith.addf %137, %139 : vector<128x128xf32>
    %c0_35 = arith.constant 0 : index
    %c0_36 = arith.constant 0 : index
    %c0_37 = arith.constant 0 : index
    %141 = vector.load %arg1[%c0_35, %c0_36, %c0_37] : memref<2x64x128xf32, #tpu.memory_space<vmem>>, vector<2x64x128xf32>
    %142 = vector.shape_cast %141 : vector<2x64x128xf32> to vector<128x128xf32>
    %143 = arith.addf %142, %140 : vector<128x128xf32>
    %c0_38 = arith.constant 0 : index
    %c0_39 = arith.constant 0 : index
    %144 = vector.load %arg12[%c0_38, %c0_39] : memref<1x128xf32, #tpu.memory_space<vmem>>, vector<1x128xf32>
    %c0_40 = arith.constant 0 : index
    %c0_41 = arith.constant 0 : index
    %145 = vector.load %arg13[%c0_40, %c0_41] : memref<1x128xf32, #tpu.memory_space<vmem>>, vector<1x128xf32>
    %cst_42 = arith.constant dense<0.000000e+00> : vector<128xf32>
    %146 = vector.multi_reduction <add>, %143, %cst_42 [1] : vector<128x128xf32> to vector<128xf32>
    %147 = vector.shape_cast %146 : vector<128xf32> to vector<128x1xf32>
    %cst_43 = arith.constant 1.280000e+02 : f32
    %148 = vector.broadcast %cst_43 : f32 to vector<128x1xf32>
    %149 = arith.divf %147, %148 : vector<128x1xf32>
    %150 = vector.broadcast %149 : vector<128x1xf32> to vector<128x128xf32>
    %151 = arith.subf %143, %150 : vector<128x128xf32>
    %152 = arith.mulf %151, %151 : vector<128x128xf32>
    %cst_44 = arith.constant dense<0.000000e+00> : vector<128xf32>
    %153 = vector.multi_reduction <add>, %152, %cst_44 [1] : vector<128x128xf32> to vector<128xf32>
    %154 = vector.shape_cast %153 : vector<128xf32> to vector<128x1xf32>
    %cst_45 = arith.constant 1.280000e+02 : f32
    %155 = vector.broadcast %cst_45 : f32 to vector<128x1xf32>
    %156 = arith.divf %154, %155 : vector<128x1xf32>
    %cst_46 = arith.constant 9.99999974E-6 : f32
    %157 = vector.broadcast %cst_46 : f32 to vector<128x1xf32>
    %158 = arith.addf %156, %157 : vector<128x1xf32>
    %159 = math.rsqrt %158 : vector<128x1xf32>
    %160 = vector.broadcast %159 : vector<128x1xf32> to vector<128x128xf32>
    %161 = arith.mulf %151, %160 : vector<128x128xf32>
    %162 = vector.broadcast %144 : vector<1x128xf32> to vector<128x128xf32>
    %163 = arith.mulf %161, %162 : vector<128x128xf32>
    %164 = vector.broadcast %145 : vector<1x128xf32> to vector<128x128xf32>
    %165 = arith.addf %163, %164 : vector<128x128xf32>
    %166 = arith.truncf %165 : vector<128x128xf32> to vector<128x128xbf16>
    %c0_47 = arith.constant 0 : index
    %c0_48 = arith.constant 0 : index
    %167 = vector.load %arg14[%c0_47, %c0_48] : memref<128x512xbf16, #tpu.memory_space<vmem>>, vector<128x512xbf16>
    %cst_49 = arith.constant dense<0.000000e+00> : vector<128x512xf32>
    %168 = tpu.matmul %166, %167, %cst_49 {dimension_numbers = #tpu.dot_dimension_numbers<[1], [0], [0], [1], [0, 0, 1, 1], [], []>} : vector<128x128xbf16>, vector<128x512xbf16>, vector<128x512xf32> -> vector<128x512xf32>
    %c0_50 = arith.constant 0 : index
    %c0_51 = arith.constant 0 : index
    %169 = vector.load %arg15[%c0_50, %c0_51] : memref<1x512xf32, #tpu.memory_space<vmem>>, vector<1x512xf32>
    %170 = vector.broadcast %169 : vector<1x512xf32> to vector<128x512xf32>
    %171 = arith.addf %168, %170 : vector<128x512xf32>
    %cst_52 = arith.constant 5.000000e-01 : f32
    %172 = vector.broadcast %cst_52 : f32 to vector<128x512xf32>
    %173 = arith.mulf %172, %171 : vector<128x512xf32>
    %cst_53 = arith.constant 0.707106769 : f32
    %174 = vector.broadcast %cst_53 : f32 to vector<128x512xf32>
    %175 = arith.mulf %171, %174 : vector<128x512xf32>
    %176 = math.erf %175 : vector<128x512xf32>
    %cst_54 = arith.constant 1.000000e+00 : f32
    %177 = vector.broadcast %cst_54 : f32 to vector<128x512xf32>
    %178 = arith.addf %177, %176 : vector<128x512xf32>
    %179 = arith.mulf %173, %178 : vector<128x512xf32>
    %180 = arith.truncf %179 : vector<128x512xf32> to vector<128x512xbf16>
    %c0_55 = arith.constant 0 : index
    %c0_56 = arith.constant 0 : index
    %181 = vector.load %arg16[%c0_55, %c0_56] : memref<512x128xbf16, #tpu.memory_space<vmem>>, vector<512x128xbf16>
    %cst_57 = arith.constant dense<0.000000e+00> : vector<128x128xf32>
    %182 = tpu.matmul %180, %181, %cst_57 {dimension_numbers = #tpu.dot_dimension_numbers<[1], [0], [0], [1], [0, 0, 1, 1], [], []>} : vector<128x512xbf16>, vector<512x128xbf16>, vector<128x128xf32> -> vector<128x128xf32>
    %c0_58 = arith.constant 0 : index
    %c0_59 = arith.constant 0 : index
    %183 = vector.load %arg17[%c0_58, %c0_59] : memref<1x128xf32, #tpu.memory_space<vmem>>, vector<1x128xf32>
    %184 = vector.broadcast %183 : vector<1x128xf32> to vector<128x128xf32>
    %185 = arith.addf %182, %184 : vector<128x128xf32>
    %186 = arith.addf %143, %185 : vector<128x128xf32>
    %187 = vector.shape_cast %186 : vector<128x128xf32> to vector<2x64x128xf32>
    %c0_60 = arith.constant 0 : index
    %c0_61 = arith.constant 0 : index
    %c0_62 = arith.constant 0 : index
    %188 = vector.load %arg18[%c0_60, %c0_61, %c0_62] : memref<2x64x128xf32, #tpu.memory_space<vmem>>, vector<2x64x128xf32>
    tpu.vector_store %arg18[%c0_60, %c0_61, %c0_62], %187 {strides = array<i32>} : memref<2x64x128xf32, #tpu.memory_space<vmem>>, vector<2x64x128xf32>,
    return
  }
  func.func @transform_0(%arg0: i32) -> (i32, i32, i32) {
    %c0_i32 = arith.constant 0 : i32
    %c0_i32_0 = arith.constant 0 : i32
    %c0_i32_1 = arith.constant 0 : i32
    return %arg0, %c0_i32, %c0_i32_0 : i32, i32, i32
  }
  func.func @transform_1(%arg0: i32) -> (i32, i32, i32) {
    %c0_i32 = arith.constant 0 : i32
    %c0_i32_0 = arith.constant 0 : i32
    %c0_i32_1 = arith.constant 0 : i32
    return %arg0, %c0_i32, %c0_i32_0 : i32, i32, i32
  }
  func.func @transform_2(%arg0: i32) -> (i32, i32, i32) {
    %c0_i32 = arith.constant 0 : i32
    %c0_i32_0 = arith.constant 0 : i32
    %c0_i32_1 = arith.constant 0 : i32
    return %arg0, %c0_i32, %c0_i32_0 : i32, i32, i32
  }
  func.func @transform_3(%arg0: i32) -> (i32, i32, i32) {
    %c0_i32 = arith.constant 0 : i32
    %c0_i32_0 = arith.constant 0 : i32
    %c0_i32_1 = arith.constant 0 : i32
    return %arg0, %c0_i32, %c0_i32_0 : i32, i32, i32
  }
  func.func @transform_4(%arg0: i32) -> (i32, i32) {
    %c0_i32 = arith.constant 0 : i32
    %c0_i32_0 = arith.constant 0 : i32
    %c0_i32_1 = arith.constant 0 : i32
    return %c0_i32, %c0_i32_0 : i32, i32
  }
  func.func @transform_5(%arg0: i32) -> (i32, i32) {
    %c0_i32 = arith.constant 0 : i32
    %c0_i32_0 = arith.constant 0 : i32
    %c0_i32_1 = arith.constant 0 : i32
    return %c0_i32, %c0_i32_0 : i32, i32
  }
  func.func @transform_6(%arg0: i32) -> (i32, i32) {
    %c0_i32 = arith.constant 0 : i32
    %c0_i32_0 = arith.constant 0 : i32
    %c0_i32_1 = arith.constant 0 : i32
    return %c0_i32, %c0_i32_0 : i32, i32
  }
  func.func @transform_7(%arg0: i32) -> (i32, i32) {
    %c0_i32 = arith.constant 0 : i32
    %c0_i32_0 = arith.constant 0 : i32
    %c0_i32_1 = arith.constant 0 : i32
    return %c0_i32, %c0_i32_0 : i32, i32
  }
  func.func @transform_8(%arg0: i32) -> (i32, i32) {
    %c0_i32 = arith.constant 0 : i32
    %c0_i32_0 = arith.constant 0 : i32
    %c0_i32_1 = arith.constant 0 : i32
    return %c0_i32, %c0_i32_0 : i32, i32
  }
  func.func @transform_9(%arg0: i32) -> (i32, i32) {
    %c0_i32 = arith.constant 0 : i32
    %c0_i32_0 = arith.constant 0 : i32
    %c0_i32_1 = arith.constant 0 : i32
    return %c0_i32, %c0_i32_0 : i32, i32
  }
  func.func @transform_10(%arg0: i32) -> (i32, i32) {
    %c0_i32 = arith.constant 0 : i32
    %c0_i32_0 = arith.constant 0 : i32
    %c0_i32_1 = arith.constant 0 : i32
    return %c0_i32, %c0_i32_0 : i32, i32
  }
  func.func @transform_11(%arg0: i32) -> (i32, i32) {
    %c0_i32 = arith.constant 0 : i32
    %c0_i32_0 = arith.constant 0 : i32
    %c0_i32_1 = arith.constant 0 : i32
    return %c0_i32, %c0_i32_0 : i32, i32
  }
  func.func @transform_12(%arg0: i32) -> (i32, i32) {
    %c0_i32 = arith.constant 0 : i32
    %c0_i32_0 = arith.constant 0 : i32
    %c0_i32_1 = arith.constant 0 : i32
    return %c0_i32, %c0_i32_0 : i32, i32
  }
  func.func @transform_13(%arg0: i32) -> (i32, i32) {
    %c0_i32 = arith.constant 0 : i32
    %c0_i32_0 = arith.constant 0 : i32
    %c0_i32_1 = arith.constant 0 : i32
    return %c0_i32, %c0_i32_0 : i32, i32
  }
  func.func @transform_14(%arg0: i32) -> (i32, i32) {
    %c0_i32 = arith.constant 0 : i32
    %c0_i32_0 = arith.constant 0 : i32
    %c0_i32_1 = arith.constant 0 : i32
    return %c0_i32, %c0_i32_0 : i32, i32
  }
  func.func @transform_15(%arg0: i32) -> (i32, i32) {
    %c0_i32 = arith.constant 0 : i32
    %c0_i32_0 = arith.constant 0 : i32
    %c0_i32_1 = arith.constant 0 : i32
    return %c0_i32, %c0_i32_0 : i32, i32
  }
  func.func @transform_16(%arg0: i32) -> (i32, i32) {
    %c0_i32 = arith.constant 0 : i32
    %c0_i32_0 = arith.constant 0 : i32
    %c0_i32_1 = arith.constant 0 : i32
    return %c0_i32, %c0_i32_0 : i32, i32
  }
  func.func @transform_17(%arg0: i32) -> (i32, i32, i32) {
    %c0_i32 = arith.constant 0 : i32
    %c0_i32_0 = arith.constant 0 : i32
    %c0_i32_1 = arith.constant 0 : i32
    return %arg0, %c0_i32, %c0_i32_0 : i32, i32, i32
  }
}

module attributes {stable_mosaic.version = 11 : i64} {
  func.func @_block_kernel(%arg0: i32, %arg1: memref<2x64x128xf32, #tpu.memory_space<vmem>>, %arg2: memref<2x128x128xf32, #tpu.memory_space<vmem>>, %arg3: memref<2x64x128xf32, #tpu.memory_space<vmem>>, %arg4: memref<2x128x128xf32, #tpu.memory_space<vmem>>, %arg5: memref<1x128xf32, #tpu.memory_space<vmem>>, %arg6: memref<1x128xf32, #tpu.memory_space<vmem>>, %arg7: memref<128x128xbf16, #tpu.memory_space<vmem>>, %arg8: memref<128x128xbf16, #tpu.memory_space<vmem>>, %arg9: memref<128x128xbf16, #tpu.memory_space<vmem>>, %arg10: memref<128x128xbf16, #tpu.memory_space<vmem>>, %arg11: memref<1x128xf32, #tpu.memory_space<vmem>>, %arg12: memref<1x128xf32, #tpu.memory_space<vmem>>, %arg13: memref<1x128xf32, #tpu.memory_space<vmem>>, %arg14: memref<128x512xbf16, #tpu.memory_space<vmem>>, %arg15: memref<1x512xf32, #tpu.memory_space<vmem>>, %arg16: memref<512x128xbf16, #tpu.memory_space<vmem>>, %arg17: memref<1x128xf32, #tpu.memory_space<vmem>>, %arg18: memref<2x64x128xf32, #tpu.memory_space<vmem>>) attributes {dimension_semantics = [#tpu.dimension_semantics<parallel>], iteration_bounds = array<i64: 1>, scalar_prefetch = 0 : i64, scratch_operands = 0 : i64, tpu.core_type = #tpu.core_type<tc>, window_params = [{transform_indices = @transform_0, window_bounds = array<i64: 2, 64, 128>}, {transform_indices = @transform_1, window_bounds = array<i64: 2, 128, 128>}, {transform_indices = @transform_2, window_bounds = array<i64: 2, 64, 128>}, {transform_indices = @transform_3, window_bounds = array<i64: 2, 128, 128>}, {pipeline_mode = #tpu.pipeline_mode<synchronous>, transform_indices = @transform_4, window_bounds = array<i64: 1, 128>}, {pipeline_mode = #tpu.pipeline_mode<synchronous>, transform_indices = @transform_5, window_bounds = array<i64: 1, 128>}, {pipeline_mode = #tpu.pipeline_mode<synchronous>, transform_indices = @transform_6, window_bounds = array<i64: 128, 128>}, {pipeline_mode = #tpu.pipeline_mode<synchronous>, transform_indices = @transform_7, window_bounds = array<i64: 128, 128>}, {pipeline_mode = #tpu.pipeline_mode<synchronous>, transform_indices = @transform_8, window_bounds = array<i64: 128, 128>}, {pipeline_mode = #tpu.pipeline_mode<synchronous>, transform_indices = @transform_9, window_bounds = array<i64: 128, 128>}, {pipeline_mode = #tpu.pipeline_mode<synchronous>, transform_indices = @transform_10, window_bounds = array<i64: 1, 128>}, {pipeline_mode = #tpu.pipeline_mode<synchronous>, transform_indices = @transform_11, window_bounds = array<i64: 1, 128>}, {pipeline_mode = #tpu.pipeline_mode<synchronous>, transform_indices = @transform_12, window_bounds = array<i64: 1, 128>}, {pipeline_mode = #tpu.pipeline_mode<synchronous>, transform_indices = @transform_13, window_bounds = array<i64: 128, 512>}, {pipeline_mode = #tpu.pipeline_mode<synchronous>, transform_indices = @transform_14, window_bounds = array<i64: 1, 512>}, {pipeline_mode = #tpu.pipeline_mode<synchronous>, transform_indices = @transform_15, window_bounds = array<i64: 512, 128>}, {pipeline_mode = #tpu.pipeline_mode<synchronous>, transform_indices = @transform_16, window_bounds = array<i64: 1, 128>}, {transform_indices = @transform_17, window_bounds = array<i64: 2, 64, 128>}]} {
    %c0 = arith.constant 0 : index
    %c0_0 = arith.constant 0 : index
    %c0_1 = arith.constant 0 : index
    %0 = vector.load %arg2[%c0, %c0_0, %c0_1] : memref<2x128x128xf32, #tpu.memory_space<vmem>>, vector<2x128x128xf32>
    %c0_2 = arith.constant 0 : index
    %c0_3 = arith.constant 0 : index
    %1 = vector.load %arg5[%c0_2, %c0_3] : memref<1x128xf32, #tpu.memory_space<vmem>>, vector<1x128xf32>
    %c0_4 = arith.constant 0 : index
    %c0_5 = arith.constant 0 : index
    %2 = vector.load %arg6[%c0_4, %c0_5] : memref<1x128xf32, #tpu.memory_space<vmem>>, vector<1x128xf32>
    %cst = arith.constant dense<0.000000e+00> : vector<2x128xf32>
    %3 = vector.multi_reduction <add>, %0, %cst [2] : vector<2x128x128xf32> to vector<2x128xf32>
    %4 = vector.shape_cast %3 : vector<2x128xf32> to vector<2x128x1xf32>
    %cst_6 = arith.constant 1.280000e+02 : f32
    %5 = vector.broadcast %cst_6 : f32 to vector<2x128x1xf32>
    %6 = arith.divf %4, %5 : vector<2x128x1xf32>
    %7 = vector.broadcast %6 : vector<2x128x1xf32> to vector<2x128x128xf32>
    %8 = arith.subf %0, %7 : vector<2x128x128xf32>
    %9 = arith.mulf %8, %8 : vector<2x128x128xf32>
    %cst_7 = arith.constant dense<0.000000e+00> : vector<2x128xf32>
    %10 = vector.multi_reduction <add>, %9, %cst_7 [2] : vector<2x128x128xf32> to vector<2x128xf32>
    %11 = vector.shape_cast %10 : vector<2x128xf32> to vector<2x128x1xf32>
    %cst_8 = arith.constant 1.280000e+02 : f32
    %12 = vector.broadcast %cst_8 : f32 to vector<2x128x1xf32>
    %13 = arith.divf %11, %12 : vector<2x128x1xf32>
    %cst_9 = arith.constant 9.99999974E-6 : f32
    %14 = vector.broadcast %cst_9 : f32 to vector<2x128x1xf32>
    %15 = arith.addf %13, %14 : vector<2x128x1xf32>
    %16 = math.rsqrt %15 : vector<2x128x1xf32>
    %17 = vector.broadcast %16 : vector<2x128x1xf32> to vector<2x128x128xf32>
    %18 = arith.mulf %8, %17 : vector<2x128x128xf32>
    %19 = vector.shape_cast %1 : vector<1x128xf32> to vector<1x1x128xf32>
    %20 = vector.broadcast %19 : vector<1x1x128xf32> to vector<2x128x128xf32>
    %21 = arith.mulf %18, %20 : vector<2x128x128xf32>
    %22 = vector.shape_cast %2 : vector<1x128xf32> to vector<1x1x128xf32>
    %23 = vector.broadcast %22 : vector<1x1x128xf32> to vector<2x128x128xf32>
    %24 = arith.addf %21, %23 : vector<2x128x128xf32>
    %25 = vector.extract_strided_slice %24 {offsets = [0, 16, 0], sizes = [2, 64, 128], strides = [1, 1, 1]} : vector<2x128x128xf32> to vector<2x64x128xf32>
    %c0_10 = arith.constant 0 : index
    %c0_11 = arith.constant 0 : index
    %c0_12 = arith.constant 0 : index
    %26 = vector.load %arg3[%c0_10, %c0_11, %c0_12] : memref<2x64x128xf32, #tpu.memory_space<vmem>>, vector<2x64x128xf32>
    %27 = arith.addf %25, %26 : vector<2x64x128xf32>
    %28 = vector.shape_cast %27 : vector<2x64x128xf32> to vector<128x128xf32>
    %29 = arith.truncf %28 : vector<128x128xf32> to vector<128x128xbf16>
    %c0_13 = arith.constant 0 : index
    %c0_14 = arith.constant 0 : index
    %c0_15 = arith.constant 0 : index
    %30 = vector.load %arg4[%c0_13, %c0_14, %c0_15] : memref<2x128x128xf32, #tpu.memory_space<vmem>>, vector<2x128x128xf32>
    %31 = arith.addf %24, %30 : vector<2x128x128xf32>
    %32 = vector.shape_cast %31 : vector<2x128x128xf32> to vector<256x128xf32>
    %33 = arith.truncf %32 : vector<256x128xf32> to vector<256x128xbf16>
    %34 = vector.shape_cast %24 : vector<2x128x128xf32> to vector<256x128xf32>
    %35 = arith.truncf %34 : vector<256x128xf32> to vector<256x128xbf16>
    %c0_16 = arith.constant 0 : index
    %c0_17 = arith.constant 0 : index
    %36 = vector.load %arg7[%c0_16, %c0_17] : memref<128x128xbf16, #tpu.memory_space<vmem>>, vector<128x128xbf16>
    %cst_18 = arith.constant dense<0.000000e+00> : vector<128x128xf32>
    %37 = tpu.matmul %29, %36, %cst_18 {dimension_numbers = #tpu.dot_dimension_numbers<[1], [0], [0], [1], [0, 0, 1, 1], [], []>} : vector<128x128xbf16>, vector<128x128xbf16>, vector<128x128xf32> -> vector<128x128xf32>
    %38 = arith.truncf %37 : vector<128x128xf32> to vector<128x128xbf16>
    %c0_19 = arith.constant 0 : index
    %c0_20 = arith.constant 0 : index
    %39 = vector.load %arg8[%c0_19, %c0_20] : memref<128x128xbf16, #tpu.memory_space<vmem>>, vector<128x128xbf16>
    %cst_21 = arith.constant dense<0.000000e+00> : vector<256x128xf32>
    %40 = tpu.matmul %33, %39, %cst_21 {dimension_numbers = #tpu.dot_dimension_numbers<[1], [0], [0], [1], [0, 0, 1, 1], [], []>} : vector<256x128xbf16>, vector<128x128xbf16>, vector<256x128xf32> -> vector<256x128xf32>
    %41 = arith.truncf %40 : vector<256x128xf32> to vector<256x128xbf16>
    %c0_22 = arith.constant 0 : index
    %c0_23 = arith.constant 0 : index
    %42 = vector.load %arg9[%c0_22, %c0_23] : memref<128x128xbf16, #tpu.memory_space<vmem>>, vector<128x128xbf16>
    %cst_24 = arith.constant dense<0.000000e+00> : vector<256x128xf32>
    %43 = tpu.matmul %35, %42, %cst_24 {dimension_numbers = #tpu.dot_dimension_numbers<[1], [0], [0], [1], [0, 0, 1, 1], [], []>} : vector<256x128xbf16>, vector<128x128xbf16>, vector<256x128xf32> -> vector<256x128xf32>
    %44 = arith.truncf %43 : vector<256x128xf32> to vector<256x128xbf16>
    %45 = vector.extract_strided_slice %38 {offsets = [0, 0], sizes = [64, 32], strides = [1, 1]} : vector<128x128xbf16> to vector<64x32xbf16>
    %46 = vector.extract_strided_slice %38 {offsets = [0, 32], sizes = [64, 32], strides = [1, 1]} : vector<128x128xbf16> to vector<64x32xbf16>
    %47 = vector.extract_strided_slice %38 {offsets = [0, 64], sizes = [64, 32], strides = [1, 1]} : vector<128x128xbf16> to vector<64x32xbf16>
    %48 = vector.extract_strided_slice %38 {offsets = [0, 96], sizes = [64, 32], strides = [1, 1]} : vector<128x128xbf16> to vector<64x32xbf16>
    %49 = vector.extract_strided_slice %38 {offsets = [64, 0], sizes = [64, 32], strides = [1, 1]} : vector<128x128xbf16> to vector<64x32xbf16>
    %50 = vector.extract_strided_slice %38 {offsets = [64, 32], sizes = [64, 32], strides = [1, 1]} : vector<128x128xbf16> to vector<64x32xbf16>
    %51 = vector.extract_strided_slice %38 {offsets = [64, 64], sizes = [64, 32], strides = [1, 1]} : vector<128x128xbf16> to vector<64x32xbf16>
    %52 = vector.extract_strided_slice %38 {offsets = [64, 96], sizes = [64, 32], strides = [1, 1]} : vector<128x128xbf16> to vector<64x32xbf16>
    %53 = vector.shape_cast %45 : vector<64x32xbf16> to vector<1x64x32xbf16>
    %54 = vector.shape_cast %46 : vector<64x32xbf16> to vector<1x64x32xbf16>
    %55 = vector.shape_cast %47 : vector<64x32xbf16> to vector<1x64x32xbf16>
    %56 = vector.shape_cast %48 : vector<64x32xbf16> to vector<1x64x32xbf16>
    %57 = vector.shape_cast %49 : vector<64x32xbf16> to vector<1x64x32xbf16>
    %58 = vector.shape_cast %50 : vector<64x32xbf16> to vector<1x64x32xbf16>
    %59 = vector.shape_cast %51 : vector<64x32xbf16> to vector<1x64x32xbf16>
    %60 = vector.shape_cast %52 : vector<64x32xbf16> to vector<1x64x32xbf16>
    %61 = tpu.concatenate %53, %54, %55, %56, %57, %58, %59, %60 in 0 : vector<1x64x32xbf16>, vector<1x64x32xbf16>, vector<1x64x32xbf16>, vector<1x64x32xbf16>, vector<1x64x32xbf16>, vector<1x64x32xbf16>, vector<1x64x32xbf16>, vector<1x64x32xbf16> -> vector<8x64x32xbf16>
    %62 = vector.extract_strided_slice %41 {offsets = [0, 0], sizes = [128, 32], strides = [1, 1]} : vector<256x128xbf16> to vector<128x32xbf16>
    %63 = vector.extract_strided_slice %41 {offsets = [0, 32], sizes = [128, 32], strides = [1, 1]} : vector<256x128xbf16> to vector<128x32xbf16>
    %64 = vector.extract_strided_slice %41 {offsets = [0, 64], sizes = [128, 32], strides = [1, 1]} : vector<256x128xbf16> to vector<128x32xbf16>
    %65 = vector.extract_strided_slice %41 {offsets = [0, 96], sizes = [128, 32], strides = [1, 1]} : vector<256x128xbf16> to vector<128x32xbf16>
    %66 = vector.extract_strided_slice %41 {offsets = [128, 0], sizes = [128, 32], strides = [1, 1]} : vector<256x128xbf16> to vector<128x32xbf16>
    %67 = vector.extract_strided_slice %41 {offsets = [128, 32], sizes = [128, 32], strides = [1, 1]} : vector<256x128xbf16> to vector<128x32xbf16>
    %68 = vector.extract_strided_slice %41 {offsets = [128, 64], sizes = [128, 32], strides = [1, 1]} : vector<256x128xbf16> to vector<128x32xbf16>
    %69 = vector.extract_strided_slice %41 {offsets = [128, 96], sizes = [128, 32], strides = [1, 1]} : vector<256x128xbf16> to vector<128x32xbf16>
    %70 = vector.shape_cast %62 : vector<128x32xbf16> to vector<1x128x32xbf16>
    %71 = vector.shape_cast %63 : vector<128x32xbf16> to vector<1x128x32xbf16>
    %72 = vector.shape_cast %64 : vector<128x32xbf16> to vector<1x128x32xbf16>
    %73 = vector.shape_cast %65 : vector<128x32xbf16> to vector<1x128x32xbf16>
    %74 = vector.shape_cast %66 : vector<128x32xbf16> to vector<1x128x32xbf16>
    %75 = vector.shape_cast %67 : vector<128x32xbf16> to vector<1x128x32xbf16>
    %76 = vector.shape_cast %68 : vector<128x32xbf16> to vector<1x128x32xbf16>
    %77 = vector.shape_cast %69 : vector<128x32xbf16> to vector<1x128x32xbf16>
    %78 = tpu.concatenate %70, %71, %72, %73, %74, %75, %76, %77 in 0 : vector<1x128x32xbf16>, vector<1x128x32xbf16>, vector<1x128x32xbf16>, vector<1x128x32xbf16>, vector<1x128x32xbf16>, vector<1x128x32xbf16>, vector<1x128x32xbf16>, vector<1x128x32xbf16> -> vector<8x128x32xbf16>
    %79 = vector.extract_strided_slice %44 {offsets = [0, 0], sizes = [128, 32], strides = [1, 1]} : vector<256x128xbf16> to vector<128x32xbf16>
    %80 = vector.extract_strided_slice %44 {offsets = [0, 32], sizes = [128, 32], strides = [1, 1]} : vector<256x128xbf16> to vector<128x32xbf16>
    %81 = vector.extract_strided_slice %44 {offsets = [0, 64], sizes = [128, 32], strides = [1, 1]} : vector<256x128xbf16> to vector<128x32xbf16>
    %82 = vector.extract_strided_slice %44 {offsets = [0, 96], sizes = [128, 32], strides = [1, 1]} : vector<256x128xbf16> to vector<128x32xbf16>
    %83 = vector.extract_strided_slice %44 {offsets = [128, 0], sizes = [128, 32], strides = [1, 1]} : vector<256x128xbf16> to vector<128x32xbf16>
    %84 = vector.extract_strided_slice %44 {offsets = [128, 32], sizes = [128, 32], strides = [1, 1]} : vector<256x128xbf16> to vector<128x32xbf16>
    %85 = vector.extract_strided_slice %44 {offsets = [128, 64], sizes = [128, 32], strides = [1, 1]} : vector<256x128xbf16> to vector<128x32xbf16>
    %86 = vector.extract_strided_slice %44 {offsets = [128, 96], sizes = [128, 32], strides = [1, 1]} : vector<256x128xbf16> to vector<128x32xbf16>
    %87 = vector.shape_cast %79 : vector<128x32xbf16> to vector<1x128x32xbf16>
    %88 = vector.shape_cast %80 : vector<128x32xbf16> to vector<1x128x32xbf16>
    %89 = vector.shape_cast %81 : vector<128x32xbf16> to vector<1x128x32xbf16>
    %90 = vector.shape_cast %82 : vector<128x32xbf16> to vector<1x128x32xbf16>
    %91 = vector.shape_cast %83 : vector<128x32xbf16> to vector<1x128x32xbf16>
    %92 = vector.shape_cast %84 : vector<128x32xbf16> to vector<1x128x32xbf16>
    %93 = vector.shape_cast %85 : vector<128x32xbf16> to vector<1x128x32xbf16>
    %94 = vector.shape_cast %86 : vector<128x32xbf16> to vector<1x128x32xbf16>
    %95 = tpu.concatenate %87, %88, %89, %90, %91, %92, %93, %94 in 0 : vector<1x128x32xbf16>, vector<1x128x32xbf16>, vector<1x128x32xbf16>, vector<1x128x32xbf16>, vector<1x128x32xbf16>, vector<1x128x32xbf16>, vector<1x128x32xbf16>, vector<1x128x32xbf16> -> vector<8x128x32xbf16>
    "tpu.trace_start"() <{level = 10 : i32, message = "bqd,bkd->bqk"}> : () -> ()
    %cst_25 = arith.constant dense<0.000000e+00> : vector<8x64x128xf32>
    %96 = tpu.matmul %61, %78, %cst_25 {dimension_numbers = #tpu.dot_dimension_numbers<[2], [2], [1], [1], [0, 0, 0, 1, 1, 1], [0], [0]>} : vector<8x64x32xbf16>, vector<8x128x32xbf16>, vector<8x64x128xf32> -> vector<8x64x128xf32>
    "tpu.trace_stop"() : () -> ()
    %97 = tpu.iota {dimensions = array<i32: 2>} : vector<1x1x128xi32>
    %c80_i32 = arith.constant 80 : i32
    %98 = vector.broadcast %c80_i32 : i32 to vector<1x1x128xi32>
    %99 = arith.cmpi slt, %97, %98 : vector<1x1x128xi32>
    %cst_26 = arith.constant -1.000000e+30 : f32
    %100 = vector.shape_cast %99 : vector<1x1x128xi1> to vector<1x1x128xi1>
    %101 = vector.broadcast %100 : vector<1x1x128xi1> to vector<8x64x128xi1>
    %102 = vector.broadcast %cst_26 : f32 to vector<8x64x128xf32>
    %103 = arith.select %101, %96, %102 : vector<8x64x128xi1>, vector<8x64x128xf32>
    %cst_27 = arith.constant dense<0xFF800000> : vector<8x64xf32>
    %104 = vector.multi_reduction <maximumf>, %103, %cst_27 [2] : vector<8x64x128xf32> to vector<8x64xf32>
    %105 = vector.shape_cast %104 : vector<8x64xf32> to vector<8x64x1xf32>
    %106 = vector.broadcast %105 : vector<8x64x1xf32> to vector<8x64x128xf32>
    %107 = arith.subf %103, %106 : vector<8x64x128xf32>
    %108 = math.exp %107 : vector<8x64x128xf32>
    %cst_28 = arith.constant dense<0.000000e+00> : vector<8x64xf32>
    %109 = vector.multi_reduction <add>, %108, %cst_28 [2] : vector<8x64x128xf32> to vector<8x64xf32>
    %110 = vector.shape_cast %109 : vector<8x64xf32> to vector<8x64x1xf32>
    %111 = tpu.reciprocal %110 {approx = true} : vector<8x64x1xf32> -> vector<8x64x1xf32>
    %112 = vector.broadcast %111 : vector<8x64x1xf32> to vector<8x64x128xf32>
    %113 = arith.mulf %108, %112 : vector<8x64x128xf32>
    %114 = arith.truncf %113 : vector<8x64x128xf32> to vector<8x64x128xbf16>
    "tpu.trace_start"() <{level = 10 : i32, message = "bqk,bkd->bqd"}> : () -> ()
    %cst_29 = arith.constant dense<0.000000e+00> : vector<8x64x32xf32>
    %115 = tpu.matmul %114, %95, %cst_29 {dimension_numbers = #tpu.dot_dimension_numbers<[2], [1], [1], [2], [0, 0, 0, 1, 1, 2], [0], [0]>} : vector<8x64x128xbf16>, vector<8x128x32xbf16>, vector<8x64x32xf32> -> vector<8x64x32xf32>
    "tpu.trace_stop"() : () -> ()
    %116 = arith.truncf %115 : vector<8x64x32xf32> to vector<8x64x32xbf16>
    %117 = vector.extract_strided_slice %116 {offsets = [0, 0, 0], sizes = [1, 64, 32], strides = [1, 1, 1]} : vector<8x64x32xbf16> to vector<1x64x32xbf16>
    %118 = vector.shape_cast %117 : vector<1x64x32xbf16> to vector<64x32xbf16>
    %119 = vector.extract_strided_slice %116 {offsets = [1, 0, 0], sizes = [1, 64, 32], strides = [1, 1, 1]} : vector<8x64x32xbf16> to vector<1x64x32xbf16>
    %120 = vector.shape_cast %119 : vector<1x64x32xbf16> to vector<64x32xbf16>
    %121 = vector.extract_strided_slice %116 {offsets = [2, 0, 0], sizes = [1, 64, 32], strides = [1, 1, 1]} : vector<8x64x32xbf16> to vector<1x64x32xbf16>
    %122 = vector.shape_cast %121 : vector<1x64x32xbf16> to vector<64x32xbf16>
    %123 = vector.extract_strided_slice %116 {offsets = [3, 0, 0], sizes = [1, 64, 32], strides = [1, 1, 1]} : vector<8x64x32xbf16> to vector<1x64x32xbf16>
    %124 = vector.shape_cast %123 : vector<1x64x32xbf16> to vector<64x32xbf16>
    %125 = tpu.concatenate %118, %120, %122, %124 in 1 : vector<64x32xbf16>, vector<64x32xbf16>, vector<64x32xbf16>, vector<64x32xbf16> -> vector<64x128xbf16>
    %126 = vector.extract_strided_slice %116 {offsets = [4, 0, 0], sizes = [1, 64, 32], strides = [1, 1, 1]} : vector<8x64x32xbf16> to vector<1x64x32xbf16>
    %127 = vector.shape_cast %126 : vector<1x64x32xbf16> to vector<64x32xbf16>
    %128 = vector.extract_strided_slice %116 {offsets = [5, 0, 0], sizes = [1, 64, 32], strides = [1, 1, 1]} : vector<8x64x32xbf16> to vector<1x64x32xbf16>
    %129 = vector.shape_cast %128 : vector<1x64x32xbf16> to vector<64x32xbf16>
    %130 = vector.extract_strided_slice %116 {offsets = [6, 0, 0], sizes = [1, 64, 32], strides = [1, 1, 1]} : vector<8x64x32xbf16> to vector<1x64x32xbf16>
    %131 = vector.shape_cast %130 : vector<1x64x32xbf16> to vector<64x32xbf16>
    %132 = vector.extract_strided_slice %116 {offsets = [7, 0, 0], sizes = [1, 64, 32], strides = [1, 1, 1]} : vector<8x64x32xbf16> to vector<1x64x32xbf16>
    %133 = vector.shape_cast %132 : vector<1x64x32xbf16> to vector<64x32xbf16>
    %134 = tpu.concatenate %127, %129, %131, %133 in 1 : vector<64x32xbf16>, vector<64x32xbf16>, vector<64x32xbf16>, vector<64x32xbf16> -> vector<64x128xbf16>
    %135 = tpu.concatenate %125, %134 in 0 : vector<64x128xbf16>, vector<64x128xbf16> -> vector<128x128xbf16>
    %c0_30 = arith.constant 0 : index
    %c0_31 = arith.constant 0 : index
    %136 = vector.load %arg10[%c0_30, %c0_31] : memref<128x128xbf16, #tpu.memory_space<vmem>>, vector<128x128xbf16>
    %cst_32 = arith.constant dense<0.000000e+00> : vector<128x128xf32>
    %137 = tpu.matmul %135, %136, %cst_32 {dimension_numbers = #tpu.dot_dimension_numbers<[1], [0], [0], [1], [0, 0, 1, 1], [], []>} : vector<128x128xbf16>, vector<128x128xbf16>, vector<128x128xf32> -> vector<128x128xf32>
    %c0_33 = arith.constant 0 : index
    %c0_34 = arith.constant 0 : index
    %138 = vector.load %arg11[%c0_33, %c0_34] : memref<1x128xf32, #tpu.memory_space<vmem>>, vector<1x128xf32>
    %139 = vector.broadcast %138 : vector<1x128xf32> to vector<128x128xf32>
    %140 = arith.addf %137, %139 : vector<128x128xf32>
    %c0_35 = arith.constant 0 : index
    %c0_36 = arith.constant 0 : index
    %c0_37 = arith.constant 0 : index
    %141 = vector.load %arg1[%c0_35, %c0_36, %c0_37] : memref<2x64x128xf32, #tpu.memory_space<vmem>>, vector<2x64x128xf32>
    %142 = vector.shape_cast %141 : vector<2x64x128xf32> to vector<128x128xf32>
    %143 = arith.addf %142, %140 : vector<128x128xf32>
    %c0_38 = arith.constant 0 : index
    %c0_39 = arith.constant 0 : index
    %144 = vector.load %arg12[%c0_38, %c0_39] : memref<1x128xf32, #tpu.memory_space<vmem>>, vector<1x128xf32>
    %c0_40 = arith.constant 0 : index
    %c0_41 = arith.constant 0 : index
    %145 = vector.load %arg13[%c0_40, %c0_41] : memref<1x128xf32, #tpu.memory_space<vmem>>, vector<1x128xf32>
    %cst_42 = arith.constant dense<0.000000e+00> : vector<128xf32>
    %146 = vector.multi_reduction <add>, %143, %cst_42 [1] : vector<128x128xf32> to vector<128xf32>
    %147 = vector.shape_cast %146 : vector<128xf32> to vector<128x1xf32>
    %cst_43 = arith.constant 1.280000e+02 : f32
    %148 = vector.broadcast %cst_43 : f32 to vector<128x1xf32>
    %149 = arith.divf %147, %148 : vector<128x1xf32>
    %150 = vector.broadcast %149 : vector<128x1xf32> to vector<128x128xf32>
    %151 = arith.subf %143, %150 : vector<128x128xf32>
    %152 = arith.mulf %151, %151 : vector<128x128xf32>
    %cst_44 = arith.constant dense<0.000000e+00> : vector<128xf32>
    %153 = vector.multi_reduction <add>, %152, %cst_44 [1] : vector<128x128xf32> to vector<128xf32>
    %154 = vector.shape_cast %153 : vector<128xf32> to vector<128x1xf32>
    %cst_45 = arith.constant 1.280000e+02 : f32
    %155 = vector.broadcast %cst_45 : f32 to vector<128x1xf32>
    %156 = arith.divf %154, %155 : vector<128x1xf32>
    %cst_46 = arith.constant 9.99999974E-6 : f32
    %157 = vector.broadcast %cst_46 : f32 to vector<128x1xf32>
    %158 = arith.addf %156, %157 : vector<128x1xf32>
    %159 = math.rsqrt %158 : vector<128x1xf32>
    %160 = vector.broadcast %159 : vector<128x1xf32> to vector<128x128xf32>
    %161 = arith.mulf %151, %160 : vector<128x128xf32>
    %162 = vector.broadcast %144 : vector<1x128xf32> to vector<128x128xf32>
    %163 = arith.mulf %161, %162 : vector<128x128xf32>
    %164 = vector.broadcast %145 : vector<1x128xf32> to vector<128x128xf32>
    %165 = arith.addf %163, %164 : vector<128x128xf32>
    %166 = arith.truncf %165 : vector<128x128xf32> to vector<128x128xbf16>
    %c0_47 = arith.constant 0 : index
    %c0_48 = arith.constant 0 : index
    %167 = vector.load %arg14[%c0_47, %c0_48] : memref<128x512xbf16, #tpu.memory_space<vmem>>, vector<128x512xbf16>
    %cst_49 = arith.constant dense<0.000000e+00> : vector<128x512xf32>
    %168 = tpu.matmul %166, %167, %cst_49 {dimension_numbers = #tpu.dot_dimension_numbers<[1], [0], [0], [1], [0, 0, 1, 1], [], []>} : vector<128x128xbf16>, vector<128x512xbf16>, vector<128x512xf32> -> vector<128x512xf32>
    %c0_50 = arith.constant 0 : index
    %c0_51 = arith.constant 0 : index
    %169 = vector.load %arg15[%c0_50, %c0_51] : memref<1x512xf32, #tpu.memory_space<vmem>>, vector<1x512xf32>
    %170 = vector.broadcast %169 : vector<1x512xf32> to vector<128x512xf32>
    %171 = arith.addf %168, %170 : vector<128x512xf32>
    %cst_52 = arith.constant 5.000000e-01 : f32
    %172 = vector.broadcast %cst_52 : f32 to vector<128x512xf32>
    %173 = arith.mulf %172, %171 : vector<128x512xf32>
    %cst_53 = arith.constant 0.707106769 : f32
    %174 = vector.broadcast %cst_53 : f32 to vector<128x512xf32>
    %175 = arith.mulf %171, %174 : vector<128x512xf32>
    %176 = math.erf %175 : vector<128x512xf32>
    %cst_54 = arith.constant 1.000000e+00 : f32
    %177 = vector.broadcast %cst_54 : f32 to vector<128x512xf32>
    %178 = arith.addf %177, %176 : vector<128x512xf32>
    %179 = arith.mulf %173, %178 : vector<128x512xf32>
    %180 = arith.truncf %179 : vector<128x512xf32> to vector<128x512xbf16>
    %c0_55 = arith.constant 0 : index
    %c0_56 = arith.constant 0 : index
    %181 = vector.load %arg16[%c0_55, %c0_56] : memref<512x128xbf16, #tpu.memory_space<vmem>>, vector<512x128xbf16>
    %cst_57 = arith.constant dense<0.000000e+00> : vector<128x128xf32>
    %182 = tpu.matmul %180, %181, %cst_57 {dimension_numbers = #tpu.dot_dimension_numbers<[1], [0], [0], [1], [0, 0, 1, 1], [], []>} : vector<128x512xbf16>, vector<512x128xbf16>, vector<128x128xf32> -> vector<128x128xf32>
    %c0_58 = arith.constant 0 : index
    %c0_59 = arith.constant 0 : index
    %183 = vector.load %arg17[%c0_58, %c0_59] : memref<1x128xf32, #tpu.memory_space<vmem>>, vector<1x128xf32>
    %184 = vector.broadcast %183 : vector<1x128xf32> to vector<128x128xf32>
    %185 = arith.addf %182, %184 : vector<128x128xf32>
    %186 = arith.addf %143, %185 : vector<128x128xf32>
    %187 = vector.shape_cast %186 : vector<128x128xf32> to vector<2x64x128xf32>
    %c0_60 = arith.constant 0 : index
    %c0_61 = arith.constant 0 : index
    %c0_62 = arith.constant 0 : index
    %188 = vector.load %arg18[%c0_60, %c0_61, %c0_62] : memref<2x64x128xf32, #tpu.memory_space<vmem>>, vector<2x64x128xf32>
    tpu.vector_store %arg18[%c0_60, %c0_61, %c0_62], %187 {strides = array<i32>} : memref<2x64x128xf32, #tpu.memory_space<vmem>>, vector<2x64x128xf32>,
    return
  }
  func.func @transform_0(%arg0: i32) -> (i32, i32, i32) {
    %c0_i32 = arith.constant 0 : i32
    %c0_i32_0 = arith.constant 0 : i32
    %c0_i32_1 = arith.constant 0 : i32
    return %arg0, %c0_i32, %c0_i32_0 : i32, i32, i32
  }
  func.func @transform_1(%arg0: i32) -> (i32, i32, i32) {
    %c0_i32 = arith.constant 0 : i32
    %c0_i32_0 = arith.constant 0 : i32
    %c0_i32_1 = arith.constant 0 : i32
    return %arg0, %c0_i32, %c0_i32_0 : i32, i32, i32
  }
  func.func @transform_2(%arg0: i32) -> (i32, i32, i32) {
    %c0_i32 = arith.constant 0 : i32
    %c0_i32_0 = arith.constant 0 : i32
    %c0_i32_1 = arith.constant 0 : i32
    return %arg0, %c0_i32, %c0_i32_0 : i32, i32, i32
  }
  func.func @transform_3(%arg0: i32) -> (i32, i32, i32) {
    %c0_i32 = arith.constant 0 : i32
    %c0_i32_0 = arith.constant 0 : i32
    %c0_i32_1 = arith.constant 0 : i32
    return %arg0, %c0_i32, %c0_i32_0 : i32, i32, i32
  }
  func.func @transform_4(%arg0: i32) -> (i32, i32) {
    %c0_i32 = arith.constant 0 : i32
    %c0_i32_0 = arith.constant 0 : i32
    %c0_i32_1 = arith.constant 0 : i32
    return %c0_i32, %c0_i32_0 : i32, i32
  }
  func.func @transform_5(%arg0: i32) -> (i32, i32) {
    %c0_i32 = arith.constant 0 : i32
    %c0_i32_0 = arith.constant 0 : i32
    %c0_i32_1 = arith.constant 0 : i32
    return %c0_i32, %c0_i32_0 : i32, i32
  }
  func.func @transform_6(%arg0: i32) -> (i32, i32) {
    %c0_i32 = arith.constant 0 : i32
    %c0_i32_0 = arith.constant 0 : i32
    %c0_i32_1 = arith.constant 0 : i32
    return %c0_i32, %c0_i32_0 : i32, i32
  }
  func.func @transform_7(%arg0: i32) -> (i32, i32) {
    %c0_i32 = arith.constant 0 : i32
    %c0_i32_0 = arith.constant 0 : i32
    %c0_i32_1 = arith.constant 0 : i32
    return %c0_i32, %c0_i32_0 : i32, i32
  }
  func.func @transform_8(%arg0: i32) -> (i32, i32) {
    %c0_i32 = arith.constant 0 : i32
    %c0_i32_0 = arith.constant 0 : i32
    %c0_i32_1 = arith.constant 0 : i32
    return %c0_i32, %c0_i32_0 : i32, i32
  }
  func.func @transform_9(%arg0: i32) -> (i32, i32) {
    %c0_i32 = arith.constant 0 : i32
    %c0_i32_0 = arith.constant 0 : i32
    %c0_i32_1 = arith.constant 0 : i32
    return %c0_i32, %c0_i32_0 : i32, i32
  }
  func.func @transform_10(%arg0: i32) -> (i32, i32) {
    %c0_i32 = arith.constant 0 : i32
    %c0_i32_0 = arith.constant 0 : i32
    %c0_i32_1 = arith.constant 0 : i32
    return %c0_i32, %c0_i32_0 : i32, i32
  }
  func.func @transform_11(%arg0: i32) -> (i32, i32) {
    %c0_i32 = arith.constant 0 : i32
    %c0_i32_0 = arith.constant 0 : i32
    %c0_i32_1 = arith.constant 0 : i32
    return %c0_i32, %c0_i32_0 : i32, i32
  }
  func.func @transform_12(%arg0: i32) -> (i32, i32) {
    %c0_i32 = arith.constant 0 : i32
    %c0_i32_0 = arith.constant 0 : i32
    %c0_i32_1 = arith.constant 0 : i32
    return %c0_i32, %c0_i32_0 : i32, i32
  }
  func.func @transform_13(%arg0: i32) -> (i32, i32) {
    %c0_i32 = arith.constant 0 : i32
    %c0_i32_0 = arith.constant 0 : i32
    %c0_i32_1 = arith.constant 0 : i32
    return %c0_i32, %c0_i32_0 : i32, i32
  }
  func.func @transform_14(%arg0: i32) -> (i32, i32) {
    %c0_i32 = arith.constant 0 : i32
    %c0_i32_0 = arith.constant 0 : i32
    %c0_i32_1 = arith.constant 0 : i32
    return %c0_i32, %c0_i32_0 : i32, i32
  }
  func.func @transform_15(%arg0: i32) -> (i32, i32) {
    %c0_i32 = arith.constant 0 : i32
    %c0_i32_0 = arith.constant 0 : i32
    %c0_i32_1 = arith.constant 0 : i32
    return %c0_i32, %c0_i32_0 : i32, i32
  }
  func.func @transform_16(%arg0: i32) -> (i32, i32) {
    %c0_i32 = arith.constant 0 : i32
    %c0_i32_0 = arith.constant 0 : i32
    %c0_i32_1 = arith.constant 0 : i32
    return %c0_i32, %c0_i32_0 : i32, i32
  }
  func.func @transform_17(%arg0: i32) -> (i32, i32, i32) {
    %c0_i32 = arith.constant 0 : i32
    %c0_i32_0 = arith.constant 0 : i32
    %c0_i32_1 = arith.constant 0 : i32
    return %arg0, %c0_i32, %c0_i32_0 : i32, i32, i32
  }
}

</mosaic_0001>

<llo_original>
// kernel: tpu_custom_call.1
$region0: #{tpu_custom_call.1}
  #allocation0 [shape = 'u32[]', space=smem, size = 0x4, offset = 0x4, fixed_abs, tag = 'smem constant byte address 0x4 - core index']
  #allocation1 [shape = 'u32[144,128]{1,0:T(1,128)}', space=vmem, size = 0x12000, scoped, tag = 'internal scratch']
  %s0 = inlined_call_operand.hbm [shape: f32[2,64,128], index: 0, kind: input, shape index: {}]
  %s1 = inlined_call_operand.hbm [shape: f32[2,128,128], index: 1, kind: input, shape index: {}]
  %s2 = inlined_call_operand.hbm [shape: f32[2,64,128], index: 2, kind: input, shape index: {}]
  %s3 = inlined_call_operand.hbm [shape: f32[2,128,128], index: 3, kind: input, shape index: {}]
  %s4 = inlined_call_operand.vmem [shape: f32[1,128], index: 4, kind: input, shape index: {}]
  %s5 = inlined_call_operand.vmem [shape: f32[1,128], index: 5, kind: input, shape index: {}]
  %s6 = inlined_call_operand.hbm [shape: bf16[128,128], index: 6, kind: input, shape index: {}]
  %s7 = inlined_call_operand.hbm [shape: bf16[128,128], index: 7, kind: input, shape index: {}]
  %s8 = inlined_call_operand.hbm [shape: bf16[128,128], index: 8, kind: input, shape index: {}]
  %s9 = inlined_call_operand.hbm [shape: bf16[128,128], index: 9, kind: input, shape index: {}]
  %s10 = inlined_call_operand.vmem [shape: f32[1,128], index: 10, kind: input, shape index: {}]
  %s11 = inlined_call_operand.vmem [shape: f32[1,128], index: 11, kind: input, shape index: {}]
  %s12 = inlined_call_operand.vmem [shape: f32[1,128], index: 12, kind: input, shape index: {}]
  %s13 = inlined_call_operand.hbm [shape: bf16[128,512], index: 13, kind: input, shape index: {}]
  %s14 = inlined_call_operand.vmem [shape: f32[1,512], index: 14, kind: input, shape index: {}]
  %s15 = inlined_call_operand.hbm [shape: bf16[512,128], index: 15, kind: input, shape index: {}]
  %s16 = inlined_call_operand.vmem [shape: f32[1,128], index: 16, kind: input, shape index: {}]
  %s17 = inlined_call_operand.hbm [shape: f32[2,64,128], index: 17, kind: output, shape index: {}]
  %s18 = sld [smem:[#allocation0]]
  $region118: #{tpu_custom_call.1} parent=0
    _
  %s20 = ssub.s32 1, %s18
  %s21 = scalar_select 0, %s20, %s18
  $region1: #{tpu_custom_call.1} parent=0
    #allocation2 [shape = 'u8[65536]{0}', space=vmem, size = 0x10000, scoped, tag = 'input window, operand 0, single buffered']
    #allocation3 [shape = 's32[1]{0}', space=sflag, size = 0x4, scoped, tag = 'scoped memory for tpu_custom_call.1']
    #allocation4 [shape = 's32[1]{0}', space=sflag, size = 0x4, scoped, tag = 'scoped memory for tpu_custom_call.1']
    #allocation5 [shape = 'u8[131072]{0}', space=vmem, size = 0x20000, scoped, tag = 'input window, operand 1, single buffered']
    #allocation6 [shape = 's32[1]{0}', space=sflag, size = 0x4, scoped, tag = 'scoped memory for tpu_custom_call.1']
    #allocation7 [shape = 'u8[65536]{0}', space=vmem, size = 0x10000, scoped, tag = 'input window, operand 2, single buffered']
    #allocation8 [shape = 'u8[131072]{0}', space=vmem, size = 0x20000, scoped, tag = 'input window, operand 3, single buffered']
    #allocation9 [shape = 's32[1]{0}', space=sflag, size = 0x4, scoped, tag = 'scoped memory for tpu_custom_call.1']
    #allocation10 [shape = 'u8[32768]{0}', space=vmem, size = 0x8000, scoped, tag = 'input window, operand 6, single buffered']
    #allocation11 [shape = 'u8[32768]{0}', space=vmem, size = 0x8000, scoped, tag = 'input window, operand 7, single buffered']
    #allocation12 [shape = 's32[1]{0}', space=sflag, size = 0x4, scoped, tag = 'scoped memory for tpu_custom_call.1']
    #allocation13 [shape = 'u8[32768]{0}', space=vmem, size = 0x8000, scoped, tag = 'input window, operand 8, single buffered']
    #allocation14 [shape = 'u8[32768]{0}', space=vmem, size = 0x8000, scoped, tag = 'input window, operand 9, single buffered']
    #allocation15 [shape = 's32[1]{0}', space=sflag, size = 0x4, scoped, tag = 'scoped memory for tpu_custom_call.1']
    #allocation16 [shape = 'u8[131072]{0}', space=vmem, size = 0x20000, scoped, tag = 'input window, operand 13, single buffered']
    #allocation17 [shape = 'u8[131072]{0}', space=vmem, size = 0x20000, scoped, tag = 'input window, operand 15, single buffered']
    #allocation18 [shape = 's32[1]{0}', space=sflag, size = 0x4, scoped, tag = 'scoped memory for tpu_custom_call.1']
    #allocation19 [shape = 'u8[65536]{0}', space=vmem, size = 0x10000, scoped, tag = 'output window, operand 0, single buffered']
    %22 = vsyncpa [#allocation3], 0
    %23 = vsyncpa [#allocation6], 0
    %24 = vsyncpa [#allocation9], 0
    %25 = vsyncpa [#allocation12], 0
    %26 = vsyncpa [#allocation15], 0
    %27 = vsyncpa [#allocation18], 0
    %28 = vsyncpa [#allocation4], 0
    // Predicated region
    $region2: #{tpu_custom_call.1} parent=1 // pred_check
      _
    $region3: #{tpu_custom_call.1} parent=1 // pred_check_branch
      %30 = sbr.rel (0) target = $region5
    $region4: #{tpu_custom_call.1} parent=1 // pred_region
      %s32 = ssub.s32 2048, 2048
      %33 = vsyncadd [#allocation3], %s32
      %s34 = sshll.u32 [#allocation2], 4
      %s35 = int_to_ptr.vmem [resolvable:$true] %s34
      %40 = dma.hbm_to_vmem [thread:$0]  %s0, 2048, %s35, [#allocation3], 128, 128, 8
    $region5: #{tpu_custom_call.1} parent=1 // pred_fallthru
      _
    // Predicated region
    $region6: #{tpu_custom_call.1} parent=1 // pred_check
      _
    $region7: #{tpu_custom_call.1} parent=1 // pred_check_branch
      %42 = sbr.rel (0) target = $region9
    $region8: #{tpu_custom_call.1} parent=1 // pred_region
      %s44 = ssub.s32 4096, 4096
      %45 = vsyncadd [#allocation6], %s44
      %s46 = sshll.u32 [#allocation5], 4
      %s47 = int_to_ptr.vmem [resolvable:$true] %s46
      %52 = dma.hbm_to_vmem [thread:$0]  %s1, 4096, %s47, [#allocation6], 128, 128, 8
    $region9: #{tpu_custom_call.1} parent=1 // pred_fallthru
      _
    // Predicated region
    $region10: #{tpu_custom_call.1} parent=1 // pred_check
      _
    $region11: #{tpu_custom_call.1} parent=1 // pred_check_branch
      %54 = sbr.rel (0) target = $region13
    $region12: #{tpu_custom_call.1} parent=1 // pred_region
      %s56 = ssub.s32 2048, 2048
      %57 = vsyncadd [#allocation6], %s56
      %s58 = sshll.u32 [#allocation7], 4
      %s59 = int_to_ptr.vmem [resolvable:$true] %s58
      %64 = dma.hbm_to_vmem [thread:$0]  %s2, 2048, %s59, [#allocation6], 128, 128, 8
    $region13: #{tpu_custom_call.1} parent=1 // pred_fallthru
      _
    // Predicated region
    $region14: #{tpu_custom_call.1} parent=1 // pred_check
      _
    $region15: #{tpu_custom_call.1} parent=1 // pred_check_branch
      %66 = sbr.rel (0) target = $region17
    $region16: #{tpu_custom_call.1} parent=1 // pred_region
      %s68 = ssub.s32 4096, 4096
      %69 = vsyncadd [#allocation9], %s68
      %s70 = sshll.u32 [#allocation8], 4
      %s71 = int_to_ptr.vmem [resolvable:$true] %s70
      %76 = dma.hbm_to_vmem [thread:$0]  %s3, 4096, %s71, [#allocation9], 128, 128, 8
    $region17: #{tpu_custom_call.1} parent=1 // pred_fallthru
      _
    // Predicated region
    $region18: #{tpu_custom_call.1} parent=1 // pred_check
      _
    $region19: #{tpu_custom_call.1} parent=1 // pred_check_branch
      %78 = sbr.rel (0) target = $region21
    $region20: #{tpu_custom_call.1} parent=1 // pred_region
      _
    $region21: #{tpu_custom_call.1} parent=1 // pred_fallthru
      _
    // Predicated region
    $region22: #{tpu_custom_call.1} parent=1 // pred_check
      _
    $region23: #{tpu_custom_call.1} parent=1 // pred_check_branch
      %80 = sbr.rel (0) target = $region25
    $region24: #{tpu_custom_call.1} parent=1 // pred_region
      _
    $region25: #{tpu_custom_call.1} parent=1 // pred_fallthru
      _
    // Predicated region
    $region26: #{tpu_custom_call.1} parent=1 // pred_check
      _
    $region27: #{tpu_custom_call.1} parent=1 // pred_check_branch
      %82 = sbr.rel (0) target = $region29
    $region28: #{tpu_custom_call.1} parent=1 // pred_region
      %s84 = ssub.s32 1024, 1024
      %85 = vsyncadd [#allocation9], %s84
      %s86 = sshll.u32 [#allocation10], 4
      %s87 = int_to_ptr.vmem [resolvable:$true] %s86
      %92 = dma.hbm_to_vmem [thread:$0]  %s6, 1024, %s87, [#allocation9], 64, 64, 4
    $region29: #{tpu_custom_call.1} parent=1 // pred_fallthru
      _
    // Predicated region
    $region30: #{tpu_custom_call.1} parent=1 // pred_check
      _
    $region31: #{tpu_custom_call.1} parent=1 // pred_check_branch
      %94 = sbr.rel (0) target = $region33
    $region32: #{tpu_custom_call.1} parent=1 // pred_region
      %s96 = ssub.s32 1024, 1024
      %97 = vsyncadd [#allocation12], %s96
      %s98 = sshll.u32 [#allocation11], 4
      %s99 = int_to_ptr.vmem [resolvable:$true] %s98
      %104 = dma.hbm_to_vmem [thread:$0]  %s7, 1024, %s99, [#allocation12], 64, 64, 4
    $region33: #{tpu_custom_call.1} parent=1 // pred_fallthru
      _
    // Predicated region
    $region34: #{tpu_custom_call.1} parent=1 // pred_check
      _
    $region35: #{tpu_custom_call.1} parent=1 // pred_check_branch
      %106 = sbr.rel (0) target = $region37
    $region36: #{tpu_custom_call.1} parent=1 // pred_region
      %s108 = ssub.s32 1024, 1024
      %109 = vsyncadd [#allocation12], %s108
      %s110 = sshll.u32 [#allocation13], 4
      %s111 = int_to_ptr.vmem [resolvable:$true] %s110
      %116 = dma.hbm_to_vmem [thread:$0]  %s8, 1024, %s111, [#allocation12], 64, 64, 4
    $region37: #{tpu_custom_call.1} parent=1 // pred_fallthru
      _
    // Predicated region
    $region38: #{tpu_custom_call.1} parent=1 // pred_check
      _
    $region39: #{tpu_custom_call.1} parent=1 // pred_check_branch
      %118 = sbr.rel (0) target = $region41
    $region40: #{tpu_custom_call.1} parent=1 // pred_region
      %s120 = ssub.s32 1024, 1024
      %121 = vsyncadd [#allocation15], %s120
      %s122 = sshll.u32 [#allocation14], 4
      %s123 = int_to_ptr.vmem [resolvable:$true] %s122
      %128 = dma.hbm_to_vmem [thread:$0]  %s9, 1024, %s123, [#allocation15], 64, 64, 4
    $region41: #{tpu_custom_call.1} parent=1 // pred_fallthru
      _
    // Predicated region
    $region42: #{tpu_custom_call.1} parent=1 // pred_check
      _
    $region43: #{tpu_custom_call.1} parent=1 // pred_check_branch
      %130 = sbr.rel (0) target = $region45
    $region44: #{tpu_custom_call.1} parent=1 // pred_region
      _
    $region45: #{tpu_custom_call.1} parent=1 // pred_fallthru
      _
    // Predicated region
    $region46: #{tpu_custom_call.1} parent=1 // pred_check
      _
    $region47: #{tpu_custom_call.1} parent=1 // pred_check_branch
      %132 = sbr.rel (0) target = $region49
    $region48: #{tpu_custom_call.1} parent=1 // pred_region
      _
    $region49: #{tpu_custom_call.1} parent=1 // pred_fallthru
      _
    // Predicated region
    $region50: #{tpu_custom_call.1} parent=1 // pred_check
      _
    $region51: #{tpu_custom_call.1} parent=1 // pred_check_branch
      %134 = sbr.rel (0) target = $region53
    $region52: #{tpu_custom_call.1} parent=1 // pred_region
      _
    $region53: #{tpu_custom_call.1} parent=1 // pred_fallthru
      _
    // Predicated region
    $region54: #{tpu_custom_call.1} parent=1 // pred_check
      _
    $region55: #{tpu_custom_call.1} parent=1 // pred_check_branch
      %136 = sbr.rel (0) target = $region57
    $region56: #{tpu_custom_call.1} parent=1 // pred_region
      %s138 = ssub.s32 4096, 4096
      %139 = vsyncadd [#allocation15], %s138
      %s140 = sshll.u32 [#allocation16], 4
      %s141 = int_to_ptr.vmem [resolvable:$true] %s140
      %146 = dma.hbm_to_vmem [thread:$0]  %s13, 4096, %s141, [#allocation15], 256, 256, 16
    $region57: #{tpu_custom_call.1} parent=1 // pred_fallthru
      _
    // Predicated region
    $region58: #{tpu_custom_call.1} parent=1 // pred_check
      _
    $region59: #{tpu_custom_call.1} parent=1 // pred_check_branch
      %148 = sbr.rel (0) target = $region61
    $region60: #{tpu_custom_call.1} parent=1 // pred_region
      _
    $region61: #{tpu_custom_call.1} parent=1 // pred_fallthru
      _
    // Predicated region
    $region62: #{tpu_custom_call.1} parent=1 // pred_check
      _
    $region63: #{tpu_custom_call.1} parent=1 // pred_check_branch
      %150 = sbr.rel (0) target = $region65
    $region64: #{tpu_custom_call.1} parent=1 // pred_region
      %s152 = ssub.s32 4096, 4096
      %153 = vsyncadd [#allocation18], %s152
      %s154 = sshll.u32 [#allocation17], 4
      %s155 = int_to_ptr.vmem [resolvable:$true] %s154
      %160 = dma.hbm_to_vmem [thread:$0]  %s15, 4096, %s155, [#allocation18], 64, 64, 4
    $region65: #{tpu_custom_call.1} parent=1 // pred_fallthru
      _
    // Predicated region
    $region66: #{tpu_custom_call.1} parent=1 // pred_check
      _
    $region67: #{tpu_custom_call.1} parent=1 // pred_check_branch
      %162 = sbr.rel (0) target = $region69
    $region68: #{tpu_custom_call.1} parent=1 // pred_region
      _
    $region69: #{tpu_custom_call.1} parent=1 // pred_fallthru
      _
    // Predicated region
    $region70: #{tpu_custom_call.1} parent=1 // pred_check
      _
    $region71: #{tpu_custom_call.1} parent=1 // pred_check_branch
      %164 = sbr.rel (0) target = $region73
    $region72: #{tpu_custom_call.1} parent=1 // pred_region
      %165 = dma.done [#allocation3], 2048
    $region73: #{tpu_custom_call.1} parent=1 // pred_fallthru
      _
    // Predicated region
    $region74: #{tpu_custom_call.1} parent=1 // pred_check
      _
    $region75: #{tpu_custom_call.1} parent=1 // pred_check_branch
      %167 = sbr.rel (0) target = $region77
    $region76: #{tpu_custom_call.1} parent=1 // pred_region
      %168 = dma.done [#allocation6], 4096
    $region77: #{tpu_custom_call.1} parent=1 // pred_fallthru
      _
    // Predicated region
    $region78: #{tpu_custom_call.1} parent=1 // pred_check
      _
    $region79: #{tpu_custom_call.1} parent=1 // pred_check_branch
      %170 = sbr.rel (0) target = $region81
    $region80: #{tpu_custom_call.1} parent=1 // pred_region
      %171 = dma.done [#allocation6], 2048
    $region81: #{tpu_custom_call.1} parent=1 // pred_fallthru
      _
    // Predicated region
    $region82: #{tpu_custom_call.1} parent=1 // pred_check
      _
    $region83: #{tpu_custom_call.1} parent=1 // pred_check_branch
      %173 = sbr.rel (0) target = $region85
    $region84: #{tpu_custom_call.1} parent=1 // pred_region
      %174 = dma.done [#allocation9], 4096
    $region85: #{tpu_custom_call.1} parent=1 // pred_fallthru
      _
    // Predicated region
    $region86: #{tpu_custom_call.1} parent=1 // pred_check
      _
    $region87: #{tpu_custom_call.1} parent=1 // pred_check_branch
      %176 = sbr.rel (0) target = $region89
    $region88: #{tpu_custom_call.1} parent=1 // pred_region
      %177 = dma.done [#allocation9], 1024
    $region89: #{tpu_custom_call.1} parent=1 // pred_fallthru
      _
    // Predicated region
    $region90: #{tpu_custom_call.1} parent=1 // pred_check
      _
    $region91: #{tpu_custom_call.1} parent=1 // pred_check_branch
      %179 = sbr.rel (0) target = $region93
    $region92: #{tpu_custom_call.1} parent=1 // pred_region
      %180 = dma.done [#allocation12], 1024
    $region93: #{tpu_custom_call.1} parent=1 // pred_fallthru
      _
    // Predicated region
    $region94: #{tpu_custom_call.1} parent=1 // pred_check
      _
    $region95: #{tpu_custom_call.1} parent=1 // pred_check_branch
      %182 = sbr.rel (0) target = $region97
    $region96: #{tpu_custom_call.1} parent=1 // pred_region
      %183 = dma.done [#allocation12], 1024
    $region97: #{tpu_custom_call.1} parent=1 // pred_fallthru
      _
    // Predicated region
    $region98: #{tpu_custom_call.1} parent=1 // pred_check
      _
    $region99: #{tpu_custom_call.1} parent=1 // pred_check_branch
      %185 = sbr.rel (0) target = $region101
    $region100: #{tpu_custom_call.1} parent=1 // pred_region
      %186 = dma.done [#allocation15], 1024
    $region101: #{tpu_custom_call.1} parent=1 // pred_fallthru
      _
    // Predicated region
    $region102: #{tpu_custom_call.1} parent=1 // pred_check
      _
    $region103: #{tpu_custom_call.1} parent=1 // pred_check_branch
      %188 = sbr.rel (0) target = $region105
    $region104: #{tpu_custom_call.1} parent=1 // pred_region
      %189 = dma.done [#allocation15], 4096
    $region105: #{tpu_custom_call.1} parent=1 // pred_fallthru
      _
    // Predicated region
    $region106: #{tpu_custom_call.1} parent=1 // pred_check
      _
    $region107: #{tpu_custom_call.1} parent=1 // pred_check_branch
      %191 = sbr.rel (0) target = $region109
    $region108: #{tpu_custom_call.1} parent=1 // pred_region
      %192 = dma.done [#allocation18], 4096
    $region109: #{tpu_custom_call.1} parent=1 // pred_fallthru
      _
    %v194 = vld [vmem:[#allocation5] sm:$0xff]
    %v195 = vld [vmem:[#allocation5 + $0x8] sm:$0xff]
    %v196 = vld [vmem:[#allocation5 + $0x10] sm:$0xff]
    %v197 = vld [vmem:[#allocation5 + $0x18] sm:$0xff]
    %v198 = vld [vmem:[#allocation5 + $0x20] sm:$0xff]
    %v199 = vld [vmem:[#allocation5 + $0x28] sm:$0xff]
    %v200 = vld [vmem:[#allocation5 + $0x30] sm:$0xff]
    %v201 = vld [vmem:[#allocation5 + $0x38] sm:$0xff]
    %v202 = vld [vmem:[#allocation5 + $0x40] sm:$0xff]
    %v203 = vld [vmem:[#allocation5 + $0x48] sm:$0xff]
    %v204 = vld [vmem:[#allocation5 + $0x50] sm:$0xff]
    %v205 = vld [vmem:[#allocation5 + $0x58] sm:$0xff]
    %v206 = vld [vmem:[#allocation5 + $0x60] sm:$0xff]
    %v207 = vld [vmem:[#allocation5 + $0x68] sm:$0xff]
    %v208 = vld [vmem:[#allocation5 + $0x70] sm:$0xff]
    %v209 = vld [vmem:[#allocation5 + $0x78] sm:$0xff]
    %v210 = vld [vmem:[#allocation5 + $0x80] sm:$0xff]
    %v211 = vld [vmem:[#allocation5 + $0x88] sm:$0xff]
    %v212 = vld [vmem:[#allocation5 + $0x90] sm:$0xff]
    %v213 = vld [vmem:[#allocation5 + $0x98] sm:$0xff]
    %v214 = vld [vmem:[#allocation5 + $0xa0] sm:$0xff]
    %v215 = vld [vmem:[#allocation5 + $0xa8] sm:$0xff]
    %v216 = vld [vmem:[#allocation5 + $0xb0] sm:$0xff]
    %v217 = vld [vmem:[#allocation5 + $0xb8] sm:$0xff]
    %v218 = vld [vmem:[#allocation5 + $0xc0] sm:$0xff]
    %v219 = vld [vmem:[#allocation5 + $0xc8] sm:$0xff]
    %v220 = vld [vmem:[#allocation5 + $0xd0] sm:$0xff]
    %v221 = vld [vmem:[#allocation5 + $0xd8] sm:$0xff]
    %v222 = vld [vmem:[#allocation5 + $0xe0] sm:$0xff]
    %v223 = vld [vmem:[#allocation5 + $0xe8] sm:$0xff]
    %v224 = vld [vmem:[#allocation5 + $0xf0] sm:$0xff]
    %v225 = vld [vmem:[#allocation5 + $0xf8] sm:$0xff]
    %v226 = vld [vmem:[%s4] sm:$0x1]
    %v227 = vld [vmem:[%s5] sm:$0x1]
    %228 = vadd.xlane.f32.xlu0 %v194
    %v229 = vpop.xlane.xlu0 %228
    %230 = vadd.xlane.f32.xlu0 %v195
    %v231 = vpop.xlane.xlu0 %230
    %232 = vadd.xlane.f32.xlu0 %v196
    %v233 = vpop.xlane.xlu0 %232
    %234 = vadd.xlane.f32.xlu0 %v197
    %v235 = vpop.xlane.xlu0 %234
    %236 = vadd.xlane.f32.xlu0 %v198
    %v237 = vpop.xlane.xlu0 %236
    %238 = vadd.xlane.f32.xlu0 %v199
    %v239 = vpop.xlane.xlu0 %238
    %240 = vadd.xlane.f32.xlu0 %v200
    %v241 = vpop.xlane.xlu0 %240
    %242 = vadd.xlane.f32.xlu0 %v201
    %v243 = vpop.xlane.xlu0 %242
    %244 = vadd.xlane.f32.xlu0 %v202
    %v245 = vpop.xlane.xlu0 %244
    %246 = vadd.xlane.f32.xlu0 %v203
    %v247 = vpop.xlane.xlu0 %246
    %248 = vadd.xlane.f32.xlu0 %v204
    %v249 = vpop.xlane.xlu0 %248
    %250 = vadd.xlane.f32.xlu0 %v205
    %v251 = vpop.xlane.xlu0 %250
    %252 = vadd.xlane.f32.xlu0 %v206
    %v253 = vpop.xlane.xlu0 %252
    %254 = vadd.xlane.f32.xlu0 %v207
    %v255 = vpop.xlane.xlu0 %254
    %256 = vadd.xlane.f32.xlu0 %v208
    %v257 = vpop.xlane.xlu0 %256
    %258 = vadd.xlane.f32.xlu0 %v209
    %v259 = vpop.xlane.xlu0 %258
    %260 = vadd.xlane.f32.xlu0 %v210
    %v261 = vpop.xlane.xlu0 %260
    %262 = vadd.xlane.f32.xlu0 %v211
    %v263 = vpop.xlane.xlu0 %262
    %264 = vadd.xlane.f32.xlu0 %v212
    %v265 = vpop.xlane.xlu0 %264
    %266 = vadd.xlane.f32.xlu0 %v213
    %v267 = vpop.xlane.xlu0 %266
    %268 = vadd.xlane.f32.xlu0 %v214
    %v269 = vpop.xlane.xlu0 %268
    %270 = vadd.xlane.f32.xlu0 %v215
    %v271 = vpop.xlane.xlu0 %270
    %272 = vadd.xlane.f32.xlu0 %v216
    %v273 = vpop.xlane.xlu0 %272
    %274 = vadd.xlane.f32.xlu0 %v217
    %v275 = vpop.xlane.xlu0 %274
    %276 = vadd.xlane.f32.xlu0 %v218
    %v277 = vpop.xlane.xlu0 %276
    %278 = vadd.xlane.f32.xlu0 %v219
    %v279 = vpop.xlane.xlu0 %278
    %280 = vadd.xlane.f32.xlu0 %v220
    %v281 = vpop.xlane.xlu0 %280
    %282 = vadd.xlane.f32.xlu0 %v221
    %v283 = vpop.xlane.xlu0 %282
    %284 = vadd.xlane.f32.xlu0 %v222
    %v285 = vpop.xlane.xlu0 %284
    %286 = vadd.xlane.f32.xlu0 %v223
    %v287 = vpop.xlane.xlu0 %286
    %288 = vadd.xlane.f32.xlu0 %v224
    %v289 = vpop.xlane.xlu0 %288
    %290 = vadd.xlane.f32.xlu0 %v225
    %v291 = vpop.xlane.xlu0 %290
    %v292 = vrcp.pop 128.0
    %v293 = vmul.f32 %v229, %v292
    %v294 = vmul.f32 %v231, %v292
    %v295 = vmul.f32 %v233, %v292
    %v296 = vmul.f32 %v235, %v292
    %v297 = vmul.f32 %v237, %v292
    %v298 = vmul.f32 %v239, %v292
    %v299 = vmul.f32 %v241, %v292
    %v300 = vmul.f32 %v243, %v292
    %v301 = vmul.f32 %v245, %v292
    %v302 = vmul.f32 %v247, %v292
    %v303 = vmul.f32 %v249, %v292
    %v304 = vmul.f32 %v251, %v292
    %v305 = vmul.f32 %v253, %v292
    %v306 = vmul.f32 %v255, %v292
    %v307 = vmul.f32 %v257, %v292
    %v308 = vmul.f32 %v259, %v292
    %v309 = vmul.f32 %v261, %v292
    %v310 = vmul.f32 %v263, %v292
    %v311 = vmul.f32 %v265, %v292
    %v312 = vmul.f32 %v267, %v292
    %v313 = vmul.f32 %v269, %v292
    %v314 = vmul.f32 %v271, %v292
    %v315 = vmul.f32 %v273, %v292
    %v316 = vmul.f32 %v275, %v292
    %v317 = vmul.f32 %v277, %v292
    %v318 = vmul.f32 %v279, %v292
    %v319 = vmul.f32 %v281, %v292
    %v320 = vmul.f32 %v283, %v292
    %v321 = vmul.f32 %v285, %v292
    %v322 = vmul.f32 %v287, %v292
    %v323 = vmul.f32 %v289, %v292
    %v324 = vmul.f32 %v291, %v292
    %v325 = vsub.f32 %v194, %v293
    %v326 = vsub.f32 %v195, %v294
    %v327 = vsub.f32 %v196, %v295
    %v328 = vsub.f32 %v197, %v296
    %v329 = vsub.f32 %v198, %v297
    %v330 = vsub.f32 %v199, %v298
    %v331 = vsub.f32 %v200, %v299
    %v332 = vsub.f32 %v201, %v300
    %v333 = vsub.f32 %v202, %v301
    %v334 = vsub.f32 %v203, %v302
    %v335 = vsub.f32 %v204, %v303
    %v336 = vsub.f32 %v205, %v304
    %v337 = vsub.f32 %v206, %v305
    %v338 = vsub.f32 %v207, %v306
    %v339 = vsub.f32 %v208, %v307
    %v340 = vsub.f32 %v209, %v308
    %v341 = vsub.f32 %v210, %v309
    %v342 = vsub.f32 %v211, %v310
    %v343 = vsub.f32 %v212, %v311
    %v344 = vsub.f32 %v213, %v312
    %v345 = vsub.f32 %v214, %v313
    %v346 = vsub.f32 %v215, %v314
    %v347 = vsub.f32 %v216, %v315
    %v348 = vsub.f32 %v217, %v316
    %v349 = vsub.f32 %v218, %v317
    %v350 = vsub.f32 %v219, %v318
    %v351 = vsub.f32 %v220, %v319
    %v352 = vsub.f32 %v221, %v320
    %v353 = vsub.f32 %v222, %v321
    %v354 = vsub.f32 %v223, %v322
    %v355 = vsub.f32 %v224, %v323
    %v356 = vsub.f32 %v225, %v324
    %v357 = vmul.f32 %v325, %v325
    %v358 = vmul.f32 %v326, %v326
    %v359 = vmul.f32 %v327, %v327
    %v360 = vmul.f32 %v328, %v328
    %v361 = vmul.f32 %v329, %v329
    %v362 = vmul.f32 %v330, %v330
    %v363 = vmul.f32 %v331, %v331
    %v364 = vmul.f32 %v332, %v332
    %v365 = vmul.f32 %v333, %v333
    %v366 = vmul.f32 %v334, %v334
    %v367 = vmul.f32 %v335, %v335
    %v368 = vmul.f32 %v336, %v336
    %v369 = vmul.f32 %v337, %v337
    %v370 = vmul.f32 %v338, %v338
    %v371 = vmul.f32 %v339, %v339
    %v372 = vmul.f32 %v340, %v340
    %v373 = vmul.f32 %v341, %v341
    %v374 = vmul.f32 %v342, %v342
    %v375 = vmul.f32 %v343, %v343
    %v376 = vmul.f32 %v344, %v344
    %v377 = vmul.f32 %v345, %v345
    %v378 = vmul.f32 %v346, %v346
    %v379 = vmul.f32 %v347, %v347
    %v380 = vmul.f32 %v348, %v348
    %v381 = vmul.f32 %v349, %v349
    %v382 = vmul.f32 %v350, %v350
    %v383 = vmul.f32 %v351, %v351
    %v384 = vmul.f32 %v352, %v352
    %v385 = vmul.f32 %v353, %v353
    %v386 = vmul.f32 %v354, %v354
    %v387 = vmul.f32 %v355, %v355
    %v388 = vmul.f32 %v356, %v356
    %389 = vadd.xlane.f32.xlu0 %v357
    %v390 = vpop.xlane.xlu0 %389
    %391 = vadd.xlane.f32.xlu0 %v358
    %v392 = vpop.xlane.xlu0 %391
    %393 = vadd.xlane.f32.xlu0 %v359
    %v394 = vpop.xlane.xlu0 %393
    %395 = vadd.xlane.f32.xlu0 %v360
    %v396 = vpop.xlane.xlu0 %395
    %397 = vadd.xlane.f32.xlu0 %v361
    %v398 = vpop.xlane.xlu0 %397
    %399 = vadd.xlane.f32.xlu0 %v362
    %v400 = vpop.xlane.xlu0 %399
    %401 = vadd.xlane.f32.xlu0 %v363
    %v402 = vpop.xlane.xlu0 %401
    %403 = vadd.xlane.f32.xlu0 %v364
    %v404 = vpop.xlane.xlu0 %403
    %405 = vadd.xlane.f32.xlu0 %v365
    %v406 = vpop.xlane.xlu0 %405
    %407 = vadd.xlane.f32.xlu0 %v366
    %v408 = vpop.xlane.xlu0 %407
    %409 = vadd.xlane.f32.xlu0 %v367
    %v410 = vpop.xlane.xlu0 %409
    %411 = vadd.xlane.f32.xlu0 %v368
    %v412 = vpop.xlane.xlu0 %411
    %413 = vadd.xlane.f32.xlu0 %v369
    %v414 = vpop.xlane.xlu0 %413
    %415 = vadd.xlane.f32.xlu0 %v370
    %v416 = vpop.xlane.xlu0 %415
    %417 = vadd.xlane.f32.xlu0 %v371
    %v418 = vpop.xlane.xlu0 %417
    %419 = vadd.xlane.f32.xlu0 %v372
    %v420 = vpop.xlane.xlu0 %419
    %421 = vadd.xlane.f32.xlu0 %v373
    %v422 = vpop.xlane.xlu0 %421
    %423 = vadd.xlane.f32.xlu0 %v374
    %v424 = vpop.xlane.xlu0 %423
    %425 = vadd.xlane.f32.xlu0 %v375
    %v426 = vpop.xlane.xlu0 %425
    %427 = vadd.xlane.f32.xlu0 %v376
    %v428 = vpop.xlane.xlu0 %427
    %429 = vadd.xlane.f32.xlu0 %v377
    %v430 = vpop.xlane.xlu0 %429
    %431 = vadd.xlane.f32.xlu0 %v378
    %v432 = vpop.xlane.xlu0 %431
    %433 = vadd.xlane.f32.xlu0 %v379
    %v434 = vpop.xlane.xlu0 %433
    %435 = vadd.xlane.f32.xlu0 %v380
    %v436 = vpop.xlane.xlu0 %435
    %437 = vadd.xlane.f32.xlu0 %v381
    %v438 = vpop.xlane.xlu0 %437
    %439 = vadd.xlane.f32.xlu0 %v382
    %v440 = vpop.xlane.xlu0 %439
    %441 = vadd.xlane.f32.xlu0 %v383
    %v442 = vpop.xlane.xlu0 %441
    %443 = vadd.xlane.f32.xlu0 %v384
    %v444 = vpop.xlane.xlu0 %443
    %445 = vadd.xlane.f32.xlu0 %v385
    %v446 = vpop.xlane.xlu0 %445
    %447 = vadd.xlane.f32.xlu0 %v386
    %v448 = vpop.xlane.xlu0 %447
    %449 = vadd.xlane.f32.xlu0 %v387
    %v450 = vpop.xlane.xlu0 %449
    %451 = vadd.xlane.f32.xlu0 %v388
    %v452 = vpop.xlane.xlu0 %451
    %v453 = vmul.f32 %v390, %v292
    %v454 = vmul.f32 %v392, %v292
    %v455 = vmul.f32 %v394, %v292
    %v456 = vmul.f32 %v396, %v292
    %v457 = vmul.f32 %v398, %v292
    %v458 = vmul.f32 %v400, %v292
    %v459 = vmul.f32 %v402, %v292
    %v460 = vmul.f32 %v404, %v292
    %v461 = vmul.f32 %v406, %v292
    %v462 = vmul.f32 %v408, %v292
    %v463 = vmul.f32 %v410, %v292
    %v464 = vmul.f32 %v412, %v292
    %v465 = vmul.f32 %v414, %v292
    %v466 = vmul.f32 %v416, %v292
    %v467 = vmul.f32 %v418, %v292
    %v468 = vmul.f32 %v420, %v292
    %v469 = vmul.f32 %v422, %v292
    %v470 = vmul.f32 %v424, %v292
    %v471 = vmul.f32 %v426, %v292
    %v472 = vmul.f32 %v428, %v292
    %v473 = vmul.f32 %v430, %v292
    %v474 = vmul.f32 %v432, %v292
    %v475 = vmul.f32 %v434, %v292
    %v476 = vmul.f32 %v436, %v292
    %v477 = vmul.f32 %v438, %v292
    %v478 = vmul.f32 %v440, %v292
    %v479 = vmul.f32 %v442, %v292
    %v480 = vmul.f32 %v444, %v292
    %v481 = vmul.f32 %v446, %v292
    %v482 = vmul.f32 %v448, %v292
    %v483 = vmul.f32 %v450, %v292
    %v484 = vmul.f32 %v452, %v292
    %v485 = vadd.f32 %v453, 1e-05
    %v486 = vadd.f32 %v454, 1e-05
    %v487 = vadd.f32 %v455, 1e-05
    %v488 = vadd.f32 %v456, 1e-05
    %v489 = vadd.f32 %v457, 1e-05
    %v490 = vadd.f32 %v458, 1e-05
    %v491 = vadd.f32 %v459, 1e-05
    %v492 = vadd.f32 %v460, 1e-05
    %v493 = vadd.f32 %v461, 1e-05
    %v494 = vadd.f32 %v462, 1e-05
    %v495 = vadd.f32 %v463, 1e-05
    %v496 = vadd.f32 %v464, 1e-05
    %v497 = vadd.f32 %v465, 1e-05
    %v498 = vadd.f32 %v466, 1e-05
    %v499 = vadd.f32 %v467, 1e-05
    %v500 = vadd.f32 %v468, 1e-05
    %v501 = vadd.f32 %v469, 1e-05
    %v502 = vadd.f32 %v470, 1e-05
    %v503 = vadd.f32 %v471, 1e-05
    %v504 = vadd.f32 %v472, 1e-05
    %v505 = vadd.f32 %v473, 1e-05
    %v506 = vadd.f32 %v474, 1e-05
    %v507 = vadd.f32 %v475, 1e-05
    %v508 = vadd.f32 %v476, 1e-05
    %v509 = vadd.f32 %v477, 1e-05
    %v510 = vadd.f32 %v478, 1e-05
    %v511 = vadd.f32 %v479, 1e-05
    %v512 = vadd.f32 %v480, 1e-05
    %v513 = vadd.f32 %v481, 1e-05
    %v514 = vadd.f32 %v482, 1e-05
    %v515 = vadd.f32 %v483, 1e-05
    %v516 = vadd.f32 %v484, 1e-05
    %v517 = vrsqrt.pop %v485
    %v518 = vrsqrt.pop %v486
    %v519 = vrsqrt.pop %v487
    %v520 = vrsqrt.pop %v488
    %v521 = vrsqrt.pop %v489
    %v522 = vrsqrt.pop %v490
    %v523 = vrsqrt.pop %v491
    %v524 = vrsqrt.pop %v492
    %v525 = vrsqrt.pop %v493
    %v526 = vrsqrt.pop %v494
    %v527 = vrsqrt.pop %v495
    %v528 = vrsqrt.pop %v496
    %v529 = vrsqrt.pop %v497
    %v530 = vrsqrt.pop %v498
    %v531 = vrsqrt.pop %v499
    %v532 = vrsqrt.pop %v500
    %v533 = vrsqrt.pop %v501
    %v534 = vrsqrt.pop %v502
    %v535 = vrsqrt.pop %v503
    %v536 = vrsqrt.pop %v504
    %v537 = vrsqrt.pop %v505
    %v538 = vrsqrt.pop %v506
    %v539 = vrsqrt.pop %v507
    %v540 = vrsqrt.pop %v508
    %v541 = vrsqrt.pop %v509
    %v542 = vrsqrt.pop %v510
    %v543 = vrsqrt.pop %v511
    %v544 = vrsqrt.pop %v512
    %v545 = vrsqrt.pop %v513
    %v546 = vrsqrt.pop %v514
    %v547 = vrsqrt.pop %v515
    %v548 = vrsqrt.pop %v516
    %v549 = vmul.f32 %v325, %v517
    %v550 = vmul.f32 %v326, %v518
    %v551 = vmul.f32 %v327, %v519
    %v552 = vmul.f32 %v328, %v520
    %v553 = vmul.f32 %v329, %v521
    %v554 = vmul.f32 %v330, %v522
    %v555 = vmul.f32 %v331, %v523
    %v556 = vmul.f32 %v332, %v524
    %v557 = vmul.f32 %v333, %v525
    %v558 = vmul.f32 %v334, %v526
    %v559 = vmul.f32 %v335, %v527
    %v560 = vmul.f32 %v336, %v528
    %v561 = vmul.f32 %v337, %v529
    %v562 = vmul.f32 %v338, %v530
    %v563 = vmul.f32 %v339, %v531
    %v564 = vmul.f32 %v340, %v532
    %v565 = vmul.f32 %v341, %v533
    %v566 = vmul.f32 %v342, %v534
    %v567 = vmul.f32 %v343, %v535
    %v568 = vmul.f32 %v344, %v536
    %v569 = vmul.f32 %v345, %v537
    %v570 = vmul.f32 %v346, %v538
    %v571 = vmul.f32 %v347, %v539
    %v572 = vmul.f32 %v348, %v540
    %v573 = vmul.f32 %v349, %v541
    %v574 = vmul.f32 %v350, %v542
    %v575 = vmul.f32 %v351, %v543
    %v576 = vmul.f32 %v352, %v544
    %v577 = vmul.f32 %v353, %v545
    %v578 = vmul.f32 %v354, %v546
    %v579 = vmul.f32 %v355, %v547
    %v580 = vmul.f32 %v356, %v548
    %v582 = vlaneseq
    %v583 = vshrl.u32 %v582, 7
    %v584 = vsub.s32 0, %v583
    %v585 = vrot.slane %v226, %v584
    %v587 = vmul.f32 %v549, %v585
    %v588 = vmul.f32 %v550, %v585
    %v589 = vmul.f32 %v551, %v585
    %v590 = vmul.f32 %v552, %v585
    %v591 = vmul.f32 %v553, %v585
    %v592 = vmul.f32 %v554, %v585
    %v593 = vmul.f32 %v555, %v585
    %v594 = vmul.f32 %v556, %v585
    %v595 = vmul.f32 %v557, %v585
    %v596 = vmul.f32 %v558, %v585
    %v597 = vmul.f32 %v559, %v585
    %v598 = vmul.f32 %v560, %v585
    %v599 = vmul.f32 %v561, %v585
    %v600 = vmul.f32 %v562, %v585
    %v601 = vmul.f32 %v563, %v585
    %v602 = vmul.f32 %v564, %v585
    %v603 = vmul.f32 %v565, %v585
    %v604 = vmul.f32 %v566, %v585
    %v605 = vmul.f32 %v567, %v585
    %v606 = vmul.f32 %v568, %v585
    %v607 = vmul.f32 %v569, %v585
    %v608 = vmul.f32 %v570, %v585
    %v609 = vmul.f32 %v571, %v585
    %v610 = vmul.f32 %v572, %v585
    %v611 = vmul.f32 %v573, %v585
    %v612 = vmul.f32 %v574, %v585
    %v613 = vmul.f32 %v575, %v585
    %v614 = vmul.f32 %v576, %v585
    %v615 = vmul.f32 %v577, %v585
    %v616 = vmul.f32 %v578, %v585
    %v617 = vmul.f32 %v579, %v585
    %v618 = vmul.f32 %v580, %v585
    %v620 = vlaneseq
    %v621 = vshrl.u32 %v620, 7
    %v622 = vsub.s32 0, %v621
    %v623 = vrot.slane %v227, %v622
    %v625 = vadd.f32 %v587, %v623
    %v626 = vadd.f32 %v588, %v623
    %v627 = vadd.f32 %v589, %v623
    %v628 = vadd.f32 %v590, %v623
    %v629 = vadd.f32 %v591, %v623
    %v630 = vadd.f32 %v592, %v623
    %v631 = vadd.f32 %v593, %v623
    %v632 = vadd.f32 %v594, %v623
    %v633 = vadd.f32 %v595, %v623
    %v634 = vadd.f32 %v596, %v623
    %v635 = vadd.f32 %v597, %v623
    %v636 = vadd.f32 %v598, %v623
    %v637 = vadd.f32 %v599, %v623
    %v638 = vadd.f32 %v600, %v623
    %v639 = vadd.f32 %v601, %v623
    %v640 = vadd.f32 %v602, %v623
    %v641 = vadd.f32 %v603, %v623
    %v642 = vadd.f32 %v604, %v623
    %v643 = vadd.f32 %v605, %v623
    %v644 = vadd.f32 %v606, %v623
    %v645 = vadd.f32 %v607, %v623
    %v646 = vadd.f32 %v608, %v623
    %v647 = vadd.f32 %v609, %v623
    %v648 = vadd.f32 %v610, %v623
    %v649 = vadd.f32 %v611, %v623
    %v650 = vadd.f32 %v612, %v623
    %v651 = vadd.f32 %v613, %v623
    %v652 = vadd.f32 %v614, %v623
    %v653 = vadd.f32 %v615, %v623
    %v654 = vadd.f32 %v616, %v623
    %v655 = vadd.f32 %v617, %v623
    %v656 = vadd.f32 %v618, %v623
    %v657 = vld [vmem:[#allocation7] sm:$0xff]
    %v658 = vld [vmem:[#allocation7 + $0x8] sm:$0xff]
    %v659 = vld [vmem:[#allocation7 + $0x10] sm:$0xff]
    %v660 = vld [vmem:[#allocation7 + $0x18] sm:$0xff]
    %v661 = vld [vmem:[#allocation7 + $0x20] sm:$0xff]
    %v662 = vld [vmem:[#allocation7 + $0x28] sm:$0xff]
    %v663 = vld [vmem:[#allocation7 + $0x30] sm:$0xff]
    %v664 = vld [vmem:[#allocation7 + $0x38] sm:$0xff]
    %v665 = vld [vmem:[#allocation7 + $0x40] sm:$0xff]
    %v666 = vld [vmem:[#allocation7 + $0x48] sm:$0xff]
    %v667 = vld [vmem:[#allocation7 + $0x50] sm:$0xff]
    %v668 = vld [vmem:[#allocation7 + $0x58] sm:$0xff]
    %v669 = vld [vmem:[#allocation7 + $0x60] sm:$0xff]
    %v670 = vld [vmem:[#allocation7 + $0x68] sm:$0xff]
    %v671 = vld [vmem:[#allocation7 + $0x70] sm:$0xff]
    %v672 = vld [vmem:[#allocation7 + $0x78] sm:$0xff]
    %v673 = vadd.f32 %v627, %v657
    %v674 = vadd.f32 %v628, %v658
    %v675 = vadd.f32 %v629, %v659
    %v676 = vadd.f32 %v630, %v660
    %v677 = vadd.f32 %v631, %v661
    %v678 = vadd.f32 %v632, %v662
    %v679 = vadd.f32 %v633, %v663
    %v680 = vadd.f32 %v634, %v664
    %v681 = vadd.f32 %v643, %v665
    %v682 = vadd.f32 %v644, %v666
    %v683 = vadd.f32 %v645, %v667
    %v684 = vadd.f32 %v646, %v668
    %v685 = vadd.f32 %v647, %v669
    %v686 = vadd.f32 %v648, %v670
    %v687 = vadd.f32 %v649, %v671
    %v688 = vadd.f32 %v650, %v672
    %v689 = vpack.c.bf16 %v674, %v673
    %v690 = vpack.c.bf16 %v676, %v675
    %v691 = vpack.c.bf16 %v678, %v677
    %v692 = vpack.c.bf16 %v680, %v679
    %v693 = vpack.c.bf16 %v682, %v681
    %v694 = vpack.c.bf16 %v684, %v683
    %v695 = vpack.c.bf16 %v686, %v685
    %v696 = vpack.c.bf16 %v688, %v687
    %v697 = vld [vmem:[#allocation8] sm:$0xff]
    %v698 = vld [vmem:[#allocation8 + $0x8] sm:$0xff]
    %v699 = vld [vmem:[#allocation8 + $0x10] sm:$0xff]
    %v700 = vld [vmem:[#allocation8 + $0x18] sm:$0xff]
    %v701 = vld [vmem:[#allocation8 + $0x20] sm:$0xff]
    %v702 = vld [vmem:[#allocation8 + $0x28] sm:$0xff]
    %v703 = vld [vmem:[#allocation8 + $0x30] sm:$0xff]
    %v704 = vld [vmem:[#allocation8 + $0x38] sm:$0xff]
    %v705 = vld [vmem:[#allocation8 + $0x40] sm:$0xff]
    %v706 = vld [vmem:[#allocation8 + $0x48] sm:$0xff]
    %v707 = vld [vmem:[#allocation8 + $0x50] sm:$0xff]
    %v708 = vld [vmem:[#allocation8 + $0x58] sm:$0xff]
    %v709 = vld [vmem:[#allocation8 + $0x60] sm:$0xff]
    %v710 = vld [vmem:[#allocation8 + $0x68] sm:$0xff]
    %v711 = vld [vmem:[#allocation8 + $0x70] sm:$0xff]
    %v712 = vld [vmem:[#allocation8 + $0x78] sm:$0xff]
    %v713 = vld [vmem:[#allocation8 + $0x80] sm:$0xff]
    %v714 = vld [vmem:[#allocation8 + $0x88] sm:$0xff]
    %v715 = vld [vmem:[#allocation8 + $0x90] sm:$0xff]
    %v716 = vld [vmem:[#allocation8 + $0x98] sm:$0xff]
    %v717 = vld [vmem:[#allocation8 + $0xa0] sm:$0xff]
    %v718 = vld [vmem:[#allocation8 + $0xa8] sm:$0xff]
    %v719 = vld [vmem:[#allocation8 + $0xb0] sm:$0xff]
    %v720 = vld [vmem:[#allocation8 + $0xb8] sm:$0xff]
    %v721 = vld [vmem:[#allocation8 + $0xc0] sm:$0xff]
    %v722 = vld [vmem:[#allocation8 + $0xc8] sm:$0xff]
    %v723 = vld [vmem:[#allocation8 + $0xd0] sm:$0xff]
    %v724 = vld [vmem:[#allocation8 + $0xd8] sm:$0xff]
    %v725 = vld [vmem:[#allocation8 + $0xe0] sm:$0xff]
    %v726 = vld [vmem:[#allocation8 + $0xe8] sm:$0xff]
    %v727 = vld [vmem:[#allocation8 + $0xf0] sm:$0xff]
    %v728 = vld [vmem:[#allocation8 + $0xf8] sm:$0xff]
    %v729 = vadd.f32 %v625, %v697
    %v730 = vadd.f32 %v626, %v698
    %v731 = vadd.f32 %v627, %v699
    %v732 = vadd.f32 %v628, %v700
    %v733 = vadd.f32 %v629, %v701
    %v734 = vadd.f32 %v630, %v702
    %v735 = vadd.f32 %v631, %v703
    %v736 = vadd.f32 %v632, %v704
    %v737 = vadd.f32 %v633, %v705
    %v738 = vadd.f32 %v634, %v706
    %v739 = vadd.f32 %v635, %v707
    %v740 = vadd.f32 %v636, %v708
    %v741 = vadd.f32 %v637, %v709
    %v742 = vadd.f32 %v638, %v710
    %v743 = vadd.f32 %v639, %v711
    %v744 = vadd.f32 %v640, %v712
    %v745 = vadd.f32 %v641, %v713
    %v746 = vadd.f32 %v642, %v714
    %v747 = vadd.f32 %v643, %v715
    %v748 = vadd.f32 %v644, %v716
    %v749 = vadd.f32 %v645, %v717
    %v750 = vadd.f32 %v646, %v718
    %v751 = vadd.f32 %v647, %v719
    %v752 = vadd.f32 %v648, %v720
    %v753 = vadd.f32 %v649, %v721
    %v754 = vadd.f32 %v650, %v722
    %v755 = vadd.f32 %v651, %v723
    %v756 = vadd.f32 %v652, %v724
    %v757 = vadd.f32 %v653, %v725
    %v758 = vadd.f32 %v654, %v726
    %v759 = vadd.f32 %v655, %v727
    %v760 = vadd.f32 %v656, %v728
    %v761 = vpack.c.bf16 %v730, %v729
    %v762 = vpack.c.bf16 %v732, %v731
    %v763 = vpack.c.bf16 %v734, %v733
    %v764 = vpack.c.bf16 %v736, %v735
    %v765 = vpack.c.bf16 %v738, %v737
    %v766 = vpack.c.bf16 %v740, %v739
    %v767 = vpack.c.bf16 %v742, %v741
    %v768 = vpack.c.bf16 %v744, %v743
    %v769 = vpack.c.bf16 %v746, %v745
    %v770 = vpack.c.bf16 %v748, %v747
    %v771 = vpack.c.bf16 %v750, %v749
    %v772 = vpack.c.bf16 %v752, %v751
    %v773 = vpack.c.bf16 %v754, %v753
    %v774 = vpack.c.bf16 %v756, %v755
    %v775 = vpack.c.bf16 %v758, %v757
    %v776 = vpack.c.bf16 %v760, %v759
    %v777 = vpack.c.bf16 %v626, %v625
    %v778 = vpack.c.bf16 %v628, %v627
    %v779 = vpack.c.bf16 %v630, %v629
    %v780 = vpack.c.bf16 %v632, %v631
    %v781 = vpack.c.bf16 %v634, %v633
    %v782 = vpack.c.bf16 %v636, %v635
    %v783 = vpack.c.bf16 %v638, %v637
    %v784 = vpack.c.bf16 %v640, %v639
    %v785 = vpack.c.bf16 %v642, %v641
    %v786 = vpack.c.bf16 %v644, %v643
    %v787 = vpack.c.bf16 %v646, %v645
    %v788 = vpack.c.bf16 %v648, %v647
    %v789 = vpack.c.bf16 %v650, %v649
    %v790 = vpack.c.bf16 %v652, %v651
    %v791 = vpack.c.bf16 %v654, %v653
    %v792 = vpack.c.bf16 %v656, %v655
    %v793 = vld [vmem:[#allocation10] sm:$0xf]
    %v794 = vld [vmem:[#allocation10 + $0x4] sm:$0xf]
    %v795 = vld [vmem:[#allocation10 + $0x8] sm:$0xf]
    %v796 = vld [vmem:[#allocation10 + $0xc] sm:$0xf]
    %v797 = vld [vmem:[#allocation10 + $0x10] sm:$0xf]
    %v798 = vld [vmem:[#allocation10 + $0x14] sm:$0xf]
    %v799 = vld [vmem:[#allocation10 + $0x18] sm:$0xf]
    %v800 = vld [vmem:[#allocation10 + $0x1c] sm:$0xf]
    %v801 = vld [vmem:[#allocation10 + $0x20] sm:$0xf]
    %v802 = vld [vmem:[#allocation10 + $0x24] sm:$0xf]
    %v803 = vld [vmem:[#allocation10 + $0x28] sm:$0xf]
    %v804 = vld [vmem:[#allocation10 + $0x2c] sm:$0xf]
    %v805 = vld [vmem:[#allocation10 + $0x30] sm:$0xf]
    %v806 = vld [vmem:[#allocation10 + $0x34] sm:$0xf]
    %v807 = vld [vmem:[#allocation10 + $0x38] sm:$0xf]
    %v808 = vld [vmem:[#allocation10 + $0x3c] sm:$0xf]
    %v825 = vunpack.c.l.b16 %v793
    %v826 = vunpack.c.l.b16 %v794
    %v827 = vunpack.c.l.b16 %v795
    %v828 = vunpack.c.l.b16 %v796
    %v829 = vunpack.c.l.b16 %v797
    %v830 = vunpack.c.l.b16 %v798
    %v831 = vunpack.c.l.b16 %v799
    %v832 = vunpack.c.l.b16 %v800
    %v833 = vunpack.c.l.b16 %v801
    %v834 = vunpack.c.l.b16 %v802
    %v835 = vunpack.c.l.b16 %v803
    %v836 = vunpack.c.l.b16 %v804
    %v837 = vunpack.c.l.b16 %v805
    %v838 = vunpack.c.l.b16 %v806
    %v839 = vunpack.c.l.b16 %v807
    %v840 = vunpack.c.l.b16 %v808
    %v841 = vpack.c.b16 %v826, %v825
    %v842 = vpack.c.b16 %v828, %v827
    %v843 = vpack.c.b16 %v830, %v829
    %v844 = vpack.c.b16 %v832, %v831
    %v845 = vpack.c.b16 %v834, %v833
    %v846 = vpack.c.b16 %v836, %v835
    %v847 = vpack.c.b16 %v838, %v837
    %v848 = vpack.c.b16 %v840, %v839
    %857 = vmatprep.subr.bf16.mxu0 0
    %858 = vmatpush1.bf16.msra.mxu0 %v848
    %859 = vmatprep.subr.bf16.mxu0 0
    %860 = vmatpush1.bf16.msra.mxu0 %v847
    %861 = vmatprep.subr.bf16.mxu0 0
    %862 = vmatpush1.bf16.msra.mxu0 %v846
    %863 = vmatprep.subr.bf16.mxu0 0
    %864 = vmatpush1.bf16.msra.mxu0 %v845
    %865 = vmatprep.subr.bf16.mxu0 0
    %866 = vmatpush1.bf16.msra.mxu0 %v844
    %867 = vmatprep.subr.bf16.mxu0 0
    %868 = vmatpush1.bf16.msra.mxu0 %v843
    %869 = vmatprep.subr.bf16.mxu0 0
    %870 = vmatpush1.bf16.msra.mxu0 %v842
    %871 = vmatprep.subr.bf16.mxu0 0
    %872 = vmatpush1.bf16.msra.mxu0 %v841
    %873 = vmatprep.subr.bf16.mxu0 0
    %874 = vmatpush2.bf16.msra.mxu0 0
    %875 = vmatprep.subr.bf16.mxu0 0
    %876 = vmatpush2.bf16.msra.mxu0 0
    %877 = vmatprep.subr.bf16.mxu0 0
    %878 = vmatpush2.bf16.msra.mxu0 0
    %879 = vmatprep.subr.bf16.mxu0 0
    %880 = vmatpush2.bf16.msra.mxu0 0
    %881 = vmatprep.subr.bf16.mxu0 0
    %882 = vmatpush2.bf16.msra.mxu0 0
    %883 = vmatprep.subr.bf16.mxu0 0
    %884 = vmatpush2.bf16.msra.mxu0 0
    %885 = vmatprep.subr.bf16.mxu0 0
    %886 = vmatpush2.bf16.msra.mxu0 0
    %887 = vmatprep.subr.bf16.mxu0 0
    %888 = vmatpush2.bf16.msra.mxu0 0
    %889 = vmatprep.mubr.bf16.mxu0 0
    %890 = vmatmul.mubr.bf16.gmra.mxu0 %v689
    %v891 = vpop.f32.mrf.mxu0
    %v892 = vadd.f32 0.0, %v891
    %v893 = vpop.f32.mrf.mxu0
    %v894 = vpop.f32.mrf.mxu0
    %v895 = vadd.f32 0.0, %v894
    %v896 = vpop.f32.mrf.mxu0
    %897 = vmatprep.mubr.bf16.mxu0 0
    %898 = vmatmul.mubr.bf16.gmra.mxu0 %v690
    %v899 = vpop.f32.mrf.mxu0
    %v900 = vadd.f32 0.0, %v899
    %v901 = vpop.f32.mrf.mxu0
    %v902 = vpop.f32.mrf.mxu0
    %v903 = vadd.f32 0.0, %v902
    %v904 = vpop.f32.mrf.mxu0
    %905 = vmatprep.mubr.bf16.mxu0 0
    %906 = vmatmul.mubr.bf16.gmra.mxu0 %v691
    %v907 = vpop.f32.mrf.mxu0
    %v908 = vadd.f32 0.0, %v907
    %v909 = vpop.f32.mrf.mxu0
    %v910 = vpop.f32.mrf.mxu0
    %v911 = vadd.f32 0.0, %v910
    %v912 = vpop.f32.mrf.mxu0
    %913 = vmatprep.mubr.bf16.mxu0 0
    %914 = vmatmul.mubr.bf16.gmra.mxu0 %v692
    %v915 = vpop.f32.mrf.mxu0
    %v916 = vadd.f32 0.0, %v915
    %v917 = vpop.f32.mrf.mxu0
    %v918 = vpop.f32.mrf.mxu0
    %v919 = vadd.f32 0.0, %v918
    %v920 = vpop.f32.mrf.mxu0
    %921 = vmatprep.mubr.bf16.mxu0 0
    %922 = vmatmul.mubr.bf16.gmra.mxu0 %v693
    %v923 = vpop.f32.mrf.mxu0
    %v924 = vadd.f32 0.0, %v923
    %v925 = vpop.f32.mrf.mxu0
    %v926 = vpop.f32.mrf.mxu0
    %v927 = vadd.f32 0.0, %v926
    %v928 = vpop.f32.mrf.mxu0
    %929 = vmatprep.mubr.bf16.mxu0 0
    %930 = vmatmul.mubr.bf16.gmra.mxu0 %v694
    %v931 = vpop.f32.mrf.mxu0
    %v932 = vadd.f32 0.0, %v931
    %v933 = vpop.f32.mrf.mxu0
    %v934 = vpop.f32.mrf.mxu0
    %v935 = vadd.f32 0.0, %v934
    %v936 = vpop.f32.mrf.mxu0
    %937 = vmatprep.mubr.bf16.mxu0 0
    %938 = vmatmul.mubr.bf16.gmra.mxu0 %v695
    %v939 = vpop.f32.mrf.mxu0
    %v940 = vadd.f32 0.0, %v939
    %v941 = vpop.f32.mrf.mxu0
    %v942 = vpop.f32.mrf.mxu0
    %v943 = vadd.f32 0.0, %v942
    %v944 = vpop.f32.mrf.mxu0
    %945 = vmatprep.mubr.bf16.mxu0 0
    %946 = vmatmul.mubr.bf16.gmra.mxu0 %v696
    %v947 = vpop.f32.mrf.mxu0
    %v948 = vadd.f32 0.0, %v947
    %v949 = vpop.f32.mrf.mxu0
    %v950 = vpop.f32.mrf.mxu0
    %v951 = vadd.f32 0.0, %v950
    %v952 = vpop.f32.mrf.mxu0
    %953 = vdwg.mxu0
    %v954 = vpack.c.bf16 %v895, %v892
    %v955 = vpack.c.bf16 %v903, %v900
    %v956 = vpack.c.bf16 %v911, %v908
    %v957 = vpack.c.bf16 %v919, %v916
    %v958 = vpack.c.bf16 %v927, %v924
    %v959 = vpack.c.bf16 %v935, %v932
    %v960 = vpack.c.bf16 %v943, %v940
    %v961 = vpack.c.bf16 %v951, %v948
    %v962 = vld [vmem:[#allocation11] sm:$0xf]
    %v963 = vld [vmem:[#allocation11 + $0x4] sm:$0xf]
    %v964 = vld [vmem:[#allocation11 + $0x8] sm:$0xf]
    %v965 = vld [vmem:[#allocation11 + $0xc] sm:$0xf]
    %v966 = vld [vmem:[#allocation11 + $0x10] sm:$0xf]
    %v967 = vld [vmem:[#allocation11 + $0x14] sm:$0xf]
    %v968 = vld [vmem:[#allocation11 + $0x18] sm:$0xf]
    %v969 = vld [vmem:[#allocation11 + $0x1c] sm:$0xf]
    %v970 = vld [vmem:[#allocation11 + $0x20] sm:$0xf]
    %v971 = vld [vmem:[#allocation11 + $0x24] sm:$0xf]
    %v972 = vld [vmem:[#allocation11 + $0x28] sm:$0xf]
    %v973 = vld [vmem:[#allocation11 + $0x2c] sm:$0xf]
    %v974 = vld [vmem:[#allocation11 + $0x30] sm:$0xf]
    %v975 = vld [vmem:[#allocation11 + $0x34] sm:$0xf]
    %v976 = vld [vmem:[#allocation11 + $0x38] sm:$0xf]
    %v977 = vld [vmem:[#allocation11 + $0x3c] sm:$0xf]
    %v994 = vunpack.c.l.b16 %v962
    %v995 = vunpack.c.l.b16 %v963
    %v996 = vunpack.c.l.b16 %v964
    %v997 = vunpack.c.l.b16 %v965
    %v998 = vunpack.c.l.b16 %v966
    %v999 = vunpack.c.l.b16 %v967
    %v1000 = vunpack.c.l.b16 %v968
    %v1001 = vunpack.c.l.b16 %v969
    %v1002 = vunpack.c.l.b16 %v970
    %v1003 = vunpack.c.l.b16 %v971
    %v1004 = vunpack.c.l.b16 %v972
    %v1005 = vunpack.c.l.b16 %v973
    %v1006 = vunpack.c.l.b16 %v974
    %v1007 = vunpack.c.l.b16 %v975
    %v1008 = vunpack.c.l.b16 %v976
    %v1009 = vunpack.c.l.b16 %v977
    %v1010 = vpack.c.b16 %v995, %v994
    %v1011 = vpack.c.b16 %v997, %v996
    %v1012 = vpack.c.b16 %v999, %v998
    %v1013 = vpack.c.b16 %v1001, %v1000
    %v1014 = vpack.c.b16 %v1003, %v1002
    %v1015 = vpack.c.b16 %v1005, %v1004
    %v1016 = vpack.c.b16 %v1007, %v1006
    %v1017 = vpack.c.b16 %v1009, %v1008
    %1026 = vmatprep.subr.bf16.mxu0 0
    %1027 = vmatpush1.bf16.msra.mxu0 %v1017
    %1028 = vmatprep.subr.bf16.mxu0 0
    %1029 = vmatpush1.bf16.msra.mxu0 %v1016
    %1030 = vmatprep.subr.bf16.mxu0 0
    %1031 = vmatpush1.bf16.msra.mxu0 %v1015
    %1032 = vmatprep.subr.bf16.mxu0 0
    %1033 = vmatpush1.bf16.msra.mxu0 %v1014
    %1034 = vmatprep.subr.bf16.mxu0 0
    %1035 = vmatpush1.bf16.msra.mxu0 %v1013
    %1036 = vmatprep.subr.bf16.mxu0 0
    %1037 = vmatpush1.bf16.msra.mxu0 %v1012
    %1038 = vmatprep.subr.bf16.mxu0 0
    %1039 = vmatpush1.bf16.msra.mxu0 %v1011
    %1040 = vmatprep.subr.bf16.mxu0 0
    %1041 = vmatpush1.bf16.msra.mxu0 %v1010
    %1042 = vmatprep.subr.bf16.mxu0 0
    %1043 = vmatpush2.bf16.msra.mxu0 0
    %1044 = vmatprep.subr.bf16.mxu0 0
    %1045 = vmatpush2.bf16.msra.mxu0 0
    %1046 = vmatprep.subr.bf16.mxu0 0
    %1047 = vmatpush2.bf16.msra.mxu0 0
    %1048 = vmatprep.subr.bf16.mxu0 0
    %1049 = vmatpush2.bf16.msra.mxu0 0
    %1050 = vmatprep.subr.bf16.mxu0 0
    %1051 = vmatpush2.bf16.msra.mxu0 0
    %1052 = vmatprep.subr.bf16.mxu0 0
    %1053 = vmatpush2.bf16.msra.mxu0 0
    %1054 = vmatprep.subr.bf16.mxu0 0
    %1055 = vmatpush2.bf16.msra.mxu0 0
    %1056 = vmatprep.subr.bf16.mxu0 0
    %1057 = vmatpush2.bf16.msra.mxu0 0
    %1058 = vmatprep.mubr.bf16.mxu0 0
    %1059 = vmatmul.mubr.bf16.gmra.mxu0 %v761
    %v1060 = vpop.f32.mrf.mxu0
    %v1061 = vadd.f32 0.0, %v1060
    %v1062 = vpop.f32.mrf.mxu0
    %v1063 = vpop.f32.mrf.mxu0
    %v1064 = vadd.f32 0.0, %v1063
    %v1065 = vpop.f32.mrf.mxu0
    %1066 = vmatprep.mubr.bf16.mxu0 0
    %1067 = vmatmul.mubr.bf16.gmra.mxu0 %v762
    %v1068 = vpop.f32.mrf.mxu0
    %v1069 = vadd.f32 0.0, %v1068
    %v1070 = vpop.f32.mrf.mxu0
    %v1071 = vpop.f32.mrf.mxu0
    %v1072 = vadd.f32 0.0, %v1071
    %v1073 = vpop.f32.mrf.mxu0
    %1074 = vmatprep.mubr.bf16.mxu0 0
    %1075 = vmatmul.mubr.bf16.gmra.mxu0 %v763
    %v1076 = vpop.f32.mrf.mxu0
    %v1077 = vadd.f32 0.0, %v1076
    %v1078 = vpop.f32.mrf.mxu0
    %v1079 = vpop.f32.mrf.mxu0
    %v1080 = vadd.f32 0.0, %v1079
    %v1081 = vpop.f32.mrf.mxu0
    %1082 = vmatprep.mubr.bf16.mxu0 0
    %1083 = vmatmul.mubr.bf16.gmra.mxu0 %v764
    %v1084 = vpop.f32.mrf.mxu0
    %v1085 = vadd.f32 0.0, %v1084
    %v1086 = vpop.f32.mrf.mxu0
    %v1087 = vpop.f32.mrf.mxu0
    %v1088 = vadd.f32 0.0, %v1087
    %v1089 = vpop.f32.mrf.mxu0
    %1090 = vmatprep.mubr.bf16.mxu0 0
    %1091 = vmatmul.mubr.bf16.gmra.mxu0 %v765
    %v1092 = vpop.f32.mrf.mxu0
    %v1093 = vadd.f32 0.0, %v1092
    %v1094 = vpop.f32.mrf.mxu0
    %v1095 = vpop.f32.mrf.mxu0
    %v1096 = vadd.f32 0.0, %v1095
    %v1097 = vpop.f32.mrf.mxu0
    %1098 = vmatprep.mubr.bf16.mxu0 0
    %1099 = vmatmul.mubr.bf16.gmra.mxu0 %v766
    %v1100 = vpop.f32.mrf.mxu0
    %v1101 = vadd.f32 0.0, %v1100
    %v1102 = vpop.f32.mrf.mxu0
    %v1103 = vpop.f32.mrf.mxu0
    %v1104 = vadd.f32 0.0, %v1103
    %v1105 = vpop.f32.mrf.mxu0
    %1106 = vmatprep.mubr.bf16.mxu0 0
    %1107 = vmatmul.mubr.bf16.gmra.mxu0 %v767
    %v1108 = vpop.f32.mrf.mxu0
    %v1109 = vadd.f32 0.0, %v1108
    %v1110 = vpop.f32.mrf.mxu0
    %v1111 = vpop.f32.mrf.mxu0
    %v1112 = vadd.f32 0.0, %v1111
    %v1113 = vpop.f32.mrf.mxu0
    %1114 = vmatprep.mubr.bf16.mxu0 0
    %1115 = vmatmul.mubr.bf16.gmra.mxu0 %v768
    %v1116 = vpop.f32.mrf.mxu0
    %v1117 = vadd.f32 0.0, %v1116
    %v1118 = vpop.f32.mrf.mxu0
    %v1119 = vpop.f32.mrf.mxu0
    %v1120 = vadd.f32 0.0, %v1119
    %v1121 = vpop.f32.mrf.mxu0
    %1122 = vmatprep.mubr.bf16.mxu0 0
    %1123 = vmatmul.mubr.bf16.gmra.mxu0 %v769
    %v1124 = vpop.f32.mrf.mxu0
    %v1125 = vadd.f32 0.0, %v1124
    %v1126 = vpop.f32.mrf.mxu0
    %v1127 = vpop.f32.mrf.mxu0
    %v1128 = vadd.f32 0.0, %v1127
    %v1129 = vpop.f32.mrf.mxu0
    %1130 = vmatprep.mubr.bf16.mxu0 0
    %1131 = vmatmul.mubr.bf16.gmra.mxu0 %v770
    %v1132 = vpop.f32.mrf.mxu0
    %v1133 = vadd.f32 0.0, %v1132
    %v1134 = vpop.f32.mrf.mxu0
    %v1135 = vpop.f32.mrf.mxu0
    %v1136 = vadd.f32 0.0, %v1135
    %v1137 = vpop.f32.mrf.mxu0
    %1138 = vmatprep.mubr.bf16.mxu0 0
    %1139 = vmatmul.mubr.bf16.gmra.mxu0 %v771
    %v1140 = vpop.f32.mrf.mxu0
    %v1141 = vadd.f32 0.0, %v1140
    %v1142 = vpop.f32.mrf.mxu0
    %v1143 = vpop.f32.mrf.mxu0
    %v1144 = vadd.f32 0.0, %v1143
    %v1145 = vpop.f32.mrf.mxu0
    %1146 = vmatprep.mubr.bf16.mxu0 0
    %1147 = vmatmul.mubr.bf16.gmra.mxu0 %v772
    %v1148 = vpop.f32.mrf.mxu0
    %v1149 = vadd.f32 0.0, %v1148
    %v1150 = vpop.f32.mrf.mxu0
    %v1151 = vpop.f32.mrf.mxu0
    %v1152 = vadd.f32 0.0, %v1151
    %v1153 = vpop.f32.mrf.mxu0
    %1154 = vmatprep.mubr.bf16.mxu0 0
    %1155 = vmatmul.mubr.bf16.gmra.mxu0 %v773
    %v1156 = vpop.f32.mrf.mxu0
    %v1157 = vadd.f32 0.0, %v1156
    %v1158 = vpop.f32.mrf.mxu0
    %v1159 = vpop.f32.mrf.mxu0
    %v1160 = vadd.f32 0.0, %v1159
    %v1161 = vpop.f32.mrf.mxu0
    %1162 = vmatprep.mubr.bf16.mxu0 0
    %1163 = vmatmul.mubr.bf16.gmra.mxu0 %v774
    %v1164 = vpop.f32.mrf.mxu0
    %v1165 = vadd.f32 0.0, %v1164
    %v1166 = vpop.f32.mrf.mxu0
    %v1167 = vpop.f32.mrf.mxu0
    %v1168 = vadd.f32 0.0, %v1167
    %v1169 = vpop.f32.mrf.mxu0
    %1170 = vmatprep.mubr.bf16.mxu0 0
    %1171 = vmatmul.mubr.bf16.gmra.mxu0 %v775
    %v1172 = vpop.f32.mrf.mxu0
    %v1173 = vadd.f32 0.0, %v1172
    %v1174 = vpop.f32.mrf.mxu0
    %v1175 = vpop.f32.mrf.mxu0
    %v1176 = vadd.f32 0.0, %v1175
    %v1177 = vpop.f32.mrf.mxu0
    %1178 = vmatprep.mubr.bf16.mxu0 0
    %1179 = vmatmul.mubr.bf16.gmra.mxu0 %v776
    %v1180 = vpop.f32.mrf.mxu0
    %v1181 = vadd.f32 0.0, %v1180
    %v1182 = vpop.f32.mrf.mxu0
    %v1183 = vpop.f32.mrf.mxu0
    %v1184 = vadd.f32 0.0, %v1183
    %v1185 = vpop.f32.mrf.mxu0
    %1186 = vdwg.mxu0
    %v1187 = vpack.c.bf16 %v1064, %v1061
    %v1188 = vpack.c.bf16 %v1072, %v1069
    %v1189 = vpack.c.bf16 %v1080, %v1077
    %v1190 = vpack.c.bf16 %v1088, %v1085
    %v1191 = vpack.c.bf16 %v1096, %v1093
    %v1192 = vpack.c.bf16 %v1104, %v1101
    %v1193 = vpack.c.bf16 %v1112, %v1109
    %v1194 = vpack.c.bf16 %v1120, %v1117
    %v1195 = vpack.c.bf16 %v1128, %v1125
    %v1196 = vpack.c.bf16 %v1136, %v1133
    %v1197 = vpack.c.bf16 %v1144, %v1141
    %v1198 = vpack.c.bf16 %v1152, %v1149
    %v1199 = vpack.c.bf16 %v1160, %v1157
    %v1200 = vpack.c.bf16 %v1168, %v1165
    %v1201 = vpack.c.bf16 %v1176, %v1173
    %v1202 = vpack.c.bf16 %v1184, %v1181
    %v1203 = vld [vmem:[#allocation13] sm:$0xf]
    %v1204 = vld [vmem:[#allocation13 + $0x4] sm:$0xf]
    %v1205 = vld [vmem:[#allocation13 + $0x8] sm:$0xf]
    %v1206 = vld [vmem:[#allocation13 + $0xc] sm:$0xf]
    %v1207 = vld [vmem:[#allocation13 + $0x10] sm:$0xf]
    %v1208 = vld [vmem:[#allocation13 + $0x14] sm:$0xf]
    %v1209 = vld [vmem:[#allocation13 + $0x18] sm:$0xf]
    %v1210 = vld [vmem:[#allocation13 + $0x1c] sm:$0xf]
    %v1211 = vld [vmem:[#allocation13 + $0x20] sm:$0xf]
    %v1212 = vld [vmem:[#allocation13 + $0x24] sm:$0xf]
    %v1213 = vld [vmem:[#allocation13 + $0x28] sm:$0xf]
    %v1214 = vld [vmem:[#allocation13 + $0x2c] sm:$0xf]
    %v1215 = vld [vmem:[#allocation13 + $0x30] sm:$0xf]
    %v1216 = vld [vmem:[#allocation13 + $0x34] sm:$0xf]
    %v1217 = vld [vmem:[#allocation13 + $0x38] sm:$0xf]
    %v1218 = vld [vmem:[#allocation13 + $0x3c] sm:$0xf]
    %v1235 = vunpack.c.l.b16 %v1203
    %v1236 = vunpack.c.l.b16 %v1204
    %v1237 = vunpack.c.l.b16 %v1205
    %v1238 = vunpack.c.l.b16 %v1206
    %v1239 = vunpack.c.l.b16 %v1207
    %v1240 = vunpack.c.l.b16 %v1208
    %v1241 = vunpack.c.l.b16 %v1209
    %v1242 = vunpack.c.l.b16 %v1210
    %v1243 = vunpack.c.l.b16 %v1211
    %v1244 = vunpack.c.l.b16 %v1212
    %v1245 = vunpack.c.l.b16 %v1213
    %v1246 = vunpack.c.l.b16 %v1214
    %v1247 = vunpack.c.l.b16 %v1215
    %v1248 = vunpack.c.l.b16 %v1216
    %v1249 = vunpack.c.l.b16 %v1217
    %v1250 = vunpack.c.l.b16 %v1218
    %v1251 = vpack.c.b16 %v1236, %v1235
    %v1252 = vpack.c.b16 %v1238, %v1237
    %v1253 = vpack.c.b16 %v1240, %v1239
    %v1254 = vpack.c.b16 %v1242, %v1241
    %v1255 = vpack.c.b16 %v1244, %v1243
    %v1256 = vpack.c.b16 %v1246, %v1245
    %v1257 = vpack.c.b16 %v1248, %v1247
    %v1258 = vpack.c.b16 %v1250, %v1249
    %1267 = vmatprep.subr.bf16.mxu0 0
    %1268 = vmatpush1.bf16.msra.mxu0 %v1258
    %1269 = vmatprep.subr.bf16.mxu0 0
    %1270 = vmatpush1.bf16.msra.mxu0 %v1257
    %1271 = vmatprep.subr.bf16.mxu0 0
    %1272 = vmatpush1.bf16.msra.mxu0 %v1256
    %1273 = vmatprep.subr.bf16.mxu0 0
    %1274 = vmatpush1.bf16.msra.mxu0 %v1255
    %1275 = vmatprep.subr.bf16.mxu0 0
    %1276 = vmatpush1.bf16.msra.mxu0 %v1254
    %1277 = vmatprep.subr.bf16.mxu0 0
    %1278 = vmatpush1.bf16.msra.mxu0 %v1253
    %1279 = vmatprep.subr.bf16.mxu0 0
    %1280 = vmatpush1.bf16.msra.mxu0 %v1252
    %1281 = vmatprep.subr.bf16.mxu0 0
    %1282 = vmatpush1.bf16.msra.mxu0 %v1251
    %1283 = vmatprep.subr.bf16.mxu0 0
    %1284 = vmatpush2.bf16.msra.mxu0 0
    %1285 = vmatprep.subr.bf16.mxu0 0
    %1286 = vmatpush2.bf16.msra.mxu0 0
    %1287 = vmatprep.subr.bf16.mxu0 0
    %1288 = vmatpush2.bf16.msra.mxu0 0
    %1289 = vmatprep.subr.bf16.mxu0 0
    %1290 = vmatpush2.bf16.msra.mxu0 0
    %1291 = vmatprep.subr.bf16.mxu0 0
    %1292 = vmatpush2.bf16.msra.mxu0 0
    %1293 = vmatprep.subr.bf16.mxu0 0
    %1294 = vmatpush2.bf16.msra.mxu0 0
    %1295 = vmatprep.subr.bf16.mxu0 0
    %1296 = vmatpush2.bf16.msra.mxu0 0
    %1297 = vmatprep.subr.bf16.mxu0 0
    %1298 = vmatpush2.bf16.msra.mxu0 0
    %1299 = vmatprep.mubr.bf16.mxu0 0
    %1300 = vmatmul.mubr.bf16.gmra.mxu0 %v777
    %v1301 = vpop.f32.mrf.mxu0
    %v1302 = vadd.f32 0.0, %v1301
    %v1303 = vpop.f32.mrf.mxu0
    %v1304 = vpop.f32.mrf.mxu0
    %v1305 = vadd.f32 0.0, %v1304
    %v1306 = vpop.f32.mrf.mxu0
    %1307 = vmatprep.mubr.bf16.mxu0 0
    %1308 = vmatmul.mubr.bf16.gmra.mxu0 %v778
    %v1309 = vpop.f32.mrf.mxu0
    %v1310 = vadd.f32 0.0, %v1309
    %v1311 = vpop.f32.mrf.mxu0
    %v1312 = vpop.f32.mrf.mxu0
    %v1313 = vadd.f32 0.0, %v1312
    %v1314 = vpop.f32.mrf.mxu0
    %1315 = vmatprep.mubr.bf16.mxu0 0
    %1316 = vmatmul.mubr.bf16.gmra.mxu0 %v779
    %v1317 = vpop.f32.mrf.mxu0
    %v1318 = vadd.f32 0.0, %v1317
    %v1319 = vpop.f32.mrf.mxu0
    %v1320 = vpop.f32.mrf.mxu0
    %v1321 = vadd.f32 0.0, %v1320
    %v1322 = vpop.f32.mrf.mxu0
    %1323 = vmatprep.mubr.bf16.mxu0 0
    %1324 = vmatmul.mubr.bf16.gmra.mxu0 %v780
    %v1325 = vpop.f32.mrf.mxu0
    %v1326 = vadd.f32 0.0, %v1325
    %v1327 = vpop.f32.mrf.mxu0
    %v1328 = vpop.f32.mrf.mxu0
    %v1329 = vadd.f32 0.0, %v1328
    %v1330 = vpop.f32.mrf.mxu0
    %1331 = vmatprep.mubr.bf16.mxu0 0
    %1332 = vmatmul.mubr.bf16.gmra.mxu0 %v781
    %v1333 = vpop.f32.mrf.mxu0
    %v1334 = vadd.f32 0.0, %v1333
    %v1335 = vpop.f32.mrf.mxu0
    %v1336 = vpop.f32.mrf.mxu0
    %v1337 = vadd.f32 0.0, %v1336
    %v1338 = vpop.f32.mrf.mxu0
    %1339 = vmatprep.mubr.bf16.mxu0 0
    %1340 = vmatmul.mubr.bf16.gmra.mxu0 %v782
    %v1341 = vpop.f32.mrf.mxu0
    %v1342 = vadd.f32 0.0, %v1341
    %v1343 = vpop.f32.mrf.mxu0
    %v1344 = vpop.f32.mrf.mxu0
    %v1345 = vadd.f32 0.0, %v1344
    %v1346 = vpop.f32.mrf.mxu0
    %1347 = vmatprep.mubr.bf16.mxu0 0
    %1348 = vmatmul.mubr.bf16.gmra.mxu0 %v783
    %v1349 = vpop.f32.mrf.mxu0
    %v1350 = vadd.f32 0.0, %v1349
    %v1351 = vpop.f32.mrf.mxu0
    %v1352 = vpop.f32.mrf.mxu0
    %v1353 = vadd.f32 0.0, %v1352
    %v1354 = vpop.f32.mrf.mxu0
    %1355 = vmatprep.mubr.bf16.mxu0 0
    %1356 = vmatmul.mubr.bf16.gmra.mxu0 %v784
    %v1357 = vpop.f32.mrf.mxu0
    %v1358 = vadd.f32 0.0, %v1357
    %v1359 = vpop.f32.mrf.mxu0
    %v1360 = vpop.f32.mrf.mxu0
    %v1361 = vadd.f32 0.0, %v1360
    %v1362 = vpop.f32.mrf.mxu0
    %1363 = vmatprep.mubr.bf16.mxu0 0
    %1364 = vmatmul.mubr.bf16.gmra.mxu0 %v785
    %v1365 = vpop.f32.mrf.mxu0
    %v1366 = vadd.f32 0.0, %v1365
    %v1367 = vpop.f32.mrf.mxu0
    %v1368 = vpop.f32.mrf.mxu0
    %v1369 = vadd.f32 0.0, %v1368
    %v1370 = vpop.f32.mrf.mxu0
    %1371 = vmatprep.mubr.bf16.mxu0 0
    %1372 = vmatmul.mubr.bf16.gmra.mxu0 %v786
    %v1373 = vpop.f32.mrf.mxu0
    %v1374 = vadd.f32 0.0, %v1373
    %v1375 = vpop.f32.mrf.mxu0
    %v1376 = vpop.f32.mrf.mxu0
    %v1377 = vadd.f32 0.0, %v1376
    %v1378 = vpop.f32.mrf.mxu0
    %1379 = vmatprep.mubr.bf16.mxu0 0
    %1380 = vmatmul.mubr.bf16.gmra.mxu0 %v787
    %v1381 = vpop.f32.mrf.mxu0
    %v1382 = vadd.f32 0.0, %v1381
    %v1383 = vpop.f32.mrf.mxu0
    %v1384 = vpop.f32.mrf.mxu0
    %v1385 = vadd.f32 0.0, %v1384
    %v1386 = vpop.f32.mrf.mxu0
    %1387 = vmatprep.mubr.bf16.mxu0 0
    %1388 = vmatmul.mubr.bf16.gmra.mxu0 %v788
    %v1389 = vpop.f32.mrf.mxu0
    %v1390 = vadd.f32 0.0, %v1389
    %v1391 = vpop.f32.mrf.mxu0
    %v1392 = vpop.f32.mrf.mxu0
    %v1393 = vadd.f32 0.0, %v1392
    %v1394 = vpop.f32.mrf.mxu0
    %1395 = vmatprep.mubr.bf16.mxu0 0
    %1396 = vmatmul.mubr.bf16.gmra.mxu0 %v789
    %v1397 = vpop.f32.mrf.mxu0
    %v1398 = vadd.f32 0.0, %v1397
    %v1399 = vpop.f32.mrf.mxu0
    %v1400 = vpop.f32.mrf.mxu0
    %v1401 = vadd.f32 0.0, %v1400
    %v1402 = vpop.f32.mrf.mxu0
    %1403 = vmatprep.mubr.bf16.mxu0 0
    %1404 = vmatmul.mubr.bf16.gmra.mxu0 %v790
    %v1405 = vpop.f32.mrf.mxu0
    %v1406 = vadd.f32 0.0, %v1405
    %v1407 = vpop.f32.mrf.mxu0
    %v1408 = vpop.f32.mrf.mxu0
    %v1409 = vadd.f32 0.0, %v1408
    %v1410 = vpop.f32.mrf.mxu0
    %1411 = vmatprep.mubr.bf16.mxu0 0
    %1412 = vmatmul.mubr.bf16.gmra.mxu0 %v791
    %v1413 = vpop.f32.mrf.mxu0
    %v1414 = vadd.f32 0.0, %v1413
    %v1415 = vpop.f32.mrf.mxu0
    %v1416 = vpop.f32.mrf.mxu0
    %v1417 = vadd.f32 0.0, %v1416
    %v1418 = vpop.f32.mrf.mxu0
    %1419 = vmatprep.mubr.bf16.mxu0 0
    %1420 = vmatmul.mubr.bf16.gmra.mxu0 %v792
    %v1421 = vpop.f32.mrf.mxu0
    %v1422 = vadd.f32 0.0, %v1421
    %v1423 = vpop.f32.mrf.mxu0
    %v1424 = vpop.f32.mrf.mxu0
    %v1425 = vadd.f32 0.0, %v1424
    %v1426 = vpop.f32.mrf.mxu0
    %1427 = vdwg.mxu0
    %v1428 = vpack.c.bf16 %v1305, %v1302
    %v1429 = vpack.c.bf16 %v1313, %v1310
    %v1430 = vpack.c.bf16 %v1321, %v1318
    %v1431 = vpack.c.bf16 %v1329, %v1326
    %v1432 = vpack.c.bf16 %v1337, %v1334
    %v1433 = vpack.c.bf16 %v1345, %v1342
    %v1434 = vpack.c.bf16 %v1353, %v1350
    %v1435 = vpack.c.bf16 %v1361, %v1358
    %v1436 = vpack.c.bf16 %v1369, %v1366
    %v1437 = vpack.c.bf16 %v1377, %v1374
    %v1438 = vpack.c.bf16 %v1385, %v1382
    %v1439 = vpack.c.bf16 %v1393, %v1390
    %v1440 = vpack.c.bf16 %v1401, %v1398
    %v1441 = vpack.c.bf16 %v1409, %v1406
    %v1442 = vpack.c.bf16 %v1417, %v1414
    %v1443 = vpack.c.bf16 %v1425, %v1422
    %1448 = vrot.lane.b32.xlu0 %v954, 96
    %v1449 = vpop.permute.xlu0 %1448
    %1450 = vrot.lane.b32.xlu0 %v955, 96
    %v1451 = vpop.permute.xlu0 %1450
    %1452 = vrot.lane.b32.xlu0 %v956, 96
    %v1453 = vpop.permute.xlu0 %1452
    %1454 = vrot.lane.b32.xlu0 %v957, 96
    %v1455 = vpop.permute.xlu0 %1454
    %1456 = vrot.lane.b32.xlu0 %v954, 64
    %v1457 = vpop.permute.xlu0 %1456
    %1458 = vrot.lane.b32.xlu0 %v955, 64
    %v1459 = vpop.permute.xlu0 %1458
    %1460 = vrot.lane.b32.xlu0 %v956, 64
    %v1461 = vpop.permute.xlu0 %1460
    %1462 = vrot.lane.b32.xlu0 %v957, 64
    %v1463 = vpop.permute.xlu0 %1462
    %1464 = vrot.lane.b32.xlu0 %v954, 32
    %v1465 = vpop.permute.xlu0 %1464
    %1466 = vrot.lane.b32.xlu0 %v955, 32
    %v1467 = vpop.permute.xlu0 %1466
    %1468 = vrot.lane.b32.xlu0 %v956, 32
    %v1469 = vpop.permute.xlu0 %1468
    %1470 = vrot.lane.b32.xlu0 %v957, 32
    %v1471 = vpop.permute.xlu0 %1470
    %1476 = vrot.lane.b32.xlu0 %v958, 96
    %v1477 = vpop.permute.xlu0 %1476
    %1478 = vrot.lane.b32.xlu0 %v959, 96
    %v1479 = vpop.permute.xlu0 %1478
    %1480 = vrot.lane.b32.xlu0 %v960, 96
    %v1481 = vpop.permute.xlu0 %1480
    %1482 = vrot.lane.b32.xlu0 %v961, 96
    %v1483 = vpop.permute.xlu0 %1482
    %1484 = vrot.lane.b32.xlu0 %v958, 64
    %v1485 = vpop.permute.xlu0 %1484
    %1486 = vrot.lane.b32.xlu0 %v959, 64
    %v1487 = vpop.permute.xlu0 %1486
    %1488 = vrot.lane.b32.xlu0 %v960, 64
    %v1489 = vpop.permute.xlu0 %1488
    %1490 = vrot.lane.b32.xlu0 %v961, 64
    %v1491 = vpop.permute.xlu0 %1490
    %1492 = vrot.lane.b32.xlu0 %v958, 32
    %v1493 = vpop.permute.xlu0 %1492
    %1494 = vrot.lane.b32.xlu0 %v959, 32
    %v1495 = vpop.permute.xlu0 %1494
    %1496 = vrot.lane.b32.xlu0 %v960, 32
    %v1497 = vpop.permute.xlu0 %1496
    %1498 = vrot.lane.b32.xlu0 %v961, 32
    %v1499 = vpop.permute.xlu0 %1498
    %1508 = vrot.lane.b32.xlu0 %v1187, 96
    %v1509 = vpop.permute.xlu0 %1508
    %1510 = vrot.lane.b32.xlu0 %v1188, 96
    %v1511 = vpop.permute.xlu0 %1510
    %1512 = vrot.lane.b32.xlu0 %v1189, 96
    %v1513 = vpop.permute.xlu0 %1512
    %1514 = vrot.lane.b32.xlu0 %v1190, 96
    %v1515 = vpop.permute.xlu0 %1514
    %1516 = vrot.lane.b32.xlu0 %v1191, 96
    %v1517 = vpop.permute.xlu0 %1516
    %1518 = vrot.lane.b32.xlu0 %v1192, 96
    %v1519 = vpop.permute.xlu0 %1518
    %1520 = vrot.lane.b32.xlu0 %v1193, 96
    %v1521 = vpop.permute.xlu0 %1520
    %1522 = vrot.lane.b32.xlu0 %v1194, 96
    %v1523 = vpop.permute.xlu0 %1522
    %1524 = vrot.lane.b32.xlu0 %v1187, 64
    %v1525 = vpop.permute.xlu0 %1524
    %1526 = vrot.lane.b32.xlu0 %v1188, 64
    %v1527 = vpop.permute.xlu0 %1526
    %1528 = vrot.lane.b32.xlu0 %v1189, 64
    %v1529 = vpop.permute.xlu0 %1528
    %1530 = vrot.lane.b32.xlu0 %v1190, 64
    %v1531 = vpop.permute.xlu0 %1530
    %1532 = vrot.lane.b32.xlu0 %v1191, 64
    %v1533 = vpop.permute.xlu0 %1532
    %1534 = vrot.lane.b32.xlu0 %v1192, 64
    %v1535 = vpop.permute.xlu0 %1534
    %1536 = vrot.lane.b32.xlu0 %v1193, 64
    %v1537 = vpop.permute.xlu0 %1536
    %1538 = vrot.lane.b32.xlu0 %v1194, 64
    %v1539 = vpop.permute.xlu0 %1538
    %1540 = vrot.lane.b32.xlu0 %v1187, 32
    %v1541 = vpop.permute.xlu0 %1540
    %1542 = vrot.lane.b32.xlu0 %v1188, 32
    %v1543 = vpop.permute.xlu0 %1542
    %1544 = vrot.lane.b32.xlu0 %v1189, 32
    %v1545 = vpop.permute.xlu0 %1544
    %1546 = vrot.lane.b32.xlu0 %v1190, 32
    %v1547 = vpop.permute.xlu0 %1546
    %1548 = vrot.lane.b32.xlu0 %v1191, 32
    %v1549 = vpop.permute.xlu0 %1548
    %1550 = vrot.lane.b32.xlu0 %v1192, 32
    %v1551 = vpop.permute.xlu0 %1550
    %1552 = vrot.lane.b32.xlu0 %v1193, 32
    %v1553 = vpop.permute.xlu0 %1552
    %1554 = vrot.lane.b32.xlu0 %v1194, 32
    %v1555 = vpop.permute.xlu0 %1554
    %1564 = vrot.lane.b32.xlu0 %v1195, 96
    %v1565 = vpop.permute.xlu0 %1564
    %1566 = vrot.lane.b32.xlu0 %v1196, 96
    %v1567 = vpop.permute.xlu0 %1566
    %1568 = vrot.lane.b32.xlu0 %v1197, 96
    %v1569 = vpop.permute.xlu0 %1568
    %1570 = vrot.lane.b32.xlu0 %v1198, 96
    %v1571 = vpop.permute.xlu0 %1570
    %1572 = vrot.lane.b32.xlu0 %v1199, 96
    %v1573 = vpop.permute.xlu0 %1572
    %1574 = vrot.lane.b32.xlu0 %v1200, 96
    %v1575 = vpop.permute.xlu0 %1574
    %1576 = vrot.lane.b32.xlu0 %v1201, 96
    %v1577 = vpop.permute.xlu0 %1576
    %1578 = vrot.lane.b32.xlu0 %v1202, 96
    %v1579 = vpop.permute.xlu0 %1578
    %1580 = vrot.lane.b32.xlu0 %v1195, 64
    %v1581 = vpop.permute.xlu0 %1580
    %1582 = vrot.lane.b32.xlu0 %v1196, 64
    %v1583 = vpop.permute.xlu0 %1582
    %1584 = vrot.lane.b32.xlu0 %v1197, 64
    %v1585 = vpop.permute.xlu0 %1584
    %1586 = vrot.lane.b32.xlu0 %v1198, 64
    %v1587 = vpop.permute.xlu0 %1586
    %1588 = vrot.lane.b32.xlu0 %v1199, 64
    %v1589 = vpop.permute.xlu0 %1588
    %1590 = vrot.lane.b32.xlu0 %v1200, 64
    %v1591 = vpop.permute.xlu0 %1590
    %1592 = vrot.lane.b32.xlu0 %v1201, 64
    %v1593 = vpop.permute.xlu0 %1592
    %1594 = vrot.lane.b32.xlu0 %v1202, 64
    %v1595 = vpop.permute.xlu0 %1594
    %1596 = vrot.lane.b32.xlu0 %v1195, 32
    %v1597 = vpop.permute.xlu0 %1596
    %1598 = vrot.lane.b32.xlu0 %v1196, 32
    %v1599 = vpop.permute.xlu0 %1598
    %1600 = vrot.lane.b32.xlu0 %v1197, 32
    %v1601 = vpop.permute.xlu0 %1600
    %1602 = vrot.lane.b32.xlu0 %v1198, 32
    %v1603 = vpop.permute.xlu0 %1602
    %1604 = vrot.lane.b32.xlu0 %v1199, 32
    %v1605 = vpop.permute.xlu0 %1604
    %1606 = vrot.lane.b32.xlu0 %v1200, 32
    %v1607 = vpop.permute.xlu0 %1606
    %1608 = vrot.lane.b32.xlu0 %v1201, 32
    %v1609 = vpop.permute.xlu0 %1608
    %1610 = vrot.lane.b32.xlu0 %v1202, 32
    %v1611 = vpop.permute.xlu0 %1610
    %1620 = vrot.lane.b32.xlu0 %v1428, 96
    %v1621 = vpop.permute.xlu0 %1620
    %1622 = vrot.lane.b32.xlu0 %v1429, 96
    %v1623 = vpop.permute.xlu0 %1622
    %1624 = vrot.lane.b32.xlu0 %v1430, 96
    %v1625 = vpop.permute.xlu0 %1624
    %1626 = vrot.lane.b32.xlu0 %v1431, 96
    %v1627 = vpop.permute.xlu0 %1626
    %1628 = vrot.lane.b32.xlu0 %v1432, 96
    %v1629 = vpop.permute.xlu0 %1628
    %1630 = vrot.lane.b32.xlu0 %v1433, 96
    %v1631 = vpop.permute.xlu0 %1630
    %1632 = vrot.lane.b32.xlu0 %v1434, 96
    %v1633 = vpop.permute.xlu0 %1632
    %1634 = vrot.lane.b32.xlu0 %v1435, 96
    %v1635 = vpop.permute.xlu0 %1634
    %1644 = vrot.lane.b32.xlu0 %v1428, 64
    %v1645 = vpop.permute.xlu0 %1644
    %1646 = vrot.lane.b32.xlu0 %v1429, 64
    %v1647 = vpop.permute.xlu0 %1646
    %1648 = vrot.lane.b32.xlu0 %v1430, 64
    %v1649 = vpop.permute.xlu0 %1648
    %1650 = vrot.lane.b32.xlu0 %v1431, 64
    %v1651 = vpop.permute.xlu0 %1650
    %1652 = vrot.lane.b32.xlu0 %v1432, 64
    %v1653 = vpop.permute.xlu0 %1652
    %1654 = vrot.lane.b32.xlu0 %v1433, 64
    %v1655 = vpop.permute.xlu0 %1654
    %1656 = vrot.lane.b32.xlu0 %v1434, 64
    %v1657 = vpop.permute.xlu0 %1656
    %1658 = vrot.lane.b32.xlu0 %v1435, 64
    %v1659 = vpop.permute.xlu0 %1658
    %1668 = vrot.lane.b32.xlu0 %v1428, 32
    %v1669 = vpop.permute.xlu0 %1668
    %1670 = vrot.lane.b32.xlu0 %v1429, 32
    %v1671 = vpop.permute.xlu0 %1670
    %1672 = vrot.lane.b32.xlu0 %v1430, 32
    %v1673 = vpop.permute.xlu0 %1672
    %1674 = vrot.lane.b32.xlu0 %v1431, 32
    %v1675 = vpop.permute.xlu0 %1674
    %1676 = vrot.lane.b32.xlu0 %v1432, 32
    %v1677 = vpop.permute.xlu0 %1676
    %1678 = vrot.lane.b32.xlu0 %v1433, 32
    %v1679 = vpop.permute.xlu0 %1678
    %1680 = vrot.lane.b32.xlu0 %v1434, 32
    %v1681 = vpop.permute.xlu0 %1680
    %1682 = vrot.lane.b32.xlu0 %v1435, 32
    %v1683 = vpop.permute.xlu0 %1682
    %1700 = vrot.lane.b32.xlu0 %v1436, 96
    %v1701 = vpop.permute.xlu0 %1700
    %1702 = vrot.lane.b32.xlu0 %v1437, 96
    %v1703 = vpop.permute.xlu0 %1702
    %1704 = vrot.lane.b32.xlu0 %v1438, 96
    %v1705 = vpop.permute.xlu0 %1704
    %1706 = vrot.lane.b32.xlu0 %v1439, 96
    %v1707 = vpop.permute.xlu0 %1706
    %1708 = vrot.lane.b32.xlu0 %v1440, 96
    %v1709 = vpop.permute.xlu0 %1708
    %1710 = vrot.lane.b32.xlu0 %v1441, 96
    %v1711 = vpop.permute.xlu0 %1710
    %1712 = vrot.lane.b32.xlu0 %v1442, 96
    %v1713 = vpop.permute.xlu0 %1712
    %1714 = vrot.lane.b32.xlu0 %v1443, 96
    %v1715 = vpop.permute.xlu0 %1714
    %1724 = vrot.lane.b32.xlu0 %v1436, 64
    %v1725 = vpop.permute.xlu0 %1724
    %1726 = vrot.lane.b32.xlu0 %v1437, 64
    %v1727 = vpop.permute.xlu0 %1726
    %1728 = vrot.lane.b32.xlu0 %v1438, 64
    %v1729 = vpop.permute.xlu0 %1728
    %1730 = vrot.lane.b32.xlu0 %v1439, 64
    %v1731 = vpop.permute.xlu0 %1730
    %1732 = vrot.lane.b32.xlu0 %v1440, 64
    %v1733 = vpop.permute.xlu0 %1732
    %1734 = vrot.lane.b32.xlu0 %v1441, 64
    %v1735 = vpop.permute.xlu0 %1734
    %1736 = vrot.lane.b32.xlu0 %v1442, 64
    %v1737 = vpop.permute.xlu0 %1736
    %1738 = vrot.lane.b32.xlu0 %v1443, 64
    %v1739 = vpop.permute.xlu0 %1738
    %1748 = vrot.lane.b32.xlu0 %v1436, 32
    %v1749 = vpop.permute.xlu0 %1748
    %1750 = vrot.lane.b32.xlu0 %v1437, 32
    %v1751 = vpop.permute.xlu0 %1750
    %1752 = vrot.lane.b32.xlu0 %v1438, 32
    %v1753 = vpop.permute.xlu0 %1752
    %1754 = vrot.lane.b32.xlu0 %v1439, 32
    %v1755 = vpop.permute.xlu0 %1754
    %1756 = vrot.lane.b32.xlu0 %v1440, 32
    %v1757 = vpop.permute.xlu0 %1756
    %1758 = vrot.lane.b32.xlu0 %v1441, 32
    %v1759 = vpop.permute.xlu0 %1758
    %1760 = vrot.lane.b32.xlu0 %v1442, 32
    %v1761 = vpop.permute.xlu0 %1760
    %1762 = vrot.lane.b32.xlu0 %v1443, 32
    %v1763 = vpop.permute.xlu0 %1762
    %vm1772 = vcmask 261120
    %v1774 = vsel %vm1772, %v954, 0
    %v1777 = vsel %vm1772, %v955, 0
    %v1780 = vsel %vm1772, %v956, 0
    %v1783 = vsel %vm1772, %v957, 0
    %v1786 = vsel %vm1772, %v1187, 0
    %v1789 = vsel %vm1772, %v1188, 0
    %v1792 = vsel %vm1772, %v1189, 0
    %v1795 = vsel %vm1772, %v1190, 0
    %v1798 = vsel %vm1772, %v1191, 0
    %v1801 = vsel %vm1772, %v1192, 0
    %v1804 = vsel %vm1772, %v1193, 0
    %v1807 = vsel %vm1772, %v1194, 0
    %1809 = vmatprep.subr.bf16.mxu0 0
    %1810 = vmatpush1.bf16.xpose.msra.mxu0 %v1807
    %1811 = vmatprep.subr.bf16.mxu0 0
    %1812 = vmatpush1.bf16.xpose.msra.mxu0 %v1804
    %1813 = vmatprep.subr.bf16.mxu0 0
    %1814 = vmatpush1.bf16.xpose.msra.mxu0 %v1801
    %1815 = vmatprep.subr.bf16.mxu0 0
    %1816 = vmatpush1.bf16.xpose.msra.mxu0 %v1798
    %1817 = vmatprep.subr.bf16.mxu0 0
    %1818 = vmatpush1.bf16.xpose.msra.mxu0 %v1795
    %1819 = vmatprep.subr.bf16.mxu0 0
    %1820 = vmatpush1.bf16.xpose.msra.mxu0 %v1792
    %1821 = vmatprep.subr.bf16.mxu0 0
    %1822 = vmatpush1.bf16.xpose.msra.mxu0 %v1789
    %1823 = vmatprep.subr.bf16.mxu0 0
    %1824 = vmatpush1.bf16.xpose.msra.mxu0 %v1786
    %1825 = vmatprep.subr.bf16.mxu0 0
    %1826 = vmatpush2.bf16.xpose.msra.mxu0 0
    %1827 = vmatprep.subr.bf16.mxu0 0
    %1828 = vmatpush2.bf16.xpose.msra.mxu0 0
    %1829 = vmatprep.subr.bf16.mxu0 0
    %1830 = vmatpush2.bf16.xpose.msra.mxu0 0
    %1831 = vmatprep.subr.bf16.mxu0 0
    %1832 = vmatpush2.bf16.xpose.msra.mxu0 0
    %1833 = vmatprep.subr.bf16.mxu0 0
    %1834 = vmatpush2.bf16.xpose.msra.mxu0 0
    %1835 = vmatprep.subr.bf16.mxu0 0
    %1836 = vmatpush2.bf16.xpose.msra.mxu0 0
    %1837 = vmatprep.subr.bf16.mxu0 0
    %1838 = vmatpush2.bf16.xpose.msra.mxu0 0
    %1839 = vmatprep.subr.bf16.mxu0 0
    %1840 = vmatpush2.bf16.xpose.msra.mxu0 0
    %1841 = vmatprep.mubr.bf16.mxu0 0
    %1842 = vmatmul.mubr.bf16.gmra.mxu0 %v1774
    %v1843 = vpop.f32.mrf.mxu0
    %v1844 = vadd.f32 0.0, %v1843
    %v1845 = vpop.f32.mrf.mxu0
    %v1846 = vpop.f32.mrf.mxu0
    %v1847 = vadd.f32 0.0, %v1846
    %v1848 = vpop.f32.mrf.mxu0
    %1849 = vmatprep.mubr.bf16.mxu0 0
    %1850 = vmatmul.mubr.bf16.gmra.mxu0 %v1777
    %v1851 = vpop.f32.mrf.mxu0
    %v1852 = vadd.f32 0.0, %v1851
    %v1853 = vpop.f32.mrf.mxu0
    %v1854 = vpop.f32.mrf.mxu0
    %v1855 = vadd.f32 0.0, %v1854
    %v1856 = vpop.f32.mrf.mxu0
    %1857 = vmatprep.mubr.bf16.mxu0 0
    %1858 = vmatmul.mubr.bf16.gmra.mxu0 %v1780
    %v1859 = vpop.f32.mrf.mxu0
    %v1860 = vadd.f32 0.0, %v1859
    %v1861 = vpop.f32.mrf.mxu0
    %v1862 = vpop.f32.mrf.mxu0
    %v1863 = vadd.f32 0.0, %v1862
    %v1864 = vpop.f32.mrf.mxu0
    %1865 = vmatprep.mubr.bf16.mxu0 0
    %1866 = vmatmul.mubr.bf16.gmra.mxu0 %v1783
    %v1867 = vpop.f32.mrf.mxu0
    %v1868 = vadd.f32 0.0, %v1867
    %v1869 = vpop.f32.mrf.mxu0
    %v1870 = vpop.f32.mrf.mxu0
    %v1871 = vadd.f32 0.0, %v1870
    %v1872 = vpop.f32.mrf.mxu0
    %1873 = vdwg.mxu0
    %v1875 = vsel %vm1772, %v1449, 0
    %v1878 = vsel %vm1772, %v1451, 0
    %v1881 = vsel %vm1772, %v1453, 0
    %v1884 = vsel %vm1772, %v1455, 0
    %v1887 = vsel %vm1772, %v1509, 0
    %v1890 = vsel %vm1772, %v1511, 0
    %v1893 = vsel %vm1772, %v1513, 0
    %v1896 = vsel %vm1772, %v1515, 0
    %v1899 = vsel %vm1772, %v1517, 0
    %v1902 = vsel %vm1772, %v1519, 0
    %v1905 = vsel %vm1772, %v1521, 0
    %v1908 = vsel %vm1772, %v1523, 0
    %1910 = vmatprep.subr.bf16.mxu0 0
    %1911 = vmatpush1.bf16.xpose.msra.mxu0 %v1908
    %1912 = vmatprep.subr.bf16.mxu0 0
    %1913 = vmatpush1.bf16.xpose.msra.mxu0 %v1905
    %1914 = vmatprep.subr.bf16.mxu0 0
    %1915 = vmatpush1.bf16.xpose.msra.mxu0 %v1902
    %1916 = vmatprep.subr.bf16.mxu0 0
    %1917 = vmatpush1.bf16.xpose.msra.mxu0 %v1899
    %1918 = vmatprep.subr.bf16.mxu0 0
    %1919 = vmatpush1.bf16.xpose.msra.mxu0 %v1896
    %1920 = vmatprep.subr.bf16.mxu0 0
    %1921 = vmatpush1.bf16.xpose.msra.mxu0 %v1893
    %1922 = vmatprep.subr.bf16.mxu0 0
    %1923 = vmatpush1.bf16.xpose.msra.mxu0 %v1890
    %1924 = vmatprep.subr.bf16.mxu0 0
    %1925 = vmatpush1.bf16.xpose.msra.mxu0 %v1887
    %1926 = vmatprep.subr.bf16.mxu0 0
    %1927 = vmatpush2.bf16.xpose.msra.mxu0 0
    %1928 = vmatprep.subr.bf16.mxu0 0
    %1929 = vmatpush2.bf16.xpose.msra.mxu0 0
    %1930 = vmatprep.subr.bf16.mxu0 0
    %1931 = vmatpush2.bf16.xpose.msra.mxu0 0
    %1932 = vmatprep.subr.bf16.mxu0 0
    %1933 = vmatpush2.bf16.xpose.msra.mxu0 0
    %1934 = vmatprep.subr.bf16.mxu0 0
    %1935 = vmatpush2.bf16.xpose.msra.mxu0 0
    %1936 = vmatprep.subr.bf16.mxu0 0
    %1937 = vmatpush2.bf16.xpose.msra.mxu0 0
    %1938 = vmatprep.subr.bf16.mxu0 0
    %1939 = vmatpush2.bf16.xpose.msra.mxu0 0
    %1940 = vmatprep.subr.bf16.mxu0 0
    %1941 = vmatpush2.bf16.xpose.msra.mxu0 0
    %1942 = vmatprep.mubr.bf16.mxu0 0
    %1943 = vmatmul.mubr.bf16.gmra.mxu0 %v1875
    %v1944 = vpop.f32.mrf.mxu0
    %v1945 = vadd.f32 0.0, %v1944
    %v1946 = vpop.f32.mrf.mxu0
    %v1947 = vpop.f32.mrf.mxu0
    %v1948 = vadd.f32 0.0, %v1947
    %v1949 = vpop.f32.mrf.mxu0
    %1950 = vmatprep.mubr.bf16.mxu0 0
    %1951 = vmatmul.mubr.bf16.gmra.mxu0 %v1878
    %v1952 = vpop.f32.mrf.mxu0
    %v1953 = vadd.f32 0.0, %v1952
    %v1954 = vpop.f32.mrf.mxu0
    %v1955 = vpop.f32.mrf.mxu0
    %v1956 = vadd.f32 0.0, %v1955
    %v1957 = vpop.f32.mrf.mxu0
    %1958 = vmatprep.mubr.bf16.mxu0 0
    %1959 = vmatmul.mubr.bf16.gmra.mxu0 %v1881
    %v1960 = vpop.f32.mrf.mxu0
    %v1961 = vadd.f32 0.0, %v1960
    %v1962 = vpop.f32.mrf.mxu0
    %v1963 = vpop.f32.mrf.mxu0
    %v1964 = vadd.f32 0.0, %v1963
    %v1965 = vpop.f32.mrf.mxu0
    %1966 = vmatprep.mubr.bf16.mxu0 0
    %1967 = vmatmul.mubr.bf16.gmra.mxu0 %v1884
    %v1968 = vpop.f32.mrf.mxu0
    %v1969 = vadd.f32 0.0, %v1968
    %v1970 = vpop.f32.mrf.mxu0
    %v1971 = vpop.f32.mrf.mxu0
    %v1972 = vadd.f32 0.0, %v1971
    %v1973 = vpop.f32.mrf.mxu0
    %1974 = vdwg.mxu0
    %v1976 = vsel %vm1772, %v1457, 0
    %v1979 = vsel %vm1772, %v1459, 0
    %v1982 = vsel %vm1772, %v1461, 0
    %v1985 = vsel %vm1772, %v1463, 0
    %v1988 = vsel %vm1772, %v1525, 0
    %v1991 = vsel %vm1772, %v1527, 0
    %v1994 = vsel %vm1772, %v1529, 0
    %v1997 = vsel %vm1772, %v1531, 0
    %v2000 = vsel %vm1772, %v1533, 0
    %v2003 = vsel %vm1772, %v1535, 0
    %v2006 = vsel %vm1772, %v1537, 0
    %v2009 = vsel %vm1772, %v1539, 0
    %2011 = vmatprep.subr.bf16.mxu0 0
    %2012 = vmatpush1.bf16.xpose.msra.mxu0 %v2009
    %2013 = vmatprep.subr.bf16.mxu0 0
    %2014 = vmatpush1.bf16.xpose.msra.mxu0 %v2006
    %2015 = vmatprep.subr.bf16.mxu0 0
    %2016 = vmatpush1.bf16.xpose.msra.mxu0 %v2003
    %2017 = vmatprep.subr.bf16.mxu0 0
    %2018 = vmatpush1.bf16.xpose.msra.mxu0 %v2000
    %2019 = vmatprep.subr.bf16.mxu0 0
    %2020 = vmatpush1.bf16.xpose.msra.mxu0 %v1997
    %2021 = vmatprep.subr.bf16.mxu0 0
    %2022 = vmatpush1.bf16.xpose.msra.mxu0 %v1994
    %2023 = vmatprep.subr.bf16.mxu0 0
    %2024 = vmatpush1.bf16.xpose.msra.mxu0 %v1991
    %2025 = vmatprep.subr.bf16.mxu0 0
    %2026 = vmatpush1.bf16.xpose.msra.mxu0 %v1988
    %2027 = vmatprep.subr.bf16.mxu0 0
    %2028 = vmatpush2.bf16.xpose.msra.mxu0 0
    %2029 = vmatprep.subr.bf16.mxu0 0
    %2030 = vmatpush2.bf16.xpose.msra.mxu0 0
    %2031 = vmatprep.subr.bf16.mxu0 0
    %2032 = vmatpush2.bf16.xpose.msra.mxu0 0
    %2033 = vmatprep.subr.bf16.mxu0 0
    %2034 = vmatpush2.bf16.xpose.msra.mxu0 0
    %2035 = vmatprep.subr.bf16.mxu0 0
    %2036 = vmatpush2.bf16.xpose.msra.mxu0 0
    %2037 = vmatprep.subr.bf16.mxu0 0
    %2038 = vmatpush2.bf16.xpose.msra.mxu0 0
    %2039 = vmatprep.subr.bf16.mxu0 0
    %2040 = vmatpush2.bf16.xpose.msra.mxu0 0
    %2041 = vmatprep.subr.bf16.mxu0 0
    %2042 = vmatpush2.bf16.xpose.msra.mxu0 0
    %2043 = vmatprep.mubr.bf16.mxu0 0
    %2044 = vmatmul.mubr.bf16.gmra.mxu0 %v1976
    %v2045 = vpop.f32.mrf.mxu0
    %v2046 = vadd.f32 0.0, %v2045
    %v2047 = vpop.f32.mrf.mxu0
    %v2048 = vpop.f32.mrf.mxu0
    %v2049 = vadd.f32 0.0, %v2048
    %v2050 = vpop.f32.mrf.mxu0
    %2051 = vmatprep.mubr.bf16.mxu0 0
    %2052 = vmatmul.mubr.bf16.gmra.mxu0 %v1979
    %v2053 = vpop.f32.mrf.mxu0
    %v2054 = vadd.f32 0.0, %v2053
    %v2055 = vpop.f32.mrf.mxu0
    %v2056 = vpop.f32.mrf.mxu0
    %v2057 = vadd.f32 0.0, %v2056
    %v2058 = vpop.f32.mrf.mxu0
    %2059 = vmatprep.mubr.bf16.mxu0 0
    %2060 = vmatmul.mubr.bf16.gmra.mxu0 %v1982
    %v2061 = vpop.f32.mrf.mxu0
    %v2062 = vadd.f32 0.0, %v2061
    %v2063 = vpop.f32.mrf.mxu0
    %v2064 = vpop.f32.mrf.mxu0
    %v2065 = vadd.f32 0.0, %v2064
    %v2066 = vpop.f32.mrf.mxu0
    %2067 = vmatprep.mubr.bf16.mxu0 0
    %2068 = vmatmul.mubr.bf16.gmra.mxu0 %v1985
    %v2069 = vpop.f32.mrf.mxu0
    %v2070 = vadd.f32 0.0, %v2069
    %v2071 = vpop.f32.mrf.mxu0
    %v2072 = vpop.f32.mrf.mxu0
    %v2073 = vadd.f32 0.0, %v2072
    %v2074 = vpop.f32.mrf.mxu0
    %2075 = vdwg.mxu0
    %v2077 = vsel %vm1772, %v1465, 0
    %v2080 = vsel %vm1772, %v1467, 0
    %v2083 = vsel %vm1772, %v1469, 0
    %v2086 = vsel %vm1772, %v1471, 0
    %v2089 = vsel %vm1772, %v1541, 0
    %v2092 = vsel %vm1772, %v1543, 0
    %v2095 = vsel %vm1772, %v1545, 0
    %v2098 = vsel %vm1772, %v1547, 0
    %v2101 = vsel %vm1772, %v1549, 0
    %v2104 = vsel %vm1772, %v1551, 0
    %v2107 = vsel %vm1772, %v1553, 0
    %v2110 = vsel %vm1772, %v1555, 0
    %2112 = vmatprep.subr.bf16.mxu0 0
    %2113 = vmatpush1.bf16.xpose.msra.mxu0 %v2110
    %2114 = vmatprep.subr.bf16.mxu0 0
    %2115 = vmatpush1.bf16.xpose.msra.mxu0 %v2107
    %2116 = vmatprep.subr.bf16.mxu0 0
    %2117 = vmatpush1.bf16.xpose.msra.mxu0 %v2104
    %2118 = vmatprep.subr.bf16.mxu0 0
    %2119 = vmatpush1.bf16.xpose.msra.mxu0 %v2101
    %2120 = vmatprep.subr.bf16.mxu0 0
    %2121 = vmatpush1.bf16.xpose.msra.mxu0 %v2098
    %2122 = vmatprep.subr.bf16.mxu0 0
    %2123 = vmatpush1.bf16.xpose.msra.mxu0 %v2095
    %2124 = vmatprep.subr.bf16.mxu0 0
    %2125 = vmatpush1.bf16.xpose.msra.mxu0 %v2092
    %2126 = vmatprep.subr.bf16.mxu0 0
    %2127 = vmatpush1.bf16.xpose.msra.mxu0 %v2089
    %2128 = vmatprep.subr.bf16.mxu0 0
    %2129 = vmatpush2.bf16.xpose.msra.mxu0 0
    %2130 = vmatprep.subr.bf16.mxu0 0
    %2131 = vmatpush2.bf16.xpose.msra.mxu0 0
    %2132 = vmatprep.subr.bf16.mxu0 0
    %2133 = vmatpush2.bf16.xpose.msra.mxu0 0
    %2134 = vmatprep.subr.bf16.mxu0 0
    %2135 = vmatpush2.bf16.xpose.msra.mxu0 0
    %2136 = vmatprep.subr.bf16.mxu0 0
    %2137 = vmatpush2.bf16.xpose.msra.mxu0 0
    %2138 = vmatprep.subr.bf16.mxu0 0
    %2139 = vmatpush2.bf16.xpose.msra.mxu0 0
    %2140 = vmatprep.subr.bf16.mxu0 0
    %2141 = vmatpush2.bf16.xpose.msra.mxu0 0
    %2142 = vmatprep.subr.bf16.mxu0 0
    %2143 = vmatpush2.bf16.xpose.msra.mxu0 0
    %2144 = vmatprep.mubr.bf16.mxu0 0
    %2145 = vmatmul.mubr.bf16.gmra.mxu0 %v2077
    %v2146 = vpop.f32.mrf.mxu0
    %v2147 = vadd.f32 0.0, %v2146
    %v2148 = vpop.f32.mrf.mxu0
    %v2149 = vpop.f32.mrf.mxu0
    %v2150 = vadd.f32 0.0, %v2149
    %v2151 = vpop.f32.mrf.mxu0
    %2152 = vmatprep.mubr.bf16.mxu0 0
    %2153 = vmatmul.mubr.bf16.gmra.mxu0 %v2080
    %v2154 = vpop.f32.mrf.mxu0
    %v2155 = vadd.f32 0.0, %v2154
    %v2156 = vpop.f32.mrf.mxu0
    %v2157 = vpop.f32.mrf.mxu0
    %v2158 = vadd.f32 0.0, %v2157
    %v2159 = vpop.f32.mrf.mxu0
    %2160 = vmatprep.mubr.bf16.mxu0 0
    %2161 = vmatmul.mubr.bf16.gmra.mxu0 %v2083
    %v2162 = vpop.f32.mrf.mxu0
    %v2163 = vadd.f32 0.0, %v2162
    %v2164 = vpop.f32.mrf.mxu0
    %v2165 = vpop.f32.mrf.mxu0
    %v2166 = vadd.f32 0.0, %v2165
    %v2167 = vpop.f32.mrf.mxu0
    %2168 = vmatprep.mubr.bf16.mxu0 0
    %2169 = vmatmul.mubr.bf16.gmra.mxu0 %v2086
    %v2170 = vpop.f32.mrf.mxu0
    %v2171 = vadd.f32 0.0, %v2170
    %v2172 = vpop.f32.mrf.mxu0
    %v2173 = vpop.f32.mrf.mxu0
    %v2174 = vadd.f32 0.0, %v2173
    %v2175 = vpop.f32.mrf.mxu0
    %2176 = vdwg.mxu0
    %v2178 = vsel %vm1772, %v958, 0
    %v2181 = vsel %vm1772, %v959, 0
    %v2184 = vsel %vm1772, %v960, 0
    %v2187 = vsel %vm1772, %v961, 0
    %v2190 = vsel %vm1772, %v1195, 0
    %v2193 = vsel %vm1772, %v1196, 0
    %v2196 = vsel %vm1772, %v1197, 0
    %v2199 = vsel %vm1772, %v1198, 0
    %v2202 = vsel %vm1772, %v1199, 0
    %v2205 = vsel %vm1772, %v1200, 0
    %v2208 = vsel %vm1772, %v1201, 0
    %v2211 = vsel %vm1772, %v1202, 0
    %2213 = vmatprep.subr.bf16.mxu0 0
    %2214 = vmatpush1.bf16.xpose.msra.mxu0 %v2211
    %2215 = vmatprep.subr.bf16.mxu0 0
    %2216 = vmatpush1.bf16.xpose.msra.mxu0 %v2208
    %2217 = vmatprep.subr.bf16.mxu0 0
    %2218 = vmatpush1.bf16.xpose.msra.mxu0 %v2205
    %2219 = vmatprep.subr.bf16.mxu0 0
    %2220 = vmatpush1.bf16.xpose.msra.mxu0 %v2202
    %2221 = vmatprep.subr.bf16.mxu0 0
    %2222 = vmatpush1.bf16.xpose.msra.mxu0 %v2199
    %2223 = vmatprep.subr.bf16.mxu0 0
    %2224 = vmatpush1.bf16.xpose.msra.mxu0 %v2196
    %2225 = vmatprep.subr.bf16.mxu0 0
    %2226 = vmatpush1.bf16.xpose.msra.mxu0 %v2193
    %2227 = vmatprep.subr.bf16.mxu0 0
    %2228 = vmatpush1.bf16.xpose.msra.mxu0 %v2190
    %2229 = vmatprep.subr.bf16.mxu0 0
    %2230 = vmatpush2.bf16.xpose.msra.mxu0 0
    %2231 = vmatprep.subr.bf16.mxu0 0
    %2232 = vmatpush2.bf16.xpose.msra.mxu0 0
    %2233 = vmatprep.subr.bf16.mxu0 0
    %2234 = vmatpush2.bf16.xpose.msra.mxu0 0
    %2235 = vmatprep.subr.bf16.mxu0 0
    %2236 = vmatpush2.bf16.xpose.msra.mxu0 0
    %2237 = vmatprep.subr.bf16.mxu0 0
    %2238 = vmatpush2.bf16.xpose.msra.mxu0 0
    %2239 = vmatprep.subr.bf16.mxu0 0
    %2240 = vmatpush2.bf16.xpose.msra.mxu0 0
    %2241 = vmatprep.subr.bf16.mxu0 0
    %2242 = vmatpush2.bf16.xpose.msra.mxu0 0
    %2243 = vmatprep.subr.bf16.mxu0 0
    %2244 = vmatpush2.bf16.xpose.msra.mxu0 0
    %2245 = vmatprep.mubr.bf16.mxu0 0
    %2246 = vmatmul.mubr.bf16.gmra.mxu0 %v2178
    %v2247 = vpop.f32.mrf.mxu0
    %v2248 = vadd.f32 0.0, %v2247
    %v2249 = vpop.f32.mrf.mxu0
    %v2250 = vpop.f32.mrf.mxu0
    %v2251 = vadd.f32 0.0, %v2250
    %v2252 = vpop.f32.mrf.mxu0
    %2253 = vmatprep.mubr.bf16.mxu0 0
    %2254 = vmatmul.mubr.bf16.gmra.mxu0 %v2181
    %v2255 = vpop.f32.mrf.mxu0
    %v2256 = vadd.f32 0.0, %v2255
    %v2257 = vpop.f32.mrf.mxu0
    %v2258 = vpop.f32.mrf.mxu0
    %v2259 = vadd.f32 0.0, %v2258
    %v2260 = vpop.f32.mrf.mxu0
    %2261 = vmatprep.mubr.bf16.mxu0 0
    %2262 = vmatmul.mubr.bf16.gmra.mxu0 %v2184
    %v2263 = vpop.f32.mrf.mxu0
    %v2264 = vadd.f32 0.0, %v2263
    %v2265 = vpop.f32.mrf.mxu0
    %v2266 = vpop.f32.mrf.mxu0
    %v2267 = vadd.f32 0.0, %v2266
    %v2268 = vpop.f32.mrf.mxu0
    %2269 = vmatprep.mubr.bf16.mxu0 0
    %2270 = vmatmul.mubr.bf16.gmra.mxu0 %v2187
    %v2271 = vpop.f32.mrf.mxu0
    %v2272 = vadd.f32 0.0, %v2271
    %v2273 = vpop.f32.mrf.mxu0
    %v2274 = vpop.f32.mrf.mxu0
    %v2275 = vadd.f32 0.0, %v2274
    %v2276 = vpop.f32.mrf.mxu0
    %2277 = vdwg.mxu0
    %v2279 = vsel %vm1772, %v1477, 0
    %v2282 = vsel %vm1772, %v1479, 0
    %v2285 = vsel %vm1772, %v1481, 0
    %v2288 = vsel %vm1772, %v1483, 0
    %v2291 = vsel %vm1772, %v1565, 0
    %v2294 = vsel %vm1772, %v1567, 0
    %v2297 = vsel %vm1772, %v1569, 0
    %v2300 = vsel %vm1772, %v1571, 0
    %v2303 = vsel %vm1772, %v1573, 0
    %v2306 = vsel %vm1772, %v1575, 0
    %v2309 = vsel %vm1772, %v1577, 0
    %v2312 = vsel %vm1772, %v1579, 0
    %2314 = vmatprep.subr.bf16.mxu0 0
    %2315 = vmatpush1.bf16.xpose.msra.mxu0 %v2312
    %2316 = vmatprep.subr.bf16.mxu0 0
    %2317 = vmatpush1.bf16.xpose.msra.mxu0 %v2309
    %2318 = vmatprep.subr.bf16.mxu0 0
    %2319 = vmatpush1.bf16.xpose.msra.mxu0 %v2306
    %2320 = vmatprep.subr.bf16.mxu0 0
    %2321 = vmatpush1.bf16.xpose.msra.mxu0 %v2303
    %2322 = vmatprep.subr.bf16.mxu0 0
    %2323 = vmatpush1.bf16.xpose.msra.mxu0 %v2300
    %2324 = vmatprep.subr.bf16.mxu0 0
    %2325 = vmatpush1.bf16.xpose.msra.mxu0 %v2297
    %2326 = vmatprep.subr.bf16.mxu0 0
    %2327 = vmatpush1.bf16.xpose.msra.mxu0 %v2294
    %2328 = vmatprep.subr.bf16.mxu0 0
    %2329 = vmatpush1.bf16.xpose.msra.mxu0 %v2291
    %2330 = vmatprep.subr.bf16.mxu0 0
    %2331 = vmatpush2.bf16.xpose.msra.mxu0 0
    %2332 = vmatprep.subr.bf16.mxu0 0
    %2333 = vmatpush2.bf16.xpose.msra.mxu0 0
    %2334 = vmatprep.subr.bf16.mxu0 0
    %2335 = vmatpush2.bf16.xpose.msra.mxu0 0
    %2336 = vmatprep.subr.bf16.mxu0 0
    %2337 = vmatpush2.bf16.xpose.msra.mxu0 0
    %2338 = vmatprep.subr.bf16.mxu0 0
    %2339 = vmatpush2.bf16.xpose.msra.mxu0 0
    %2340 = vmatprep.subr.bf16.mxu0 0
    %2341 = vmatpush2.bf16.xpose.msra.mxu0 0
    %2342 = vmatprep.subr.bf16.mxu0 0
    %2343 = vmatpush2.bf16.xpose.msra.mxu0 0
    %2344 = vmatprep.subr.bf16.mxu0 0
    %2345 = vmatpush2.bf16.xpose.msra.mxu0 0
    %2346 = vmatprep.mubr.bf16.mxu0 0
    %2347 = vmatmul.mubr.bf16.gmra.mxu0 %v2279
    %v2348 = vpop.f32.mrf.mxu0
    %v2349 = vadd.f32 0.0, %v2348
    %v2350 = vpop.f32.mrf.mxu0
    %v2351 = vpop.f32.mrf.mxu0
    %v2352 = vadd.f32 0.0, %v2351
    %v2353 = vpop.f32.mrf.mxu0
    %2354 = vmatprep.mubr.bf16.mxu0 0
    %2355 = vmatmul.mubr.bf16.gmra.mxu0 %v2282
    %v2356 = vpop.f32.mrf.mxu0
    %v2357 = vadd.f32 0.0, %v2356
    %v2358 = vpop.f32.mrf.mxu0
    %v2359 = vpop.f32.mrf.mxu0
    %v2360 = vadd.f32 0.0, %v2359
    %v2361 = vpop.f32.mrf.mxu0
    %2362 = vmatprep.mubr.bf16.mxu0 0
    %2363 = vmatmul.mubr.bf16.gmra.mxu0 %v2285
    %v2364 = vpop.f32.mrf.mxu0
    %v2365 = vadd.f32 0.0, %v2364
    %v2366 = vpop.f32.mrf.mxu0
    %v2367 = vpop.f32.mrf.mxu0
    %v2368 = vadd.f32 0.0, %v2367
    %v2369 = vpop.f32.mrf.mxu0
    %2370 = vmatprep.mubr.bf16.mxu0 0
    %2371 = vmatmul.mubr.bf16.gmra.mxu0 %v2288
    %v2372 = vpop.f32.mrf.mxu0
    %v2373 = vadd.f32 0.0, %v2372
    %v2374 = vpop.f32.mrf.mxu0
    %v2375 = vpop.f32.mrf.mxu0
    %v2376 = vadd.f32 0.0, %v2375
    %v2377 = vpop.f32.mrf.mxu0
    %2378 = vdwg.mxu0
    %v2380 = vsel %vm1772, %v1485, 0
    %v2383 = vsel %vm1772, %v1487, 0
    %v2386 = vsel %vm1772, %v1489, 0
    %v2389 = vsel %vm1772, %v1491, 0
    %v2392 = vsel %vm1772, %v1581, 0
    %v2395 = vsel %vm1772, %v1583, 0
    %v2398 = vsel %vm1772, %v1585, 0
    %v2401 = vsel %vm1772, %v1587, 0
    %v2404 = vsel %vm1772, %v1589, 0
    %v2407 = vsel %vm1772, %v1591, 0
    %v2410 = vsel %vm1772, %v1593, 0
    %v2413 = vsel %vm1772, %v1595, 0
    %2415 = vmatprep.subr.bf16.mxu0 0
    %2416 = vmatpush1.bf16.xpose.msra.mxu0 %v2413
    %2417 = vmatprep.subr.bf16.mxu0 0
    %2418 = vmatpush1.bf16.xpose.msra.mxu0 %v2410
    %2419 = vmatprep.subr.bf16.mxu0 0
    %2420 = vmatpush1.bf16.xpose.msra.mxu0 %v2407
    %2421 = vmatprep.subr.bf16.mxu0 0
    %2422 = vmatpush1.bf16.xpose.msra.mxu0 %v2404
    %2423 = vmatprep.subr.bf16.mxu0 0
    %2424 = vmatpush1.bf16.xpose.msra.mxu0 %v2401
    %2425 = vmatprep.subr.bf16.mxu0 0
    %2426 = vmatpush1.bf16.xpose.msra.mxu0 %v2398
    %2427 = vmatprep.subr.bf16.mxu0 0
    %2428 = vmatpush1.bf16.xpose.msra.mxu0 %v2395
    %2429 = vmatprep.subr.bf16.mxu0 0
    %2430 = vmatpush1.bf16.xpose.msra.mxu0 %v2392
    %2431 = vmatprep.subr.bf16.mxu0 0
    %2432 = vmatpush2.bf16.xpose.msra.mxu0 0
    %2433 = vmatprep.subr.bf16.mxu0 0
    %2434 = vmatpush2.bf16.xpose.msra.mxu0 0
    %2435 = vmatprep.subr.bf16.mxu0 0
    %2436 = vmatpush2.bf16.xpose.msra.mxu0 0
    %2437 = vmatprep.subr.bf16.mxu0 0
    %2438 = vmatpush2.bf16.xpose.msra.mxu0 0
    %2439 = vmatprep.subr.bf16.mxu0 0
    %2440 = vmatpush2.bf16.xpose.msra.mxu0 0
    %2441 = vmatprep.subr.bf16.mxu0 0
    %2442 = vmatpush2.bf16.xpose.msra.mxu0 0
    %2443 = vmatprep.subr.bf16.mxu0 0
    %2444 = vmatpush2.bf16.xpose.msra.mxu0 0
    %2445 = vmatprep.subr.bf16.mxu0 0
    %2446 = vmatpush2.bf16.xpose.msra.mxu0 0
    %2447 = vmatprep.mubr.bf16.mxu0 0
    %2448 = vmatmul.mubr.bf16.gmra.mxu0 %v2380
    %v2449 = vpop.f32.mrf.mxu0
    %v2450 = vadd.f32 0.0, %v2449
    %v2451 = vpop.f32.mrf.mxu0
    %v2452 = vpop.f32.mrf.mxu0
    %v2453 = vadd.f32 0.0, %v2452
    %v2454 = vpop.f32.mrf.mxu0
    %2455 = vmatprep.mubr.bf16.mxu0 0
    %2456 = vmatmul.mubr.bf16.gmra.mxu0 %v2383
    %v2457 = vpop.f32.mrf.mxu0
    %v2458 = vadd.f32 0.0, %v2457
    %v2459 = vpop.f32.mrf.mxu0
    %v2460 = vpop.f32.mrf.mxu0
    %v2461 = vadd.f32 0.0, %v2460
    %v2462 = vpop.f32.mrf.mxu0
    %2463 = vmatprep.mubr.bf16.mxu0 0
    %2464 = vmatmul.mubr.bf16.gmra.mxu0 %v2386
    %v2465 = vpop.f32.mrf.mxu0
    %v2466 = vadd.f32 0.0, %v2465
    %v2467 = vpop.f32.mrf.mxu0
    %v2468 = vpop.f32.mrf.mxu0
    %v2469 = vadd.f32 0.0, %v2468
    %v2470 = vpop.f32.mrf.mxu0
    %2471 = vmatprep.mubr.bf16.mxu0 0
    %2472 = vmatmul.mubr.bf16.gmra.mxu0 %v2389
    %v2473 = vpop.f32.mrf.mxu0
    %v2474 = vadd.f32 0.0, %v2473
    %v2475 = vpop.f32.mrf.mxu0
    %v2476 = vpop.f32.mrf.mxu0
    %v2477 = vadd.f32 0.0, %v2476
    %v2478 = vpop.f32.mrf.mxu0
    %2479 = vdwg.mxu0
    %v2481 = vsel %vm1772, %v1493, 0
    %v2484 = vsel %vm1772, %v1495, 0
    %v2487 = vsel %vm1772, %v1497, 0
    %v2490 = vsel %vm1772, %v1499, 0
    %v2493 = vsel %vm1772, %v1597, 0
    %v2496 = vsel %vm1772, %v1599, 0
    %v2499 = vsel %vm1772, %v1601, 0
    %v2502 = vsel %vm1772, %v1603, 0
    %v2505 = vsel %vm1772, %v1605, 0
    %v2508 = vsel %vm1772, %v1607, 0
    %v2511 = vsel %vm1772, %v1609, 0
    %v2514 = vsel %vm1772, %v1611, 0
    %2516 = vmatprep.subr.bf16.mxu0 0
    %2517 = vmatpush1.bf16.xpose.msra.mxu0 %v2514
    %2518 = vmatprep.subr.bf16.mxu0 0
    %2519 = vmatpush1.bf16.xpose.msra.mxu0 %v2511
    %2520 = vmatprep.subr.bf16.mxu0 0
    %2521 = vmatpush1.bf16.xpose.msra.mxu0 %v2508
    %2522 = vmatprep.subr.bf16.mxu0 0
    %2523 = vmatpush1.bf16.xpose.msra.mxu0 %v2505
    %2524 = vmatprep.subr.bf16.mxu0 0
    %2525 = vmatpush1.bf16.xpose.msra.mxu0 %v2502
    %2526 = vmatprep.subr.bf16.mxu0 0
    %2527 = vmatpush1.bf16.xpose.msra.mxu0 %v2499
    %2528 = vmatprep.subr.bf16.mxu0 0
    %2529 = vmatpush1.bf16.xpose.msra.mxu0 %v2496
    %2530 = vmatprep.subr.bf16.mxu0 0
    %2531 = vmatpush1.bf16.xpose.msra.mxu0 %v2493
    %2532 = vmatprep.subr.bf16.mxu0 0
    %2533 = vmatpush2.bf16.xpose.msra.mxu0 0
    %2534 = vmatprep.subr.bf16.mxu0 0
    %2535 = vmatpush2.bf16.xpose.msra.mxu0 0
    %2536 = vmatprep.subr.bf16.mxu0 0
    %2537 = vmatpush2.bf16.xpose.msra.mxu0 0
    %2538 = vmatprep.subr.bf16.mxu0 0
    %2539 = vmatpush2.bf16.xpose.msra.mxu0 0
    %2540 = vmatprep.subr.bf16.mxu0 0
    %2541 = vmatpush2.bf16.xpose.msra.mxu0 0
    %2542 = vmatprep.subr.bf16.mxu0 0
    %2543 = vmatpush2.bf16.xpose.msra.mxu0 0
    %2544 = vmatprep.subr.bf16.mxu0 0
    %2545 = vmatpush2.bf16.xpose.msra.mxu0 0
    %2546 = vmatprep.subr.bf16.mxu0 0
    %2547 = vmatpush2.bf16.xpose.msra.mxu0 0
    %2548 = vmatprep.mubr.bf16.mxu0 0
    %2549 = vmatmul.mubr.bf16.gmra.mxu0 %v2481
    %v2550 = vpop.f32.mrf.mxu0
    %v2551 = vadd.f32 0.0, %v2550
    %v2552 = vpop.f32.mrf.mxu0
    %v2553 = vpop.f32.mrf.mxu0
    %v2554 = vadd.f32 0.0, %v2553
    %v2555 = vpop.f32.mrf.mxu0
    %2556 = vmatprep.mubr.bf16.mxu0 0
    %2557 = vmatmul.mubr.bf16.gmra.mxu0 %v2484
    %v2558 = vpop.f32.mrf.mxu0
    %v2559 = vadd.f32 0.0, %v2558
    %v2560 = vpop.f32.mrf.mxu0
    %v2561 = vpop.f32.mrf.mxu0
    %v2562 = vadd.f32 0.0, %v2561
    %v2563 = vpop.f32.mrf.mxu0
    %2564 = vmatprep.mubr.bf16.mxu0 0
    %2565 = vmatmul.mubr.bf16.gmra.mxu0 %v2487
    %v2566 = vpop.f32.mrf.mxu0
    %v2567 = vadd.f32 0.0, %v2566
    %v2568 = vpop.f32.mrf.mxu0
    %v2569 = vpop.f32.mrf.mxu0
    %v2570 = vadd.f32 0.0, %v2569
    %v2571 = vpop.f32.mrf.mxu0
    %2572 = vmatprep.mubr.bf16.mxu0 0
    %2573 = vmatmul.mubr.bf16.gmra.mxu0 %v2490
    %v2574 = vpop.f32.mrf.mxu0
    %v2575 = vadd.f32 0.0, %v2574
    %v2576 = vpop.f32.mrf.mxu0
    %v2577 = vpop.f32.mrf.mxu0
    %v2578 = vadd.f32 0.0, %v2577
    %v2579 = vpop.f32.mrf.mxu0
    %2580 = vdwg.mxu0
    %v2581 = vlaneseq
    %v2582 = vand.u32 %v2581, 127
    %vm2583 = vcmp.lt.s32.totalorder %v2582, 80
    %v2584 = vsel %vm2583, 1, 0
    %vm2585 = vcmp.eq.s32.totalorder %v2584, 1
    %v2586 = vsel %vm2585, %v1844, -1e+30
    %v2587 = vsel %vm2585, %v1847, -1e+30
    %v2588 = vsel %vm2585, %v1852, -1e+30
    %v2589 = vsel %vm2585, %v1855, -1e+30
    %v2590 = vsel %vm2585, %v1860, -1e+30
    %v2591 = vsel %vm2585, %v1863, -1e+30
    %v2592 = vsel %vm2585, %v1868, -1e+30
    %v2593 = vsel %vm2585, %v1871, -1e+30
    %v2594 = vsel %vm2585, %v1945, -1e+30
    %v2595 = vsel %vm2585, %v1948, -1e+30
    %v2596 = vsel %vm2585, %v1953, -1e+30
    %v2597 = vsel %vm2585, %v1956, -1e+30
    %v2598 = vsel %vm2585, %v1961, -1e+30
    %v2599 = vsel %vm2585, %v1964, -1e+30
    %v2600 = vsel %vm2585, %v1969, -1e+30
    %v2601 = vsel %vm2585, %v1972, -1e+30
    %v2602 = vsel %vm2585, %v2046, -1e+30
    %v2603 = vsel %vm2585, %v2049, -1e+30
    %v2604 = vsel %vm2585, %v2054, -1e+30
    %v2605 = vsel %vm2585, %v2057, -1e+30
    %v2606 = vsel %vm2585, %v2062, -1e+30
    %v2607 = vsel %vm2585, %v2065, -1e+30
    %v2608 = vsel %vm2585, %v2070, -1e+30
    %v2609 = vsel %vm2585, %v2073, -1e+30
    %v2610 = vsel %vm2585, %v2147, -1e+30
    %v2611 = vsel %vm2585, %v2150, -1e+30
    %v2612 = vsel %vm2585, %v2155, -1e+30
    %v2613 = vsel %vm2585, %v2158, -1e+30
    %v2614 = vsel %vm2585, %v2163, -1e+30
    %v2615 = vsel %vm2585, %v2166, -1e+30
    %v2616 = vsel %vm2585, %v2171, -1e+30
    %v2617 = vsel %vm2585, %v2174, -1e+30
    %v2618 = vsel %vm2585, %v2248, -1e+30
    %v2619 = vsel %vm2585, %v2251, -1e+30
    %v2620 = vsel %vm2585, %v2256, -1e+30
    %v2621 = vsel %vm2585, %v2259, -1e+30
    %v2622 = vsel %vm2585, %v2264, -1e+30
    %v2623 = vsel %vm2585, %v2267, -1e+30
    %v2624 = vsel %vm2585, %v2272, -1e+30
    %v2625 = vsel %vm2585, %v2275, -1e+30
    %v2626 = vsel %vm2585, %v2349, -1e+30
    %v2627 = vsel %vm2585, %v2352, -1e+30
    %v2628 = vsel %vm2585, %v2357, -1e+30
    %v2629 = vsel %vm2585, %v2360, -1e+30
    %v2630 = vsel %vm2585, %v2365, -1e+30
    %v2631 = vsel %vm2585, %v2368, -1e+30
    %v2632 = vsel %vm2585, %v2373, -1e+30
    %v2633 = vsel %vm2585, %v2376, -1e+30
    %v2634 = vsel %vm2585, %v2450, -1e+30
    %v2635 = vsel %vm2585, %v2453, -1e+30
    %v2636 = vsel %vm2585, %v2458, -1e+30
    %v2637 = vsel %vm2585, %v2461, -1e+30
    %v2638 = vsel %vm2585, %v2466, -1e+30
    %v2639 = vsel %vm2585, %v2469, -1e+30
    %v2640 = vsel %vm2585, %v2474, -1e+30
    %v2641 = vsel %vm2585, %v2477, -1e+30
    %v2642 = vsel %vm2585, %v2551, -1e+30
    %v2643 = vsel %vm2585, %v2554, -1e+30
    %v2644 = vsel %vm2585, %v2559, -1e+30
    %v2645 = vsel %vm2585, %v2562, -1e+30
    %v2646 = vsel %vm2585, %v2567, -1e+30
    %v2647 = vsel %vm2585, %v2570, -1e+30
    %v2648 = vsel %vm2585, %v2575, -1e+30
    %v2649 = vsel %vm2585, %v2578, -1e+30
    %2650 = vmax.xlane.f32.xlu0 %v2586
    %v2651 = vpop.xlane.xlu0 %2650
    %2652 = vmax.xlane.f32.xlu0 %v2587
    %v2653 = vpop.xlane.xlu0 %2652
    %2654 = vmax.xlane.f32.xlu0 %v2588
    %v2655 = vpop.xlane.xlu0 %2654
    %2656 = vmax.xlane.f32.xlu0 %v2589
    %v2657 = vpop.xlane.xlu0 %2656
    %2658 = vmax.xlane.f32.xlu0 %v2590
    %v2659 = vpop.xlane.xlu0 %2658
    %2660 = vmax.xlane.f32.xlu0 %v2591
    %v2661 = vpop.xlane.xlu0 %2660
    %2662 = vmax.xlane.f32.xlu0 %v2592
    %v2663 = vpop.xlane.xlu0 %2662
    %2664 = vmax.xlane.f32.xlu0 %v2593
    %v2665 = vpop.xlane.xlu0 %2664
    %2666 = vmax.xlane.f32.xlu0 %v2594
    %v2667 = vpop.xlane.xlu0 %2666
    %2668 = vmax.xlane.f32.xlu0 %v2595
    %v2669 = vpop.xlane.xlu0 %2668
    %2670 = vmax.xlane.f32.xlu0 %v2596
    %v2671 = vpop.xlane.xlu0 %2670
    %2672 = vmax.xlane.f32.xlu0 %v2597
    %v2673 = vpop.xlane.xlu0 %2672
    %2674 = vmax.xlane.f32.xlu0 %v2598
    %v2675 = vpop.xlane.xlu0 %2674
    %2676 = vmax.xlane.f32.xlu0 %v2599
    %v2677 = vpop.xlane.xlu0 %2676
    %2678 = vmax.xlane.f32.xlu0 %v2600
    %v2679 = vpop.xlane.xlu0 %2678
    %2680 = vmax.xlane.f32.xlu0 %v2601
    %v2681 = vpop.xlane.xlu0 %2680
    %2682 = vmax.xlane.f32.xlu0 %v2602
    %v2683 = vpop.xlane.xlu0 %2682
    %2684 = vmax.xlane.f32.xlu0 %v2603
    %v2685 = vpop.xlane.xlu0 %2684
    %2686 = vmax.xlane.f32.xlu0 %v2604
    %v2687 = vpop.xlane.xlu0 %2686
    %2688 = vmax.xlane.f32.xlu0 %v2605
    %v2689 = vpop.xlane.xlu0 %2688
    %2690 = vmax.xlane.f32.xlu0 %v2606
    %v2691 = vpop.xlane.xlu0 %2690
    %2692 = vmax.xlane.f32.xlu0 %v2607
    %v2693 = vpop.xlane.xlu0 %2692
    %2694 = vmax.xlane.f32.xlu0 %v2608
    %v2695 = vpop.xlane.xlu0 %2694
    %2696 = vmax.xlane.f32.xlu0 %v2609
    %v2697 = vpop.xlane.xlu0 %2696
    %2698 = vmax.xlane.f32.xlu0 %v2610
    %v2699 = vpop.xlane.xlu0 %2698
    %2700 = vmax.xlane.f32.xlu0 %v2611
    %v2701 = vpop.xlane.xlu0 %2700
    %2702 = vmax.xlane.f32.xlu0 %v2612
    %v2703 = vpop.xlane.xlu0 %2702
    %2704 = vmax.xlane.f32.xlu0 %v2613
    %v2705 = vpop.xlane.xlu0 %2704
    %2706 = vmax.xlane.f32.xlu0 %v2614
    %v2707 = vpop.xlane.xlu0 %2706
    %2708 = vmax.xlane.f32.xlu0 %v2615
    %v2709 = vpop.xlane.xlu0 %2708
    %2710 = vmax.xlane.f32.xlu0 %v2616
    %v2711 = vpop.xlane.xlu0 %2710
    %2712 = vmax.xlane.f32.xlu0 %v2617
    %v2713 = vpop.xlane.xlu0 %2712
    %2714 = vmax.xlane.f32.xlu0 %v2618
    %v2715 = vpop.xlane.xlu0 %2714
    %2716 = vmax.xlane.f32.xlu0 %v2619
    %v2717 = vpop.xlane.xlu0 %2716
    %2718 = vmax.xlane.f32.xlu0 %v2620
    %v2719 = vpop.xlane.xlu0 %2718
    %2720 = vmax.xlane.f32.xlu0 %v2621
    %v2721 = vpop.xlane.xlu0 %2720
    %2722 = vmax.xlane.f32.xlu0 %v2622
    %v2723 = vpop.xlane.xlu0 %2722
    %2724 = vmax.xlane.f32.xlu0 %v2623
    %v2725 = vpop.xlane.xlu0 %2724
    %2726 = vmax.xlane.f32.xlu0 %v2624
    %v2727 = vpop.xlane.xlu0 %2726
    %2728 = vmax.xlane.f32.xlu0 %v2625
    %v2729 = vpop.xlane.xlu0 %2728
    %2730 = vmax.xlane.f32.xlu0 %v2626
    %v2731 = vpop.xlane.xlu0 %2730
    %2732 = vmax.xlane.f32.xlu0 %v2627
    %v2733 = vpop.xlane.xlu0 %2732
    %2734 = vmax.xlane.f32.xlu0 %v2628
    %v2735 = vpop.xlane.xlu0 %2734
    %2736 = vmax.xlane.f32.xlu0 %v2629
    %v2737 = vpop.xlane.xlu0 %2736
    %2738 = vmax.xlane.f32.xlu0 %v2630
    %v2739 = vpop.xlane.xlu0 %2738
    %2740 = vmax.xlane.f32.xlu0 %v2631
    %v2741 = vpop.xlane.xlu0 %2740
    %2742 = vmax.xlane.f32.xlu0 %v2632
    %v2743 = vpop.xlane.xlu0 %2742
    %2744 = vmax.xlane.f32.xlu0 %v2633
    %v2745 = vpop.xlane.xlu0 %2744
    %2746 = vmax.xlane.f32.xlu0 %v2634
    %v2747 = vpop.xlane.xlu0 %2746
    %2748 = vmax.xlane.f32.xlu0 %v2635
    %v2749 = vpop.xlane.xlu0 %2748
    %2750 = vmax.xlane.f32.xlu0 %v2636
    %v2751 = vpop.xlane.xlu0 %2750
    %2752 = vmax.xlane.f32.xlu0 %v2637
    %v2753 = vpop.xlane.xlu0 %2752
    %2754 = vmax.xlane.f32.xlu0 %v2638
    %v2755 = vpop.xlane.xlu0 %2754
    %2756 = vmax.xlane.f32.xlu0 %v2639
    %v2757 = vpop.xlane.xlu0 %2756
    %2758 = vmax.xlane.f32.xlu0 %v2640
    %v2759 = vpop.xlane.xlu0 %2758
    %2760 = vmax.xlane.f32.xlu0 %v2641
    %v2761 = vpop.xlane.xlu0 %2760
    %2762 = vmax.xlane.f32.xlu0 %v2642
    %v2763 = vpop.xlane.xlu0 %2762
    %2764 = vmax.xlane.f32.xlu0 %v2643
    %v2765 = vpop.xlane.xlu0 %2764
    %2766 = vmax.xlane.f32.xlu0 %v2644
    %v2767 = vpop.xlane.xlu0 %2766
    %2768 = vmax.xlane.f32.xlu0 %v2645
    %v2769 = vpop.xlane.xlu0 %2768
    %2770 = vmax.xlane.f32.xlu0 %v2646
    %v2771 = vpop.xlane.xlu0 %2770
    %2772 = vmax.xlane.f32.xlu0 %v2647
    %v2773 = vpop.xlane.xlu0 %2772
    %2774 = vmax.xlane.f32.xlu0 %v2648
    %v2775 = vpop.xlane.xlu0 %2774
    %2776 = vmax.xlane.f32.xlu0 %v2649
    %v2777 = vpop.xlane.xlu0 %2776
    %v2778 = vsub.f32 %v2586, %v2651
    %v2779 = vsub.f32 %v2587, %v2653
    %v2780 = vsub.f32 %v2588, %v2655
    %v2781 = vsub.f32 %v2589, %v2657
    %v2782 = vsub.f32 %v2590, %v2659
    %v2783 = vsub.f32 %v2591, %v2661
    %v2784 = vsub.f32 %v2592, %v2663
    %v2785 = vsub.f32 %v2593, %v2665
    %v2786 = vsub.f32 %v2594, %v2667
    %v2787 = vsub.f32 %v2595, %v2669
    %v2788 = vsub.f32 %v2596, %v2671
    %v2789 = vsub.f32 %v2597, %v2673
    %v2790 = vsub.f32 %v2598, %v2675
    %v2791 = vsub.f32 %v2599, %v2677
    %v2792 = vsub.f32 %v2600, %v2679
    %v2793 = vsub.f32 %v2601, %v2681
    %v2794 = vsub.f32 %v2602, %v2683
    %v2795 = vsub.f32 %v2603, %v2685
    %v2796 = vsub.f32 %v2604, %v2687
    %v2797 = vsub.f32 %v2605, %v2689
    %v2798 = vsub.f32 %v2606, %v2691
    %v2799 = vsub.f32 %v2607, %v2693
    %v2800 = vsub.f32 %v2608, %v2695
    %v2801 = vsub.f32 %v2609, %v2697
    %v2802 = vsub.f32 %v2610, %v2699
    %v2803 = vsub.f32 %v2611, %v2701
    %v2804 = vsub.f32 %v2612, %v2703
    %v2805 = vsub.f32 %v2613, %v2705
    %v2806 = vsub.f32 %v2614, %v2707
    %v2807 = vsub.f32 %v2615, %v2709
    %v2808 = vsub.f32 %v2616, %v2711
    %v2809 = vsub.f32 %v2617, %v2713
    %v2810 = vsub.f32 %v2618, %v2715
    %v2811 = vsub.f32 %v2619, %v2717
    %v2812 = vsub.f32 %v2620, %v2719
    %v2813 = vsub.f32 %v2621, %v2721
    %v2814 = vsub.f32 %v2622, %v2723
    %v2815 = vsub.f32 %v2623, %v2725
    %v2816 = vsub.f32 %v2624, %v2727
    %v2817 = vsub.f32 %v2625, %v2729
    %v2818 = vsub.f32 %v2626, %v2731
    %v2819 = vsub.f32 %v2627, %v2733
    %v2820 = vsub.f32 %v2628, %v2735
    %v2821 = vsub.f32 %v2629, %v2737
    %v2822 = vsub.f32 %v2630, %v2739
    %v2823 = vsub.f32 %v2631, %v2741
    %v2824 = vsub.f32 %v2632, %v2743
    %v2825 = vsub.f32 %v2633, %v2745
    %v2826 = vsub.f32 %v2634, %v2747
    %v2827 = vsub.f32 %v2635, %v2749
    %v2828 = vsub.f32 %v2636, %v2751
    %v2829 = vsub.f32 %v2637, %v2753
    %v2830 = vsub.f32 %v2638, %v2755
    %v2831 = vsub.f32 %v2639, %v2757
    %v2832 = vsub.f32 %v2640, %v2759
    %v2833 = vsub.f32 %v2641, %v2761
    %v2834 = vsub.f32 %v2642, %v2763
    %v2835 = vsub.f32 %v2643, %v2765
    %v2836 = vsub.f32 %v2644, %v2767
    %v2837 = vsub.f32 %v2645, %v2769
    %v2838 = vsub.f32 %v2646, %v2771
    %v2839 = vsub.f32 %v2647, %v2773
    %v2840 = vsub.f32 %v2648, %v2775
    %v2841 = vsub.f32 %v2649, %v2777
    %v2842 = vmul.f32 %v2778, 1.442695
    %v2843 = vpow.pop %v2842
    %v2844 = vmul.f32 %v2779, 1.442695
    %v2845 = vpow.pop %v2844
    %v2846 = vmul.f32 %v2780, 1.442695
    %v2847 = vpow.pop %v2846
    %v2848 = vmul.f32 %v2781, 1.442695
    %v2849 = vpow.pop %v2848
    %v2850 = vmul.f32 %v2782, 1.442695
    %v2851 = vpow.pop %v2850
    %v2852 = vmul.f32 %v2783, 1.442695
    %v2853 = vpow.pop %v2852
    %v2854 = vmul.f32 %v2784, 1.442695
    %v2855 = vpow.pop %v2854
    %v2856 = vmul.f32 %v2785, 1.442695
    %v2857 = vpow.pop %v2856
    %v2858 = vmul.f32 %v2786, 1.442695
    %v2859 = vpow.pop %v2858
    %v2860 = vmul.f32 %v2787, 1.442695
    %v2861 = vpow.pop %v2860
    %v2862 = vmul.f32 %v2788, 1.442695
    %v2863 = vpow.pop %v2862
    %v2864 = vmul.f32 %v2789, 1.442695
    %v2865 = vpow.pop %v2864
    %v2866 = vmul.f32 %v2790, 1.442695
    %v2867 = vpow.pop %v2866
    %v2868 = vmul.f32 %v2791, 1.442695
    %v2869 = vpow.pop %v2868
    %v2870 = vmul.f32 %v2792, 1.442695
    %v2871 = vpow.pop %v2870
    %v2872 = vmul.f32 %v2793, 1.442695
    %v2873 = vpow.pop %v2872
    %v2874 = vmul.f32 %v2794, 1.442695
    %v2875 = vpow.pop %v2874
    %v2876 = vmul.f32 %v2795, 1.442695
    %v2877 = vpow.pop %v2876
    %v2878 = vmul.f32 %v2796, 1.442695
    %v2879 = vpow.pop %v2878
    %v2880 = vmul.f32 %v2797, 1.442695
    %v2881 = vpow.pop %v2880
    %v2882 = vmul.f32 %v2798, 1.442695
    %v2883 = vpow.pop %v2882
    %v2884 = vmul.f32 %v2799, 1.442695
    %v2885 = vpow.pop %v2884
    %v2886 = vmul.f32 %v2800, 1.442695
    %v2887 = vpow.pop %v2886
    %v2888 = vmul.f32 %v2801, 1.442695
    %v2889 = vpow.pop %v2888
    %v2890 = vmul.f32 %v2802, 1.442695
    %v2891 = vpow.pop %v2890
    %v2892 = vmul.f32 %v2803, 1.442695
    %v2893 = vpow.pop %v2892
    %v2894 = vmul.f32 %v2804, 1.442695
    %v2895 = vpow.pop %v2894
    %v2896 = vmul.f32 %v2805, 1.442695
    %v2897 = vpow.pop %v2896
    %v2898 = vmul.f32 %v2806, 1.442695
    %v2899 = vpow.pop %v2898
    %v2900 = vmul.f32 %v2807, 1.442695
    %v2901 = vpow.pop %v2900
    %v2902 = vmul.f32 %v2808, 1.442695
    %v2903 = vpow.pop %v2902
    %v2904 = vmul.f32 %v2809, 1.442695
    %v2905 = vpow.pop %v2904
    %v2906 = vmul.f32 %v2810, 1.442695
    %v2907 = vpow.pop %v2906
    %v2908 = vmul.f32 %v2811, 1.442695
    %v2909 = vpow.pop %v2908
    %v2910 = vmul.f32 %v2812, 1.442695
    %v2911 = vpow.pop %v2910
    %v2912 = vmul.f32 %v2813, 1.442695
    %v2913 = vpow.pop %v2912
    %v2914 = vmul.f32 %v2814, 1.442695
    %v2915 = vpow.pop %v2914
    %v2916 = vmul.f32 %v2815, 1.442695
    %v2917 = vpow.pop %v2916
    %v2918 = vmul.f32 %v2816, 1.442695
    %v2919 = vpow.pop %v2918
    %v2920 = vmul.f32 %v2817, 1.442695
    %v2921 = vpow.pop %v2920
    %v2922 = vmul.f32 %v2818, 1.442695
    %v2923 = vpow.pop %v2922
    %v2924 = vmul.f32 %v2819, 1.442695
    %v2925 = vpow.pop %v2924
    %v2926 = vmul.f32 %v2820, 1.442695
    %v2927 = vpow.pop %v2926
    %v2928 = vmul.f32 %v2821, 1.442695
    %v2929 = vpow.pop %v2928
    %v2930 = vmul.f32 %v2822, 1.442695
    %v2931 = vpow.pop %v2930
    %v2932 = vmul.f32 %v2823, 1.442695
    %v2933 = vpow.pop %v2932
    %v2934 = vmul.f32 %v2824, 1.442695
    %v2935 = vpow.pop %v2934
    %v2936 = vmul.f32 %v2825, 1.442695
    %v2937 = vpow.pop %v2936
    %v2938 = vmul.f32 %v2826, 1.442695
    %v2939 = vpow.pop %v2938
    %v2940 = vmul.f32 %v2827, 1.442695
    %v2941 = vpow.pop %v2940
    %v2942 = vmul.f32 %v2828, 1.442695
    %v2943 = vpow.pop %v2942
    %v2944 = vmul.f32 %v2829, 1.442695
    %v2945 = vpow.pop %v2944
    %v2946 = vmul.f32 %v2830, 1.442695
    %v2947 = vpow.pop %v2946
    %v2948 = vmul.f32 %v2831, 1.442695
    %v2949 = vpow.pop %v2948
    %v2950 = vmul.f32 %v2832, 1.442695
    %v2951 = vpow.pop %v2950
    %v2952 = vmul.f32 %v2833, 1.442695
    %v2953 = vpow.pop %v2952
    %v2954 = vmul.f32 %v2834, 1.442695
    %v2955 = vpow.pop %v2954
    %v2956 = vmul.f32 %v2835, 1.442695
    %v2957 = vpow.pop %v2956
    %v2958 = vmul.f32 %v2836, 1.442695
    %v2959 = vpow.pop %v2958
    %v2960 = vmul.f32 %v2837, 1.442695
    %v2961 = vpow.pop %v2960
    %v2962 = vmul.f32 %v2838, 1.442695
    %v2963 = vpow.pop %v2962
    %v2964 = vmul.f32 %v2839, 1.442695
    %v2965 = vpow.pop %v2964
    %v2966 = vmul.f32 %v2840, 1.442695
    %v2967 = vpow.pop %v2966
    %v2968 = vmul.f32 %v2841, 1.442695
    %v2969 = vpow.pop %v2968
    %2970 = vadd.xlane.f32.xlu0 %v2843
    %v2971 = vpop.xlane.xlu0 %2970
    %2972 = vadd.xlane.f32.xlu0 %v2845
    %v2973 = vpop.xlane.xlu0 %2972
    %2974 = vadd.xlane.f32.xlu0 %v2847
    %v2975 = vpop.xlane.xlu0 %2974
    %2976 = vadd.xlane.f32.xlu0 %v2849
    %v2977 = vpop.xlane.xlu0 %2976
    %2978 = vadd.xlane.f32.xlu0 %v2851
    %v2979 = vpop.xlane.xlu0 %2978
    %2980 = vadd.xlane.f32.xlu0 %v2853
    %v2981 = vpop.xlane.xlu0 %2980
    %2982 = vadd.xlane.f32.xlu0 %v2855
    %v2983 = vpop.xlane.xlu0 %2982
    %2984 = vadd.xlane.f32.xlu0 %v2857
    %v2985 = vpop.xlane.xlu0 %2984
    %2986 = vadd.xlane.f32.xlu0 %v2859
    %v2987 = vpop.xlane.xlu0 %2986
    %2988 = vadd.xlane.f32.xlu0 %v2861
    %v2989 = vpop.xlane.xlu0 %2988
    %2990 = vadd.xlane.f32.xlu0 %v2863
    %v2991 = vpop.xlane.xlu0 %2990
    %2992 = vadd.xlane.f32.xlu0 %v2865
    %v2993 = vpop.xlane.xlu0 %2992
    %2994 = vadd.xlane.f32.xlu0 %v2867
    %v2995 = vpop.xlane.xlu0 %2994
    %2996 = vadd.xlane.f32.xlu0 %v2869
    %v2997 = vpop.xlane.xlu0 %2996
    %2998 = vadd.xlane.f32.xlu0 %v2871
    %v2999 = vpop.xlane.xlu0 %2998
    %3000 = vadd.xlane.f32.xlu0 %v2873
    %v3001 = vpop.xlane.xlu0 %3000
    %3002 = vadd.xlane.f32.xlu0 %v2875
    %v3003 = vpop.xlane.xlu0 %3002
    %3004 = vadd.xlane.f32.xlu0 %v2877
    %v3005 = vpop.xlane.xlu0 %3004
    %3006 = vadd.xlane.f32.xlu0 %v2879
    %v3007 = vpop.xlane.xlu0 %3006
    %3008 = vadd.xlane.f32.xlu0 %v2881
    %v3009 = vpop.xlane.xlu0 %3008
    %3010 = vadd.xlane.f32.xlu0 %v2883
    %v3011 = vpop.xlane.xlu0 %3010
    %3012 = vadd.xlane.f32.xlu0 %v2885
    %v3013 = vpop.xlane.xlu0 %3012
    %3014 = vadd.xlane.f32.xlu0 %v2887
    %v3015 = vpop.xlane.xlu0 %3014
    %3016 = vadd.xlane.f32.xlu0 %v2889
    %v3017 = vpop.xlane.xlu0 %3016
    %3018 = vadd.xlane.f32.xlu0 %v2891
    %v3019 = vpop.xlane.xlu0 %3018
    %3020 = vadd.xlane.f32.xlu0 %v2893
    %v3021 = vpop.xlane.xlu0 %3020
    %3022 = vadd.xlane.f32.xlu0 %v2895
    %v3023 = vpop.xlane.xlu0 %3022
    %3024 = vadd.xlane.f32.xlu0 %v2897
    %v3025 = vpop.xlane.xlu0 %3024
    %3026 = vadd.xlane.f32.xlu0 %v2899
    %v3027 = vpop.xlane.xlu0 %3026
    %3028 = vadd.xlane.f32.xlu0 %v2901
    %v3029 = vpop.xlane.xlu0 %3028
    %3030 = vadd.xlane.f32.xlu0 %v2903
    %v3031 = vpop.xlane.xlu0 %3030
    %3032 = vadd.xlane.f32.xlu0 %v2905
    %v3033 = vpop.xlane.xlu0 %3032
    %3034 = vadd.xlane.f32.xlu0 %v2907
    %v3035 = vpop.xlane.xlu0 %3034
    %3036 = vadd.xlane.f32.xlu0 %v2909
    %v3037 = vpop.xlane.xlu0 %3036
    %3038 = vadd.xlane.f32.xlu0 %v2911
    %v3039 = vpop.xlane.xlu0 %3038
    %3040 = vadd.xlane.f32.xlu0 %v2913
    %v3041 = vpop.xlane.xlu0 %3040
    %3042 = vadd.xlane.f32.xlu0 %v2915
    %v3043 = vpop.xlane.xlu0 %3042
    %3044 = vadd.xlane.f32.xlu0 %v2917
    %v3045 = vpop.xlane.xlu0 %3044
    %3046 = vadd.xlane.f32.xlu0 %v2919
    %v3047 = vpop.xlane.xlu0 %3046
    %3048 = vadd.xlane.f32.xlu0 %v2921
    %v3049 = vpop.xlane.xlu0 %3048
    %3050 = vadd.xlane.f32.xlu0 %v2923
    %v3051 = vpop.xlane.xlu0 %3050
    %3052 = vadd.xlane.f32.xlu0 %v2925
    %v3053 = vpop.xlane.xlu0 %3052
    %3054 = vadd.xlane.f32.xlu0 %v2927
    %v3055 = vpop.xlane.xlu0 %3054
    %3056 = vadd.xlane.f32.xlu0 %v2929
    %v3057 = vpop.xlane.xlu0 %3056
    %3058 = vadd.xlane.f32.xlu0 %v2931
    %v3059 = vpop.xlane.xlu0 %3058
    %3060 = vadd.xlane.f32.xlu0 %v2933
    %v3061 = vpop.xlane.xlu0 %3060
    %3062 = vadd.xlane.f32.xlu0 %v2935
    %v3063 = vpop.xlane.xlu0 %3062
    %3064 = vadd.xlane.f32.xlu0 %v2937
    %v3065 = vpop.xlane.xlu0 %3064
    %3066 = vadd.xlane.f32.xlu0 %v2939
    %v3067 = vpop.xlane.xlu0 %3066
    %3068 = vadd.xlane.f32.xlu0 %v2941
    %v3069 = vpop.xlane.xlu0 %3068
    %3070 = vadd.xlane.f32.xlu0 %v2943
    %v3071 = vpop.xlane.xlu0 %3070
    %3072 = vadd.xlane.f32.xlu0 %v2945
    %v3073 = vpop.xlane.xlu0 %3072
    %3074 = vadd.xlane.f32.xlu0 %v2947
    %v3075 = vpop.xlane.xlu0 %3074
    %3076 = vadd.xlane.f32.xlu0 %v2949
    %v3077 = vpop.xlane.xlu0 %3076
    %3078 = vadd.xlane.f32.xlu0 %v2951
    %v3079 = vpop.xlane.xlu0 %3078
    %3080 = vadd.xlane.f32.xlu0 %v2953
    %v3081 = vpop.xlane.xlu0 %3080
    %3082 = vadd.xlane.f32.xlu0 %v2955
    %v3083 = vpop.xlane.xlu0 %3082
    %3084 = vadd.xlane.f32.xlu0 %v2957
    %v3085 = vpop.xlane.xlu0 %3084
    %3086 = vadd.xlane.f32.xlu0 %v2959
    %v3087 = vpop.xlane.xlu0 %3086
    %3088 = vadd.xlane.f32.xlu0 %v2961
    %v3089 = vpop.xlane.xlu0 %3088
    %3090 = vadd.xlane.f32.xlu0 %v2963
    %v3091 = vpop.xlane.xlu0 %3090
    %3092 = vadd.xlane.f32.xlu0 %v2965
    %v3093 = vpop.xlane.xlu0 %3092
    %3094 = vadd.xlane.f32.xlu0 %v2967
    %v3095 = vpop.xlane.xlu0 %3094
    %3096 = vadd.xlane.f32.xlu0 %v2969
    %v3097 = vpop.xlane.xlu0 %3096
    %v3098 = vrcp.pop %v2971
    %v3099 = vrcp.pop %v2973
    %v3100 = vrcp.pop %v2975
    %v3101 = vrcp.pop %v2977
    %v3102 = vrcp.pop %v2979
    %v3103 = vrcp.pop %v2981
    %v3104 = vrcp.pop %v2983
    %v3105 = vrcp.pop %v2985
    %v3106 = vrcp.pop %v2987
    %v3107 = vrcp.pop %v2989
    %v3108 = vrcp.pop %v2991
    %v3109 = vrcp.pop %v2993
    %v3110 = vrcp.pop %v2995
    %v3111 = vrcp.pop %v2997
    %v3112 = vrcp.pop %v2999
    %v3113 = vrcp.pop %v3001
    %v3114 = vrcp.pop %v3003
    %v3115 = vrcp.pop %v3005
    %v3116 = vrcp.pop %v3007
    %v3117 = vrcp.pop %v3009
    %v3118 = vrcp.pop %v3011
    %v3119 = vrcp.pop %v3013
    %v3120 = vrcp.pop %v3015
    %v3121 = vrcp.pop %v3017
    %v3122 = vrcp.pop %v3019
    %v3123 = vrcp.pop %v3021
    %v3124 = vrcp.pop %v3023
    %v3125 = vrcp.pop %v3025
    %v3126 = vrcp.pop %v3027
    %v3127 = vrcp.pop %v3029
    %v3128 = vrcp.pop %v3031
    %v3129 = vrcp.pop %v3033
    %v3130 = vrcp.pop %v3035
    %v3131 = vrcp.pop %v3037
    %v3132 = vrcp.pop %v3039
    %v3133 = vrcp.pop %v3041
    %v3134 = vrcp.pop %v3043
    %v3135 = vrcp.pop %v3045
    %v3136 = vrcp.pop %v3047
    %v3137 = vrcp.pop %v3049
    %v3138 = vrcp.pop %v3051
    %v3139 = vrcp.pop %v3053
    %v3140 = vrcp.pop %v3055
    %v3141 = vrcp.pop %v3057
    %v3142 = vrcp.pop %v3059
    %v3143 = vrcp.pop %v3061
    %v3144 = vrcp.pop %v3063
    %v3145 = vrcp.pop %v3065
    %v3146 = vrcp.pop %v3067
    %v3147 = vrcp.pop %v3069
    %v3148 = vrcp.pop %v3071
    %v3149 = vrcp.pop %v3073
    %v3150 = vrcp.pop %v3075
    %v3151 = vrcp.pop %v3077
    %v3152 = vrcp.pop %v3079
    %v3153 = vrcp.pop %v3081
    %v3154 = vrcp.pop %v3083
    %v3155 = vrcp.pop %v3085
    %v3156 = vrcp.pop %v3087
    %v3157 = vrcp.pop %v3089
    %v3158 = vrcp.pop %v3091
    %v3159 = vrcp.pop %v3093
    %v3160 = vrcp.pop %v3095
    %v3161 = vrcp.pop %v3097
    %v3162 = vmul.f32 %v2843, %v3098
    %v3163 = vmul.f32 %v2845, %v3099
    %v3164 = vmul.f32 %v2847, %v3100
    %v3165 = vmul.f32 %v2849, %v3101
    %v3166 = vmul.f32 %v2851, %v3102
    %v3167 = vmul.f32 %v2853, %v3103
    %v3168 = vmul.f32 %v2855, %v3104
    %v3169 = vmul.f32 %v2857, %v3105
    %v3170 = vmul.f32 %v2859, %v3106
    %v3171 = vmul.f32 %v2861, %v3107
    %v3172 = vmul.f32 %v2863, %v3108
    %v3173 = vmul.f32 %v2865, %v3109
    %v3174 = vmul.f32 %v2867, %v3110
    %v3175 = vmul.f32 %v2869, %v3111
    %v3176 = vmul.f32 %v2871, %v3112
    %v3177 = vmul.f32 %v2873, %v3113
    %v3178 = vmul.f32 %v2875, %v3114
    %v3179 = vmul.f32 %v2877, %v3115
    %v3180 = vmul.f32 %v2879, %v3116
    %v3181 = vmul.f32 %v2881, %v3117
    %v3182 = vmul.f32 %v2883, %v3118
    %v3183 = vmul.f32 %v2885, %v3119
    %v3184 = vmul.f32 %v2887, %v3120
    %v3185 = vmul.f32 %v2889, %v3121
    %v3186 = vmul.f32 %v2891, %v3122
    %v3187 = vmul.f32 %v2893, %v3123
    %v3188 = vmul.f32 %v2895, %v3124
    %v3189 = vmul.f32 %v2897, %v3125
    %v3190 = vmul.f32 %v2899, %v3126
    %v3191 = vmul.f32 %v2901, %v3127
    %v3192 = vmul.f32 %v2903, %v3128
    %v3193 = vmul.f32 %v2905, %v3129
    %v3194 = vmul.f32 %v2907, %v3130
    %v3195 = vmul.f32 %v2909, %v3131
    %v3196 = vmul.f32 %v2911, %v3132
    %v3197 = vmul.f32 %v2913, %v3133
    %v3198 = vmul.f32 %v2915, %v3134
    %v3199 = vmul.f32 %v2917, %v3135
    %v3200 = vmul.f32 %v2919, %v3136
    %v3201 = vmul.f32 %v2921, %v3137
    %v3202 = vmul.f32 %v2923, %v3138
    %v3203 = vmul.f32 %v2925, %v3139
    %v3204 = vmul.f32 %v2927, %v3140
    %v3205 = vmul.f32 %v2929, %v3141
    %v3206 = vmul.f32 %v2931, %v3142
    %v3207 = vmul.f32 %v2933, %v3143
    %v3208 = vmul.f32 %v2935, %v3144
    %v3209 = vmul.f32 %v2937, %v3145
    %v3210 = vmul.f32 %v2939, %v3146
    %v3211 = vmul.f32 %v2941, %v3147
    %v3212 = vmul.f32 %v2943, %v3148
    %v3213 = vmul.f32 %v2945, %v3149
    %v3214 = vmul.f32 %v2947, %v3150
    %v3215 = vmul.f32 %v2949, %v3151
    %v3216 = vmul.f32 %v2951, %v3152
    %v3217 = vmul.f32 %v2953, %v3153
    %v3218 = vmul.f32 %v2955, %v3154
    %v3219 = vmul.f32 %v2957, %v3155
    %v3220 = vmul.f32 %v2959, %v3156
    %v3221 = vmul.f32 %v2961, %v3157
    %v3222 = vmul.f32 %v2963, %v3158
    %v3223 = vmul.f32 %v2965, %v3159
    %v3224 = vmul.f32 %v2967, %v3160
    %v3225 = vmul.f32 %v2969, %v3161
    %v3226 = vpack.c.bf16 %v3163, %v3162
    %v3227 = vpack.c.bf16 %v3165, %v3164
    %v3228 = vpack.c.bf16 %v3167, %v3166
    %v3229 = vpack.c.bf16 %v3169, %v3168
    %v3230 = vpack.c.bf16 %v3171, %v3170
    %v3231 = vpack.c.bf16 %v3173, %v3172
    %v3232 = vpack.c.bf16 %v3175, %v3174
    %v3233 = vpack.c.bf16 %v3177, %v3176
    %v3234 = vpack.c.bf16 %v3179, %v3178
    %v3235 = vpack.c.bf16 %v3181, %v3180
    %v3236 = vpack.c.bf16 %v3183, %v3182
    %v3237 = vpack.c.bf16 %v3185, %v3184
    %v3238 = vpack.c.bf16 %v3187, %v3186
    %v3239 = vpack.c.bf16 %v3189, %v3188
    %v3240 = vpack.c.bf16 %v3191, %v3190
    %v3241 = vpack.c.bf16 %v3193, %v3192
    %v3242 = vpack.c.bf16 %v3195, %v3194
    %v3243 = vpack.c.bf16 %v3197, %v3196
    %v3244 = vpack.c.bf16 %v3199, %v3198
    %v3245 = vpack.c.bf16 %v3201, %v3200
    %v3246 = vpack.c.bf16 %v3203, %v3202
    %v3247 = vpack.c.bf16 %v3205, %v3204
    %v3248 = vpack.c.bf16 %v3207, %v3206
    %v3249 = vpack.c.bf16 %v3209, %v3208
    %v3250 = vpack.c.bf16 %v3211, %v3210
    %v3251 = vpack.c.bf16 %v3213, %v3212
    %v3252 = vpack.c.bf16 %v3215, %v3214
    %v3253 = vpack.c.bf16 %v3217, %v3216
    %v3254 = vpack.c.bf16 %v3219, %v3218
    %v3255 = vpack.c.bf16 %v3221, %v3220
    %v3256 = vpack.c.bf16 %v3223, %v3222
    %v3257 = vpack.c.bf16 %v3225, %v3224
    %3258 = vmatprep.subr.bf16.mxu0 0
    %3259 = vmatpush1.bf16.msra.mxu0 %v1435
    %3260 = vmatprep.subr.bf16.mxu0 0
    %3261 = vmatpush1.bf16.msra.mxu0 %v1434
    %3262 = vmatprep.subr.bf16.mxu0 0
    %3263 = vmatpush1.bf16.msra.mxu0 %v1433
    %3264 = vmatprep.subr.bf16.mxu0 0
    %3265 = vmatpush1.bf16.msra.mxu0 %v1432
    %3266 = vmatprep.subr.bf16.mxu0 0
    %3267 = vmatpush1.bf16.msra.mxu0 %v1431
    %3268 = vmatprep.subr.bf16.mxu0 0
    %3269 = vmatpush1.bf16.msra.mxu0 %v1430
    %3270 = vmatprep.subr.bf16.mxu0 0
    %3271 = vmatpush1.bf16.msra.mxu0 %v1429
    %3272 = vmatprep.subr.bf16.mxu0 0
    %3273 = vmatpush1.bf16.msra.mxu0 %v1428
    %3274 = vmatprep.subr.bf16.mxu0 0
    %3275 = vmatpush2.bf16.msra.mxu0 0
    %3276 = vmatprep.subr.bf16.mxu0 0
    %3277 = vmatpush2.bf16.msra.mxu0 0
    %3278 = vmatprep.subr.bf16.mxu0 0
    %3279 = vmatpush2.bf16.msra.mxu0 0
    %3280 = vmatprep.subr.bf16.mxu0 0
    %3281 = vmatpush2.bf16.msra.mxu0 0
    %3282 = vmatprep.subr.bf16.mxu0 0
    %3283 = vmatpush2.bf16.msra.mxu0 0
    %3284 = vmatprep.subr.bf16.mxu0 0
    %3285 = vmatpush2.bf16.msra.mxu0 0
    %3286 = vmatprep.subr.bf16.mxu0 0
    %3287 = vmatpush2.bf16.msra.mxu0 0
    %3288 = vmatprep.subr.bf16.mxu0 0
    %3289 = vmatpush2.bf16.msra.mxu0 0
    %3290 = vmatprep.mubr.bf16.mxu0 0
    %3291 = vmatmul.mubr.bf16.gmra.mxu0 %v3226
    %v3292 = vpop.f32.mrf.mxu0
    %v3293 = vadd.f32 0.0, %v3292
    %v3294 = vpop.f32.mrf.mxu0
    %v3295 = vpop.f32.mrf.mxu0
    %v3296 = vadd.f32 0.0, %v3295
    %v3297 = vpop.f32.mrf.mxu0
    %3298 = vmatprep.mubr.bf16.mxu0 0
    %3299 = vmatmul.mubr.bf16.gmra.mxu0 %v3227
    %v3300 = vpop.f32.mrf.mxu0
    %v3301 = vadd.f32 0.0, %v3300
    %v3302 = vpop.f32.mrf.mxu0
    %v3303 = vpop.f32.mrf.mxu0
    %v3304 = vadd.f32 0.0, %v3303
    %v3305 = vpop.f32.mrf.mxu0
    %3306 = vmatprep.mubr.bf16.mxu0 0
    %3307 = vmatmul.mubr.bf16.gmra.mxu0 %v3228
    %v3308 = vpop.f32.mrf.mxu0
    %v3309 = vadd.f32 0.0, %v3308
    %v3310 = vpop.f32.mrf.mxu0
    %v3311 = vpop.f32.mrf.mxu0
    %v3312 = vadd.f32 0.0, %v3311
    %v3313 = vpop.f32.mrf.mxu0
    %3314 = vmatprep.mubr.bf16.mxu0 0
    %3315 = vmatmul.mubr.bf16.gmra.mxu0 %v3229
    %v3316 = vpop.f32.mrf.mxu0
    %v3317 = vadd.f32 0.0, %v3316
    %v3318 = vpop.f32.mrf.mxu0
    %v3319 = vpop.f32.mrf.mxu0
    %v3320 = vadd.f32 0.0, %v3319
    %v3321 = vpop.f32.mrf.mxu0
    %3322 = vdwg.mxu0
    %3323 = vmatprep.subr.bf16.mxu0 0
    %3324 = vmatpush1.bf16.msra.mxu0 %v1635
    %3325 = vmatprep.subr.bf16.mxu0 0
    %3326 = vmatpush1.bf16.msra.mxu0 %v1633
    %3327 = vmatprep.subr.bf16.mxu0 0
    %3328 = vmatpush1.bf16.msra.mxu0 %v1631
    %3329 = vmatprep.subr.bf16.mxu0 0
    %3330 = vmatpush1.bf16.msra.mxu0 %v1629
    %3331 = vmatprep.subr.bf16.mxu0 0
    %3332 = vmatpush1.bf16.msra.mxu0 %v1627
    %3333 = vmatprep.subr.bf16.mxu0 0
    %3334 = vmatpush1.bf16.msra.mxu0 %v1625
    %3335 = vmatprep.subr.bf16.mxu0 0
    %3336 = vmatpush1.bf16.msra.mxu0 %v1623
    %3337 = vmatprep.subr.bf16.mxu0 0
    %3338 = vmatpush1.bf16.msra.mxu0 %v1621
    %3339 = vmatprep.subr.bf16.mxu0 0
    %3340 = vmatpush2.bf16.msra.mxu0 0
    %3341 = vmatprep.subr.bf16.mxu0 0
    %3342 = vmatpush2.bf16.msra.mxu0 0
    %3343 = vmatprep.subr.bf16.mxu0 0
    %3344 = vmatpush2.bf16.msra.mxu0 0
    %3345 = vmatprep.subr.bf16.mxu0 0
    %3346 = vmatpush2.bf16.msra.mxu0 0
    %3347 = vmatprep.subr.bf16.mxu0 0
    %3348 = vmatpush2.bf16.msra.mxu0 0
    %3349 = vmatprep.subr.bf16.mxu0 0
    %3350 = vmatpush2.bf16.msra.mxu0 0
    %3351 = vmatprep.subr.bf16.mxu0 0
    %3352 = vmatpush2.bf16.msra.mxu0 0
    %3353 = vmatprep.subr.bf16.mxu0 0
    %3354 = vmatpush2.bf16.msra.mxu0 0
    %3355 = vmatprep.mubr.bf16.mxu0 0
    %3356 = vmatmul.mubr.bf16.gmra.mxu0 %v3230
    %v3357 = vpop.f32.mrf.mxu0
    %v3358 = vadd.f32 0.0, %v3357
    %v3359 = vpop.f32.mrf.mxu0
    %v3360 = vpop.f32.mrf.mxu0
    %v3361 = vadd.f32 0.0, %v3360
    %v3362 = vpop.f32.mrf.mxu0
    %3363 = vmatprep.mubr.bf16.mxu0 0
    %3364 = vmatmul.mubr.bf16.gmra.mxu0 %v3231
    %v3365 = vpop.f32.mrf.mxu0
    %v3366 = vadd.f32 0.0, %v3365
    %v3367 = vpop.f32.mrf.mxu0
    %v3368 = vpop.f32.mrf.mxu0
    %v3369 = vadd.f32 0.0, %v3368
    %v3370 = vpop.f32.mrf.mxu0
    %3371 = vmatprep.mubr.bf16.mxu0 0
    %3372 = vmatmul.mubr.bf16.gmra.mxu0 %v3232
    %v3373 = vpop.f32.mrf.mxu0
    %v3374 = vadd.f32 0.0, %v3373
    %v3375 = vpop.f32.mrf.mxu0
    %v3376 = vpop.f32.mrf.mxu0
    %v3377 = vadd.f32 0.0, %v3376
    %v3378 = vpop.f32.mrf.mxu0
    %3379 = vmatprep.mubr.bf16.mxu0 0
    %3380 = vmatmul.mubr.bf16.gmra.mxu0 %v3233
    %v3381 = vpop.f32.mrf.mxu0
    %v3382 = vadd.f32 0.0, %v3381
    %v3383 = vpop.f32.mrf.mxu0
    %v3384 = vpop.f32.mrf.mxu0
    %v3385 = vadd.f32 0.0, %v3384
    %v3386 = vpop.f32.mrf.mxu0
    %3387 = vdwg.mxu0
    %3388 = vmatprep.subr.bf16.mxu0 0
    %3389 = vmatpush1.bf16.msra.mxu0 %v1659
    %3390 = vmatprep.subr.bf16.mxu0 0
    %3391 = vmatpush1.bf16.msra.mxu0 %v1657
    %3392 = vmatprep.subr.bf16.mxu0 0
    %3393 = vmatpush1.bf16.msra.mxu0 %v1655
    %3394 = vmatprep.subr.bf16.mxu0 0
    %3395 = vmatpush1.bf16.msra.mxu0 %v1653
    %3396 = vmatprep.subr.bf16.mxu0 0
    %3397 = vmatpush1.bf16.msra.mxu0 %v1651
    %3398 = vmatprep.subr.bf16.mxu0 0
    %3399 = vmatpush1.bf16.msra.mxu0 %v1649
    %3400 = vmatprep.subr.bf16.mxu0 0
    %3401 = vmatpush1.bf16.msra.mxu0 %v1647
    %3402 = vmatprep.subr.bf16.mxu0 0
    %3403 = vmatpush1.bf16.msra.mxu0 %v1645
    %3404 = vmatprep.subr.bf16.mxu0 0
    %3405 = vmatpush2.bf16.msra.mxu0 0
    %3406 = vmatprep.subr.bf16.mxu0 0
    %3407 = vmatpush2.bf16.msra.mxu0 0
    %3408 = vmatprep.subr.bf16.mxu0 0
    %3409 = vmatpush2.bf16.msra.mxu0 0
    %3410 = vmatprep.subr.bf16.mxu0 0
    %3411 = vmatpush2.bf16.msra.mxu0 0
    %3412 = vmatprep.subr.bf16.mxu0 0
    %3413 = vmatpush2.bf16.msra.mxu0 0
    %3414 = vmatprep.subr.bf16.mxu0 0
    %3415 = vmatpush2.bf16.msra.mxu0 0
    %3416 = vmatprep.subr.bf16.mxu0 0
    %3417 = vmatpush2.bf16.msra.mxu0 0
    %3418 = vmatprep.subr.bf16.mxu0 0
    %3419 = vmatpush2.bf16.msra.mxu0 0
    %3420 = vmatprep.mubr.bf16.mxu0 0
    %3421 = vmatmul.mubr.bf16.gmra.mxu0 %v3234
    %v3422 = vpop.f32.mrf.mxu0
    %v3423 = vadd.f32 0.0, %v3422
    %v3424 = vpop.f32.mrf.mxu0
    %v3425 = vpop.f32.mrf.mxu0
    %v3426 = vadd.f32 0.0, %v3425
    %v3427 = vpop.f32.mrf.mxu0
    %3428 = vmatprep.mubr.bf16.mxu0 0
    %3429 = vmatmul.mubr.bf16.gmra.mxu0 %v3235
    %v3430 = vpop.f32.mrf.mxu0
    %v3431 = vadd.f32 0.0, %v3430
    %v3432 = vpop.f32.mrf.mxu0
    %v3433 = vpop.f32.mrf.mxu0
    %v3434 = vadd.f32 0.0, %v3433
    %v3435 = vpop.f32.mrf.mxu0
    %3436 = vmatprep.mubr.bf16.mxu0 0
    %3437 = vmatmul.mubr.bf16.gmra.mxu0 %v3236
    %v3438 = vpop.f32.mrf.mxu0
    %v3439 = vadd.f32 0.0, %v3438
    %v3440 = vpop.f32.mrf.mxu0
    %v3441 = vpop.f32.mrf.mxu0
    %v3442 = vadd.f32 0.0, %v3441
    %v3443 = vpop.f32.mrf.mxu0
    %3444 = vmatprep.mubr.bf16.mxu0 0
    %3445 = vmatmul.mubr.bf16.gmra.mxu0 %v3237
    %v3446 = vpop.f32.mrf.mxu0
    %v3447 = vadd.f32 0.0, %v3446
    %v3448 = vpop.f32.mrf.mxu0
    %v3449 = vpop.f32.mrf.mxu0
    %v3450 = vadd.f32 0.0, %v3449
    %v3451 = vpop.f32.mrf.mxu0
    %3452 = vdwg.mxu0
    %3453 = vmatprep.subr.bf16.mxu0 0
    %3454 = vmatpush1.bf16.msra.mxu0 %v1683
    %3455 = vmatprep.subr.bf16.mxu0 0
    %3456 = vmatpush1.bf16.msra.mxu0 %v1681
    %3457 = vmatprep.subr.bf16.mxu0 0
    %3458 = vmatpush1.bf16.msra.mxu0 %v1679
    %3459 = vmatprep.subr.bf16.mxu0 0
    %3460 = vmatpush1.bf16.msra.mxu0 %v1677
    %3461 = vmatprep.subr.bf16.mxu0 0
    %3462 = vmatpush1.bf16.msra.mxu0 %v1675
    %3463 = vmatprep.subr.bf16.mxu0 0
    %3464 = vmatpush1.bf16.msra.mxu0 %v1673
    %3465 = vmatprep.subr.bf16.mxu0 0
    %3466 = vmatpush1.bf16.msra.mxu0 %v1671
    %3467 = vmatprep.subr.bf16.mxu0 0
    %3468 = vmatpush1.bf16.msra.mxu0 %v1669
    %3469 = vmatprep.subr.bf16.mxu0 0
    %3470 = vmatpush2.bf16.msra.mxu0 0
    %3471 = vmatprep.subr.bf16.mxu0 0
    %3472 = vmatpush2.bf16.msra.mxu0 0
    %3473 = vmatprep.subr.bf16.mxu0 0
    %3474 = vmatpush2.bf16.msra.mxu0 0
    %3475 = vmatprep.subr.bf16.mxu0 0
    %3476 = vmatpush2.bf16.msra.mxu0 0
    %3477 = vmatprep.subr.bf16.mxu0 0
    %3478 = vmatpush2.bf16.msra.mxu0 0
    %3479 = vmatprep.subr.bf16.mxu0 0
    %3480 = vmatpush2.bf16.msra.mxu0 0
    %3481 = vmatprep.subr.bf16.mxu0 0
    %3482 = vmatpush2.bf16.msra.mxu0 0
    %3483 = vmatprep.subr.bf16.mxu0 0
    %3484 = vmatpush2.bf16.msra.mxu0 0
    %3485 = vmatprep.mubr.bf16.mxu0 0
    %3486 = vmatmul.mubr.bf16.gmra.mxu0 %v3238
    %v3487 = vpop.f32.mrf.mxu0
    %v3488 = vadd.f32 0.0, %v3487
    %v3489 = vpop.f32.mrf.mxu0
    %v3490 = vpop.f32.mrf.mxu0
    %v3491 = vadd.f32 0.0, %v3490
    %v3492 = vpop.f32.mrf.mxu0
    %3493 = vmatprep.mubr.bf16.mxu0 0
    %3494 = vmatmul.mubr.bf16.gmra.mxu0 %v3239
    %v3495 = vpop.f32.mrf.mxu0
    %v3496 = vadd.f32 0.0, %v3495
    %v3497 = vpop.f32.mrf.mxu0
    %v3498 = vpop.f32.mrf.mxu0
    %v3499 = vadd.f32 0.0, %v3498
    %v3500 = vpop.f32.mrf.mxu0
    %3501 = vmatprep.mubr.bf16.mxu0 0
    %3502 = vmatmul.mubr.bf16.gmra.mxu0 %v3240
    %v3503 = vpop.f32.mrf.mxu0
    %v3504 = vadd.f32 0.0, %v3503
    %v3505 = vpop.f32.mrf.mxu0
    %v3506 = vpop.f32.mrf.mxu0
    %v3507 = vadd.f32 0.0, %v3506
    %v3508 = vpop.f32.mrf.mxu0
    %3509 = vmatprep.mubr.bf16.mxu0 0
    %3510 = vmatmul.mubr.bf16.gmra.mxu0 %v3241
    %v3511 = vpop.f32.mrf.mxu0
    %v3512 = vadd.f32 0.0, %v3511
    %v3513 = vpop.f32.mrf.mxu0
    %v3514 = vpop.f32.mrf.mxu0
    %v3515 = vadd.f32 0.0, %v3514
    %v3516 = vpop.f32.mrf.mxu0
    %3517 = vdwg.mxu0
    %3518 = vmatprep.subr.bf16.mxu0 0
    %3519 = vmatpush1.bf16.msra.mxu0 %v1443
    %3520 = vmatprep.subr.bf16.mxu0 0
    %3521 = vmatpush1.bf16.msra.mxu0 %v1442
    %3522 = vmatprep.subr.bf16.mxu0 0
    %3523 = vmatpush1.bf16.msra.mxu0 %v1441
    %3524 = vmatprep.subr.bf16.mxu0 0
    %3525 = vmatpush1.bf16.msra.mxu0 %v1440
    %3526 = vmatprep.subr.bf16.mxu0 0
    %3527 = vmatpush1.bf16.msra.mxu0 %v1439
    %3528 = vmatprep.subr.bf16.mxu0 0
    %3529 = vmatpush1.bf16.msra.mxu0 %v1438
    %3530 = vmatprep.subr.bf16.mxu0 0
    %3531 = vmatpush1.bf16.msra.mxu0 %v1437
    %3532 = vmatprep.subr.bf16.mxu0 0
    %3533 = vmatpush1.bf16.msra.mxu0 %v1436
    %3534 = vmatprep.subr.bf16.mxu0 0
    %3535 = vmatpush2.bf16.msra.mxu0 0
    %3536 = vmatprep.subr.bf16.mxu0 0
    %3537 = vmatpush2.bf16.msra.mxu0 0
    %3538 = vmatprep.subr.bf16.mxu0 0
    %3539 = vmatpush2.bf16.msra.mxu0 0
    %3540 = vmatprep.subr.bf16.mxu0 0
    %3541 = vmatpush2.bf16.msra.mxu0 0
    %3542 = vmatprep.subr.bf16.mxu0 0
    %3543 = vmatpush2.bf16.msra.mxu0 0
    %3544 = vmatprep.subr.bf16.mxu0 0
    %3545 = vmatpush2.bf16.msra.mxu0 0
    %3546 = vmatprep.subr.bf16.mxu0 0
    %3547 = vmatpush2.bf16.msra.mxu0 0
    %3548 = vmatprep.subr.bf16.mxu0 0
    %3549 = vmatpush2.bf16.msra.mxu0 0
    %3550 = vmatprep.mubr.bf16.mxu0 0
    %3551 = vmatmul.mubr.bf16.gmra.mxu0 %v3242
    %v3552 = vpop.f32.mrf.mxu0
    %v3553 = vadd.f32 0.0, %v3552
    %v3554 = vpop.f32.mrf.mxu0
    %v3555 = vpop.f32.mrf.mxu0
    %v3556 = vadd.f32 0.0, %v3555
    %v3557 = vpop.f32.mrf.mxu0
    %3558 = vmatprep.mubr.bf16.mxu0 0
    %3559 = vmatmul.mubr.bf16.gmra.mxu0 %v3243
    %v3560 = vpop.f32.mrf.mxu0
    %v3561 = vadd.f32 0.0, %v3560
    %v3562 = vpop.f32.mrf.mxu0
    %v3563 = vpop.f32.mrf.mxu0
    %v3564 = vadd.f32 0.0, %v3563
    %v3565 = vpop.f32.mrf.mxu0
    %3566 = vmatprep.mubr.bf16.mxu0 0
    %3567 = vmatmul.mubr.bf16.gmra.mxu0 %v3244
    %v3568 = vpop.f32.mrf.mxu0
    %v3569 = vadd.f32 0.0, %v3568
    %v3570 = vpop.f32.mrf.mxu0
    %v3571 = vpop.f32.mrf.mxu0
    %v3572 = vadd.f32 0.0, %v3571
    %v3573 = vpop.f32.mrf.mxu0
    %3574 = vmatprep.mubr.bf16.mxu0 0
    %3575 = vmatmul.mubr.bf16.gmra.mxu0 %v3245
    %v3576 = vpop.f32.mrf.mxu0
    %v3577 = vadd.f32 0.0, %v3576
    %v3578 = vpop.f32.mrf.mxu0
    %v3579 = vpop.f32.mrf.mxu0
    %v3580 = vadd.f32 0.0, %v3579
    %v3581 = vpop.f32.mrf.mxu0
    %3582 = vdwg.mxu0
    %3583 = vmatprep.subr.bf16.mxu0 0
    %3584 = vmatpush1.bf16.msra.mxu0 %v1715
    %3585 = vmatprep.subr.bf16.mxu0 0
    %3586 = vmatpush1.bf16.msra.mxu0 %v1713
    %3587 = vmatprep.subr.bf16.mxu0 0
    %3588 = vmatpush1.bf16.msra.mxu0 %v1711
    %3589 = vmatprep.subr.bf16.mxu0 0
    %3590 = vmatpush1.bf16.msra.mxu0 %v1709
    %3591 = vmatprep.subr.bf16.mxu0 0
    %3592 = vmatpush1.bf16.msra.mxu0 %v1707
    %3593 = vmatprep.subr.bf16.mxu0 0
    %3594 = vmatpush1.bf16.msra.mxu0 %v1705
    %3595 = vmatprep.subr.bf16.mxu0 0
    %3596 = vmatpush1.bf16.msra.mxu0 %v1703
    %3597 = vmatprep.subr.bf16.mxu0 0
    %3598 = vmatpush1.bf16.msra.mxu0 %v1701
    %3599 = vmatprep.subr.bf16.mxu0 0
    %3600 = vmatpush2.bf16.msra.mxu0 0
    %3601 = vmatprep.subr.bf16.mxu0 0
    %3602 = vmatpush2.bf16.msra.mxu0 0
    %3603 = vmatprep.subr.bf16.mxu0 0
    %3604 = vmatpush2.bf16.msra.mxu0 0
    %3605 = vmatprep.subr.bf16.mxu0 0
    %3606 = vmatpush2.bf16.msra.mxu0 0
    %3607 = vmatprep.subr.bf16.mxu0 0
    %3608 = vmatpush2.bf16.msra.mxu0 0
    %3609 = vmatprep.subr.bf16.mxu0 0
    %3610 = vmatpush2.bf16.msra.mxu0 0
    %3611 = vmatprep.subr.bf16.mxu0 0
    %3612 = vmatpush2.bf16.msra.mxu0 0
    %3613 = vmatprep.subr.bf16.mxu0 0
    %3614 = vmatpush2.bf16.msra.mxu0 0
    %3615 = vmatprep.mubr.bf16.mxu0 0
    %3616 = vmatmul.mubr.bf16.gmra.mxu0 %v3246
    %v3617 = vpop.f32.mrf.mxu0
    %v3618 = vadd.f32 0.0, %v3617
    %v3619 = vpop.f32.mrf.mxu0
    %v3620 = vpop.f32.mrf.mxu0
    %v3621 = vadd.f32 0.0, %v3620
    %v3622 = vpop.f32.mrf.mxu0
    %3623 = vmatprep.mubr.bf16.mxu0 0
    %3624 = vmatmul.mubr.bf16.gmra.mxu0 %v3247
    %v3625 = vpop.f32.mrf.mxu0
    %v3626 = vadd.f32 0.0, %v3625
    %v3627 = vpop.f32.mrf.mxu0
    %v3628 = vpop.f32.mrf.mxu0
    %v3629 = vadd.f32 0.0, %v3628
    %v3630 = vpop.f32.mrf.mxu0
    %3631 = vmatprep.mubr.bf16.mxu0 0
    %3632 = vmatmul.mubr.bf16.gmra.mxu0 %v3248
    %v3633 = vpop.f32.mrf.mxu0
    %v3634 = vadd.f32 0.0, %v3633
    %v3635 = vpop.f32.mrf.mxu0
    %v3636 = vpop.f32.mrf.mxu0
    %v3637 = vadd.f32 0.0, %v3636
    %v3638 = vpop.f32.mrf.mxu0
    %3639 = vmatprep.mubr.bf16.mxu0 0
    %3640 = vmatmul.mubr.bf16.gmra.mxu0 %v3249
    %v3641 = vpop.f32.mrf.mxu0
    %v3642 = vadd.f32 0.0, %v3641
    %v3643 = vpop.f32.mrf.mxu0
    %v3644 = vpop.f32.mrf.mxu0
    %v3645 = vadd.f32 0.0, %v3644
    %v3646 = vpop.f32.mrf.mxu0
    %3647 = vdwg.mxu0
    %3648 = vmatprep.subr.bf16.mxu0 0
    %3649 = vmatpush1.bf16.msra.mxu0 %v1739
    %3650 = vmatprep.subr.bf16.mxu0 0
    %3651 = vmatpush1.bf16.msra.mxu0 %v1737
    %3652 = vmatprep.subr.bf16.mxu0 0
    %3653 = vmatpush1.bf16.msra.mxu0 %v1735
    %3654 = vmatprep.subr.bf16.mxu0 0
    %3655 = vmatpush1.bf16.msra.mxu0 %v1733
    %3656 = vmatprep.subr.bf16.mxu0 0
    %3657 = vmatpush1.bf16.msra.mxu0 %v1731
    %3658 = vmatprep.subr.bf16.mxu0 0
    %3659 = vmatpush1.bf16.msra.mxu0 %v1729
    %3660 = vmatprep.subr.bf16.mxu0 0
    %3661 = vmatpush1.bf16.msra.mxu0 %v1727
    %3662 = vmatprep.subr.bf16.mxu0 0
    %3663 = vmatpush1.bf16.msra.mxu0 %v1725
    %3664 = vmatprep.subr.bf16.mxu0 0
    %3665 = vmatpush2.bf16.msra.mxu0 0
    %3666 = vmatprep.subr.bf16.mxu0 0
    %3667 = vmatpush2.bf16.msra.mxu0 0
    %3668 = vmatprep.subr.bf16.mxu0 0
    %3669 = vmatpush2.bf16.msra.mxu0 0
    %3670 = vmatprep.subr.bf16.mxu0 0
    %3671 = vmatpush2.bf16.msra.mxu0 0
    %3672 = vmatprep.subr.bf16.mxu0 0
    %3673 = vmatpush2.bf16.msra.mxu0 0
    %3674 = vmatprep.subr.bf16.mxu0 0
    %3675 = vmatpush2.bf16.msra.mxu0 0
    %3676 = vmatprep.subr.bf16.mxu0 0
    %3677 = vmatpush2.bf16.msra.mxu0 0
    %3678 = vmatprep.subr.bf16.mxu0 0
    %3679 = vmatpush2.bf16.msra.mxu0 0
    %3680 = vmatprep.mubr.bf16.mxu0 0
    %3681 = vmatmul.mubr.bf16.gmra.mxu0 %v3250
    %v3682 = vpop.f32.mrf.mxu0
    %v3683 = vadd.f32 0.0, %v3682
    %v3684 = vpop.f32.mrf.mxu0
    %v3685 = vpop.f32.mrf.mxu0
    %v3686 = vadd.f32 0.0, %v3685
    %v3687 = vpop.f32.mrf.mxu0
    %3688 = vmatprep.mubr.bf16.mxu0 0
    %3689 = vmatmul.mubr.bf16.gmra.mxu0 %v3251
    %v3690 = vpop.f32.mrf.mxu0
    %v3691 = vadd.f32 0.0, %v3690
    %v3692 = vpop.f32.mrf.mxu0
    %v3693 = vpop.f32.mrf.mxu0
    %v3694 = vadd.f32 0.0, %v3693
    %v3695 = vpop.f32.mrf.mxu0
    %3696 = vmatprep.mubr.bf16.mxu0 0
    %3697 = vmatmul.mubr.bf16.gmra.mxu0 %v3252
    %v3698 = vpop.f32.mrf.mxu0
    %v3699 = vadd.f32 0.0, %v3698
    %v3700 = vpop.f32.mrf.mxu0
    %v3701 = vpop.f32.mrf.mxu0
    %v3702 = vadd.f32 0.0, %v3701
    %v3703 = vpop.f32.mrf.mxu0
    %3704 = vmatprep.mubr.bf16.mxu0 0
    %3705 = vmatmul.mubr.bf16.gmra.mxu0 %v3253
    %v3706 = vpop.f32.mrf.mxu0
    %v3707 = vadd.f32 0.0, %v3706
    %v3708 = vpop.f32.mrf.mxu0
    %v3709 = vpop.f32.mrf.mxu0
    %v3710 = vadd.f32 0.0, %v3709
    %v3711 = vpop.f32.mrf.mxu0
    %3712 = vdwg.mxu0
    %3713 = vmatprep.subr.bf16.mxu0 0
    %3714 = vmatpush1.bf16.msra.mxu0 %v1763
    %3715 = vmatprep.subr.bf16.mxu0 0
    %3716 = vmatpush1.bf16.msra.mxu0 %v1761
    %3717 = vmatprep.subr.bf16.mxu0 0
    %3718 = vmatpush1.bf16.msra.mxu0 %v1759
    %3719 = vmatprep.subr.bf16.mxu0 0
    %3720 = vmatpush1.bf16.msra.mxu0 %v1757
    %3721 = vmatprep.subr.bf16.mxu0 0
    %3722 = vmatpush1.bf16.msra.mxu0 %v1755
    %3723 = vmatprep.subr.bf16.mxu0 0
    %3724 = vmatpush1.bf16.msra.mxu0 %v1753
    %3725 = vmatprep.subr.bf16.mxu0 0
    %3726 = vmatpush1.bf16.msra.mxu0 %v1751
    %3727 = vmatprep.subr.bf16.mxu0 0
    %3728 = vmatpush1.bf16.msra.mxu0 %v1749
    %3729 = vmatprep.subr.bf16.mxu0 0
    %3730 = vmatpush2.bf16.msra.mxu0 0
    %3731 = vmatprep.subr.bf16.mxu0 0
    %3732 = vmatpush2.bf16.msra.mxu0 0
    %3733 = vmatprep.subr.bf16.mxu0 0
    %3734 = vmatpush2.bf16.msra.mxu0 0
    %3735 = vmatprep.subr.bf16.mxu0 0
    %3736 = vmatpush2.bf16.msra.mxu0 0
    %3737 = vmatprep.subr.bf16.mxu0 0
    %3738 = vmatpush2.bf16.msra.mxu0 0
    %3739 = vmatprep.subr.bf16.mxu0 0
    %3740 = vmatpush2.bf16.msra.mxu0 0
    %3741 = vmatprep.subr.bf16.mxu0 0
    %3742 = vmatpush2.bf16.msra.mxu0 0
    %3743 = vmatprep.subr.bf16.mxu0 0
    %3744 = vmatpush2.bf16.msra.mxu0 0
    %3745 = vmatprep.mubr.bf16.mxu0 0
    %3746 = vmatmul.mubr.bf16.gmra.mxu0 %v3254
    %v3747 = vpop.f32.mrf.mxu0
    %v3748 = vadd.f32 0.0, %v3747
    %v3749 = vpop.f32.mrf.mxu0
    %v3750 = vpop.f32.mrf.mxu0
    %v3751 = vadd.f32 0.0, %v3750
    %v3752 = vpop.f32.mrf.mxu0
    %3753 = vmatprep.mubr.bf16.mxu0 0
    %3754 = vmatmul.mubr.bf16.gmra.mxu0 %v3255
    %v3755 = vpop.f32.mrf.mxu0
    %v3756 = vadd.f32 0.0, %v3755
    %v3757 = vpop.f32.mrf.mxu0
    %v3758 = vpop.f32.mrf.mxu0
    %v3759 = vadd.f32 0.0, %v3758
    %v3760 = vpop.f32.mrf.mxu0
    %3761 = vmatprep.mubr.bf16.mxu0 0
    %3762 = vmatmul.mubr.bf16.gmra.mxu0 %v3256
    %v3763 = vpop.f32.mrf.mxu0
    %v3764 = vadd.f32 0.0, %v3763
    %v3765 = vpop.f32.mrf.mxu0
    %v3766 = vpop.f32.mrf.mxu0
    %v3767 = vadd.f32 0.0, %v3766
    %v3768 = vpop.f32.mrf.mxu0
    %3769 = vmatprep.mubr.bf16.mxu0 0
    %3770 = vmatmul.mubr.bf16.gmra.mxu0 %v3257
    %v3771 = vpop.f32.mrf.mxu0
    %v3772 = vadd.f32 0.0, %v3771
    %v3773 = vpop.f32.mrf.mxu0
    %v3774 = vpop.f32.mrf.mxu0
    %v3775 = vadd.f32 0.0, %v3774
    %v3776 = vpop.f32.mrf.mxu0
    %3777 = vdwg.mxu0
    %v3778 = vpack.c.bf16 %v3296, %v3293
    %v3779 = vpack.c.bf16 %v3304, %v3301
    %v3780 = vpack.c.bf16 %v3312, %v3309
    %v3781 = vpack.c.bf16 %v3320, %v3317
    %v3782 = vpack.c.bf16 %v3361, %v3358
    %v3783 = vpack.c.bf16 %v3369, %v3366
    %v3784 = vpack.c.bf16 %v3377, %v3374
    %v3785 = vpack.c.bf16 %v3385, %v3382
    %v3786 = vpack.c.bf16 %v3426, %v3423
    %v3787 = vpack.c.bf16 %v3434, %v3431
    %v3788 = vpack.c.bf16 %v3442, %v3439
    %v3789 = vpack.c.bf16 %v3450, %v3447
    %v3790 = vpack.c.bf16 %v3491, %v3488
    %v3791 = vpack.c.bf16 %v3499, %v3496
    %v3792 = vpack.c.bf16 %v3507, %v3504
    %v3793 = vpack.c.bf16 %v3515, %v3512
    %v3794 = vpack.c.bf16 %v3556, %v3553
    %v3795 = vpack.c.bf16 %v3564, %v3561
    %v3796 = vpack.c.bf16 %v3572, %v3569
    %v3797 = vpack.c.bf16 %v3580, %v3577
    %v3798 = vpack.c.bf16 %v3621, %v3618
    %v3799 = vpack.c.bf16 %v3629, %v3626
    %v3800 = vpack.c.bf16 %v3637, %v3634
    %v3801 = vpack.c.bf16 %v3645, %v3642
    %v3802 = vpack.c.bf16 %v3686, %v3683
    %v3803 = vpack.c.bf16 %v3694, %v3691
    %v3804 = vpack.c.bf16 %v3702, %v3699
    %v3805 = vpack.c.bf16 %v3710, %v3707
    %v3806 = vpack.c.bf16 %v3751, %v3748
    %v3807 = vpack.c.bf16 %v3759, %v3756
    %v3808 = vpack.c.bf16 %v3767, %v3764
    %v3809 = vpack.c.bf16 %v3775, %v3772
    %3814 = vrot.lane.b32.xlu0 %v3782, 32
    %v3815 = vpop.permute.xlu0 %3814
    %3816 = vrot.lane.b32.xlu0 %v3783, 32
    %v3817 = vpop.permute.xlu0 %3816
    %3818 = vrot.lane.b32.xlu0 %v3784, 32
    %v3819 = vpop.permute.xlu0 %3818
    %3820 = vrot.lane.b32.xlu0 %v3785, 32
    %v3821 = vpop.permute.xlu0 %3820
    %3826 = vrot.lane.b32.xlu0 %v3786, 64
    %v3827 = vpop.permute.xlu0 %3826
    %3828 = vrot.lane.b32.xlu0 %v3787, 64
    %v3829 = vpop.permute.xlu0 %3828
    %3830 = vrot.lane.b32.xlu0 %v3788, 64
    %v3831 = vpop.permute.xlu0 %3830
    %3832 = vrot.lane.b32.xlu0 %v3789, 64
    %v3833 = vpop.permute.xlu0 %3832
    %3838 = vrot.lane.b32.xlu0 %v3790, 96
    %v3839 = vpop.permute.xlu0 %3838
    %3840 = vrot.lane.b32.xlu0 %v3791, 96
    %v3841 = vpop.permute.xlu0 %3840
    %3842 = vrot.lane.b32.xlu0 %v3792, 96
    %v3843 = vpop.permute.xlu0 %3842
    %3844 = vrot.lane.b32.xlu0 %v3793, 96
    %v3845 = vpop.permute.xlu0 %3844
    %v3848 = vsel %vm1772, %v3778, %v3815
    %v3851 = vsel %vm1772, %v3779, %v3817
    %v3854 = vsel %vm1772, %v3780, %v3819
    %v3857 = vsel %vm1772, %v3781, %v3821
    %vm3858 = vcmask 523264
    %v3860 = vsel %vm3858, %v3848, %v3827
    %v3862 = vsel %vm3858, %v3851, %v3829
    %v3864 = vsel %vm3858, %v3854, %v3831
    %v3866 = vsel %vm3858, %v3857, %v3833
    %vm3867 = vcmask 785408
    %v3869 = vsel %vm3867, %v3860, %v3839
    %v3872 = vsel %vm3867, %v3862, %v3841
    %v3875 = vsel %vm3867, %v3864, %v3843
    %v3878 = vsel %vm3867, %v3866, %v3845
    %3884 = vrot.lane.b32.xlu0 %v3798, 32
    %v3885 = vpop.permute.xlu0 %3884
    %3886 = vrot.lane.b32.xlu0 %v3799, 32
    %v3887 = vpop.permute.xlu0 %3886
    %3888 = vrot.lane.b32.xlu0 %v3800, 32
    %v3889 = vpop.permute.xlu0 %3888
    %3890 = vrot.lane.b32.xlu0 %v3801, 32
    %v3891 = vpop.permute.xlu0 %3890
    %3896 = vrot.lane.b32.xlu0 %v3802, 64
    %v3897 = vpop.permute.xlu0 %3896
    %3898 = vrot.lane.b32.xlu0 %v3803, 64
    %v3899 = vpop.permute.xlu0 %3898
    %3900 = vrot.lane.b32.xlu0 %v3804, 64
    %v3901 = vpop.permute.xlu0 %3900
    %3902 = vrot.lane.b32.xlu0 %v3805, 64
    %v3903 = vpop.permute.xlu0 %3902
    %3908 = vrot.lane.b32.xlu0 %v3806, 96
    %v3909 = vpop.permute.xlu0 %3908
    %3910 = vrot.lane.b32.xlu0 %v3807, 96
    %v3911 = vpop.permute.xlu0 %3910
    %3912 = vrot.lane.b32.xlu0 %v3808, 96
    %v3913 = vpop.permute.xlu0 %3912
    %3914 = vrot.lane.b32.xlu0 %v3809, 96
    %v3915 = vpop.permute.xlu0 %3914
    %v3918 = vsel %vm1772, %v3794, %v3885
    %v3921 = vsel %vm1772, %v3795, %v3887
    %v3924 = vsel %vm1772, %v3796, %v3889
    %v3927 = vsel %vm1772, %v3797, %v3891
    %v3929 = vsel %vm3858, %v3918, %v3897
    %v3931 = vsel %vm3858, %v3921, %v3899
    %v3933 = vsel %vm3858, %v3924, %v3901
    %v3935 = vsel %vm3858, %v3927, %v3903
    %v3937 = vsel %vm3867, %v3929, %v3909
    %v3940 = vsel %vm3867, %v3931, %v3911
    %v3943 = vsel %vm3867, %v3933, %v3913
    %v3946 = vsel %vm3867, %v3935, %v3915
    %v3948 = vld [vmem:[#allocation14] sm:$0xf]
    %v3949 = vld [vmem:[#allocation14 + $0x4] sm:$0xf]
    %v3950 = vld [vmem:[#allocation14 + $0x8] sm:$0xf]
    %v3951 = vld [vmem:[#allocation14 + $0xc] sm:$0xf]
    %v3952 = vld [vmem:[#allocation14 + $0x10] sm:$0xf]
    %v3953 = vld [vmem:[#allocation14 + $0x14] sm:$0xf]
    %v3954 = vld [vmem:[#allocation14 + $0x18] sm:$0xf]
    %v3955 = vld [vmem:[#allocation14 + $0x1c] sm:$0xf]
    %v3956 = vld [vmem:[#allocation14 + $0x20] sm:$0xf]
    %v3957 = vld [vmem:[#allocation14 + $0x24] sm:$0xf]
    %v3958 = vld [vmem:[#allocation14 + $0x28] sm:$0xf]
    %v3959 = vld [vmem:[#allocation14 + $0x2c] sm:$0xf]
    %v3960 = vld [vmem:[#allocation14 + $0x30] sm:$0xf]
    %v3961 = vld [vmem:[#allocation14 + $0x34] sm:$0xf]
    %v3962 = vld [vmem:[#allocation14 + $0x38] sm:$0xf]
    %v3963 = vld [vmem:[#allocation14 + $0x3c] sm:$0xf]
    %v3964 = vld [vmem:[%s10] sm:$0x1]
    %v3966 = vlaneseq
    %v3967 = vshrl.u32 %v3966, 7
    %v3968 = vsub.s32 0, %v3967
    %v3969 = vrot.slane %v3964, %v3968
    %v3987 = vunpack.c.l.b16 %v3948
    %v3988 = vunpack.c.l.b16 %v3949
    %v3989 = vunpack.c.l.b16 %v3950
    %v3990 = vunpack.c.l.b16 %v3951
    %v3991 = vunpack.c.l.b16 %v3952
    %v3992 = vunpack.c.l.b16 %v3953
    %v3993 = vunpack.c.l.b16 %v3954
    %v3994 = vunpack.c.l.b16 %v3955
    %v3995 = vunpack.c.l.b16 %v3956
    %v3996 = vunpack.c.l.b16 %v3957
    %v3997 = vunpack.c.l.b16 %v3958
    %v3998 = vunpack.c.l.b16 %v3959
    %v3999 = vunpack.c.l.b16 %v3960
    %v4000 = vunpack.c.l.b16 %v3961
    %v4001 = vunpack.c.l.b16 %v3962
    %v4002 = vunpack.c.l.b16 %v3963
    %v4003 = vpack.c.b16 %v3988, %v3987
    %v4004 = vpack.c.b16 %v3990, %v3989
    %v4005 = vpack.c.b16 %v3992, %v3991
    %v4006 = vpack.c.b16 %v3994, %v3993
    %v4007 = vpack.c.b16 %v3996, %v3995
    %v4008 = vpack.c.b16 %v3998, %v3997
    %v4009 = vpack.c.b16 %v4000, %v3999
    %v4010 = vpack.c.b16 %v4002, %v4001
    %4019 = vmatprep.subr.bf16.mxu0 0
    %4020 = vmatpush1.bf16.msra.mxu0 %v4010
    %4021 = vmatprep.subr.bf16.mxu0 0
    %4022 = vmatpush1.bf16.msra.mxu0 %v4009
    %4023 = vmatprep.subr.bf16.mxu0 0
    %4024 = vmatpush1.bf16.msra.mxu0 %v4008
    %4025 = vmatprep.subr.bf16.mxu0 0
    %4026 = vmatpush1.bf16.msra.mxu0 %v4007
    %4027 = vmatprep.subr.bf16.mxu0 0
    %4028 = vmatpush1.bf16.msra.mxu0 %v4006
    %4029 = vmatprep.subr.bf16.mxu0 0
    %4030 = vmatpush1.bf16.msra.mxu0 %v4005
    %4031 = vmatprep.subr.bf16.mxu0 0
    %4032 = vmatpush1.bf16.msra.mxu0 %v4004
    %4033 = vmatprep.subr.bf16.mxu0 0
    %4034 = vmatpush1.bf16.msra.mxu0 %v4003
    %4035 = vmatprep.subr.bf16.mxu0 0
    %4036 = vmatpush2.bf16.msra.mxu0 0
    %4037 = vmatprep.subr.bf16.mxu0 0
    %4038 = vmatpush2.bf16.msra.mxu0 0
    %4039 = vmatprep.subr.bf16.mxu0 0
    %4040 = vmatpush2.bf16.msra.mxu0 0
    %4041 = vmatprep.subr.bf16.mxu0 0
    %4042 = vmatpush2.bf16.msra.mxu0 0
    %4043 = vmatprep.subr.bf16.mxu0 0
    %4044 = vmatpush2.bf16.msra.mxu0 0
    %4045 = vmatprep.subr.bf16.mxu0 0
    %4046 = vmatpush2.bf16.msra.mxu0 0
    %4047 = vmatprep.subr.bf16.mxu0 0
    %4048 = vmatpush2.bf16.msra.mxu0 0
    %4049 = vmatprep.subr.bf16.mxu0 0
    %4050 = vmatpush2.bf16.msra.mxu0 0
    %4051 = vmatprep.mubr.bf16.mxu0 0
    %4052 = vmatmul.mubr.bf16.gmra.mxu0 %v3869
    %v4053 = vpop.f32.mrf.mxu0
    %v4054 = vadd.f32 %v3969, %v4053
    %v4055 = vpop.f32.mrf.mxu0
    %v4056 = vpop.f32.mrf.mxu0
    %v4057 = vadd.f32 %v3969, %v4056
    %v4058 = vpop.f32.mrf.mxu0
    %4059 = vmatprep.mubr.bf16.mxu0 0
    %4060 = vmatmul.mubr.bf16.gmra.mxu0 %v3872
    %v4061 = vpop.f32.mrf.mxu0
    %v4062 = vadd.f32 %v3969, %v4061
    %v4063 = vpop.f32.mrf.mxu0
    %v4064 = vpop.f32.mrf.mxu0
    %v4065 = vadd.f32 %v3969, %v4064
    %v4066 = vpop.f32.mrf.mxu0
    %4067 = vmatprep.mubr.bf16.mxu0 0
    %4068 = vmatmul.mubr.bf16.gmra.mxu0 %v3875
    %v4069 = vpop.f32.mrf.mxu0
    %v4070 = vadd.f32 %v3969, %v4069
    %v4071 = vpop.f32.mrf.mxu0
    %v4072 = vpop.f32.mrf.mxu0
    %v4073 = vadd.f32 %v3969, %v4072
    %v4074 = vpop.f32.mrf.mxu0
    %4075 = vmatprep.mubr.bf16.mxu0 0
    %4076 = vmatmul.mubr.bf16.gmra.mxu0 %v3878
    %v4077 = vpop.f32.mrf.mxu0
    %v4078 = vadd.f32 %v3969, %v4077
    %v4079 = vpop.f32.mrf.mxu0
    %v4080 = vpop.f32.mrf.mxu0
    %v4081 = vadd.f32 %v3969, %v4080
    %v4082 = vpop.f32.mrf.mxu0
    %4083 = vmatprep.mubr.bf16.mxu0 0
    %4084 = vmatmul.mubr.bf16.gmra.mxu0 %v3937
    %v4085 = vpop.f32.mrf.mxu0
    %v4086 = vadd.f32 %v3969, %v4085
    %v4087 = vpop.f32.mrf.mxu0
    %v4088 = vpop.f32.mrf.mxu0
    %v4089 = vadd.f32 %v3969, %v4088
    %v4090 = vpop.f32.mrf.mxu0
    %4091 = vmatprep.mubr.bf16.mxu0 0
    %4092 = vmatmul.mubr.bf16.gmra.mxu0 %v3940
    %v4093 = vpop.f32.mrf.mxu0
    %v4094 = vadd.f32 %v3969, %v4093
    %v4095 = vpop.f32.mrf.mxu0
    %v4096 = vpop.f32.mrf.mxu0
    %v4097 = vadd.f32 %v3969, %v4096
    %v4098 = vpop.f32.mrf.mxu0
    %4099 = vmatprep.mubr.bf16.mxu0 0
    %4100 = vmatmul.mubr.bf16.gmra.mxu0 %v3943
    %v4101 = vpop.f32.mrf.mxu0
    %v4102 = vadd.f32 %v3969, %v4101
    %v4103 = vpop.f32.mrf.mxu0
    %v4104 = vpop.f32.mrf.mxu0
    %v4105 = vadd.f32 %v3969, %v4104
    %v4106 = vpop.f32.mrf.mxu0
    %4107 = vmatprep.mubr.bf16.mxu0 0
    %4108 = vmatmul.mubr.bf16.gmra.mxu0 %v3946
    %v4109 = vpop.f32.mrf.mxu0
    %v4110 = vadd.f32 %v3969, %v4109
    %v4111 = vpop.f32.mrf.mxu0
    %v4112 = vpop.f32.mrf.mxu0
    %v4113 = vadd.f32 %v3969, %v4112
    %v4114 = vpop.f32.mrf.mxu0
    %4115 = vdwg.mxu0
    %v4116 = vld [vmem:[#allocation2] sm:$0xff]
    %v4117 = vld [vmem:[#allocation2 + $0x8] sm:$0xff]
    %v4118 = vld [vmem:[#allocation2 + $0x10] sm:$0xff]
    %v4119 = vld [vmem:[#allocation2 + $0x18] sm:$0xff]
    %v4120 = vld [vmem:[#allocation2 + $0x20] sm:$0xff]
    %v4121 = vld [vmem:[#allocation2 + $0x28] sm:$0xff]
    %v4122 = vld [vmem:[#allocation2 + $0x30] sm:$0xff]
    %v4123 = vld [vmem:[#allocation2 + $0x38] sm:$0xff]
    %v4124 = vld [vmem:[#allocation2 + $0x40] sm:$0xff]
    %v4125 = vld [vmem:[#allocation2 + $0x48] sm:$0xff]
    %v4126 = vld [vmem:[#allocation2 + $0x50] sm:$0xff]
    %v4127 = vld [vmem:[#allocation2 + $0x58] sm:$0xff]
    %v4128 = vld [vmem:[#allocation2 + $0x60] sm:$0xff]
    %v4129 = vld [vmem:[#allocation2 + $0x68] sm:$0xff]
    %v4130 = vld [vmem:[#allocation2 + $0x70] sm:$0xff]
    %v4131 = vld [vmem:[#allocation2 + $0x78] sm:$0xff]
    %v4132 = vadd.f32 %v4116, %v4054
    %v4133 = vadd.f32 %v4117, %v4057
    %v4134 = vadd.f32 %v4118, %v4062
    %v4135 = vadd.f32 %v4119, %v4065
    %v4136 = vadd.f32 %v4120, %v4070
    %v4137 = vadd.f32 %v4121, %v4073
    %v4138 = vadd.f32 %v4122, %v4078
    %v4139 = vadd.f32 %v4123, %v4081
    %v4140 = vadd.f32 %v4124, %v4086
    %v4141 = vadd.f32 %v4125, %v4089
    %v4142 = vadd.f32 %v4126, %v4094
    %v4143 = vadd.f32 %v4127, %v4097
    %v4144 = vadd.f32 %v4128, %v4102
    %v4145 = vadd.f32 %v4129, %v4105
    %v4146 = vadd.f32 %v4130, %v4110
    %v4147 = vadd.f32 %v4131, %v4113
    %v4148 = vld [vmem:[%s11] sm:$0x1]
    %v4149 = vld [vmem:[%s12] sm:$0x1]
    %4150 = vadd.xlane.f32.xlu0 %v4132
    %v4151 = vpop.xlane.xlu0 %4150
    %4152 = vadd.xlane.f32.xlu0 %v4133
    %v4153 = vpop.xlane.xlu0 %4152
    %4154 = vadd.xlane.f32.xlu0 %v4134
    %v4155 = vpop.xlane.xlu0 %4154
    %4156 = vadd.xlane.f32.xlu0 %v4135
    %v4157 = vpop.xlane.xlu0 %4156
    %4158 = vadd.xlane.f32.xlu0 %v4136
    %v4159 = vpop.xlane.xlu0 %4158
    %4160 = vadd.xlane.f32.xlu0 %v4137
    %v4161 = vpop.xlane.xlu0 %4160
    %4162 = vadd.xlane.f32.xlu0 %v4138
    %v4163 = vpop.xlane.xlu0 %4162
    %4164 = vadd.xlane.f32.xlu0 %v4139
    %v4165 = vpop.xlane.xlu0 %4164
    %4166 = vadd.xlane.f32.xlu0 %v4140
    %v4167 = vpop.xlane.xlu0 %4166
    %4168 = vadd.xlane.f32.xlu0 %v4141
    %v4169 = vpop.xlane.xlu0 %4168
    %4170 = vadd.xlane.f32.xlu0 %v4142
    %v4171 = vpop.xlane.xlu0 %4170
    %4172 = vadd.xlane.f32.xlu0 %v4143
    %v4173 = vpop.xlane.xlu0 %4172
    %4174 = vadd.xlane.f32.xlu0 %v4144
    %v4175 = vpop.xlane.xlu0 %4174
    %4176 = vadd.xlane.f32.xlu0 %v4145
    %v4177 = vpop.xlane.xlu0 %4176
    %4178 = vadd.xlane.f32.xlu0 %v4146
    %v4179 = vpop.xlane.xlu0 %4178
    %4180 = vadd.xlane.f32.xlu0 %v4147
    %v4181 = vpop.xlane.xlu0 %4180
    %v4182 = vmul.f32 %v4151, %v292
    %v4183 = vmul.f32 %v4153, %v292
    %v4184 = vmul.f32 %v4155, %v292
    %v4185 = vmul.f32 %v4157, %v292
    %v4186 = vmul.f32 %v4159, %v292
    %v4187 = vmul.f32 %v4161, %v292
    %v4188 = vmul.f32 %v4163, %v292
    %v4189 = vmul.f32 %v4165, %v292
    %v4190 = vmul.f32 %v4167, %v292
    %v4191 = vmul.f32 %v4169, %v292
    %v4192 = vmul.f32 %v4171, %v292
    %v4193 = vmul.f32 %v4173, %v292
    %v4194 = vmul.f32 %v4175, %v292
    %v4195 = vmul.f32 %v4177, %v292
    %v4196 = vmul.f32 %v4179, %v292
    %v4197 = vmul.f32 %v4181, %v292
    %v4198 = vsub.f32 %v4132, %v4182
    %v4199 = vsub.f32 %v4133, %v4183
    %v4200 = vsub.f32 %v4134, %v4184
    %v4201 = vsub.f32 %v4135, %v4185
    %v4202 = vsub.f32 %v4136, %v4186
    %v4203 = vsub.f32 %v4137, %v4187
    %v4204 = vsub.f32 %v4138, %v4188
    %v4205 = vsub.f32 %v4139, %v4189
    %v4206 = vsub.f32 %v4140, %v4190
    %v4207 = vsub.f32 %v4141, %v4191
    %v4208 = vsub.f32 %v4142, %v4192
    %v4209 = vsub.f32 %v4143, %v4193
    %v4210 = vsub.f32 %v4144, %v4194
    %v4211 = vsub.f32 %v4145, %v4195
    %v4212 = vsub.f32 %v4146, %v4196
    %v4213 = vsub.f32 %v4147, %v4197
    %v4214 = vmul.f32 %v4198, %v4198
    %v4215 = vmul.f32 %v4199, %v4199
    %v4216 = vmul.f32 %v4200, %v4200
    %v4217 = vmul.f32 %v4201, %v4201
    %v4218 = vmul.f32 %v4202, %v4202
    %v4219 = vmul.f32 %v4203, %v4203
    %v4220 = vmul.f32 %v4204, %v4204
    %v4221 = vmul.f32 %v4205, %v4205
    %v4222 = vmul.f32 %v4206, %v4206
    %v4223 = vmul.f32 %v4207, %v4207
    %v4224 = vmul.f32 %v4208, %v4208
    %v4225 = vmul.f32 %v4209, %v4209
    %v4226 = vmul.f32 %v4210, %v4210
    %v4227 = vmul.f32 %v4211, %v4211
    %v4228 = vmul.f32 %v4212, %v4212
    %v4229 = vmul.f32 %v4213, %v4213
    %4230 = vadd.xlane.f32.xlu0 %v4214
    %v4231 = vpop.xlane.xlu0 %4230
    %4232 = vadd.xlane.f32.xlu0 %v4215
    %v4233 = vpop.xlane.xlu0 %4232
    %4234 = vadd.xlane.f32.xlu0 %v4216
    %v4235 = vpop.xlane.xlu0 %4234
    %4236 = vadd.xlane.f32.xlu0 %v4217
    %v4237 = vpop.xlane.xlu0 %4236
    %4238 = vadd.xlane.f32.xlu0 %v4218
    %v4239 = vpop.xlane.xlu0 %4238
    %4240 = vadd.xlane.f32.xlu0 %v4219
    %v4241 = vpop.xlane.xlu0 %4240
    %4242 = vadd.xlane.f32.xlu0 %v4220
    %v4243 = vpop.xlane.xlu0 %4242
    %4244 = vadd.xlane.f32.xlu0 %v4221
    %v4245 = vpop.xlane.xlu0 %4244
    %4246 = vadd.xlane.f32.xlu0 %v4222
    %v4247 = vpop.xlane.xlu0 %4246
    %4248 = vadd.xlane.f32.xlu0 %v4223
    %v4249 = vpop.xlane.xlu0 %4248
    %4250 = vadd.xlane.f32.xlu0 %v4224
    %v4251 = vpop.xlane.xlu0 %4250
    %4252 = vadd.xlane.f32.xlu0 %v4225
    %v4253 = vpop.xlane.xlu0 %4252
    %4254 = vadd.xlane.f32.xlu0 %v4226
    %v4255 = vpop.xlane.xlu0 %4254
    %4256 = vadd.xlane.f32.xlu0 %v4227
    %v4257 = vpop.xlane.xlu0 %4256
    %4258 = vadd.xlane.f32.xlu0 %v4228
    %v4259 = vpop.xlane.xlu0 %4258
    %4260 = vadd.xlane.f32.xlu0 %v4229
    %v4261 = vpop.xlane.xlu0 %4260
    %v4262 = vmul.f32 %v4231, %v292
    %v4263 = vmul.f32 %v4233, %v292
    %v4264 = vmul.f32 %v4235, %v292
    %v4265 = vmul.f32 %v4237, %v292
    %v4266 = vmul.f32 %v4239, %v292
    %v4267 = vmul.f32 %v4241, %v292
    %v4268 = vmul.f32 %v4243, %v292
    %v4269 = vmul.f32 %v4245, %v292
    %v4270 = vmul.f32 %v4247, %v292
    %v4271 = vmul.f32 %v4249, %v292
    %v4272 = vmul.f32 %v4251, %v292
    %v4273 = vmul.f32 %v4253, %v292
    %v4274 = vmul.f32 %v4255, %v292
    %v4275 = vmul.f32 %v4257, %v292
    %v4276 = vmul.f32 %v4259, %v292
    %v4277 = vmul.f32 %v4261, %v292
    %v4278 = vadd.f32 %v4262, 1e-05
    %v4279 = vadd.f32 %v4263, 1e-05
    %v4280 = vadd.f32 %v4264, 1e-05
    %v4281 = vadd.f32 %v4265, 1e-05
    %v4282 = vadd.f32 %v4266, 1e-05
    %v4283 = vadd.f32 %v4267, 1e-05
    %v4284 = vadd.f32 %v4268, 1e-05
    %v4285 = vadd.f32 %v4269, 1e-05
    %v4286 = vadd.f32 %v4270, 1e-05
    %v4287 = vadd.f32 %v4271, 1e-05
    %v4288 = vadd.f32 %v4272, 1e-05
    %v4289 = vadd.f32 %v4273, 1e-05
    %v4290 = vadd.f32 %v4274, 1e-05
    %v4291 = vadd.f32 %v4275, 1e-05
    %v4292 = vadd.f32 %v4276, 1e-05
    %v4293 = vadd.f32 %v4277, 1e-05
    %v4294 = vrsqrt.pop %v4278
    %v4295 = vrsqrt.pop %v4279
    %v4296 = vrsqrt.pop %v4280
    %v4297 = vrsqrt.pop %v4281
    %v4298 = vrsqrt.pop %v4282
    %v4299 = vrsqrt.pop %v4283
    %v4300 = vrsqrt.pop %v4284
    %v4301 = vrsqrt.pop %v4285
    %v4302 = vrsqrt.pop %v4286
    %v4303 = vrsqrt.pop %v4287
    %v4304 = vrsqrt.pop %v4288
    %v4305 = vrsqrt.pop %v4289
    %v4306 = vrsqrt.pop %v4290
    %v4307 = vrsqrt.pop %v4291
    %v4308 = vrsqrt.pop %v4292
    %v4309 = vrsqrt.pop %v4293
    %v4310 = vmul.f32 %v4198, %v4294
    %v4311 = vmul.f32 %v4199, %v4295
    %v4312 = vmul.f32 %v4200, %v4296
    %v4313 = vmul.f32 %v4201, %v4297
    %v4314 = vmul.f32 %v4202, %v4298
    %v4315 = vmul.f32 %v4203, %v4299
    %v4316 = vmul.f32 %v4204, %v4300
    %v4317 = vmul.f32 %v4205, %v4301
    %v4318 = vmul.f32 %v4206, %v4302
    %v4319 = vmul.f32 %v4207, %v4303
    %v4320 = vmul.f32 %v4208, %v4304
    %v4321 = vmul.f32 %v4209, %v4305
    %v4322 = vmul.f32 %v4210, %v4306
    %v4323 = vmul.f32 %v4211, %v4307
    %v4324 = vmul.f32 %v4212, %v4308
    %v4325 = vmul.f32 %v4213, %v4309
    %v4327 = vlaneseq
    %v4328 = vshrl.u32 %v4327, 7
    %v4329 = vsub.s32 0, %v4328
    %v4330 = vrot.slane %v4148, %v4329
    %v4332 = vmul.f32 %v4310, %v4330
    %v4333 = vmul.f32 %v4311, %v4330
    %v4334 = vmul.f32 %v4312, %v4330
    %v4335 = vmul.f32 %v4313, %v4330
    %v4336 = vmul.f32 %v4314, %v4330
    %v4337 = vmul.f32 %v4315, %v4330
    %v4338 = vmul.f32 %v4316, %v4330
    %v4339 = vmul.f32 %v4317, %v4330
    %v4340 = vmul.f32 %v4318, %v4330
    %v4341 = vmul.f32 %v4319, %v4330
    %v4342 = vmul.f32 %v4320, %v4330
    %v4343 = vmul.f32 %v4321, %v4330
    %v4344 = vmul.f32 %v4322, %v4330
    %v4345 = vmul.f32 %v4323, %v4330
    %v4346 = vmul.f32 %v4324, %v4330
    %v4347 = vmul.f32 %v4325, %v4330
    %v4349 = vlaneseq
    %v4350 = vshrl.u32 %v4349, 7
    %v4351 = vsub.s32 0, %v4350
    %v4352 = vrot.slane %v4149, %v4351
    %v4354 = vadd.f32 %v4332, %v4352
    %v4355 = vadd.f32 %v4333, %v4352
    %v4356 = vadd.f32 %v4334, %v4352
    %v4357 = vadd.f32 %v4335, %v4352
    %v4358 = vadd.f32 %v4336, %v4352
    %v4359 = vadd.f32 %v4337, %v4352
    %v4360 = vadd.f32 %v4338, %v4352
    %v4361 = vadd.f32 %v4339, %v4352
    %v4362 = vadd.f32 %v4340, %v4352
    %v4363 = vadd.f32 %v4341, %v4352
    %v4364 = vadd.f32 %v4342, %v4352
    %v4365 = vadd.f32 %v4343, %v4352
    %v4366 = vadd.f32 %v4344, %v4352
    %v4367 = vadd.f32 %v4345, %v4352
    %v4368 = vadd.f32 %v4346, %v4352
    %v4369 = vadd.f32 %v4347, %v4352
    %v4370 = vpack.c.bf16 %v4355, %v4354
    %v4371 = vpack.c.bf16 %v4357, %v4356
    %v4372 = vpack.c.bf16 %v4359, %v4358
    %v4373 = vpack.c.bf16 %v4361, %v4360
    %v4374 = vpack.c.bf16 %v4363, %v4362
    %v4375 = vpack.c.bf16 %v4365, %v4364
    %v4376 = vpack.c.bf16 %v4367, %v4366
    %v4377 = vpack.c.bf16 %v4369, %v4368
    %v4378 = vld [vmem:[#allocation16] sm:$0xff]
    %v4379 = vld [vmem:[#allocation16 + $0x8] sm:$0xff]
    %v4380 = vld [vmem:[#allocation16 + $0x10] sm:$0xff]
    %v4381 = vld [vmem:[#allocation16 + $0x18] sm:$0xff]
    %v4382 = vld [vmem:[#allocation16 + $0x20] sm:$0xff]
    %v4383 = vld [vmem:[#allocation16 + $0x28] sm:$0xff]
    %v4384 = vld [vmem:[#allocation16 + $0x30] sm:$0xff]
    %v4385 = vld [vmem:[#allocation16 + $0x38] sm:$0xff]
    %v4386 = vld [vmem:[#allocation16 + $0x40] sm:$0xff]
    %v4387 = vld [vmem:[#allocation16 + $0x48] sm:$0xff]
    %v4388 = vld [vmem:[#allocation16 + $0x50] sm:$0xff]
    %v4389 = vld [vmem:[#allocation16 + $0x58] sm:$0xff]
    %v4390 = vld [vmem:[#allocation16 + $0x60] sm:$0xff]
    %v4391 = vld [vmem:[#allocation16 + $0x68] sm:$0xff]
    %v4392 = vld [vmem:[#allocation16 + $0x70] sm:$0xff]
    %v4393 = vld [vmem:[#allocation16 + $0x78] sm:$0xff]
    %v4394 = vld [vmem:[#allocation16 + $0x80] sm:$0xff]
    %v4395 = vld [vmem:[#allocation16 + $0x88] sm:$0xff]
    %v4396 = vld [vmem:[#allocation16 + $0x90] sm:$0xff]
    %v4397 = vld [vmem:[#allocation16 + $0x98] sm:$0xff]
    %v4398 = vld [vmem:[#allocation16 + $0xa0] sm:$0xff]
    %v4399 = vld [vmem:[#allocation16 + $0xa8] sm:$0xff]
    %v4400 = vld [vmem:[#allocation16 + $0xb0] sm:$0xff]
    %v4401 = vld [vmem:[#allocation16 + $0xb8] sm:$0xff]
    %v4402 = vld [vmem:[#allocation16 + $0xc0] sm:$0xff]
    %v4403 = vld [vmem:[#allocation16 + $0xc8] sm:$0xff]
    %v4404 = vld [vmem:[#allocation16 + $0xd0] sm:$0xff]
    %v4405 = vld [vmem:[#allocation16 + $0xd8] sm:$0xff]
    %v4406 = vld [vmem:[#allocation16 + $0xe0] sm:$0xff]
    %v4407 = vld [vmem:[#allocation16 + $0xe8] sm:$0xff]
    %v4408 = vld [vmem:[#allocation16 + $0xf0] sm:$0xff]
    %v4409 = vld [vmem:[#allocation16 + $0xf8] sm:$0xff]
    %v4410 = vld [vmem:[%s14] sm:$0xf]
    %v4412 = vlaneseq
    %v4413 = vshrl.u32 %v4412, 7
    %v4414 = vsub.s32 0, %v4413
    %v4415 = vrot.slane %v4410, %v4414
    %v4416 = vlaneseq
    %v4417 = vshrl.u32 %v4416, 7
    %v4418 = vsub.s32 1, %v4417
    %v4419 = vrot.slane %v4410, %v4418
    %v4420 = vlaneseq
    %v4421 = vshrl.u32 %v4420, 7
    %v4422 = vsub.s32 2, %v4421
    %v4423 = vrot.slane %v4410, %v4422
    %v4424 = vlaneseq
    %v4425 = vshrl.u32 %v4424, 7
    %v4426 = vsub.s32 3, %v4425
    %v4427 = vrot.slane %v4410, %v4426
    %v4464 = vunpack.c.l.b16 %v4378
    %v4465 = vunpack.c.h.b16 %v4378
    %v4466 = vunpack.c.l.b16 %v4379
    %v4467 = vunpack.c.h.b16 %v4379
    %v4468 = vunpack.c.l.b16 %v4380
    %v4469 = vunpack.c.h.b16 %v4380
    %v4470 = vunpack.c.l.b16 %v4381
    %v4471 = vunpack.c.h.b16 %v4381
    %v4472 = vunpack.c.l.b16 %v4382
    %v4473 = vunpack.c.h.b16 %v4382
    %v4474 = vunpack.c.l.b16 %v4383
    %v4475 = vunpack.c.h.b16 %v4383
    %v4476 = vunpack.c.l.b16 %v4384
    %v4477 = vunpack.c.h.b16 %v4384
    %v4478 = vunpack.c.l.b16 %v4385
    %v4479 = vunpack.c.h.b16 %v4385
    %v4480 = vunpack.c.l.b16 %v4386
    %v4481 = vunpack.c.h.b16 %v4386
    %v4482 = vunpack.c.l.b16 %v4387
    %v4483 = vunpack.c.h.b16 %v4387
    %v4484 = vunpack.c.l.b16 %v4388
    %v4485 = vunpack.c.h.b16 %v4388
    %v4486 = vunpack.c.l.b16 %v4389
    %v4487 = vunpack.c.h.b16 %v4389
    %v4488 = vunpack.c.l.b16 %v4390
    %v4489 = vunpack.c.h.b16 %v4390
    %v4490 = vunpack.c.l.b16 %v4391
    %v4491 = vunpack.c.h.b16 %v4391
    %v4492 = vunpack.c.l.b16 %v4392
    %v4493 = vunpack.c.h.b16 %v4392
    %v4494 = vunpack.c.l.b16 %v4393
    %v4495 = vunpack.c.h.b16 %v4393
    %v4496 = vunpack.c.l.b16 %v4394
    %v4497 = vunpack.c.h.b16 %v4394
    %v4498 = vunpack.c.l.b16 %v4395
    %v4499 = vunpack.c.h.b16 %v4395
    %v4500 = vunpack.c.l.b16 %v4396
    %v4501 = vunpack.c.h.b16 %v4396
    %v4502 = vunpack.c.l.b16 %v4397
    %v4503 = vunpack.c.h.b16 %v4397
    %v4504 = vunpack.c.l.b16 %v4398
    %v4505 = vunpack.c.h.b16 %v4398
    %v4506 = vunpack.c.l.b16 %v4399
    %v4507 = vunpack.c.h.b16 %v4399
    %v4508 = vunpack.c.l.b16 %v4400
    %v4509 = vunpack.c.h.b16 %v4400
    %v4510 = vunpack.c.l.b16 %v4401
    %v4511 = vunpack.c.h.b16 %v4401
    %v4512 = vunpack.c.l.b16 %v4402
    %v4513 = vunpack.c.h.b16 %v4402
    %v4514 = vunpack.c.l.b16 %v4403
    %v4515 = vunpack.c.h.b16 %v4403
    %v4516 = vunpack.c.l.b16 %v4404
    %v4517 = vunpack.c.h.b16 %v4404
    %v4518 = vunpack.c.l.b16 %v4405
    %v4519 = vunpack.c.h.b16 %v4405
    %v4520 = vunpack.c.l.b16 %v4406
    %v4521 = vunpack.c.h.b16 %v4406
    %v4522 = vunpack.c.l.b16 %v4407
    %v4523 = vunpack.c.h.b16 %v4407
    %v4524 = vunpack.c.l.b16 %v4408
    %v4525 = vunpack.c.h.b16 %v4408
    %v4526 = vunpack.c.l.b16 %v4409
    %v4527 = vunpack.c.h.b16 %v4409
    %v4528 = vpack.c.b16 %v4468, %v4464
    %v4529 = vpack.c.b16 %v4469, %v4465
    %v4530 = vpack.c.b16 %v4470, %v4466
    %v4531 = vpack.c.b16 %v4471, %v4467
    %v4532 = vpack.c.b16 %v4476, %v4472
    %v4533 = vpack.c.b16 %v4477, %v4473
    %v4534 = vpack.c.b16 %v4478, %v4474
    %v4535 = vpack.c.b16 %v4479, %v4475
    %v4536 = vpack.c.b16 %v4484, %v4480
    %v4537 = vpack.c.b16 %v4485, %v4481
    %v4538 = vpack.c.b16 %v4486, %v4482
    %v4539 = vpack.c.b16 %v4487, %v4483
    %v4540 = vpack.c.b16 %v4492, %v4488
    %v4541 = vpack.c.b16 %v4493, %v4489
    %v4542 = vpack.c.b16 %v4494, %v4490
    %v4543 = vpack.c.b16 %v4495, %v4491
    %v4544 = vpack.c.b16 %v4500, %v4496
    %v4545 = vpack.c.b16 %v4501, %v4497
    %v4546 = vpack.c.b16 %v4502, %v4498
    %v4547 = vpack.c.b16 %v4503, %v4499
    %v4548 = vpack.c.b16 %v4508, %v4504
    %v4549 = vpack.c.b16 %v4509, %v4505
    %v4550 = vpack.c.b16 %v4510, %v4506
    %v4551 = vpack.c.b16 %v4511, %v4507
    %v4552 = vpack.c.b16 %v4516, %v4512
    %v4553 = vpack.c.b16 %v4517, %v4513
    %v4554 = vpack.c.b16 %v4518, %v4514
    %v4555 = vpack.c.b16 %v4519, %v4515
    %v4556 = vpack.c.b16 %v4524, %v4520
    %v4557 = vpack.c.b16 %v4525, %v4521
    %v4558 = vpack.c.b16 %v4526, %v4522
    %v4559 = vpack.c.b16 %v4527, %v4523
    %4592 = vmatprep.subr.bf16.mxu0 %v4557
    %4593 = vmatpush1.bf16.msra.mxu0 %v4556
    %4594 = vmatprep.subr.bf16.mxu0 %v4553
    %4595 = vmatpush1.bf16.msra.mxu0 %v4552
    %4596 = vmatprep.subr.bf16.mxu0 %v4549
    %4597 = vmatpush1.bf16.msra.mxu0 %v4548
    %4598 = vmatprep.subr.bf16.mxu0 %v4545
    %4599 = vmatpush1.bf16.msra.mxu0 %v4544
    %4600 = vmatprep.subr.bf16.mxu0 %v4541
    %4601 = vmatpush1.bf16.msra.mxu0 %v4540
    %4602 = vmatprep.subr.bf16.mxu0 %v4537
    %4603 = vmatpush1.bf16.msra.mxu0 %v4536
    %4604 = vmatprep.subr.bf16.mxu0 %v4533
    %4605 = vmatpush1.bf16.msra.mxu0 %v4532
    %4606 = vmatprep.subr.bf16.mxu0 %v4529
    %4607 = vmatpush1.bf16.msra.mxu0 %v4528
    %4608 = vmatprep.subr.bf16.mxu0 0
    %4609 = vmatpush2.bf16.msra.mxu0 0
    %4610 = vmatprep.subr.bf16.mxu0 0
    %4611 = vmatpush2.bf16.msra.mxu0 0
    %4612 = vmatprep.subr.bf16.mxu0 0
    %4613 = vmatpush2.bf16.msra.mxu0 0
    %4614 = vmatprep.subr.bf16.mxu0 0
    %4615 = vmatpush2.bf16.msra.mxu0 0
    %4616 = vmatprep.subr.bf16.mxu0 0
    %4617 = vmatpush2.bf16.msra.mxu0 0
    %4618 = vmatprep.subr.bf16.mxu0 0
    %4619 = vmatpush2.bf16.msra.mxu0 0
    %4620 = vmatprep.subr.bf16.mxu0 0
    %4621 = vmatpush2.bf16.msra.mxu0 0
    %4622 = vmatprep.subr.bf16.mxu0 0
    %4623 = vmatpush2.bf16.msra.mxu0 0
    %4624 = vmatprep.mubr.bf16.mxu0 0
    %4625 = vmatmul.mubr.bf16.gmra.mxu0 %v4370
    %v4626 = vpop.f32.mrf.mxu0
    %v4627 = vadd.f32 %v4415, %v4626
    %v4628 = vpop.f32.mrf.mxu0
    %v4629 = vadd.f32 %v4419, %v4628
    %v4630 = vpop.f32.mrf.mxu0
    %v4631 = vadd.f32 %v4415, %v4630
    %v4632 = vpop.f32.mrf.mxu0
    %v4633 = vadd.f32 %v4419, %v4632
    %4634 = vmatprep.mubr.bf16.mxu0 0
    %4635 = vmatmul.mubr.bf16.gmra.mxu0 %v4371
    %v4636 = vpop.f32.mrf.mxu0
    %v4637 = vadd.f32 %v4415, %v4636
    %v4638 = vpop.f32.mrf.mxu0
    %v4639 = vadd.f32 %v4419, %v4638
    %v4640 = vpop.f32.mrf.mxu0
    %v4641 = vadd.f32 %v4415, %v4640
    %v4642 = vpop.f32.mrf.mxu0
    %v4643 = vadd.f32 %v4419, %v4642
    %4644 = vmatprep.mubr.bf16.mxu0 0
    %4645 = vmatmul.mubr.bf16.gmra.mxu0 %v4372
    %v4646 = vpop.f32.mrf.mxu0
    %v4647 = vadd.f32 %v4415, %v4646
    %v4648 = vpop.f32.mrf.mxu0
    %v4649 = vadd.f32 %v4419, %v4648
    %v4650 = vpop.f32.mrf.mxu0
    %v4651 = vadd.f32 %v4415, %v4650
    %v4652 = vpop.f32.mrf.mxu0
    %v4653 = vadd.f32 %v4419, %v4652
    %4654 = vmatprep.mubr.bf16.mxu0 0
    %4655 = vmatmul.mubr.bf16.gmra.mxu0 %v4373
    %v4656 = vpop.f32.mrf.mxu0
    %v4657 = vadd.f32 %v4415, %v4656
    %v4658 = vpop.f32.mrf.mxu0
    %v4659 = vadd.f32 %v4419, %v4658
    %v4660 = vpop.f32.mrf.mxu0
    %v4661 = vadd.f32 %v4415, %v4660
    %v4662 = vpop.f32.mrf.mxu0
    %v4663 = vadd.f32 %v4419, %v4662
    %4664 = vmatprep.mubr.bf16.mxu0 0
    %4665 = vmatmul.mubr.bf16.gmra.mxu0 %v4374
    %v4666 = vpop.f32.mrf.mxu0
    %v4667 = vadd.f32 %v4415, %v4666
    %v4668 = vpop.f32.mrf.mxu0
    %v4669 = vadd.f32 %v4419, %v4668
    %v4670 = vpop.f32.mrf.mxu0
    %v4671 = vadd.f32 %v4415, %v4670
    %v4672 = vpop.f32.mrf.mxu0
    %v4673 = vadd.f32 %v4419, %v4672
    %4674 = vmatprep.mubr.bf16.mxu0 0
    %4675 = vmatmul.mubr.bf16.gmra.mxu0 %v4375
    %v4676 = vpop.f32.mrf.mxu0
    %v4677 = vadd.f32 %v4415, %v4676
    %v4678 = vpop.f32.mrf.mxu0
    %v4679 = vadd.f32 %v4419, %v4678
    %v4680 = vpop.f32.mrf.mxu0
    %v4681 = vadd.f32 %v4415, %v4680
    %v4682 = vpop.f32.mrf.mxu0
    %v4683 = vadd.f32 %v4419, %v4682
    %4684 = vmatprep.mubr.bf16.mxu0 0
    %4685 = vmatmul.mubr.bf16.gmra.mxu0 %v4376
    %v4686 = vpop.f32.mrf.mxu0
    %v4687 = vadd.f32 %v4415, %v4686
    %v4688 = vpop.f32.mrf.mxu0
    %v4689 = vadd.f32 %v4419, %v4688
    %v4690 = vpop.f32.mrf.mxu0
    %v4691 = vadd.f32 %v4415, %v4690
    %v4692 = vpop.f32.mrf.mxu0
    %v4693 = vadd.f32 %v4419, %v4692
    %4694 = vmatprep.mubr.bf16.mxu0 0
    %4695 = vmatmul.mubr.bf16.gmra.mxu0 %v4377
    %v4696 = vpop.f32.mrf.mxu0
    %v4697 = vadd.f32 %v4415, %v4696
    %v4698 = vpop.f32.mrf.mxu0
    %v4699 = vadd.f32 %v4419, %v4698
    %v4700 = vpop.f32.mrf.mxu0
    %v4701 = vadd.f32 %v4415, %v4700
    %v4702 = vpop.f32.mrf.mxu0
    %v4703 = vadd.f32 %v4419, %v4702
    %4704 = vdwg.mxu0
    %4705 = vmatprep.subr.bf16.mxu0 %v4559
    %4706 = vmatpush1.bf16.msra.mxu0 %v4558
    %4707 = vmatprep.subr.bf16.mxu0 %v4555
    %4708 = vmatpush1.bf16.msra.mxu0 %v4554
    %4709 = vmatprep.subr.bf16.mxu0 %v4551
    %4710 = vmatpush1.bf16.msra.mxu0 %v4550
    %4711 = vmatprep.subr.bf16.mxu0 %v4547
    %4712 = vmatpush1.bf16.msra.mxu0 %v4546
    %4713 = vmatprep.subr.bf16.mxu0 %v4543
    %4714 = vmatpush1.bf16.msra.mxu0 %v4542
    %4715 = vmatprep.subr.bf16.mxu0 %v4539
    %4716 = vmatpush1.bf16.msra.mxu0 %v4538
    %4717 = vmatprep.subr.bf16.mxu0 %v4535
    %4718 = vmatpush1.bf16.msra.mxu0 %v4534
    %4719 = vmatprep.subr.bf16.mxu0 %v4531
    %4720 = vmatpush1.bf16.msra.mxu0 %v4530
    %4721 = vmatprep.subr.bf16.mxu0 0
    %4722 = vmatpush2.bf16.msra.mxu0 0
    %4723 = vmatprep.subr.bf16.mxu0 0
    %4724 = vmatpush2.bf16.msra.mxu0 0
    %4725 = vmatprep.subr.bf16.mxu0 0
    %4726 = vmatpush2.bf16.msra.mxu0 0
    %4727 = vmatprep.subr.bf16.mxu0 0
    %4728 = vmatpush2.bf16.msra.mxu0 0
    %4729 = vmatprep.subr.bf16.mxu0 0
    %4730 = vmatpush2.bf16.msra.mxu0 0
    %4731 = vmatprep.subr.bf16.mxu0 0
    %4732 = vmatpush2.bf16.msra.mxu0 0
    %4733 = vmatprep.subr.bf16.mxu0 0
    %4734 = vmatpush2.bf16.msra.mxu0 0
    %4735 = vmatprep.subr.bf16.mxu0 0
    %4736 = vmatpush2.bf16.msra.mxu0 0
    %4737 = vmatprep.mubr.bf16.mxu0 0
    %4738 = vmatmul.mubr.bf16.gmra.mxu0 %v4370
    %v4739 = vpop.f32.mrf.mxu0
    %v4740 = vadd.f32 %v4423, %v4739
    %v4741 = vpop.f32.mrf.mxu0
    %v4742 = vadd.f32 %v4427, %v4741
    %v4743 = vpop.f32.mrf.mxu0
    %v4744 = vadd.f32 %v4423, %v4743
    %v4745 = vpop.f32.mrf.mxu0
    %v4746 = vadd.f32 %v4427, %v4745
    %4747 = vmatprep.mubr.bf16.mxu0 0
    %4748 = vmatmul.mubr.bf16.gmra.mxu0 %v4371
    %v4749 = vpop.f32.mrf.mxu0
    %v4750 = vadd.f32 %v4423, %v4749
    %v4751 = vpop.f32.mrf.mxu0
    %v4752 = vadd.f32 %v4427, %v4751
    %v4753 = vpop.f32.mrf.mxu0
    %v4754 = vadd.f32 %v4423, %v4753
    %v4755 = vpop.f32.mrf.mxu0
    %v4756 = vadd.f32 %v4427, %v4755
    %4757 = vmatprep.mubr.bf16.mxu0 0
    %4758 = vmatmul.mubr.bf16.gmra.mxu0 %v4372
    %v4759 = vpop.f32.mrf.mxu0
    %v4760 = vadd.f32 %v4423, %v4759
    %v4761 = vpop.f32.mrf.mxu0
    %v4762 = vadd.f32 %v4427, %v4761
    %v4763 = vpop.f32.mrf.mxu0
    %v4764 = vadd.f32 %v4423, %v4763
    %v4765 = vpop.f32.mrf.mxu0
    %v4766 = vadd.f32 %v4427, %v4765
    %4767 = vmatprep.mubr.bf16.mxu0 0
    %4768 = vmatmul.mubr.bf16.gmra.mxu0 %v4373
    %v4769 = vpop.f32.mrf.mxu0
    %v4770 = vadd.f32 %v4423, %v4769
    %v4771 = vpop.f32.mrf.mxu0
    %v4772 = vadd.f32 %v4427, %v4771
    %v4773 = vpop.f32.mrf.mxu0
    %v4774 = vadd.f32 %v4423, %v4773
    %v4775 = vpop.f32.mrf.mxu0
    %v4776 = vadd.f32 %v4427, %v4775
    %4777 = vmatprep.mubr.bf16.mxu0 0
    %4778 = vmatmul.mubr.bf16.gmra.mxu0 %v4374
    %v4779 = vpop.f32.mrf.mxu0
    %v4780 = vadd.f32 %v4423, %v4779
    %v4781 = vpop.f32.mrf.mxu0
    %v4782 = vadd.f32 %v4427, %v4781
    %v4783 = vpop.f32.mrf.mxu0
    %v4784 = vadd.f32 %v4423, %v4783
    %v4785 = vpop.f32.mrf.mxu0
    %v4786 = vadd.f32 %v4427, %v4785
    %4787 = vmatprep.mubr.bf16.mxu0 0
    %4788 = vmatmul.mubr.bf16.gmra.mxu0 %v4375
    %v4789 = vpop.f32.mrf.mxu0
    %v4790 = vadd.f32 %v4423, %v4789
    %v4791 = vpop.f32.mrf.mxu0
    %v4792 = vadd.f32 %v4427, %v4791
    %v4793 = vpop.f32.mrf.mxu0
    %v4794 = vadd.f32 %v4423, %v4793
    %v4795 = vpop.f32.mrf.mxu0
    %v4796 = vadd.f32 %v4427, %v4795
    %4797 = vmatprep.mubr.bf16.mxu0 0
    %4798 = vmatmul.mubr.bf16.gmra.mxu0 %v4376
    %v4799 = vpop.f32.mrf.mxu0
    %v4800 = vadd.f32 %v4423, %v4799
    %v4801 = vpop.f32.mrf.mxu0
    %v4802 = vadd.f32 %v4427, %v4801
    %v4803 = vpop.f32.mrf.mxu0
    %v4804 = vadd.f32 %v4423, %v4803
    %v4805 = vpop.f32.mrf.mxu0
    %v4806 = vadd.f32 %v4427, %v4805
    %4807 = vmatprep.mubr.bf16.mxu0 0
    %4808 = vmatmul.mubr.bf16.gmra.mxu0 %v4377
    %v4809 = vpop.f32.mrf.mxu0
    %v4810 = vadd.f32 %v4423, %v4809
    %v4811 = vpop.f32.mrf.mxu0
    %v4812 = vadd.f32 %v4427, %v4811
    %v4813 = vpop.f32.mrf.mxu0
    %v4814 = vadd.f32 %v4423, %v4813
    %v4815 = vpop.f32.mrf.mxu0
    %v4816 = vadd.f32 %v4427, %v4815
    %4817 = vdwg.mxu0
    %v4818 = vmul.f32 %v4627, 0.5
    %v4819 = vmul.f32 %v4629, 0.5
    %v4820 = vmul.f32 %v4740, 0.5
    %v4821 = vmul.f32 %v4742, 0.5
    %v4822 = vmul.f32 %v4631, 0.5
    %v4823 = vmul.f32 %v4633, 0.5
    %v4824 = vmul.f32 %v4744, 0.5
    %v4825 = vmul.f32 %v4746, 0.5
    %v4826 = vmul.f32 %v4637, 0.5
    %v4827 = vmul.f32 %v4639, 0.5
    %v4828 = vmul.f32 %v4750, 0.5
    %v4829 = vmul.f32 %v4752, 0.5
    %v4830 = vmul.f32 %v4641, 0.5
    %v4831 = vmul.f32 %v4643, 0.5
    %v4832 = vmul.f32 %v4754, 0.5
    %v4833 = vmul.f32 %v4756, 0.5
    %v4834 = vmul.f32 %v4647, 0.5
    %v4835 = vmul.f32 %v4649, 0.5
    %v4836 = vmul.f32 %v4760, 0.5
    %v4837 = vmul.f32 %v4762, 0.5
    %v4838 = vmul.f32 %v4651, 0.5
    %v4839 = vmul.f32 %v4653, 0.5
    %v4840 = vmul.f32 %v4764, 0.5
    %v4841 = vmul.f32 %v4766, 0.5
    %v4842 = vmul.f32 %v4657, 0.5
    %v4843 = vmul.f32 %v4659, 0.5
    %v4844 = vmul.f32 %v4770, 0.5
    %v4845 = vmul.f32 %v4772, 0.5
    %v4846 = vmul.f32 %v4661, 0.5
    %v4847 = vmul.f32 %v4663, 0.5
    %v4848 = vmul.f32 %v4774, 0.5
    %v4849 = vmul.f32 %v4776, 0.5
    %v4850 = vmul.f32 %v4667, 0.5
    %v4851 = vmul.f32 %v4669, 0.5
    %v4852 = vmul.f32 %v4780, 0.5
    %v4853 = vmul.f32 %v4782, 0.5
    %v4854 = vmul.f32 %v4671, 0.5
    %v4855 = vmul.f32 %v4673, 0.5
    %v4856 = vmul.f32 %v4784, 0.5
    %v4857 = vmul.f32 %v4786, 0.5
    %v4858 = vmul.f32 %v4677, 0.5
    %v4859 = vmul.f32 %v4679, 0.5
    %v4860 = vmul.f32 %v4790, 0.5
    %v4861 = vmul.f32 %v4792, 0.5
    %v4862 = vmul.f32 %v4681, 0.5
    %v4863 = vmul.f32 %v4683, 0.5
    %v4864 = vmul.f32 %v4794, 0.5
    %v4865 = vmul.f32 %v4796, 0.5
    %v4866 = vmul.f32 %v4687, 0.5
    %v4867 = vmul.f32 %v4689, 0.5
    %v4868 = vmul.f32 %v4800, 0.5
    %v4869 = vmul.f32 %v4802, 0.5
    %v4870 = vmul.f32 %v4691, 0.5
    %v4871 = vmul.f32 %v4693, 0.5
    %v4872 = vmul.f32 %v4804, 0.5
    %v4873 = vmul.f32 %v4806, 0.5
    %v4874 = vmul.f32 %v4697, 0.5
    %v4875 = vmul.f32 %v4699, 0.5
    %v4876 = vmul.f32 %v4810, 0.5
    %v4877 = vmul.f32 %v4812, 0.5
    %v4878 = vmul.f32 %v4701, 0.5
    %v4879 = vmul.f32 %v4703, 0.5
    %v4880 = vmul.f32 %v4814, 0.5
    %v4881 = vmul.f32 %v4816, 0.5
    %v4882 = vmul.f32 %v4627, 0.70710677
    %v4883 = vmul.f32 %v4629, 0.70710677
    %v4884 = vmul.f32 %v4740, 0.70710677
    %v4885 = vmul.f32 %v4742, 0.70710677
    %v4886 = vmul.f32 %v4631, 0.70710677
    %v4887 = vmul.f32 %v4633, 0.70710677
    %v4888 = vmul.f32 %v4744, 0.70710677
    %v4889 = vmul.f32 %v4746, 0.70710677
    %v4890 = vmul.f32 %v4637, 0.70710677
    %v4891 = vmul.f32 %v4639, 0.70710677
    %v4892 = vmul.f32 %v4750, 0.70710677
    %v4893 = vmul.f32 %v4752, 0.70710677
    %v4894 = vmul.f32 %v4641, 0.70710677
    %v4895 = vmul.f32 %v4643, 0.70710677
    %v4896 = vmul.f32 %v4754, 0.70710677
    %v4897 = vmul.f32 %v4756, 0.70710677
    %v4898 = vmul.f32 %v4647, 0.70710677
    %v4899 = vmul.f32 %v4649, 0.70710677
    %v4900 = vmul.f32 %v4760, 0.70710677
    %v4901 = vmul.f32 %v4762, 0.70710677
    %v4902 = vmul.f32 %v4651, 0.70710677
    %v4903 = vmul.f32 %v4653, 0.70710677
    %v4904 = vmul.f32 %v4764, 0.70710677
    %v4905 = vmul.f32 %v4766, 0.70710677
    %v4906 = vmul.f32 %v4657, 0.70710677
    %v4907 = vmul.f32 %v4659, 0.70710677
    %v4908 = vmul.f32 %v4770, 0.70710677
    %v4909 = vmul.f32 %v4772, 0.70710677
    %v4910 = vmul.f32 %v4661, 0.70710677
    %v4911 = vmul.f32 %v4663, 0.70710677
    %v4912 = vmul.f32 %v4774, 0.70710677
    %v4913 = vmul.f32 %v4776, 0.70710677
    %v4914 = vmul.f32 %v4667, 0.70710677
    %v4915 = vmul.f32 %v4669, 0.70710677
    %v4916 = vmul.f32 %v4780, 0.70710677
    %v4917 = vmul.f32 %v4782, 0.70710677
    %v4918 = vmul.f32 %v4671, 0.70710677
    %v4919 = vmul.f32 %v4673, 0.70710677
    %v4920 = vmul.f32 %v4784, 0.70710677
    %v4921 = vmul.f32 %v4786, 0.70710677
    %v4922 = vmul.f32 %v4677, 0.70710677
    %v4923 = vmul.f32 %v4679, 0.70710677
    %v4924 = vmul.f32 %v4790, 0.70710677
    %v4925 = vmul.f32 %v4792, 0.70710677
    %v4926 = vmul.f32 %v4681, 0.70710677
    %v4927 = vmul.f32 %v4683, 0.70710677
    %v4928 = vmul.f32 %v4794, 0.70710677
    %v4929 = vmul.f32 %v4796, 0.70710677
    %v4930 = vmul.f32 %v4687, 0.70710677
    %v4931 = vmul.f32 %v4689, 0.70710677
    %v4932 = vmul.f32 %v4800, 0.70710677
    %v4933 = vmul.f32 %v4802, 0.70710677
    %v4934 = vmul.f32 %v4691, 0.70710677
    %v4935 = vmul.f32 %v4693, 0.70710677
    %v4936 = vmul.f32 %v4804, 0.70710677
    %v4937 = vmul.f32 %v4806, 0.70710677
    %v4938 = vmul.f32 %v4697, 0.70710677
    %v4939 = vmul.f32 %v4699, 0.70710677
    %v4940 = vmul.f32 %v4810, 0.70710677
    %v4941 = vmul.f32 %v4812, 0.70710677
    %v4942 = vmul.f32 %v4701, 0.70710677
    %v4943 = vmul.f32 %v4703, 0.70710677
    %v4944 = vmul.f32 %v4814, 0.70710677
    %v4945 = vmul.f32 %v4816, 0.70710677
    %v4946 = verf.f32.pop %v4882
    %v4947 = verf.f32.pop %v4883
    %v4948 = verf.f32.pop %v4884
    %v4949 = verf.f32.pop %v4885
    %v4950 = verf.f32.pop %v4886
    %v4951 = verf.f32.pop %v4887
    %v4952 = verf.f32.pop %v4888
    %v4953 = verf.f32.pop %v4889
    %v4954 = verf.f32.pop %v4890
    %v4955 = verf.f32.pop %v4891
    %v4956 = verf.f32.pop %v4892
    %v4957 = verf.f32.pop %v4893
    %v4958 = verf.f32.pop %v4894
    %v4959 = verf.f32.pop %v4895
    %v4960 = verf.f32.pop %v4896
    %v4961 = verf.f32.pop %v4897
    %v4962 = verf.f32.pop %v4898
    %v4963 = verf.f32.pop %v4899
    %v4964 = verf.f32.pop %v4900
    %v4965 = verf.f32.pop %v4901
    %v4966 = verf.f32.pop %v4902
    %v4967 = verf.f32.pop %v4903
    %v4968 = verf.f32.pop %v4904
    %v4969 = verf.f32.pop %v4905
    %v4970 = verf.f32.pop %v4906
    %v4971 = verf.f32.pop %v4907
    %v4972 = verf.f32.pop %v4908
    %v4973 = verf.f32.pop %v4909
    %v4974 = verf.f32.pop %v4910
    %v4975 = verf.f32.pop %v4911
    %v4976 = verf.f32.pop %v4912
    %v4977 = verf.f32.pop %v4913
    %v4978 = verf.f32.pop %v4914
    %v4979 = verf.f32.pop %v4915
    %v4980 = verf.f32.pop %v4916
    %v4981 = verf.f32.pop %v4917
    %v4982 = verf.f32.pop %v4918
    %v4983 = verf.f32.pop %v4919
    %v4984 = verf.f32.pop %v4920
    %v4985 = verf.f32.pop %v4921
    %v4986 = verf.f32.pop %v4922
    %v4987 = verf.f32.pop %v4923
    %v4988 = verf.f32.pop %v4924
    %v4989 = verf.f32.pop %v4925
    %v4990 = verf.f32.pop %v4926
    %v4991 = verf.f32.pop %v4927
    %v4992 = verf.f32.pop %v4928
    %v4993 = verf.f32.pop %v4929
    %v4994 = verf.f32.pop %v4930
    %v4995 = verf.f32.pop %v4931
    %v4996 = verf.f32.pop %v4932
    %v4997 = verf.f32.pop %v4933
    %v4998 = verf.f32.pop %v4934
    %v4999 = verf.f32.pop %v4935
    %v5000 = verf.f32.pop %v4936
    %v5001 = verf.f32.pop %v4937
    %v5002 = verf.f32.pop %v4938
    %v5003 = verf.f32.pop %v4939
    %v5004 = verf.f32.pop %v4940
    %v5005 = verf.f32.pop %v4941
    %v5006 = verf.f32.pop %v4942
    %v5007 = verf.f32.pop %v4943
    %v5008 = verf.f32.pop %v4944
    %v5009 = verf.f32.pop %v4945
    %v5010 = vadd.f32 %v4946, 1.0
    %v5011 = vadd.f32 %v4947, 1.0
    %v5012 = vadd.f32 %v4948, 1.0
    %v5013 = vadd.f32 %v4949, 1.0
    %v5014 = vadd.f32 %v4950, 1.0
    %v5015 = vadd.f32 %v4951, 1.0
    %v5016 = vadd.f32 %v4952, 1.0
    %v5017 = vadd.f32 %v4953, 1.0
    %v5018 = vadd.f32 %v4954, 1.0
    %v5019 = vadd.f32 %v4955, 1.0
    %v5020 = vadd.f32 %v4956, 1.0
    %v5021 = vadd.f32 %v4957, 1.0
    %v5022 = vadd.f32 %v4958, 1.0
    %v5023 = vadd.f32 %v4959, 1.0
    %v5024 = vadd.f32 %v4960, 1.0
    %v5025 = vadd.f32 %v4961, 1.0
    %v5026 = vadd.f32 %v4962, 1.0
    %v5027 = vadd.f32 %v4963, 1.0
    %v5028 = vadd.f32 %v4964, 1.0
    %v5029 = vadd.f32 %v4965, 1.0
    %v5030 = vadd.f32 %v4966, 1.0
    %v5031 = vadd.f32 %v4967, 1.0
    %v5032 = vadd.f32 %v4968, 1.0
    %v5033 = vadd.f32 %v4969, 1.0
    %v5034 = vadd.f32 %v4970, 1.0
    %v5035 = vadd.f32 %v4971, 1.0
    %v5036 = vadd.f32 %v4972, 1.0
    %v5037 = vadd.f32 %v4973, 1.0
    %v5038 = vadd.f32 %v4974, 1.0
    %v5039 = vadd.f32 %v4975, 1.0
    %v5040 = vadd.f32 %v4976, 1.0
    %v5041 = vadd.f32 %v4977, 1.0
    %v5042 = vadd.f32 %v4978, 1.0
    %v5043 = vadd.f32 %v4979, 1.0
    %v5044 = vadd.f32 %v4980, 1.0
    %v5045 = vadd.f32 %v4981, 1.0
    %v5046 = vadd.f32 %v4982, 1.0
    %v5047 = vadd.f32 %v4983, 1.0
    %v5048 = vadd.f32 %v4984, 1.0
    %v5049 = vadd.f32 %v4985, 1.0
    %v5050 = vadd.f32 %v4986, 1.0
    %v5051 = vadd.f32 %v4987, 1.0
    %v5052 = vadd.f32 %v4988, 1.0
    %v5053 = vadd.f32 %v4989, 1.0
    %v5054 = vadd.f32 %v4990, 1.0
    %v5055 = vadd.f32 %v4991, 1.0
    %v5056 = vadd.f32 %v4992, 1.0
    %v5057 = vadd.f32 %v4993, 1.0
    %v5058 = vadd.f32 %v4994, 1.0
    %v5059 = vadd.f32 %v4995, 1.0
    %v5060 = vadd.f32 %v4996, 1.0
    %v5061 = vadd.f32 %v4997, 1.0
    %v5062 = vadd.f32 %v4998, 1.0
    %v5063 = vadd.f32 %v4999, 1.0
    %v5064 = vadd.f32 %v5000, 1.0
    %v5065 = vadd.f32 %v5001, 1.0
    %v5066 = vadd.f32 %v5002, 1.0
    %v5067 = vadd.f32 %v5003, 1.0
    %v5068 = vadd.f32 %v5004, 1.0
    %v5069 = vadd.f32 %v5005, 1.0
    %v5070 = vadd.f32 %v5006, 1.0
    %v5071 = vadd.f32 %v5007, 1.0
    %v5072 = vadd.f32 %v5008, 1.0
    %v5073 = vadd.f32 %v5009, 1.0
    %v5074 = vmul.f32 %v4818, %v5010
    %v5075 = vmul.f32 %v4819, %v5011
    %v5076 = vmul.f32 %v4820, %v5012
    %v5077 = vmul.f32 %v4821, %v5013
    %v5078 = vmul.f32 %v4822, %v5014
    %v5079 = vmul.f32 %v4823, %v5015
    %v5080 = vmul.f32 %v4824, %v5016
    %v5081 = vmul.f32 %v4825, %v5017
    %v5082 = vmul.f32 %v4826, %v5018
    %v5083 = vmul.f32 %v4827, %v5019
    %v5084 = vmul.f32 %v4828, %v5020
    %v5085 = vmul.f32 %v4829, %v5021
    %v5086 = vmul.f32 %v4830, %v5022
    %v5087 = vmul.f32 %v4831, %v5023
    %v5088 = vmul.f32 %v4832, %v5024
    %v5089 = vmul.f32 %v4833, %v5025
    %v5090 = vmul.f32 %v4834, %v5026
    %v5091 = vmul.f32 %v4835, %v5027
    %v5092 = vmul.f32 %v4836, %v5028
    %v5093 = vmul.f32 %v4837, %v5029
    %v5094 = vmul.f32 %v4838, %v5030
    %v5095 = vmul.f32 %v4839, %v5031
    %v5096 = vmul.f32 %v4840, %v5032
    %v5097 = vmul.f32 %v4841, %v5033
    %v5098 = vmul.f32 %v4842, %v5034
    %v5099 = vmul.f32 %v4843, %v5035
    %v5100 = vmul.f32 %v4844, %v5036
    %v5101 = vmul.f32 %v4845, %v5037
    %v5102 = vmul.f32 %v4846, %v5038
    %v5103 = vmul.f32 %v4847, %v5039
    %v5104 = vmul.f32 %v4848, %v5040
    %v5105 = vmul.f32 %v4849, %v5041
    %v5106 = vmul.f32 %v4850, %v5042
    %v5107 = vmul.f32 %v4851, %v5043
    %v5108 = vmul.f32 %v4852, %v5044
    %v5109 = vmul.f32 %v4853, %v5045
    %v5110 = vmul.f32 %v4854, %v5046
    %v5111 = vmul.f32 %v4855, %v5047
    %v5112 = vmul.f32 %v4856, %v5048
    %v5113 = vmul.f32 %v4857, %v5049
    %v5114 = vmul.f32 %v4858, %v5050
    %v5115 = vmul.f32 %v4859, %v5051
    %v5116 = vmul.f32 %v4860, %v5052
    %v5117 = vmul.f32 %v4861, %v5053
    %v5118 = vmul.f32 %v4862, %v5054
    %v5119 = vmul.f32 %v4863, %v5055
    %v5120 = vmul.f32 %v4864, %v5056
    %v5121 = vmul.f32 %v4865, %v5057
    %v5122 = vmul.f32 %v4866, %v5058
    %v5123 = vmul.f32 %v4867, %v5059
    %v5124 = vmul.f32 %v4868, %v5060
    %v5125 = vmul.f32 %v4869, %v5061
    %v5126 = vmul.f32 %v4870, %v5062
    %v5127 = vmul.f32 %v4871, %v5063
    %v5128 = vmul.f32 %v4872, %v5064
    %v5129 = vmul.f32 %v4873, %v5065
    %v5130 = vmul.f32 %v4874, %v5066
    %v5131 = vmul.f32 %v4875, %v5067
    %v5132 = vmul.f32 %v4876, %v5068
    %v5133 = vmul.f32 %v4877, %v5069
    %v5134 = vmul.f32 %v4878, %v5070
    %v5135 = vmul.f32 %v4879, %v5071
    %v5136 = vmul.f32 %v4880, %v5072
    %v5137 = vmul.f32 %v4881, %v5073
    %v5138 = vpack.c.bf16 %v5078, %v5074
    %v5139 = vpack.c.bf16 %v5079, %v5075
    %v5140 = vpack.c.bf16 %v5080, %v5076
    %v5141 = vpack.c.bf16 %v5081, %v5077
    %v5142 = vpack.c.bf16 %v5086, %v5082
    %v5143 = vpack.c.bf16 %v5087, %v5083
    %v5144 = vpack.c.bf16 %v5088, %v5084
    %v5145 = vpack.c.bf16 %v5089, %v5085
    %v5146 = vpack.c.bf16 %v5094, %v5090
    %v5147 = vpack.c.bf16 %v5095, %v5091
    %v5148 = vpack.c.bf16 %v5096, %v5092
    %v5149 = vpack.c.bf16 %v5097, %v5093
    %v5150 = vpack.c.bf16 %v5102, %v5098
    %v5151 = vpack.c.bf16 %v5103, %v5099
    %v5152 = vpack.c.bf16 %v5104, %v5100
    %v5153 = vpack.c.bf16 %v5105, %v5101
    %v5154 = vpack.c.bf16 %v5110, %v5106
    %v5155 = vpack.c.bf16 %v5111, %v5107
    %v5156 = vpack.c.bf16 %v5112, %v5108
    %v5157 = vpack.c.bf16 %v5113, %v5109
    %v5158 = vpack.c.bf16 %v5118, %v5114
    %v5159 = vpack.c.bf16 %v5119, %v5115
    %v5160 = vpack.c.bf16 %v5120, %v5116
    %v5161 = vpack.c.bf16 %v5121, %v5117
    %v5162 = vpack.c.bf16 %v5126, %v5122
    %v5163 = vpack.c.bf16 %v5127, %v5123
    %v5164 = vpack.c.bf16 %v5128, %v5124
    %v5165 = vpack.c.bf16 %v5129, %v5125
    %v5166 = vpack.c.bf16 %v5134, %v5130
    %v5167 = vpack.c.bf16 %v5135, %v5131
    %v5168 = vpack.c.bf16 %v5136, %v5132
    %v5169 = vpack.c.bf16 %v5137, %v5133
    %v5170 = vld [vmem:[#allocation17] sm:$0xf]
    %v5171 = vld [vmem:[#allocation17 + $0x4] sm:$0xf]
    %v5172 = vld [vmem:[#allocation17 + $0x8] sm:$0xf]
    %v5173 = vld [vmem:[#allocation17 + $0xc] sm:$0xf]
    %v5174 = vld [vmem:[#allocation17 + $0x10] sm:$0xf]
    %v5175 = vld [vmem:[#allocation17 + $0x14] sm:$0xf]
    %v5176 = vld [vmem:[#allocation17 + $0x18] sm:$0xf]
    %v5177 = vld [vmem:[#allocation17 + $0x1c] sm:$0xf]
    %v5178 = vld [vmem:[#allocation17 + $0x20] sm:$0xf]
    %v5179 = vld [vmem:[#allocation17 + $0x24] sm:$0xf]
    %v5180 = vld [vmem:[#allocation17 + $0x28] sm:$0xf]
    %v5181 = vld [vmem:[#allocation17 + $0x2c] sm:$0xf]
    %v5182 = vld [vmem:[#allocation17 + $0x30] sm:$0xf]
    %v5183 = vld [vmem:[#allocation17 + $0x34] sm:$0xf]
    %v5184 = vld [vmem:[#allocation17 + $0x38] sm:$0xf]
    %v5185 = vld [vmem:[#allocation17 + $0x3c] sm:$0xf]
    %v5186 = vld [vmem:[#allocation17 + $0x40] sm:$0xf]
    %v5187 = vld [vmem:[#allocation17 + $0x44] sm:$0xf]
    %v5188 = vld [vmem:[#allocation17 + $0x48] sm:$0xf]
    %v5189 = vld [vmem:[#allocation17 + $0x4c] sm:$0xf]
    %v5190 = vld [vmem:[#allocation17 + $0x50] sm:$0xf]
    %v5191 = vld [vmem:[#allocation17 + $0x54] sm:$0xf]
    %v5192 = vld [vmem:[#allocation17 + $0x58] sm:$0xf]
    %v5193 = vld [vmem:[#allocation17 + $0x5c] sm:$0xf]
    %v5194 = vld [vmem:[#allocation17 + $0x60] sm:$0xf]
    %v5195 = vld [vmem:[#allocation17 + $0x64] sm:$0xf]
    %v5196 = vld [vmem:[#allocation17 + $0x68] sm:$0xf]
    %v5197 = vld [vmem:[#allocation17 + $0x6c] sm:$0xf]
    %v5198 = vld [vmem:[#allocation17 + $0x70] sm:$0xf]
    %v5199 = vld [vmem:[#allocation17 + $0x74] sm:$0xf]
    %v5200 = vld [vmem:[#allocation17 + $0x78] sm:$0xf]
    %v5201 = vld [vmem:[#allocation17 + $0x7c] sm:$0xf]
    %v5202 = vld [vmem:[#allocation17 + $0x80] sm:$0xf]
    %v5203 = vld [vmem:[#allocation17 + $0x84] sm:$0xf]
    %v5204 = vld [vmem:[#allocation17 + $0x88] sm:$0xf]
    %v5205 = vld [vmem:[#allocation17 + $0x8c] sm:$0xf]
    %v5206 = vld [vmem:[#allocation17 + $0x90] sm:$0xf]
    %v5207 = vld [vmem:[#allocation17 + $0x94] sm:$0xf]
    %v5208 = vld [vmem:[#allocation17 + $0x98] sm:$0xf]
    %v5209 = vld [vmem:[#allocation17 + $0x9c] sm:$0xf]
    %v5210 = vld [vmem:[#allocation17 + $0xa0] sm:$0xf]
    %v5211 = vld [vmem:[#allocation17 + $0xa4] sm:$0xf]
    %v5212 = vld [vmem:[#allocation17 + $0xa8] sm:$0xf]
    %v5213 = vld [vmem:[#allocation17 + $0xac] sm:$0xf]
    %v5214 = vld [vmem:[#allocation17 + $0xb0] sm:$0xf]
    %v5215 = vld [vmem:[#allocation17 + $0xb4] sm:$0xf]
    %v5216 = vld [vmem:[#allocation17 + $0xb8] sm:$0xf]
    %v5217 = vld [vmem:[#allocation17 + $0xbc] sm:$0xf]
    %v5218 = vld [vmem:[#allocation17 + $0xc0] sm:$0xf]
    %v5219 = vld [vmem:[#allocation17 + $0xc4] sm:$0xf]
    %v5220 = vld [vmem:[#allocation17 + $0xc8] sm:$0xf]
    %v5221 = vld [vmem:[#allocation17 + $0xcc] sm:$0xf]
    %v5222 = vld [vmem:[#allocation17 + $0xd0] sm:$0xf]
    %v5223 = vld [vmem:[#allocation17 + $0xd4] sm:$0xf]
    %v5224 = vld [vmem:[#allocation17 + $0xd8] sm:$0xf]
    %v5225 = vld [vmem:[#allocation17 + $0xdc] sm:$0xf]
    %v5226 = vld [vmem:[#allocation17 + $0xe0] sm:$0xf]
    %v5227 = vld [vmem:[#allocation17 + $0xe4] sm:$0xf]
    %v5228 = vld [vmem:[#allocation17 + $0xe8] sm:$0xf]
    %v5229 = vld [vmem:[#allocation17 + $0xec] sm:$0xf]
    %v5230 = vld [vmem:[#allocation17 + $0xf0] sm:$0xf]
    %v5231 = vld [vmem:[#allocation17 + $0xf4] sm:$0xf]
    %v5232 = vld [vmem:[#allocation17 + $0xf8] sm:$0xf]
    %v5233 = vld [vmem:[#allocation17 + $0xfc] sm:$0xf]
    %v5234 = vld [vmem:[%s16] sm:$0x1]
    %v5236 = vlaneseq
    %v5237 = vshrl.u32 %v5236, 7
    %v5238 = vsub.s32 0, %v5237
    %v5239 = vrot.slane %v5234, %v5238
    %v5305 = vunpack.c.l.b16 %v5170
    %v5306 = vunpack.c.l.b16 %v5171
    %v5307 = vunpack.c.l.b16 %v5172
    %v5308 = vunpack.c.l.b16 %v5173
    %v5309 = vunpack.c.l.b16 %v5174
    %v5310 = vunpack.c.l.b16 %v5175
    %v5311 = vunpack.c.l.b16 %v5176
    %v5312 = vunpack.c.l.b16 %v5177
    %v5313 = vunpack.c.l.b16 %v5178
    %v5314 = vunpack.c.l.b16 %v5179
    %v5315 = vunpack.c.l.b16 %v5180
    %v5316 = vunpack.c.l.b16 %v5181
    %v5317 = vunpack.c.l.b16 %v5182
    %v5318 = vunpack.c.l.b16 %v5183
    %v5319 = vunpack.c.l.b16 %v5184
    %v5320 = vunpack.c.l.b16 %v5185
    %v5321 = vunpack.c.l.b16 %v5186
    %v5322 = vunpack.c.l.b16 %v5187
    %v5323 = vunpack.c.l.b16 %v5188
    %v5324 = vunpack.c.l.b16 %v5189
    %v5325 = vunpack.c.l.b16 %v5190
    %v5326 = vunpack.c.l.b16 %v5191
    %v5327 = vunpack.c.l.b16 %v5192
    %v5328 = vunpack.c.l.b16 %v5193
    %v5329 = vunpack.c.l.b16 %v5194
    %v5330 = vunpack.c.l.b16 %v5195
    %v5331 = vunpack.c.l.b16 %v5196
    %v5332 = vunpack.c.l.b16 %v5197
    %v5333 = vunpack.c.l.b16 %v5198
    %v5334 = vunpack.c.l.b16 %v5199
    %v5335 = vunpack.c.l.b16 %v5200
    %v5336 = vunpack.c.l.b16 %v5201
    %v5337 = vunpack.c.l.b16 %v5202
    %v5338 = vunpack.c.l.b16 %v5203
    %v5339 = vunpack.c.l.b16 %v5204
    %v5340 = vunpack.c.l.b16 %v5205
    %v5341 = vunpack.c.l.b16 %v5206
    %v5342 = vunpack.c.l.b16 %v5207
    %v5343 = vunpack.c.l.b16 %v5208
    %v5344 = vunpack.c.l.b16 %v5209
    %v5345 = vunpack.c.l.b16 %v5210
    %v5346 = vunpack.c.l.b16 %v5211
    %v5347 = vunpack.c.l.b16 %v5212
    %v5348 = vunpack.c.l.b16 %v5213
    %v5349 = vunpack.c.l.b16 %v5214
    %v5350 = vunpack.c.l.b16 %v5215
    %v5351 = vunpack.c.l.b16 %v5216
    %v5352 = vunpack.c.l.b16 %v5217
    %v5353 = vunpack.c.l.b16 %v5218
    %v5354 = vunpack.c.l.b16 %v5219
    %v5355 = vunpack.c.l.b16 %v5220
    %v5356 = vunpack.c.l.b16 %v5221
    %v5357 = vunpack.c.l.b16 %v5222
    %v5358 = vunpack.c.l.b16 %v5223
    %v5359 = vunpack.c.l.b16 %v5224
    %v5360 = vunpack.c.l.b16 %v5225
    %v5361 = vunpack.c.l.b16 %v5226
    %v5362 = vunpack.c.l.b16 %v5227
    %v5363 = vunpack.c.l.b16 %v5228
    %v5364 = vunpack.c.l.b16 %v5229
    %v5365 = vunpack.c.l.b16 %v5230
    %v5366 = vunpack.c.l.b16 %v5231
    %v5367 = vunpack.c.l.b16 %v5232
    %v5368 = vunpack.c.l.b16 %v5233
    %v5369 = vpack.c.b16 %v5306, %v5305
    %v5370 = vpack.c.b16 %v5308, %v5307
    %v5371 = vpack.c.b16 %v5310, %v5309
    %v5372 = vpack.c.b16 %v5312, %v5311
    %v5373 = vpack.c.b16 %v5314, %v5313
    %v5374 = vpack.c.b16 %v5316, %v5315
    %v5375 = vpack.c.b16 %v5318, %v5317
    %v5376 = vpack.c.b16 %v5320, %v5319
    %v5377 = vpack.c.b16 %v5322, %v5321
    %v5378 = vpack.c.b16 %v5324, %v5323
    %v5379 = vpack.c.b16 %v5326, %v5325
    %v5380 = vpack.c.b16 %v5328, %v5327
    %v5381 = vpack.c.b16 %v5330, %v5329
    %v5382 = vpack.c.b16 %v5332, %v5331
    %v5383 = vpack.c.b16 %v5334, %v5333
    %v5384 = vpack.c.b16 %v5336, %v5335
    %v5385 = vpack.c.b16 %v5338, %v5337
    %v5386 = vpack.c.b16 %v5340, %v5339
    %v5387 = vpack.c.b16 %v5342, %v5341
    %v5388 = vpack.c.b16 %v5344, %v5343
    %v5389 = vpack.c.b16 %v5346, %v5345
    %v5390 = vpack.c.b16 %v5348, %v5347
    %v5391 = vpack.c.b16 %v5350, %v5349
    %v5392 = vpack.c.b16 %v5352, %v5351
    %v5393 = vpack.c.b16 %v5354, %v5353
    %v5394 = vpack.c.b16 %v5356, %v5355
    %v5395 = vpack.c.b16 %v5358, %v5357
    %v5396 = vpack.c.b16 %v5360, %v5359
    %v5397 = vpack.c.b16 %v5362, %v5361
    %v5398 = vpack.c.b16 %v5364, %v5363
    %v5399 = vpack.c.b16 %v5366, %v5365
    %v5400 = vpack.c.b16 %v5368, %v5367
    %5433 = vmatprep.subr.bf16.mxu0 0
    %5434 = vmatpush1.bf16.msra.mxu0 %v5376
    %5435 = vmatprep.subr.bf16.mxu0 0
    %5436 = vmatpush1.bf16.msra.mxu0 %v5375
    %5437 = vmatprep.subr.bf16.mxu0 0
    %5438 = vmatpush1.bf16.msra.mxu0 %v5374
    %5439 = vmatprep.subr.bf16.mxu0 0
    %5440 = vmatpush1.bf16.msra.mxu0 %v5373
    %5441 = vmatprep.subr.bf16.mxu0 0
    %5442 = vmatpush1.bf16.msra.mxu0 %v5372
    %5443 = vmatprep.subr.bf16.mxu0 0
    %5444 = vmatpush1.bf16.msra.mxu0 %v5371
    %5445 = vmatprep.subr.bf16.mxu0 0
    %5446 = vmatpush1.bf16.msra.mxu0 %v5370
    %5447 = vmatprep.subr.bf16.mxu0 0
    %5448 = vmatpush1.bf16.msra.mxu0 %v5369
    %5449 = vmatprep.subr.bf16.mxu0 0
    %5450 = vmatpush2.bf16.msra.mxu0 %v5384
    %5451 = vmatprep.subr.bf16.mxu0 0
    %5452 = vmatpush2.bf16.msra.mxu0 %v5383
    %5453 = vmatprep.subr.bf16.mxu0 0
    %5454 = vmatpush2.bf16.msra.mxu0 %v5382
    %5455 = vmatprep.subr.bf16.mxu0 0
    %5456 = vmatpush2.bf16.msra.mxu0 %v5381
    %5457 = vmatprep.subr.bf16.mxu0 0
    %5458 = vmatpush2.bf16.msra.mxu0 %v5380
    %5459 = vmatprep.subr.bf16.mxu0 0
    %5460 = vmatpush2.bf16.msra.mxu0 %v5379
    %5461 = vmatprep.subr.bf16.mxu0 0
    %5462 = vmatpush2.bf16.msra.mxu0 %v5378
    %5463 = vmatprep.subr.bf16.mxu0 0
    %5464 = vmatpush2.bf16.msra.mxu0 %v5377
    %5465 = vmatprep.mubr.bf16.mxu0 %v5139
    %5466 = vmatmul.mubr.bf16.gmra.mxu0 %v5138
    %v5467 = vpop.f32.mrf.mxu0
    %v5468 = vadd.f32 %v5239, %v5467
    %v5469 = vpop.f32.mrf.mxu0
    %v5470 = vpop.f32.mrf.mxu0
    %v5471 = vadd.f32 %v5239, %v5470
    %v5472 = vpop.f32.mrf.mxu0
    %5473 = vmatprep.mubr.bf16.mxu0 %v5143
    %5474 = vmatmul.mubr.bf16.gmra.mxu0 %v5142
    %v5475 = vpop.f32.mrf.mxu0
    %v5476 = vadd.f32 %v5239, %v5475
    %v5477 = vpop.f32.mrf.mxu0
    %v5478 = vpop.f32.mrf.mxu0
    %v5479 = vadd.f32 %v5239, %v5478
    %v5480 = vpop.f32.mrf.mxu0
    %5481 = vmatprep.mubr.bf16.mxu0 %v5147
    %5482 = vmatmul.mubr.bf16.gmra.mxu0 %v5146
    %v5483 = vpop.f32.mrf.mxu0
    %v5484 = vadd.f32 %v5239, %v5483
    %v5485 = vpop.f32.mrf.mxu0
    %v5486 = vpop.f32.mrf.mxu0
    %v5487 = vadd.f32 %v5239, %v5486
    %v5488 = vpop.f32.mrf.mxu0
    %5489 = vmatprep.mubr.bf16.mxu0 %v5151
    %5490 = vmatmul.mubr.bf16.gmra.mxu0 %v5150
    %v5491 = vpop.f32.mrf.mxu0
    %v5492 = vadd.f32 %v5239, %v5491
    %v5493 = vpop.f32.mrf.mxu0
    %v5494 = vpop.f32.mrf.mxu0
    %v5495 = vadd.f32 %v5239, %v5494
    %v5496 = vpop.f32.mrf.mxu0
    %5497 = vmatprep.mubr.bf16.mxu0 %v5155
    %5498 = vmatmul.mubr.bf16.gmra.mxu0 %v5154
    %v5499 = vpop.f32.mrf.mxu0
    %v5500 = vadd.f32 %v5239, %v5499
    %v5501 = vpop.f32.mrf.mxu0
    %v5502 = vpop.f32.mrf.mxu0
    %v5503 = vadd.f32 %v5239, %v5502
    %v5504 = vpop.f32.mrf.mxu0
    %5505 = vmatprep.mubr.bf16.mxu0 %v5159
    %5506 = vmatmul.mubr.bf16.gmra.mxu0 %v5158
    %v5507 = vpop.f32.mrf.mxu0
    %v5508 = vadd.f32 %v5239, %v5507
    %v5509 = vpop.f32.mrf.mxu0
    %v5510 = vpop.f32.mrf.mxu0
    %v5511 = vadd.f32 %v5239, %v5510
    %v5512 = vpop.f32.mrf.mxu0
    %5513 = vmatprep.mubr.bf16.mxu0 %v5163
    %5514 = vmatmul.mubr.bf16.gmra.mxu0 %v5162
    %v5515 = vpop.f32.mrf.mxu0
    %v5516 = vadd.f32 %v5239, %v5515
    %v5517 = vpop.f32.mrf.mxu0
    %v5518 = vpop.f32.mrf.mxu0
    %v5519 = vadd.f32 %v5239, %v5518
    %v5520 = vpop.f32.mrf.mxu0
    %5521 = vmatprep.mubr.bf16.mxu0 %v5167
    %5522 = vmatmul.mubr.bf16.gmra.mxu0 %v5166
    %v5523 = vpop.f32.mrf.mxu0
    %v5524 = vadd.f32 %v5239, %v5523
    %v5525 = vpop.f32.mrf.mxu0
    %v5526 = vpop.f32.mrf.mxu0
    %v5527 = vadd.f32 %v5239, %v5526
    %v5528 = vpop.f32.mrf.mxu0
    %5529 = vdwg.mxu0
    %5530 = vmatprep.subr.bf16.mxu0 0
    %5531 = vmatpush1.bf16.msra.mxu0 %v5392
    %5532 = vmatprep.subr.bf16.mxu0 0
    %5533 = vmatpush1.bf16.msra.mxu0 %v5391
    %5534 = vmatprep.subr.bf16.mxu0 0
    %5535 = vmatpush1.bf16.msra.mxu0 %v5390
    %5536 = vmatprep.subr.bf16.mxu0 0
    %5537 = vmatpush1.bf16.msra.mxu0 %v5389
    %5538 = vmatprep.subr.bf16.mxu0 0
    %5539 = vmatpush1.bf16.msra.mxu0 %v5388
    %5540 = vmatprep.subr.bf16.mxu0 0
    %5541 = vmatpush1.bf16.msra.mxu0 %v5387
    %5542 = vmatprep.subr.bf16.mxu0 0
    %5543 = vmatpush1.bf16.msra.mxu0 %v5386
    %5544 = vmatprep.subr.bf16.mxu0 0
    %5545 = vmatpush1.bf16.msra.mxu0 %v5385
    %5546 = vmatprep.subr.bf16.mxu0 0
    %5547 = vmatpush2.bf16.msra.mxu0 %v5400
    %5548 = vmatprep.subr.bf16.mxu0 0
    %5549 = vmatpush2.bf16.msra.mxu0 %v5399
    %5550 = vmatprep.subr.bf16.mxu0 0
    %5551 = vmatpush2.bf16.msra.mxu0 %v5398
    %5552 = vmatprep.subr.bf16.mxu0 0
    %5553 = vmatpush2.bf16.msra.mxu0 %v5397
    %5554 = vmatprep.subr.bf16.mxu0 0
    %5555 = vmatpush2.bf16.msra.mxu0 %v5396
    %5556 = vmatprep.subr.bf16.mxu0 0
    %5557 = vmatpush2.bf16.msra.mxu0 %v5395
    %5558 = vmatprep.subr.bf16.mxu0 0
    %5559 = vmatpush2.bf16.msra.mxu0 %v5394
    %5560 = vmatprep.subr.bf16.mxu0 0
    %5561 = vmatpush2.bf16.msra.mxu0 %v5393
    %5562 = vmatprep.mubr.bf16.mxu0 %v5141
    %5563 = vmatmul.mubr.bf16.gmra.mxu0 %v5140
    %v5564 = vpop.f32.mrf.mxu0
    %v5565 = vadd.f32 %v5468, %v5564
    %v5566 = vpop.f32.mrf.mxu0
    %v5567 = vpop.f32.mrf.mxu0
    %v5568 = vadd.f32 %v5471, %v5567
    %v5569 = vpop.f32.mrf.mxu0
    %5570 = vmatprep.mubr.bf16.mxu0 %v5145
    %5571 = vmatmul.mubr.bf16.gmra.mxu0 %v5144
    %v5572 = vpop.f32.mrf.mxu0
    %v5573 = vadd.f32 %v5476, %v5572
    %v5574 = vpop.f32.mrf.mxu0
    %v5575 = vpop.f32.mrf.mxu0
    %v5576 = vadd.f32 %v5479, %v5575
    %v5577 = vpop.f32.mrf.mxu0
    %5578 = vmatprep.mubr.bf16.mxu0 %v5149
    %5579 = vmatmul.mubr.bf16.gmra.mxu0 %v5148
    %v5580 = vpop.f32.mrf.mxu0
    %v5581 = vadd.f32 %v5484, %v5580
    %v5582 = vpop.f32.mrf.mxu0
    %v5583 = vpop.f32.mrf.mxu0
    %v5584 = vadd.f32 %v5487, %v5583
    %v5585 = vpop.f32.mrf.mxu0
    %5586 = vmatprep.mubr.bf16.mxu0 %v5153
    %5587 = vmatmul.mubr.bf16.gmra.mxu0 %v5152
    %v5588 = vpop.f32.mrf.mxu0
    %v5589 = vadd.f32 %v5492, %v5588
    %v5590 = vpop.f32.mrf.mxu0
    %v5591 = vpop.f32.mrf.mxu0
    %v5592 = vadd.f32 %v5495, %v5591
    %v5593 = vpop.f32.mrf.mxu0
    %5594 = vmatprep.mubr.bf16.mxu0 %v5157
    %5595 = vmatmul.mubr.bf16.gmra.mxu0 %v5156
    %v5596 = vpop.f32.mrf.mxu0
    %v5597 = vadd.f32 %v5500, %v5596
    %v5598 = vpop.f32.mrf.mxu0
    %v5599 = vpop.f32.mrf.mxu0
    %v5600 = vadd.f32 %v5503, %v5599
    %v5601 = vpop.f32.mrf.mxu0
    %5602 = vmatprep.mubr.bf16.mxu0 %v5161
    %5603 = vmatmul.mubr.bf16.gmra.mxu0 %v5160
    %v5604 = vpop.f32.mrf.mxu0
    %v5605 = vadd.f32 %v5508, %v5604
    %v5606 = vpop.f32.mrf.mxu0
    %v5607 = vpop.f32.mrf.mxu0
    %v5608 = vadd.f32 %v5511, %v5607
    %v5609 = vpop.f32.mrf.mxu0
    %5610 = vmatprep.mubr.bf16.mxu0 %v5165
    %5611 = vmatmul.mubr.bf16.gmra.mxu0 %v5164
    %v5612 = vpop.f32.mrf.mxu0
    %v5613 = vadd.f32 %v5516, %v5612
    %v5614 = vpop.f32.mrf.mxu0
    %v5615 = vpop.f32.mrf.mxu0
    %v5616 = vadd.f32 %v5519, %v5615
    %v5617 = vpop.f32.mrf.mxu0
    %5618 = vmatprep.mubr.bf16.mxu0 %v5169
    %5619 = vmatmul.mubr.bf16.gmra.mxu0 %v5168
    %v5620 = vpop.f32.mrf.mxu0
    %v5621 = vadd.f32 %v5524, %v5620
    %v5622 = vpop.f32.mrf.mxu0
    %v5623 = vpop.f32.mrf.mxu0
    %v5624 = vadd.f32 %v5527, %v5623
    %v5625 = vpop.f32.mrf.mxu0
    %5626 = vdwg.mxu0
    %v5627 = vadd.f32 %v4132, %v5565
    %v5628 = vadd.f32 %v4133, %v5568
    %v5629 = vadd.f32 %v4134, %v5573
    %v5630 = vadd.f32 %v4135, %v5576
    %v5631 = vadd.f32 %v4136, %v5581
    %v5632 = vadd.f32 %v4137, %v5584
    %v5633 = vadd.f32 %v4138, %v5589
    %v5634 = vadd.f32 %v4139, %v5592
    %v5635 = vadd.f32 %v4140, %v5597
    %v5636 = vadd.f32 %v4141, %v5600
    %v5637 = vadd.f32 %v4142, %v5605
    %v5638 = vadd.f32 %v4143, %v5608
    %v5639 = vadd.f32 %v4144, %v5613
    %v5640 = vadd.f32 %v4145, %v5616
    %v5641 = vadd.f32 %v4146, %v5621
    %v5642 = vadd.f32 %v4147, %v5624
    %5643 = vst [vmem:[#allocation19] sm:$0xff] %v5627
    %5644 = vst [vmem:[#allocation19 + $0x8] sm:$0xff] %v5628
    %5645 = vst [vmem:[#allocation19 + $0x10] sm:$0xff] %v5629
    %5646 = vst [vmem:[#allocation19 + $0x18] sm:$0xff] %v5630
    %5647 = vst [vmem:[#allocation19 + $0x20] sm:$0xff] %v5631
    %5648 = vst [vmem:[#allocation19 + $0x28] sm:$0xff] %v5632
    %5649 = vst [vmem:[#allocation19 + $0x30] sm:$0xff] %v5633
    %5650 = vst [vmem:[#allocation19 + $0x38] sm:$0xff] %v5634
    %5651 = vst [vmem:[#allocation19 + $0x40] sm:$0xff] %v5635
    %5652 = vst [vmem:[#allocation19 + $0x48] sm:$0xff] %v5636
    %5653 = vst [vmem:[#allocation19 + $0x50] sm:$0xff] %v5637
    %5654 = vst [vmem:[#allocation19 + $0x58] sm:$0xff] %v5638
    %5655 = vst [vmem:[#allocation19 + $0x60] sm:$0xff] %v5639
    %5656 = vst [vmem:[#allocation19 + $0x68] sm:$0xff] %v5640
    %5657 = vst [vmem:[#allocation19 + $0x70] sm:$0xff] %v5641
    %5658 = vst [vmem:[#allocation19 + $0x78] sm:$0xff] %v5642
    // Predicated region
    $region110: #{tpu_custom_call.1} parent=1 // pred_check
      _
    $region111: #{tpu_custom_call.1} parent=1 // pred_check_branch
      %5660 = sbr.rel (0) target = $region113
    $region112: #{tpu_custom_call.1} parent=1 // pred_region
      %s5662 = ssub.s32 2048, 2048
      %5663 = vsyncadd [#allocation4], %s5662
      %s5664 = sshll.u32 [#allocation19], 4
      %s5665 = int_to_ptr.vmem [resolvable:$true] %s5664
      %5670 = dma.vmem_to_hbm [thread:$0]  %s5665, 2048, %s17, [#allocation4], 128, 128, 8
    $region113: #{tpu_custom_call.1} parent=1 // pred_fallthru
      _
    // Predicated region
    $region114: #{tpu_custom_call.1} parent=1 // pred_check
      _
    $region115: #{tpu_custom_call.1} parent=1 // pred_check_branch
      %5672 = sbr.rel (0) target = $region117
    $region116: #{tpu_custom_call.1} parent=1 // pred_region
      %5673 = dma.done [#allocation4], 2048
    $region117: #{tpu_custom_call.1} parent=1 // pred_fallthru
      _
    %5674 = vsyncpa [#allocation3], 1
    %5675 = vsyncpa [#allocation6], 1
    %5676 = vsyncpa [#allocation9], 1
    %5677 = vsyncpa [#allocation12], 1
    %5678 = vsyncpa [#allocation15], 1
    %5679 = vsyncpa [#allocation18], 1
    %5680 = vsyncpa [#allocation4], 1

// kernel: tpu_custom_call.1
$region0: #{tpu_custom_call.1}
  #allocation0 [shape = 'u32[]', space=smem, size = 0x4, offset = 0x4, fixed_abs, tag = 'smem constant byte address 0x4 - core index']
  #allocation1 [shape = 'u32[144,128]{1,0:T(1,128)}', space=vmem, size = 0x12000, scoped, tag = 'internal scratch']
  %s0 = inlined_call_operand.hbm [shape: f32[2,64,128], index: 0, kind: input, shape index: {}]
  %s1 = inlined_call_operand.hbm [shape: f32[2,128,128], index: 1, kind: input, shape index: {}]
  %s2 = inlined_call_operand.hbm [shape: f32[2,64,128], index: 2, kind: input, shape index: {}]
  %s3 = inlined_call_operand.hbm [shape: f32[2,128,128], index: 3, kind: input, shape index: {}]
  %s4 = inlined_call_operand.vmem [shape: f32[1,128], index: 4, kind: input, shape index: {}]
  %s5 = inlined_call_operand.vmem [shape: f32[1,128], index: 5, kind: input, shape index: {}]
  %s6 = inlined_call_operand.hbm [shape: bf16[128,128], index: 6, kind: input, shape index: {}]
  %s7 = inlined_call_operand.hbm [shape: bf16[128,128], index: 7, kind: input, shape index: {}]
  %s8 = inlined_call_operand.hbm [shape: bf16[128,128], index: 8, kind: input, shape index: {}]
  %s9 = inlined_call_operand.hbm [shape: bf16[128,128], index: 9, kind: input, shape index: {}]
  %s10 = inlined_call_operand.vmem [shape: f32[1,128], index: 10, kind: input, shape index: {}]
  %s11 = inlined_call_operand.vmem [shape: f32[1,128], index: 11, kind: input, shape index: {}]
  %s12 = inlined_call_operand.vmem [shape: f32[1,128], index: 12, kind: input, shape index: {}]
  %s13 = inlined_call_operand.hbm [shape: bf16[128,512], index: 13, kind: input, shape index: {}]
  %s14 = inlined_call_operand.vmem [shape: f32[1,512], index: 14, kind: input, shape index: {}]
  %s15 = inlined_call_operand.hbm [shape: bf16[512,128], index: 15, kind: input, shape index: {}]
  %s16 = inlined_call_operand.vmem [shape: f32[1,128], index: 16, kind: input, shape index: {}]
  %s17 = inlined_call_operand.hbm [shape: f32[2,64,128], index: 17, kind: output, shape index: {}]
  %s18 = sld [smem:[#allocation0]]
  $region118: #{tpu_custom_call.1} parent=0
    _
  %s20 = ssub.s32 1, %s18
  %s21 = scalar_select 0, %s20, %s18
  $region1: #{tpu_custom_call.1} parent=0
    #allocation2 [shape = 'u8[65536]{0}', space=vmem, size = 0x10000, scoped, tag = 'input window, operand 0, single buffered']
    #allocation3 [shape = 's32[1]{0}', space=sflag, size = 0x4, scoped, tag = 'scoped memory for tpu_custom_call.1']
    #allocation4 [shape = 's32[1]{0}', space=sflag, size = 0x4, scoped, tag = 'scoped memory for tpu_custom_call.1']
    #allocation5 [shape = 'u8[131072]{0}', space=vmem, size = 0x20000, scoped, tag = 'input window, operand 1, single buffered']
    #allocation6 [shape = 's32[1]{0}', space=sflag, size = 0x4, scoped, tag = 'scoped memory for tpu_custom_call.1']
    #allocation7 [shape = 'u8[65536]{0}', space=vmem, size = 0x10000, scoped, tag = 'input window, operand 2, single buffered']
    #allocation8 [shape = 'u8[131072]{0}', space=vmem, size = 0x20000, scoped, tag = 'input window, operand 3, single buffered']
    #allocation9 [shape = 's32[1]{0}', space=sflag, size = 0x4, scoped, tag = 'scoped memory for tpu_custom_call.1']
    #allocation10 [shape = 'u8[32768]{0}', space=vmem, size = 0x8000, scoped, tag = 'input window, operand 6, single buffered']
    #allocation11 [shape = 'u8[32768]{0}', space=vmem, size = 0x8000, scoped, tag = 'input window, operand 7, single buffered']
    #allocation12 [shape = 's32[1]{0}', space=sflag, size = 0x4, scoped, tag = 'scoped memory for tpu_custom_call.1']
    #allocation13 [shape = 'u8[32768]{0}', space=vmem, size = 0x8000, scoped, tag = 'input window, operand 8, single buffered']
    #allocation14 [shape = 'u8[32768]{0}', space=vmem, size = 0x8000, scoped, tag = 'input window, operand 9, single buffered']
    #allocation15 [shape = 's32[1]{0}', space=sflag, size = 0x4, scoped, tag = 'scoped memory for tpu_custom_call.1']
    #allocation16 [shape = 'u8[131072]{0}', space=vmem, size = 0x20000, scoped, tag = 'input window, operand 13, single buffered']
    #allocation17 [shape = 'u8[131072]{0}', space=vmem, size = 0x20000, scoped, tag = 'input window, operand 15, single buffered']
    #allocation18 [shape = 's32[1]{0}', space=sflag, size = 0x4, scoped, tag = 'scoped memory for tpu_custom_call.1']
    #allocation19 [shape = 'u8[65536]{0}', space=vmem, size = 0x10000, scoped, tag = 'output window, operand 0, single buffered']
    %22 = vsyncpa [#allocation3], 0
    %23 = vsyncpa [#allocation6], 0
    %24 = vsyncpa [#allocation9], 0
    %25 = vsyncpa [#allocation12], 0
    %26 = vsyncpa [#allocation15], 0
    %27 = vsyncpa [#allocation18], 0
    %28 = vsyncpa [#allocation4], 0
    // Predicated region
    $region2: #{tpu_custom_call.1} parent=1 // pred_check
      _
    $region3: #{tpu_custom_call.1} parent=1 // pred_check_branch
      %30 = sbr.rel (0) target = $region5
    $region4: #{tpu_custom_call.1} parent=1 // pred_region
      %s32 = ssub.s32 2048, 2048
      %33 = vsyncadd [#allocation3], %s32
      %s34 = sshll.u32 [#allocation2], 4
      %s35 = int_to_ptr.vmem [resolvable:$true] %s34
      %40 = dma.hbm_to_vmem [thread:$0]  %s0, 2048, %s35, [#allocation3], 128, 128, 8
    $region5: #{tpu_custom_call.1} parent=1 // pred_fallthru
      _
    // Predicated region
    $region6: #{tpu_custom_call.1} parent=1 // pred_check
      _
    $region7: #{tpu_custom_call.1} parent=1 // pred_check_branch
      %42 = sbr.rel (0) target = $region9
    $region8: #{tpu_custom_call.1} parent=1 // pred_region
      %s44 = ssub.s32 4096, 4096
      %45 = vsyncadd [#allocation6], %s44
      %s46 = sshll.u32 [#allocation5], 4
      %s47 = int_to_ptr.vmem [resolvable:$true] %s46
      %52 = dma.hbm_to_vmem [thread:$0]  %s1, 4096, %s47, [#allocation6], 128, 128, 8
    $region9: #{tpu_custom_call.1} parent=1 // pred_fallthru
      _
    // Predicated region
    $region10: #{tpu_custom_call.1} parent=1 // pred_check
      _
    $region11: #{tpu_custom_call.1} parent=1 // pred_check_branch
      %54 = sbr.rel (0) target = $region13
    $region12: #{tpu_custom_call.1} parent=1 // pred_region
      %s56 = ssub.s32 2048, 2048
      %57 = vsyncadd [#allocation6], %s56
      %s58 = sshll.u32 [#allocation7], 4
      %s59 = int_to_ptr.vmem [resolvable:$true] %s58
      %64 = dma.hbm_to_vmem [thread:$0]  %s2, 2048, %s59, [#allocation6], 128, 128, 8
    $region13: #{tpu_custom_call.1} parent=1 // pred_fallthru
      _
    // Predicated region
    $region14: #{tpu_custom_call.1} parent=1 // pred_check
      _
    $region15: #{tpu_custom_call.1} parent=1 // pred_check_branch
      %66 = sbr.rel (0) target = $region17
    $region16: #{tpu_custom_call.1} parent=1 // pred_region
      %s68 = ssub.s32 4096, 4096
      %69 = vsyncadd [#allocation9], %s68
      %s70 = sshll.u32 [#allocation8], 4
      %s71 = int_to_ptr.vmem [resolvable:$true] %s70
      %76 = dma.hbm_to_vmem [thread:$0]  %s3, 4096, %s71, [#allocation9], 128, 128, 8
    $region17: #{tpu_custom_call.1} parent=1 // pred_fallthru
      _
    // Predicated region
    $region18: #{tpu_custom_call.1} parent=1 // pred_check
      _
    $region19: #{tpu_custom_call.1} parent=1 // pred_check_branch
      %78 = sbr.rel (0) target = $region21
    $region20: #{tpu_custom_call.1} parent=1 // pred_region
      _
    $region21: #{tpu_custom_call.1} parent=1 // pred_fallthru
      _
    // Predicated region
    $region22: #{tpu_custom_call.1} parent=1 // pred_check
      _
    $region23: #{tpu_custom_call.1} parent=1 // pred_check_branch
      %80 = sbr.rel (0) target = $region25
    $region24: #{tpu_custom_call.1} parent=1 // pred_region
      _
    $region25: #{tpu_custom_call.1} parent=1 // pred_fallthru
      _
    // Predicated region
    $region26: #{tpu_custom_call.1} parent=1 // pred_check
      _
    $region27: #{tpu_custom_call.1} parent=1 // pred_check_branch
      %82 = sbr.rel (0) target = $region29
    $region28: #{tpu_custom_call.1} parent=1 // pred_region
      %s84 = ssub.s32 1024, 1024
      %85 = vsyncadd [#allocation9], %s84
      %s86 = sshll.u32 [#allocation10], 4
      %s87 = int_to_ptr.vmem [resolvable:$true] %s86
      %92 = dma.hbm_to_vmem [thread:$0]  %s6, 1024, %s87, [#allocation9], 64, 64, 4
    $region29: #{tpu_custom_call.1} parent=1 // pred_fallthru
      _
    // Predicated region
    $region30: #{tpu_custom_call.1} parent=1 // pred_check
      _
    $region31: #{tpu_custom_call.1} parent=1 // pred_check_branch
      %94 = sbr.rel (0) target = $region33
    $region32: #{tpu_custom_call.1} parent=1 // pred_region
      %s96 = ssub.s32 1024, 1024
      %97 = vsyncadd [#allocation12], %s96
      %s98 = sshll.u32 [#allocation11], 4
      %s99 = int_to_ptr.vmem [resolvable:$true] %s98
      %104 = dma.hbm_to_vmem [thread:$0]  %s7, 1024, %s99, [#allocation12], 64, 64, 4
    $region33: #{tpu_custom_call.1} parent=1 // pred_fallthru
      _
    // Predicated region
    $region34: #{tpu_custom_call.1} parent=1 // pred_check
      _
    $region35: #{tpu_custom_call.1} parent=1 // pred_check_branch
      %106 = sbr.rel (0) target = $region37
    $region36: #{tpu_custom_call.1} parent=1 // pred_region
      %s108 = ssub.s32 1024, 1024
      %109 = vsyncadd [#allocation12], %s108
      %s110 = sshll.u32 [#allocation13], 4
      %s111 = int_to_ptr.vmem [resolvable:$true] %s110
      %116 = dma.hbm_to_vmem [thread:$0]  %s8, 1024, %s111, [#allocation12], 64, 64, 4
    $region37: #{tpu_custom_call.1} parent=1 // pred_fallthru
      _
    // Predicated region
    $region38: #{tpu_custom_call.1} parent=1 // pred_check
      _
    $region39: #{tpu_custom_call.1} parent=1 // pred_check_branch
      %118 = sbr.rel (0) target = $region41
    $region40: #{tpu_custom_call.1} parent=1 // pred_region
      %s120 = ssub.s32 1024, 1024
      %121 = vsyncadd [#allocation15], %s120
      %s122 = sshll.u32 [#allocation14], 4
      %s123 = int_to_ptr.vmem [resolvable:$true] %s122
      %128 = dma.hbm_to_vmem [thread:$0]  %s9, 1024, %s123, [#allocation15], 64, 64, 4
    $region41: #{tpu_custom_call.1} parent=1 // pred_fallthru
      _
    // Predicated region
    $region42: #{tpu_custom_call.1} parent=1 // pred_check
      _
    $region43: #{tpu_custom_call.1} parent=1 // pred_check_branch
      %130 = sbr.rel (0) target = $region45
    $region44: #{tpu_custom_call.1} parent=1 // pred_region
      _
    $region45: #{tpu_custom_call.1} parent=1 // pred_fallthru
      _
    // Predicated region
    $region46: #{tpu_custom_call.1} parent=1 // pred_check
      _
    $region47: #{tpu_custom_call.1} parent=1 // pred_check_branch
      %132 = sbr.rel (0) target = $region49
    $region48: #{tpu_custom_call.1} parent=1 // pred_region
      _
    $region49: #{tpu_custom_call.1} parent=1 // pred_fallthru
      _
    // Predicated region
    $region50: #{tpu_custom_call.1} parent=1 // pred_check
      _
    $region51: #{tpu_custom_call.1} parent=1 // pred_check_branch
      %134 = sbr.rel (0) target = $region53
    $region52: #{tpu_custom_call.1} parent=1 // pred_region
      _
    $region53: #{tpu_custom_call.1} parent=1 // pred_fallthru
      _
    // Predicated region
    $region54: #{tpu_custom_call.1} parent=1 // pred_check
      _
    $region55: #{tpu_custom_call.1} parent=1 // pred_check_branch
      %136 = sbr.rel (0) target = $region57
    $region56: #{tpu_custom_call.1} parent=1 // pred_region
      %s138 = ssub.s32 4096, 4096
      %139 = vsyncadd [#allocation15], %s138
      %s140 = sshll.u32 [#allocation16], 4
      %s141 = int_to_ptr.vmem [resolvable:$true] %s140
      %146 = dma.hbm_to_vmem [thread:$0]  %s13, 4096, %s141, [#allocation15], 256, 256, 16
    $region57: #{tpu_custom_call.1} parent=1 // pred_fallthru
      _
    // Predicated region
    $region58: #{tpu_custom_call.1} parent=1 // pred_check
      _
    $region59: #{tpu_custom_call.1} parent=1 // pred_check_branch
      %148 = sbr.rel (0) target = $region61
    $region60: #{tpu_custom_call.1} parent=1 // pred_region
      _
    $region61: #{tpu_custom_call.1} parent=1 // pred_fallthru
      _
    // Predicated region
    $region62: #{tpu_custom_call.1} parent=1 // pred_check
      _
    $region63: #{tpu_custom_call.1} parent=1 // pred_check_branch
      %150 = sbr.rel (0) target = $region65
    $region64: #{tpu_custom_call.1} parent=1 // pred_region
      %s152 = ssub.s32 4096, 4096
      %153 = vsyncadd [#allocation18], %s152
      %s154 = sshll.u32 [#allocation17], 4
      %s155 = int_to_ptr.vmem [resolvable:$true] %s154
      %160 = dma.hbm_to_vmem [thread:$0]  %s15, 4096, %s155, [#allocation18], 64, 64, 4
    $region65: #{tpu_custom_call.1} parent=1 // pred_fallthru
      _
    // Predicated region
    $region66: #{tpu_custom_call.1} parent=1 // pred_check
      _
    $region67: #{tpu_custom_call.1} parent=1 // pred_check_branch
      %162 = sbr.rel (0) target = $region69
    $region68: #{tpu_custom_call.1} parent=1 // pred_region
      _
    $region69: #{tpu_custom_call.1} parent=1 // pred_fallthru
      _
    // Predicated region
    $region70: #{tpu_custom_call.1} parent=1 // pred_check
      _
    $region71: #{tpu_custom_call.1} parent=1 // pred_check_branch
      %164 = sbr.rel (0) target = $region73
    $region72: #{tpu_custom_call.1} parent=1 // pred_region
      %165 = dma.done [#allocation3], 2048
    $region73: #{tpu_custom_call.1} parent=1 // pred_fallthru
      _
    // Predicated region
    $region74: #{tpu_custom_call.1} parent=1 // pred_check
      _
    $region75: #{tpu_custom_call.1} parent=1 // pred_check_branch
      %167 = sbr.rel (0) target = $region77
    $region76: #{tpu_custom_call.1} parent=1 // pred_region
      %168 = dma.done [#allocation6], 4096
    $region77: #{tpu_custom_call.1} parent=1 // pred_fallthru
      _
    // Predicated region
    $region78: #{tpu_custom_call.1} parent=1 // pred_check
      _
    $region79: #{tpu_custom_call.1} parent=1 // pred_check_branch
      %170 = sbr.rel (0) target = $region81
    $region80: #{tpu_custom_call.1} parent=1 // pred_region
      %171 = dma.done [#allocation6], 2048
    $region81: #{tpu_custom_call.1} parent=1 // pred_fallthru
      _
    // Predicated region
    $region82: #{tpu_custom_call.1} parent=1 // pred_check
      _
    $region83: #{tpu_custom_call.1} parent=1 // pred_check_branch
      %173 = sbr.rel (0) target = $region85
    $region84: #{tpu_custom_call.1} parent=1 // pred_region
      %174 = dma.done [#allocation9], 4096
    $region85: #{tpu_custom_call.1} parent=1 // pred_fallthru
      _
    // Predicated region
    $region86: #{tpu_custom_call.1} parent=1 // pred_check
      _
    $region87: #{tpu_custom_call.1} parent=1 // pred_check_branch
      %176 = sbr.rel (0) target = $region89
    $region88: #{tpu_custom_call.1} parent=1 // pred_region
      %177 = dma.done [#allocation9], 1024
    $region89: #{tpu_custom_call.1} parent=1 // pred_fallthru
      _
    // Predicated region
    $region90: #{tpu_custom_call.1} parent=1 // pred_check
      _
    $region91: #{tpu_custom_call.1} parent=1 // pred_check_branch
      %179 = sbr.rel (0) target = $region93
    $region92: #{tpu_custom_call.1} parent=1 // pred_region
      %180 = dma.done [#allocation12], 1024
    $region93: #{tpu_custom_call.1} parent=1 // pred_fallthru
      _
    // Predicated region
    $region94: #{tpu_custom_call.1} parent=1 // pred_check
      _
    $region95: #{tpu_custom_call.1} parent=1 // pred_check_branch
      %182 = sbr.rel (0) target = $region97
    $region96: #{tpu_custom_call.1} parent=1 // pred_region
      %183 = dma.done [#allocation12], 1024
    $region97: #{tpu_custom_call.1} parent=1 // pred_fallthru
      _
    // Predicated region
    $region98: #{tpu_custom_call.1} parent=1 // pred_check
      _
    $region99: #{tpu_custom_call.1} parent=1 // pred_check_branch
      %185 = sbr.rel (0) target = $region101
    $region100: #{tpu_custom_call.1} parent=1 // pred_region
      %186 = dma.done [#allocation15], 1024
    $region101: #{tpu_custom_call.1} parent=1 // pred_fallthru
      _
    // Predicated region
    $region102: #{tpu_custom_call.1} parent=1 // pred_check
      _
    $region103: #{tpu_custom_call.1} parent=1 // pred_check_branch
      %188 = sbr.rel (0) target = $region105
    $region104: #{tpu_custom_call.1} parent=1 // pred_region
      %189 = dma.done [#allocation15], 4096
    $region105: #{tpu_custom_call.1} parent=1 // pred_fallthru
      _
    // Predicated region
    $region106: #{tpu_custom_call.1} parent=1 // pred_check
      _
    $region107: #{tpu_custom_call.1} parent=1 // pred_check_branch
      %191 = sbr.rel (0) target = $region109
    $region108: #{tpu_custom_call.1} parent=1 // pred_region
      %192 = dma.done [#allocation18], 4096
    $region109: #{tpu_custom_call.1} parent=1 // pred_fallthru
      _
    %v194 = vld [vmem:[#allocation5] sm:$0xff]
    %v195 = vld [vmem:[#allocation5 + $0x8] sm:$0xff]
    %v196 = vld [vmem:[#allocation5 + $0x10] sm:$0xff]
    %v197 = vld [vmem:[#allocation5 + $0x18] sm:$0xff]
    %v198 = vld [vmem:[#allocation5 + $0x20] sm:$0xff]
    %v199 = vld [vmem:[#allocation5 + $0x28] sm:$0xff]
    %v200 = vld [vmem:[#allocation5 + $0x30] sm:$0xff]
    %v201 = vld [vmem:[#allocation5 + $0x38] sm:$0xff]
    %v202 = vld [vmem:[#allocation5 + $0x40] sm:$0xff]
    %v203 = vld [vmem:[#allocation5 + $0x48] sm:$0xff]
    %v204 = vld [vmem:[#allocation5 + $0x50] sm:$0xff]
    %v205 = vld [vmem:[#allocation5 + $0x58] sm:$0xff]
    %v206 = vld [vmem:[#allocation5 + $0x60] sm:$0xff]
    %v207 = vld [vmem:[#allocation5 + $0x68] sm:$0xff]
    %v208 = vld [vmem:[#allocation5 + $0x70] sm:$0xff]
    %v209 = vld [vmem:[#allocation5 + $0x78] sm:$0xff]
    %v210 = vld [vmem:[#allocation5 + $0x80] sm:$0xff]
    %v211 = vld [vmem:[#allocation5 + $0x88] sm:$0xff]
    %v212 = vld [vmem:[#allocation5 + $0x90] sm:$0xff]
    %v213 = vld [vmem:[#allocation5 + $0x98] sm:$0xff]
    %v214 = vld [vmem:[#allocation5 + $0xa0] sm:$0xff]
    %v215 = vld [vmem:[#allocation5 + $0xa8] sm:$0xff]
    %v216 = vld [vmem:[#allocation5 + $0xb0] sm:$0xff]
    %v217 = vld [vmem:[#allocation5 + $0xb8] sm:$0xff]
    %v218 = vld [vmem:[#allocation5 + $0xc0] sm:$0xff]
    %v219 = vld [vmem:[#allocation5 + $0xc8] sm:$0xff]
    %v220 = vld [vmem:[#allocation5 + $0xd0] sm:$0xff]
    %v221 = vld [vmem:[#allocation5 + $0xd8] sm:$0xff]
    %v222 = vld [vmem:[#allocation5 + $0xe0] sm:$0xff]
    %v223 = vld [vmem:[#allocation5 + $0xe8] sm:$0xff]
    %v224 = vld [vmem:[#allocation5 + $0xf0] sm:$0xff]
    %v225 = vld [vmem:[#allocation5 + $0xf8] sm:$0xff]
    %v226 = vld [vmem:[%s4] sm:$0x1]
    %v227 = vld [vmem:[%s5] sm:$0x1]
    %228 = vadd.xlane.f32.xlu0 %v194
    %v229 = vpop.xlane.xlu0 %228
    %230 = vadd.xlane.f32.xlu0 %v195
    %v231 = vpop.xlane.xlu0 %230
    %232 = vadd.xlane.f32.xlu0 %v196
    %v233 = vpop.xlane.xlu0 %232
    %234 = vadd.xlane.f32.xlu0 %v197
    %v235 = vpop.xlane.xlu0 %234
    %236 = vadd.xlane.f32.xlu0 %v198
    %v237 = vpop.xlane.xlu0 %236
    %238 = vadd.xlane.f32.xlu0 %v199
    %v239 = vpop.xlane.xlu0 %238
    %240 = vadd.xlane.f32.xlu0 %v200
    %v241 = vpop.xlane.xlu0 %240
    %242 = vadd.xlane.f32.xlu0 %v201
    %v243 = vpop.xlane.xlu0 %242
    %244 = vadd.xlane.f32.xlu0 %v202
    %v245 = vpop.xlane.xlu0 %244
    %246 = vadd.xlane.f32.xlu0 %v203
    %v247 = vpop.xlane.xlu0 %246
    %248 = vadd.xlane.f32.xlu0 %v204
    %v249 = vpop.xlane.xlu0 %248
    %250 = vadd.xlane.f32.xlu0 %v205
    %v251 = vpop.xlane.xlu0 %250
    %252 = vadd.xlane.f32.xlu0 %v206
    %v253 = vpop.xlane.xlu0 %252
    %254 = vadd.xlane.f32.xlu0 %v207
    %v255 = vpop.xlane.xlu0 %254
    %256 = vadd.xlane.f32.xlu0 %v208
    %v257 = vpop.xlane.xlu0 %256
    %258 = vadd.xlane.f32.xlu0 %v209
    %v259 = vpop.xlane.xlu0 %258
    %260 = vadd.xlane.f32.xlu0 %v210
    %v261 = vpop.xlane.xlu0 %260
    %262 = vadd.xlane.f32.xlu0 %v211
    %v263 = vpop.xlane.xlu0 %262
    %264 = vadd.xlane.f32.xlu0 %v212
    %v265 = vpop.xlane.xlu0 %264
    %266 = vadd.xlane.f32.xlu0 %v213
    %v267 = vpop.xlane.xlu0 %266
    %268 = vadd.xlane.f32.xlu0 %v214
    %v269 = vpop.xlane.xlu0 %268
    %270 = vadd.xlane.f32.xlu0 %v215
    %v271 = vpop.xlane.xlu0 %270
    %272 = vadd.xlane.f32.xlu0 %v216
    %v273 = vpop.xlane.xlu0 %272
    %274 = vadd.xlane.f32.xlu0 %v217
    %v275 = vpop.xlane.xlu0 %274
    %276 = vadd.xlane.f32.xlu0 %v218
    %v277 = vpop.xlane.xlu0 %276
    %278 = vadd.xlane.f32.xlu0 %v219
    %v279 = vpop.xlane.xlu0 %278
    %280 = vadd.xlane.f32.xlu0 %v220
    %v281 = vpop.xlane.xlu0 %280
    %282 = vadd.xlane.f32.xlu0 %v221
    %v283 = vpop.xlane.xlu0 %282
    %284 = vadd.xlane.f32.xlu0 %v222
    %v285 = vpop.xlane.xlu0 %284
    %286 = vadd.xlane.f32.xlu0 %v223
    %v287 = vpop.xlane.xlu0 %286
    %288 = vadd.xlane.f32.xlu0 %v224
    %v289 = vpop.xlane.xlu0 %288
    %290 = vadd.xlane.f32.xlu0 %v225
    %v291 = vpop.xlane.xlu0 %290
    %v292 = vrcp.pop 128.0
    %v293 = vmul.f32 %v229, %v292
    %v294 = vmul.f32 %v231, %v292
    %v295 = vmul.f32 %v233, %v292
    %v296 = vmul.f32 %v235, %v292
    %v297 = vmul.f32 %v237, %v292
    %v298 = vmul.f32 %v239, %v292
    %v299 = vmul.f32 %v241, %v292
    %v300 = vmul.f32 %v243, %v292
    %v301 = vmul.f32 %v245, %v292
    %v302 = vmul.f32 %v247, %v292
    %v303 = vmul.f32 %v249, %v292
    %v304 = vmul.f32 %v251, %v292
    %v305 = vmul.f32 %v253, %v292
    %v306 = vmul.f32 %v255, %v292
    %v307 = vmul.f32 %v257, %v292
    %v308 = vmul.f32 %v259, %v292
    %v309 = vmul.f32 %v261, %v292
    %v310 = vmul.f32 %v263, %v292
    %v311 = vmul.f32 %v265, %v292
    %v312 = vmul.f32 %v267, %v292
    %v313 = vmul.f32 %v269, %v292
    %v314 = vmul.f32 %v271, %v292
    %v315 = vmul.f32 %v273, %v292
    %v316 = vmul.f32 %v275, %v292
    %v317 = vmul.f32 %v277, %v292
    %v318 = vmul.f32 %v279, %v292
    %v319 = vmul.f32 %v281, %v292
    %v320 = vmul.f32 %v283, %v292
    %v321 = vmul.f32 %v285, %v292
    %v322 = vmul.f32 %v287, %v292
    %v323 = vmul.f32 %v289, %v292
    %v324 = vmul.f32 %v291, %v292
    %v325 = vsub.f32 %v194, %v293
    %v326 = vsub.f32 %v195, %v294
    %v327 = vsub.f32 %v196, %v295
    %v328 = vsub.f32 %v197, %v296
    %v329 = vsub.f32 %v198, %v297
    %v330 = vsub.f32 %v199, %v298
    %v331 = vsub.f32 %v200, %v299
    %v332 = vsub.f32 %v201, %v300
    %v333 = vsub.f32 %v202, %v301
    %v334 = vsub.f32 %v203, %v302
    %v335 = vsub.f32 %v204, %v303
    %v336 = vsub.f32 %v205, %v304
    %v337 = vsub.f32 %v206, %v305
    %v338 = vsub.f32 %v207, %v306
    %v339 = vsub.f32 %v208, %v307
    %v340 = vsub.f32 %v209, %v308
    %v341 = vsub.f32 %v210, %v309
    %v342 = vsub.f32 %v211, %v310
    %v343 = vsub.f32 %v212, %v311
    %v344 = vsub.f32 %v213, %v312
    %v345 = vsub.f32 %v214, %v313
    %v346 = vsub.f32 %v215, %v314
    %v347 = vsub.f32 %v216, %v315
    %v348 = vsub.f32 %v217, %v316
    %v349 = vsub.f32 %v218, %v317
    %v350 = vsub.f32 %v219, %v318
    %v351 = vsub.f32 %v220, %v319
    %v352 = vsub.f32 %v221, %v320
    %v353 = vsub.f32 %v222, %v321
    %v354 = vsub.f32 %v223, %v322
    %v355 = vsub.f32 %v224, %v323
    %v356 = vsub.f32 %v225, %v324
    %v357 = vmul.f32 %v325, %v325
    %v358 = vmul.f32 %v326, %v326
    %v359 = vmul.f32 %v327, %v327
    %v360 = vmul.f32 %v328, %v328
    %v361 = vmul.f32 %v329, %v329
    %v362 = vmul.f32 %v330, %v330
    %v363 = vmul.f32 %v331, %v331
    %v364 = vmul.f32 %v332, %v332
    %v365 = vmul.f32 %v333, %v333
    %v366 = vmul.f32 %v334, %v334
    %v367 = vmul.f32 %v335, %v335
    %v368 = vmul.f32 %v336, %v336
    %v369 = vmul.f32 %v337, %v337
    %v370 = vmul.f32 %v338, %v338
    %v371 = vmul.f32 %v339, %v339
    %v372 = vmul.f32 %v340, %v340
    %v373 = vmul.f32 %v341, %v341
    %v374 = vmul.f32 %v342, %v342
    %v375 = vmul.f32 %v343, %v343
    %v376 = vmul.f32 %v344, %v344
    %v377 = vmul.f32 %v345, %v345
    %v378 = vmul.f32 %v346, %v346
    %v379 = vmul.f32 %v347, %v347
    %v380 = vmul.f32 %v348, %v348
    %v381 = vmul.f32 %v349, %v349
    %v382 = vmul.f32 %v350, %v350
    %v383 = vmul.f32 %v351, %v351
    %v384 = vmul.f32 %v352, %v352
    %v385 = vmul.f32 %v353, %v353
    %v386 = vmul.f32 %v354, %v354
    %v387 = vmul.f32 %v355, %v355
    %v388 = vmul.f32 %v356, %v356
    %389 = vadd.xlane.f32.xlu0 %v357
    %v390 = vpop.xlane.xlu0 %389
    %391 = vadd.xlane.f32.xlu0 %v358
    %v392 = vpop.xlane.xlu0 %391
    %393 = vadd.xlane.f32.xlu0 %v359
    %v394 = vpop.xlane.xlu0 %393
    %395 = vadd.xlane.f32.xlu0 %v360
    %v396 = vpop.xlane.xlu0 %395
    %397 = vadd.xlane.f32.xlu0 %v361
    %v398 = vpop.xlane.xlu0 %397
    %399 = vadd.xlane.f32.xlu0 %v362
    %v400 = vpop.xlane.xlu0 %399
    %401 = vadd.xlane.f32.xlu0 %v363
    %v402 = vpop.xlane.xlu0 %401
    %403 = vadd.xlane.f32.xlu0 %v364
    %v404 = vpop.xlane.xlu0 %403
    %405 = vadd.xlane.f32.xlu0 %v365
    %v406 = vpop.xlane.xlu0 %405
    %407 = vadd.xlane.f32.xlu0 %v366
    %v408 = vpop.xlane.xlu0 %407
    %409 = vadd.xlane.f32.xlu0 %v367
    %v410 = vpop.xlane.xlu0 %409
    %411 = vadd.xlane.f32.xlu0 %v368
    %v412 = vpop.xlane.xlu0 %411
    %413 = vadd.xlane.f32.xlu0 %v369
    %v414 = vpop.xlane.xlu0 %413
    %415 = vadd.xlane.f32.xlu0 %v370
    %v416 = vpop.xlane.xlu0 %415
    %417 = vadd.xlane.f32.xlu0 %v371
    %v418 = vpop.xlane.xlu0 %417
    %419 = vadd.xlane.f32.xlu0 %v372
    %v420 = vpop.xlane.xlu0 %419
    %421 = vadd.xlane.f32.xlu0 %v373
    %v422 = vpop.xlane.xlu0 %421
    %423 = vadd.xlane.f32.xlu0 %v374
    %v424 = vpop.xlane.xlu0 %423
    %425 = vadd.xlane.f32.xlu0 %v375
    %v426 = vpop.xlane.xlu0 %425
    %427 = vadd.xlane.f32.xlu0 %v376
    %v428 = vpop.xlane.xlu0 %427
    %429 = vadd.xlane.f32.xlu0 %v377
    %v430 = vpop.xlane.xlu0 %429
    %431 = vadd.xlane.f32.xlu0 %v378
    %v432 = vpop.xlane.xlu0 %431
    %433 = vadd.xlane.f32.xlu0 %v379
    %v434 = vpop.xlane.xlu0 %433
    %435 = vadd.xlane.f32.xlu0 %v380
    %v436 = vpop.xlane.xlu0 %435
    %437 = vadd.xlane.f32.xlu0 %v381
    %v438 = vpop.xlane.xlu0 %437
    %439 = vadd.xlane.f32.xlu0 %v382
    %v440 = vpop.xlane.xlu0 %439
    %441 = vadd.xlane.f32.xlu0 %v383
    %v442 = vpop.xlane.xlu0 %441
    %443 = vadd.xlane.f32.xlu0 %v384
    %v444 = vpop.xlane.xlu0 %443
    %445 = vadd.xlane.f32.xlu0 %v385
    %v446 = vpop.xlane.xlu0 %445
    %447 = vadd.xlane.f32.xlu0 %v386
    %v448 = vpop.xlane.xlu0 %447
    %449 = vadd.xlane.f32.xlu0 %v387
    %v450 = vpop.xlane.xlu0 %449
    %451 = vadd.xlane.f32.xlu0 %v388
    %v452 = vpop.xlane.xlu0 %451
    %v453 = vmul.f32 %v390, %v292
    %v454 = vmul.f32 %v392, %v292
    %v455 = vmul.f32 %v394, %v292
    %v456 = vmul.f32 %v396, %v292
    %v457 = vmul.f32 %v398, %v292
    %v458 = vmul.f32 %v400, %v292
    %v459 = vmul.f32 %v402, %v292
    %v460 = vmul.f32 %v404, %v292
    %v461 = vmul.f32 %v406, %v292
    %v462 = vmul.f32 %v408, %v292
    %v463 = vmul.f32 %v410, %v292
    %v464 = vmul.f32 %v412, %v292
    %v465 = vmul.f32 %v414, %v292
    %v466 = vmul.f32 %v416, %v292
    %v467 = vmul.f32 %v418, %v292
    %v468 = vmul.f32 %v420, %v292
    %v469 = vmul.f32 %v422, %v292
    %v470 = vmul.f32 %v424, %v292
    %v471 = vmul.f32 %v426, %v292
    %v472 = vmul.f32 %v428, %v292
    %v473 = vmul.f32 %v430, %v292
    %v474 = vmul.f32 %v432, %v292
    %v475 = vmul.f32 %v434, %v292
    %v476 = vmul.f32 %v436, %v292
    %v477 = vmul.f32 %v438, %v292
    %v478 = vmul.f32 %v440, %v292
    %v479 = vmul.f32 %v442, %v292
    %v480 = vmul.f32 %v444, %v292
    %v481 = vmul.f32 %v446, %v292
    %v482 = vmul.f32 %v448, %v292
    %v483 = vmul.f32 %v450, %v292
    %v484 = vmul.f32 %v452, %v292
    %v485 = vadd.f32 %v453, 1e-05
    %v486 = vadd.f32 %v454, 1e-05
    %v487 = vadd.f32 %v455, 1e-05
    %v488 = vadd.f32 %v456, 1e-05
    %v489 = vadd.f32 %v457, 1e-05
    %v490 = vadd.f32 %v458, 1e-05
    %v491 = vadd.f32 %v459, 1e-05
    %v492 = vadd.f32 %v460, 1e-05
    %v493 = vadd.f32 %v461, 1e-05
    %v494 = vadd.f32 %v462, 1e-05
    %v495 = vadd.f32 %v463, 1e-05
    %v496 = vadd.f32 %v464, 1e-05
    %v497 = vadd.f32 %v465, 1e-05
    %v498 = vadd.f32 %v466, 1e-05
    %v499 = vadd.f32 %v467, 1e-05
    %v500 = vadd.f32 %v468, 1e-05
    %v501 = vadd.f32 %v469, 1e-05
    %v502 = vadd.f32 %v470, 1e-05
    %v503 = vadd.f32 %v471, 1e-05
    %v504 = vadd.f32 %v472, 1e-05
    %v505 = vadd.f32 %v473, 1e-05
    %v506 = vadd.f32 %v474, 1e-05
    %v507 = vadd.f32 %v475, 1e-05
    %v508 = vadd.f32 %v476, 1e-05
    %v509 = vadd.f32 %v477, 1e-05
    %v510 = vadd.f32 %v478, 1e-05
    %v511 = vadd.f32 %v479, 1e-05
    %v512 = vadd.f32 %v480, 1e-05
    %v513 = vadd.f32 %v481, 1e-05
    %v514 = vadd.f32 %v482, 1e-05
    %v515 = vadd.f32 %v483, 1e-05
    %v516 = vadd.f32 %v484, 1e-05
    %v517 = vrsqrt.pop %v485
    %v518 = vrsqrt.pop %v486
    %v519 = vrsqrt.pop %v487
    %v520 = vrsqrt.pop %v488
    %v521 = vrsqrt.pop %v489
    %v522 = vrsqrt.pop %v490
    %v523 = vrsqrt.pop %v491
    %v524 = vrsqrt.pop %v492
    %v525 = vrsqrt.pop %v493
    %v526 = vrsqrt.pop %v494
    %v527 = vrsqrt.pop %v495
    %v528 = vrsqrt.pop %v496
    %v529 = vrsqrt.pop %v497
    %v530 = vrsqrt.pop %v498
    %v531 = vrsqrt.pop %v499
    %v532 = vrsqrt.pop %v500
    %v533 = vrsqrt.pop %v501
    %v534 = vrsqrt.pop %v502
    %v535 = vrsqrt.pop %v503
    %v536 = vrsqrt.pop %v504
    %v537 = vrsqrt.pop %v505
    %v538 = vrsqrt.pop %v506
    %v539 = vrsqrt.pop %v507
    %v540 = vrsqrt.pop %v508
    %v541 = vrsqrt.pop %v509
    %v542 = vrsqrt.pop %v510
    %v543 = vrsqrt.pop %v511
    %v544 = vrsqrt.pop %v512
    %v545 = vrsqrt.pop %v513
    %v546 = vrsqrt.pop %v514
    %v547 = vrsqrt.pop %v515
    %v548 = vrsqrt.pop %v516
    %v549 = vmul.f32 %v325, %v517
    %v550 = vmul.f32 %v326, %v518
    %v551 = vmul.f32 %v327, %v519
    %v552 = vmul.f32 %v328, %v520
    %v553 = vmul.f32 %v329, %v521
    %v554 = vmul.f32 %v330, %v522
    %v555 = vmul.f32 %v331, %v523
    %v556 = vmul.f32 %v332, %v524
    %v557 = vmul.f32 %v333, %v525
    %v558 = vmul.f32 %v334, %v526
    %v559 = vmul.f32 %v335, %v527
    %v560 = vmul.f32 %v336, %v528
    %v561 = vmul.f32 %v337, %v529
    %v562 = vmul.f32 %v338, %v530
    %v563 = vmul.f32 %v339, %v531
    %v564 = vmul.f32 %v340, %v532
    %v565 = vmul.f32 %v341, %v533
    %v566 = vmul.f32 %v342, %v534
    %v567 = vmul.f32 %v343, %v535
    %v568 = vmul.f32 %v344, %v536
    %v569 = vmul.f32 %v345, %v537
    %v570 = vmul.f32 %v346, %v538
    %v571 = vmul.f32 %v347, %v539
    %v572 = vmul.f32 %v348, %v540
    %v573 = vmul.f32 %v349, %v541
    %v574 = vmul.f32 %v350, %v542
    %v575 = vmul.f32 %v351, %v543
    %v576 = vmul.f32 %v352, %v544
    %v577 = vmul.f32 %v353, %v545
    %v578 = vmul.f32 %v354, %v546
    %v579 = vmul.f32 %v355, %v547
    %v580 = vmul.f32 %v356, %v548
    %v582 = vlaneseq
    %v583 = vshrl.u32 %v582, 7
    %v584 = vsub.s32 0, %v583
    %v585 = vrot.slane %v226, %v584
    %v587 = vmul.f32 %v549, %v585
    %v588 = vmul.f32 %v550, %v585
    %v589 = vmul.f32 %v551, %v585
    %v590 = vmul.f32 %v552, %v585
    %v591 = vmul.f32 %v553, %v585
    %v592 = vmul.f32 %v554, %v585
    %v593 = vmul.f32 %v555, %v585
    %v594 = vmul.f32 %v556, %v585
    %v595 = vmul.f32 %v557, %v585
    %v596 = vmul.f32 %v558, %v585
    %v597 = vmul.f32 %v559, %v585
    %v598 = vmul.f32 %v560, %v585
    %v599 = vmul.f32 %v561, %v585
    %v600 = vmul.f32 %v562, %v585
    %v601 = vmul.f32 %v563, %v585
    %v602 = vmul.f32 %v564, %v585
    %v603 = vmul.f32 %v565, %v585
    %v604 = vmul.f32 %v566, %v585
    %v605 = vmul.f32 %v567, %v585
    %v606 = vmul.f32 %v568, %v585
    %v607 = vmul.f32 %v569, %v585
    %v608 = vmul.f32 %v570, %v585
    %v609 = vmul.f32 %v571, %v585
    %v610 = vmul.f32 %v572, %v585
    %v611 = vmul.f32 %v573, %v585
    %v612 = vmul.f32 %v574, %v585
    %v613 = vmul.f32 %v575, %v585
    %v614 = vmul.f32 %v576, %v585
    %v615 = vmul.f32 %v577, %v585
    %v616 = vmul.f32 %v578, %v585
    %v617 = vmul.f32 %v579, %v585
    %v618 = vmul.f32 %v580, %v585
    %v620 = vlaneseq
    %v621 = vshrl.u32 %v620, 7
    %v622 = vsub.s32 0, %v621
    %v623 = vrot.slane %v227, %v622
    %v625 = vadd.f32 %v587, %v623
    %v626 = vadd.f32 %v588, %v623
    %v627 = vadd.f32 %v589, %v623
    %v628 = vadd.f32 %v590, %v623
    %v629 = vadd.f32 %v591, %v623
    %v630 = vadd.f32 %v592, %v623
    %v631 = vadd.f32 %v593, %v623
    %v632 = vadd.f32 %v594, %v623
    %v633 = vadd.f32 %v595, %v623
    %v634 = vadd.f32 %v596, %v623
    %v635 = vadd.f32 %v597, %v623
    %v636 = vadd.f32 %v598, %v623
    %v637 = vadd.f32 %v599, %v623
    %v638 = vadd.f32 %v600, %v623
    %v639 = vadd.f32 %v601, %v623
    %v640 = vadd.f32 %v602, %v623
    %v641 = vadd.f32 %v603, %v623
    %v642 = vadd.f32 %v604, %v623
    %v643 = vadd.f32 %v605, %v623
    %v644 = vadd.f32 %v606, %v623
    %v645 = vadd.f32 %v607, %v623
    %v646 = vadd.f32 %v608, %v623
    %v647 = vadd.f32 %v609, %v623
    %v648 = vadd.f32 %v610, %v623
    %v649 = vadd.f32 %v611, %v623
    %v650 = vadd.f32 %v612, %v623
    %v651 = vadd.f32 %v613, %v623
    %v652 = vadd.f32 %v614, %v623
    %v653 = vadd.f32 %v615, %v623
    %v654 = vadd.f32 %v616, %v623
    %v655 = vadd.f32 %v617, %v623
    %v656 = vadd.f32 %v618, %v623
    %v657 = vld [vmem:[#allocation7] sm:$0xff]
    %v658 = vld [vmem:[#allocation7 + $0x8] sm:$0xff]
    %v659 = vld [vmem:[#allocation7 + $0x10] sm:$0xff]
    %v660 = vld [vmem:[#allocation7 + $0x18] sm:$0xff]
    %v661 = vld [vmem:[#allocation7 + $0x20] sm:$0xff]
    %v662 = vld [vmem:[#allocation7 + $0x28] sm:$0xff]
    %v663 = vld [vmem:[#allocation7 + $0x30] sm:$0xff]
    %v664 = vld [vmem:[#allocation7 + $0x38] sm:$0xff]
    %v665 = vld [vmem:[#allocation7 + $0x40] sm:$0xff]
    %v666 = vld [vmem:[#allocation7 + $0x48] sm:$0xff]
    %v667 = vld [vmem:[#allocation7 + $0x50] sm:$0xff]
    %v668 = vld [vmem:[#allocation7 + $0x58] sm:$0xff]
    %v669 = vld [vmem:[#allocation7 + $0x60] sm:$0xff]
    %v670 = vld [vmem:[#allocation7 + $0x68] sm:$0xff]
    %v671 = vld [vmem:[#allocation7 + $0x70] sm:$0xff]
    %v672 = vld [vmem:[#allocation7 + $0x78] sm:$0xff]
    %v673 = vadd.f32 %v627, %v657
    %v674 = vadd.f32 %v628, %v658
    %v675 = vadd.f32 %v629, %v659
    %v676 = vadd.f32 %v630, %v660
    %v677 = vadd.f32 %v631, %v661
    %v678 = vadd.f32 %v632, %v662
    %v679 = vadd.f32 %v633, %v663
    %v680 = vadd.f32 %v634, %v664
    %v681 = vadd.f32 %v643, %v665
    %v682 = vadd.f32 %v644, %v666
    %v683 = vadd.f32 %v645, %v667
    %v684 = vadd.f32 %v646, %v668
    %v685 = vadd.f32 %v647, %v669
    %v686 = vadd.f32 %v648, %v670
    %v687 = vadd.f32 %v649, %v671
    %v688 = vadd.f32 %v650, %v672
    %v689 = vpack.c.bf16 %v674, %v673
    %v690 = vpack.c.bf16 %v676, %v675
    %v691 = vpack.c.bf16 %v678, %v677
    %v692 = vpack.c.bf16 %v680, %v679
    %v693 = vpack.c.bf16 %v682, %v681
    %v694 = vpack.c.bf16 %v684, %v683
    %v695 = vpack.c.bf16 %v686, %v685
    %v696 = vpack.c.bf16 %v688, %v687
    %v697 = vld [vmem:[#allocation8] sm:$0xff]
    %v698 = vld [vmem:[#allocation8 + $0x8] sm:$0xff]
    %v699 = vld [vmem:[#allocation8 + $0x10] sm:$0xff]
    %v700 = vld [vmem:[#allocation8 + $0x18] sm:$0xff]
    %v701 = vld [vmem:[#allocation8 + $0x20] sm:$0xff]
    %v702 = vld [vmem:[#allocation8 + $0x28] sm:$0xff]
    %v703 = vld [vmem:[#allocation8 + $0x30] sm:$0xff]
    %v704 = vld [vmem:[#allocation8 + $0x38] sm:$0xff]
    %v705 = vld [vmem:[#allocation8 + $0x40] sm:$0xff]
    %v706 = vld [vmem:[#allocation8 + $0x48] sm:$0xff]
    %v707 = vld [vmem:[#allocation8 + $0x50] sm:$0xff]
    %v708 = vld [vmem:[#allocation8 + $0x58] sm:$0xff]
    %v709 = vld [vmem:[#allocation8 + $0x60] sm:$0xff]
    %v710 = vld [vmem:[#allocation8 + $0x68] sm:$0xff]
    %v711 = vld [vmem:[#allocation8 + $0x70] sm:$0xff]
    %v712 = vld [vmem:[#allocation8 + $0x78] sm:$0xff]
    %v713 = vld [vmem:[#allocation8 + $0x80] sm:$0xff]
    %v714 = vld [vmem:[#allocation8 + $0x88] sm:$0xff]
    %v715 = vld [vmem:[#allocation8 + $0x90] sm:$0xff]
    %v716 = vld [vmem:[#allocation8 + $0x98] sm:$0xff]
    %v717 = vld [vmem:[#allocation8 + $0xa0] sm:$0xff]
    %v718 = vld [vmem:[#allocation8 + $0xa8] sm:$0xff]
    %v719 = vld [vmem:[#allocation8 + $0xb0] sm:$0xff]
    %v720 = vld [vmem:[#allocation8 + $0xb8] sm:$0xff]
    %v721 = vld [vmem:[#allocation8 + $0xc0] sm:$0xff]
    %v722 = vld [vmem:[#allocation8 + $0xc8] sm:$0xff]
    %v723 = vld [vmem:[#allocation8 + $0xd0] sm:$0xff]
    %v724 = vld [vmem:[#allocation8 + $0xd8] sm:$0xff]
    %v725 = vld [vmem:[#allocation8 + $0xe0] sm:$0xff]
    %v726 = vld [vmem:[#allocation8 + $0xe8] sm:$0xff]
    %v727 = vld [vmem:[#allocation8 + $0xf0] sm:$0xff]
    %v728 = vld [vmem:[#allocation8 + $0xf8] sm:$0xff]
    %v729 = vadd.f32 %v625, %v697
    %v730 = vadd.f32 %v626, %v698
    %v731 = vadd.f32 %v627, %v699
    %v732 = vadd.f32 %v628, %v700
    %v733 = vadd.f32 %v629, %v701
    %v734 = vadd.f32 %v630, %v702
    %v735 = vadd.f32 %v631, %v703
    %v736 = vadd.f32 %v632, %v704
    %v737 = vadd.f32 %v633, %v705
    %v738 = vadd.f32 %v634, %v706
    %v739 = vadd.f32 %v635, %v707
    %v740 = vadd.f32 %v636, %v708
    %v741 = vadd.f32 %v637, %v709
    %v742 = vadd.f32 %v638, %v710
    %v743 = vadd.f32 %v639, %v711
    %v744 = vadd.f32 %v640, %v712
    %v745 = vadd.f32 %v641, %v713
    %v746 = vadd.f32 %v642, %v714
    %v747 = vadd.f32 %v643, %v715
    %v748 = vadd.f32 %v644, %v716
    %v749 = vadd.f32 %v645, %v717
    %v750 = vadd.f32 %v646, %v718
    %v751 = vadd.f32 %v647, %v719
    %v752 = vadd.f32 %v648, %v720
    %v753 = vadd.f32 %v649, %v721
    %v754 = vadd.f32 %v650, %v722
    %v755 = vadd.f32 %v651, %v723
    %v756 = vadd.f32 %v652, %v724
    %v757 = vadd.f32 %v653, %v725
    %v758 = vadd.f32 %v654, %v726
    %v759 = vadd.f32 %v655, %v727
    %v760 = vadd.f32 %v656, %v728
    %v761 = vpack.c.bf16 %v730, %v729
    %v762 = vpack.c.bf16 %v732, %v731
    %v763 = vpack.c.bf16 %v734, %v733
    %v764 = vpack.c.bf16 %v736, %v735
    %v765 = vpack.c.bf16 %v738, %v737
    %v766 = vpack.c.bf16 %v740, %v739
    %v767 = vpack.c.bf16 %v742, %v741
    %v768 = vpack.c.bf16 %v744, %v743
    %v769 = vpack.c.bf16 %v746, %v745
    %v770 = vpack.c.bf16 %v748, %v747
    %v771 = vpack.c.bf16 %v750, %v749
    %v772 = vpack.c.bf16 %v752, %v751
    %v773 = vpack.c.bf16 %v754, %v753
    %v774 = vpack.c.bf16 %v756, %v755
    %v775 = vpack.c.bf16 %v758, %v757
    %v776 = vpack.c.bf16 %v760, %v759
    %v777 = vpack.c.bf16 %v626, %v625
    %v778 = vpack.c.bf16 %v628, %v627
    %v779 = vpack.c.bf16 %v630, %v629
    %v780 = vpack.c.bf16 %v632, %v631
    %v781 = vpack.c.bf16 %v634, %v633
    %v782 = vpack.c.bf16 %v636, %v635
    %v783 = vpack.c.bf16 %v638, %v637
    %v784 = vpack.c.bf16 %v640, %v639
    %v785 = vpack.c.bf16 %v642, %v641
    %v786 = vpack.c.bf16 %v644, %v643
    %v787 = vpack.c.bf16 %v646, %v645
    %v788 = vpack.c.bf16 %v648, %v647
    %v789 = vpack.c.bf16 %v650, %v649
    %v790 = vpack.c.bf16 %v652, %v651
    %v791 = vpack.c.bf16 %v654, %v653
    %v792 = vpack.c.bf16 %v656, %v655
    %v793 = vld [vmem:[#allocation10] sm:$0xf]
    %v794 = vld [vmem:[#allocation10 + $0x4] sm:$0xf]
    %v795 = vld [vmem:[#allocation10 + $0x8] sm:$0xf]
    %v796 = vld [vmem:[#allocation10 + $0xc] sm:$0xf]
    %v797 = vld [vmem:[#allocation10 + $0x10] sm:$0xf]
    %v798 = vld [vmem:[#allocation10 + $0x14] sm:$0xf]
    %v799 = vld [vmem:[#allocation10 + $0x18] sm:$0xf]
    %v800 = vld [vmem:[#allocation10 + $0x1c] sm:$0xf]
    %v801 = vld [vmem:[#allocation10 + $0x20] sm:$0xf]
    %v802 = vld [vmem:[#allocation10 + $0x24] sm:$0xf]
    %v803 = vld [vmem:[#allocation10 + $0x28] sm:$0xf]
    %v804 = vld [vmem:[#allocation10 + $0x2c] sm:$0xf]
    %v805 = vld [vmem:[#allocation10 + $0x30] sm:$0xf]
    %v806 = vld [vmem:[#allocation10 + $0x34] sm:$0xf]
    %v807 = vld [vmem:[#allocation10 + $0x38] sm:$0xf]
    %v808 = vld [vmem:[#allocation10 + $0x3c] sm:$0xf]
    %v825 = vunpack.c.l.b16 %v793
    %v826 = vunpack.c.l.b16 %v794
    %v827 = vunpack.c.l.b16 %v795
    %v828 = vunpack.c.l.b16 %v796
    %v829 = vunpack.c.l.b16 %v797
    %v830 = vunpack.c.l.b16 %v798
    %v831 = vunpack.c.l.b16 %v799
    %v832 = vunpack.c.l.b16 %v800
    %v833 = vunpack.c.l.b16 %v801
    %v834 = vunpack.c.l.b16 %v802
    %v835 = vunpack.c.l.b16 %v803
    %v836 = vunpack.c.l.b16 %v804
    %v837 = vunpack.c.l.b16 %v805
    %v838 = vunpack.c.l.b16 %v806
    %v839 = vunpack.c.l.b16 %v807
    %v840 = vunpack.c.l.b16 %v808
    %v841 = vpack.c.b16 %v826, %v825
    %v842 = vpack.c.b16 %v828, %v827
    %v843 = vpack.c.b16 %v830, %v829
    %v844 = vpack.c.b16 %v832, %v831
    %v845 = vpack.c.b16 %v834, %v833
    %v846 = vpack.c.b16 %v836, %v835
    %v847 = vpack.c.b16 %v838, %v837
    %v848 = vpack.c.b16 %v840, %v839
    %857 = vmatprep.subr.bf16.mxu0 0
    %858 = vmatpush1.bf16.msra.mxu0 %v848
    %859 = vmatprep.subr.bf16.mxu0 0
    %860 = vmatpush1.bf16.msra.mxu0 %v847
    %861 = vmatprep.subr.bf16.mxu0 0
    %862 = vmatpush1.bf16.msra.mxu0 %v846
    %863 = vmatprep.subr.bf16.mxu0 0
    %864 = vmatpush1.bf16.msra.mxu0 %v845
    %865 = vmatprep.subr.bf16.mxu0 0
    %866 = vmatpush1.bf16.msra.mxu0 %v844
    %867 = vmatprep.subr.bf16.mxu0 0
    %868 = vmatpush1.bf16.msra.mxu0 %v843
    %869 = vmatprep.subr.bf16.mxu0 0
    %870 = vmatpush1.bf16.msra.mxu0 %v842
    %871 = vmatprep.subr.bf16.mxu0 0
    %872 = vmatpush1.bf16.msra.mxu0 %v841
    %873 = vmatprep.subr.bf16.mxu0 0
    %874 = vmatpush2.bf16.msra.mxu0 0
    %875 = vmatprep.subr.bf16.mxu0 0
    %876 = vmatpush2.bf16.msra.mxu0 0
    %877 = vmatprep.subr.bf16.mxu0 0
    %878 = vmatpush2.bf16.msra.mxu0 0
    %879 = vmatprep.subr.bf16.mxu0 0
    %880 = vmatpush2.bf16.msra.mxu0 0
    %881 = vmatprep.subr.bf16.mxu0 0
    %882 = vmatpush2.bf16.msra.mxu0 0
    %883 = vmatprep.subr.bf16.mxu0 0
    %884 = vmatpush2.bf16.msra.mxu0 0
    %885 = vmatprep.subr.bf16.mxu0 0
    %886 = vmatpush2.bf16.msra.mxu0 0
    %887 = vmatprep.subr.bf16.mxu0 0
    %888 = vmatpush2.bf16.msra.mxu0 0
    %889 = vmatprep.mubr.bf16.mxu0 0
    %890 = vmatmul.mubr.bf16.gmra.mxu0 %v689
    %v891 = vpop.f32.mrf.mxu0
    %v892 = vadd.f32 0.0, %v891
    %v893 = vpop.f32.mrf.mxu0
    %v894 = vpop.f32.mrf.mxu0
    %v895 = vadd.f32 0.0, %v894
    %v896 = vpop.f32.mrf.mxu0
    %897 = vmatprep.mubr.bf16.mxu0 0
    %898 = vmatmul.mubr.bf16.gmra.mxu0 %v690
    %v899 = vpop.f32.mrf.mxu0
    %v900 = vadd.f32 0.0, %v899
    %v901 = vpop.f32.mrf.mxu0
    %v902 = vpop.f32.mrf.mxu0
    %v903 = vadd.f32 0.0, %v902
    %v904 = vpop.f32.mrf.mxu0
    %905 = vmatprep.mubr.bf16.mxu0 0
    %906 = vmatmul.mubr.bf16.gmra.mxu0 %v691
    %v907 = vpop.f32.mrf.mxu0
    %v908 = vadd.f32 0.0, %v907
    %v909 = vpop.f32.mrf.mxu0
    %v910 = vpop.f32.mrf.mxu0
    %v911 = vadd.f32 0.0, %v910
    %v912 = vpop.f32.mrf.mxu0
    %913 = vmatprep.mubr.bf16.mxu0 0
    %914 = vmatmul.mubr.bf16.gmra.mxu0 %v692
    %v915 = vpop.f32.mrf.mxu0
    %v916 = vadd.f32 0.0, %v915
    %v917 = vpop.f32.mrf.mxu0
    %v918 = vpop.f32.mrf.mxu0
    %v919 = vadd.f32 0.0, %v918
    %v920 = vpop.f32.mrf.mxu0
    %921 = vmatprep.mubr.bf16.mxu0 0
    %922 = vmatmul.mubr.bf16.gmra.mxu0 %v693
    %v923 = vpop.f32.mrf.mxu0
    %v924 = vadd.f32 0.0, %v923
    %v925 = vpop.f32.mrf.mxu0
    %v926 = vpop.f32.mrf.mxu0
    %v927 = vadd.f32 0.0, %v926
    %v928 = vpop.f32.mrf.mxu0
    %929 = vmatprep.mubr.bf16.mxu0 0
    %930 = vmatmul.mubr.bf16.gmra.mxu0 %v694
    %v931 = vpop.f32.mrf.mxu0
    %v932 = vadd.f32 0.0, %v931
    %v933 = vpop.f32.mrf.mxu0
    %v934 = vpop.f32.mrf.mxu0
    %v935 = vadd.f32 0.0, %v934
    %v936 = vpop.f32.mrf.mxu0
    %937 = vmatprep.mubr.bf16.mxu0 0
    %938 = vmatmul.mubr.bf16.gmra.mxu0 %v695
    %v939 = vpop.f32.mrf.mxu0
    %v940 = vadd.f32 0.0, %v939
    %v941 = vpop.f32.mrf.mxu0
    %v942 = vpop.f32.mrf.mxu0
    %v943 = vadd.f32 0.0, %v942
    %v944 = vpop.f32.mrf.mxu0
    %945 = vmatprep.mubr.bf16.mxu0 0
    %946 = vmatmul.mubr.bf16.gmra.mxu0 %v696
    %v947 = vpop.f32.mrf.mxu0
    %v948 = vadd.f32 0.0, %v947
    %v949 = vpop.f32.mrf.mxu0
    %v950 = vpop.f32.mrf.mxu0
    %v951 = vadd.f32 0.0, %v950
    %v952 = vpop.f32.mrf.mxu0
    %953 = vdwg.mxu0
    %v954 = vpack.c.bf16 %v895, %v892
    %v955 = vpack.c.bf16 %v903, %v900
    %v956 = vpack.c.bf16 %v911, %v908
    %v957 = vpack.c.bf16 %v919, %v916
    %v958 = vpack.c.bf16 %v927, %v924
    %v959 = vpack.c.bf16 %v935, %v932
    %v960 = vpack.c.bf16 %v943, %v940
    %v961 = vpack.c.bf16 %v951, %v948
    %v962 = vld [vmem:[#allocation11] sm:$0xf]
    %v963 = vld [vmem:[#allocation11 + $0x4] sm:$0xf]
    %v964 = vld [vmem:[#allocation11 + $0x8] sm:$0xf]
    %v965 = vld [vmem:[#allocation11 + $0xc] sm:$0xf]
    %v966 = vld [vmem:[#allocation11 + $0x10] sm:$0xf]
    %v967 = vld [vmem:[#allocation11 + $0x14] sm:$0xf]
    %v968 = vld [vmem:[#allocation11 + $0x18] sm:$0xf]
    %v969 = vld [vmem:[#allocation11 + $0x1c] sm:$0xf]
    %v970 = vld [vmem:[#allocation11 + $0x20] sm:$0xf]
    %v971 = vld [vmem:[#allocation11 + $0x24] sm:$0xf]
    %v972 = vld [vmem:[#allocation11 + $0x28] sm:$0xf]
    %v973 = vld [vmem:[#allocation11 + $0x2c] sm:$0xf]
    %v974 = vld [vmem:[#allocation11 + $0x30] sm:$0xf]
    %v975 = vld [vmem:[#allocation11 + $0x34] sm:$0xf]
    %v976 = vld [vmem:[#allocation11 + $0x38] sm:$0xf]
    %v977 = vld [vmem:[#allocation11 + $0x3c] sm:$0xf]
    %v994 = vunpack.c.l.b16 %v962
    %v995 = vunpack.c.l.b16 %v963
    %v996 = vunpack.c.l.b16 %v964
    %v997 = vunpack.c.l.b16 %v965
    %v998 = vunpack.c.l.b16 %v966
    %v999 = vunpack.c.l.b16 %v967
    %v1000 = vunpack.c.l.b16 %v968
    %v1001 = vunpack.c.l.b16 %v969
    %v1002 = vunpack.c.l.b16 %v970
    %v1003 = vunpack.c.l.b16 %v971
    %v1004 = vunpack.c.l.b16 %v972
    %v1005 = vunpack.c.l.b16 %v973
    %v1006 = vunpack.c.l.b16 %v974
    %v1007 = vunpack.c.l.b16 %v975
    %v1008 = vunpack.c.l.b16 %v976
    %v1009 = vunpack.c.l.b16 %v977
    %v1010 = vpack.c.b16 %v995, %v994
    %v1011 = vpack.c.b16 %v997, %v996
    %v1012 = vpack.c.b16 %v999, %v998
    %v1013 = vpack.c.b16 %v1001, %v1000
    %v1014 = vpack.c.b16 %v1003, %v1002
    %v1015 = vpack.c.b16 %v1005, %v1004
    %v1016 = vpack.c.b16 %v1007, %v1006
    %v1017 = vpack.c.b16 %v1009, %v1008
    %1026 = vmatprep.subr.bf16.mxu0 0
    %1027 = vmatpush1.bf16.msra.mxu0 %v1017
    %1028 = vmatprep.subr.bf16.mxu0 0
    %1029 = vmatpush1.bf16.msra.mxu0 %v1016
    %1030 = vmatprep.subr.bf16.mxu0 0
    %1031 = vmatpush1.bf16.msra.mxu0 %v1015
    %1032 = vmatprep.subr.bf16.mxu0 0
    %1033 = vmatpush1.bf16.msra.mxu0 %v1014
    %1034 = vmatprep.subr.bf16.mxu0 0
    %1035 = vmatpush1.bf16.msra.mxu0 %v1013
    %1036 = vmatprep.subr.bf16.mxu0 0
    %1037 = vmatpush1.bf16.msra.mxu0 %v1012
    %1038 = vmatprep.subr.bf16.mxu0 0
    %1039 = vmatpush1.bf16.msra.mxu0 %v1011
    %1040 = vmatprep.subr.bf16.mxu0 0
    %1041 = vmatpush1.bf16.msra.mxu0 %v1010
    %1042 = vmatprep.subr.bf16.mxu0 0
    %1043 = vmatpush2.bf16.msra.mxu0 0
    %1044 = vmatprep.subr.bf16.mxu0 0
    %1045 = vmatpush2.bf16.msra.mxu0 0
    %1046 = vmatprep.subr.bf16.mxu0 0
    %1047 = vmatpush2.bf16.msra.mxu0 0
    %1048 = vmatprep.subr.bf16.mxu0 0
    %1049 = vmatpush2.bf16.msra.mxu0 0
    %1050 = vmatprep.subr.bf16.mxu0 0
    %1051 = vmatpush2.bf16.msra.mxu0 0
    %1052 = vmatprep.subr.bf16.mxu0 0
    %1053 = vmatpush2.bf16.msra.mxu0 0
    %1054 = vmatprep.subr.bf16.mxu0 0
    %1055 = vmatpush2.bf16.msra.mxu0 0
    %1056 = vmatprep.subr.bf16.mxu0 0
    %1057 = vmatpush2.bf16.msra.mxu0 0
    %1058 = vmatprep.mubr.bf16.mxu0 0
    %1059 = vmatmul.mubr.bf16.gmra.mxu0 %v761
    %v1060 = vpop.f32.mrf.mxu0
    %v1061 = vadd.f32 0.0, %v1060
    %v1062 = vpop.f32.mrf.mxu0
    %v1063 = vpop.f32.mrf.mxu0
    %v1064 = vadd.f32 0.0, %v1063
    %v1065 = vpop.f32.mrf.mxu0
    %1066 = vmatprep.mubr.bf16.mxu0 0
    %1067 = vmatmul.mubr.bf16.gmra.mxu0 %v762
    %v1068 = vpop.f32.mrf.mxu0
    %v1069 = vadd.f32 0.0, %v1068
    %v1070 = vpop.f32.mrf.mxu0
    %v1071 = vpop.f32.mrf.mxu0
    %v1072 = vadd.f32 0.0, %v1071
    %v1073 = vpop.f32.mrf.mxu0
    %1074 = vmatprep.mubr.bf16.mxu0 0
    %1075 = vmatmul.mubr.bf16.gmra.mxu0 %v763
    %v1076 = vpop.f32.mrf.mxu0
    %v1077 = vadd.f32 0.0, %v1076
    %v1078 = vpop.f32.mrf.mxu0
    %v1079 = vpop.f32.mrf.mxu0
    %v1080 = vadd.f32 0.0, %v1079
    %v1081 = vpop.f32.mrf.mxu0
    %1082 = vmatprep.mubr.bf16.mxu0 0
    %1083 = vmatmul.mubr.bf16.gmra.mxu0 %v764
    %v1084 = vpop.f32.mrf.mxu0
    %v1085 = vadd.f32 0.0, %v1084
    %v1086 = vpop.f32.mrf.mxu0
    %v1087 = vpop.f32.mrf.mxu0
    %v1088 = vadd.f32 0.0, %v1087
    %v1089 = vpop.f32.mrf.mxu0
    %1090 = vmatprep.mubr.bf16.mxu0 0
    %1091 = vmatmul.mubr.bf16.gmra.mxu0 %v765
    %v1092 = vpop.f32.mrf.mxu0
    %v1093 = vadd.f32 0.0, %v1092
    %v1094 = vpop.f32.mrf.mxu0
    %v1095 = vpop.f32.mrf.mxu0
    %v1096 = vadd.f32 0.0, %v1095
    %v1097 = vpop.f32.mrf.mxu0
    %1098 = vmatprep.mubr.bf16.mxu0 0
    %1099 = vmatmul.mubr.bf16.gmra.mxu0 %v766
    %v1100 = vpop.f32.mrf.mxu0
    %v1101 = vadd.f32 0.0, %v1100
    %v1102 = vpop.f32.mrf.mxu0
    %v1103 = vpop.f32.mrf.mxu0
    %v1104 = vadd.f32 0.0, %v1103
    %v1105 = vpop.f32.mrf.mxu0
    %1106 = vmatprep.mubr.bf16.mxu0 0
    %1107 = vmatmul.mubr.bf16.gmra.mxu0 %v767
    %v1108 = vpop.f32.mrf.mxu0
    %v1109 = vadd.f32 0.0, %v1108
    %v1110 = vpop.f32.mrf.mxu0
    %v1111 = vpop.f32.mrf.mxu0
    %v1112 = vadd.f32 0.0, %v1111
    %v1113 = vpop.f32.mrf.mxu0
    %1114 = vmatprep.mubr.bf16.mxu0 0
    %1115 = vmatmul.mubr.bf16.gmra.mxu0 %v768
    %v1116 = vpop.f32.mrf.mxu0
    %v1117 = vadd.f32 0.0, %v1116
    %v1118 = vpop.f32.mrf.mxu0
    %v1119 = vpop.f32.mrf.mxu0
    %v1120 = vadd.f32 0.0, %v1119
    %v1121 = vpop.f32.mrf.mxu0
    %1122 = vmatprep.mubr.bf16.mxu0 0
    %1123 = vmatmul.mubr.bf16.gmra.mxu0 %v769
    %v1124 = vpop.f32.mrf.mxu0
    %v1125 = vadd.f32 0.0, %v1124
    %v1126 = vpop.f32.mrf.mxu0
    %v1127 = vpop.f32.mrf.mxu0
    %v1128 = vadd.f32 0.0, %v1127
    %v1129 = vpop.f32.mrf.mxu0
    %1130 = vmatprep.mubr.bf16.mxu0 0
    %1131 = vmatmul.mubr.bf16.gmra.mxu0 %v770
    %v1132 = vpop.f32.mrf.mxu0
    %v1133 = vadd.f32 0.0, %v1132
    %v1134 = vpop.f32.mrf.mxu0
    %v1135 = vpop.f32.mrf.mxu0
    %v1136 = vadd.f32 0.0, %v1135
    %v1137 = vpop.f32.mrf.mxu0
    %1138 = vmatprep.mubr.bf16.mxu0 0
    %1139 = vmatmul.mubr.bf16.gmra.mxu0 %v771
    %v1140 = vpop.f32.mrf.mxu0
    %v1141 = vadd.f32 0.0, %v1140
    %v1142 = vpop.f32.mrf.mxu0
    %v1143 = vpop.f32.mrf.mxu0
    %v1144 = vadd.f32 0.0, %v1143
    %v1145 = vpop.f32.mrf.mxu0
    %1146 = vmatprep.mubr.bf16.mxu0 0
    %1147 = vmatmul.mubr.bf16.gmra.mxu0 %v772
    %v1148 = vpop.f32.mrf.mxu0
    %v1149 = vadd.f32 0.0, %v1148
    %v1150 = vpop.f32.mrf.mxu0
    %v1151 = vpop.f32.mrf.mxu0
    %v1152 = vadd.f32 0.0, %v1151
    %v1153 = vpop.f32.mrf.mxu0
    %1154 = vmatprep.mubr.bf16.mxu0 0
    %1155 = vmatmul.mubr.bf16.gmra.mxu0 %v773
    %v1156 = vpop.f32.mrf.mxu0
    %v1157 = vadd.f32 0.0, %v1156
    %v1158 = vpop.f32.mrf.mxu0
    %v1159 = vpop.f32.mrf.mxu0
    %v1160 = vadd.f32 0.0, %v1159
    %v1161 = vpop.f32.mrf.mxu0
    %1162 = vmatprep.mubr.bf16.mxu0 0
    %1163 = vmatmul.mubr.bf16.gmra.mxu0 %v774
    %v1164 = vpop.f32.mrf.mxu0
    %v1165 = vadd.f32 0.0, %v1164
    %v1166 = vpop.f32.mrf.mxu0
    %v1167 = vpop.f32.mrf.mxu0
    %v1168 = vadd.f32 0.0, %v1167
    %v1169 = vpop.f32.mrf.mxu0
    %1170 = vmatprep.mubr.bf16.mxu0 0
    %1171 = vmatmul.mubr.bf16.gmra.mxu0 %v775
    %v1172 = vpop.f32.mrf.mxu0
    %v1173 = vadd.f32 0.0, %v1172
    %v1174 = vpop.f32.mrf.mxu0
    %v1175 = vpop.f32.mrf.mxu0
    %v1176 = vadd.f32 0.0, %v1175
    %v1177 = vpop.f32.mrf.mxu0
    %1178 = vmatprep.mubr.bf16.mxu0 0
    %1179 = vmatmul.mubr.bf16.gmra.mxu0 %v776
    %v1180 = vpop.f32.mrf.mxu0
    %v1181 = vadd.f32 0.0, %v1180
    %v1182 = vpop.f32.mrf.mxu0
    %v1183 = vpop.f32.mrf.mxu0
    %v1184 = vadd.f32 0.0, %v1183
    %v1185 = vpop.f32.mrf.mxu0
    %1186 = vdwg.mxu0
    %v1187 = vpack.c.bf16 %v1064, %v1061
    %v1188 = vpack.c.bf16 %v1072, %v1069
    %v1189 = vpack.c.bf16 %v1080, %v1077
    %v1190 = vpack.c.bf16 %v1088, %v1085
    %v1191 = vpack.c.bf16 %v1096, %v1093
    %v1192 = vpack.c.bf16 %v1104, %v1101
    %v1193 = vpack.c.bf16 %v1112, %v1109
    %v1194 = vpack.c.bf16 %v1120, %v1117
    %v1195 = vpack.c.bf16 %v1128, %v1125
    %v1196 = vpack.c.bf16 %v1136, %v1133
    %v1197 = vpack.c.bf16 %v1144, %v1141
    %v1198 = vpack.c.bf16 %v1152, %v1149
    %v1199 = vpack.c.bf16 %v1160, %v1157
    %v1200 = vpack.c.bf16 %v1168, %v1165
    %v1201 = vpack.c.bf16 %v1176, %v1173
    %v1202 = vpack.c.bf16 %v1184, %v1181
    %v1203 = vld [vmem:[#allocation13] sm:$0xf]
    %v1204 = vld [vmem:[#allocation13 + $0x4] sm:$0xf]
    %v1205 = vld [vmem:[#allocation13 + $0x8] sm:$0xf]
    %v1206 = vld [vmem:[#allocation13 + $0xc] sm:$0xf]
    %v1207 = vld [vmem:[#allocation13 + $0x10] sm:$0xf]
    %v1208 = vld [vmem:[#allocation13 + $0x14] sm:$0xf]
    %v1209 = vld [vmem:[#allocation13 + $0x18] sm:$0xf]
    %v1210 = vld [vmem:[#allocation13 + $0x1c] sm:$0xf]
    %v1211 = vld [vmem:[#allocation13 + $0x20] sm:$0xf]
    %v1212 = vld [vmem:[#allocation13 + $0x24] sm:$0xf]
    %v1213 = vld [vmem:[#allocation13 + $0x28] sm:$0xf]
    %v1214 = vld [vmem:[#allocation13 + $0x2c] sm:$0xf]
    %v1215 = vld [vmem:[#allocation13 + $0x30] sm:$0xf]
    %v1216 = vld [vmem:[#allocation13 + $0x34] sm:$0xf]
    %v1217 = vld [vmem:[#allocation13 + $0x38] sm:$0xf]
    %v1218 = vld [vmem:[#allocation13 + $0x3c] sm:$0xf]
    %v1235 = vunpack.c.l.b16 %v1203
    %v1236 = vunpack.c.l.b16 %v1204
    %v1237 = vunpack.c.l.b16 %v1205
    %v1238 = vunpack.c.l.b16 %v1206
    %v1239 = vunpack.c.l.b16 %v1207
    %v1240 = vunpack.c.l.b16 %v1208
    %v1241 = vunpack.c.l.b16 %v1209
    %v1242 = vunpack.c.l.b16 %v1210
    %v1243 = vunpack.c.l.b16 %v1211
    %v1244 = vunpack.c.l.b16 %v1212
    %v1245 = vunpack.c.l.b16 %v1213
    %v1246 = vunpack.c.l.b16 %v1214
    %v1247 = vunpack.c.l.b16 %v1215
    %v1248 = vunpack.c.l.b16 %v1216
    %v1249 = vunpack.c.l.b16 %v1217
    %v1250 = vunpack.c.l.b16 %v1218
    %v1251 = vpack.c.b16 %v1236, %v1235
    %v1252 = vpack.c.b16 %v1238, %v1237
    %v1253 = vpack.c.b16 %v1240, %v1239
    %v1254 = vpack.c.b16 %v1242, %v1241
    %v1255 = vpack.c.b16 %v1244, %v1243
    %v1256 = vpack.c.b16 %v1246, %v1245
    %v1257 = vpack.c.b16 %v1248, %v1247
    %v1258 = vpack.c.b16 %v1250, %v1249
    %1267 = vmatprep.subr.bf16.mxu0 0
    %1268 = vmatpush1.bf16.msra.mxu0 %v1258
    %1269 = vmatprep.subr.bf16.mxu0 0
    %1270 = vmatpush1.bf16.msra.mxu0 %v1257
    %1271 = vmatprep.subr.bf16.mxu0 0
    %1272 = vmatpush1.bf16.msra.mxu0 %v1256
    %1273 = vmatprep.subr.bf16.mxu0 0
    %1274 = vmatpush1.bf16.msra.mxu0 %v1255
    %1275 = vmatprep.subr.bf16.mxu0 0
    %1276 = vmatpush1.bf16.msra.mxu0 %v1254
    %1277 = vmatprep.subr.bf16.mxu0 0
    %1278 = vmatpush1.bf16.msra.mxu0 %v1253
    %1279 = vmatprep.subr.bf16.mxu0 0
    %1280 = vmatpush1.bf16.msra.mxu0 %v1252
    %1281 = vmatprep.subr.bf16.mxu0 0
    %1282 = vmatpush1.bf16.msra.mxu0 %v1251
    %1283 = vmatprep.subr.bf16.mxu0 0
    %1284 = vmatpush2.bf16.msra.mxu0 0
    %1285 = vmatprep.subr.bf16.mxu0 0
    %1286 = vmatpush2.bf16.msra.mxu0 0
    %1287 = vmatprep.subr.bf16.mxu0 0
    %1288 = vmatpush2.bf16.msra.mxu0 0
    %1289 = vmatprep.subr.bf16.mxu0 0
    %1290 = vmatpush2.bf16.msra.mxu0 0
    %1291 = vmatprep.subr.bf16.mxu0 0
    %1292 = vmatpush2.bf16.msra.mxu0 0
    %1293 = vmatprep.subr.bf16.mxu0 0
    %1294 = vmatpush2.bf16.msra.mxu0 0
    %1295 = vmatprep.subr.bf16.mxu0 0
    %1296 = vmatpush2.bf16.msra.mxu0 0
    %1297 = vmatprep.subr.bf16.mxu0 0
    %1298 = vmatpush2.bf16.msra.mxu0 0
    %1299 = vmatprep.mubr.bf16.mxu0 0
    %1300 = vmatmul.mubr.bf16.gmra.mxu0 %v777
    %v1301 = vpop.f32.mrf.mxu0
    %v1302 = vadd.f32 0.0, %v1301
    %v1303 = vpop.f32.mrf.mxu0
    %v1304 = vpop.f32.mrf.mxu0
    %v1305 = vadd.f32 0.0, %v1304
    %v1306 = vpop.f32.mrf.mxu0
    %1307 = vmatprep.mubr.bf16.mxu0 0
    %1308 = vmatmul.mubr.bf16.gmra.mxu0 %v778
    %v1309 = vpop.f32.mrf.mxu0
    %v1310 = vadd.f32 0.0, %v1309
    %v1311 = vpop.f32.mrf.mxu0
    %v1312 = vpop.f32.mrf.mxu0
    %v1313 = vadd.f32 0.0, %v1312
    %v1314 = vpop.f32.mrf.mxu0
    %1315 = vmatprep.mubr.bf16.mxu0 0
    %1316 = vmatmul.mubr.bf16.gmra.mxu0 %v779
    %v1317 = vpop.f32.mrf.mxu0
    %v1318 = vadd.f32 0.0, %v1317
    %v1319 = vpop.f32.mrf.mxu0
    %v1320 = vpop.f32.mrf.mxu0
    %v1321 = vadd.f32 0.0, %v1320
    %v1322 = vpop.f32.mrf.mxu0
    %1323 = vmatprep.mubr.bf16.mxu0 0
    %1324 = vmatmul.mubr.bf16.gmra.mxu0 %v780
    %v1325 = vpop.f32.mrf.mxu0
    %v1326 = vadd.f32 0.0, %v1325
    %v1327 = vpop.f32.mrf.mxu0
    %v1328 = vpop.f32.mrf.mxu0
    %v1329 = vadd.f32 0.0, %v1328
    %v1330 = vpop.f32.mrf.mxu0
    %1331 = vmatprep.mubr.bf16.mxu0 0
    %1332 = vmatmul.mubr.bf16.gmra.mxu0 %v781
    %v1333 = vpop.f32.mrf.mxu0
    %v1334 = vadd.f32 0.0, %v1333
    %v1335 = vpop.f32.mrf.mxu0
    %v1336 = vpop.f32.mrf.mxu0
    %v1337 = vadd.f32 0.0, %v1336
    %v1338 = vpop.f32.mrf.mxu0
    %1339 = vmatprep.mubr.bf16.mxu0 0
    %1340 = vmatmul.mubr.bf16.gmra.mxu0 %v782
    %v1341 = vpop.f32.mrf.mxu0
    %v1342 = vadd.f32 0.0, %v1341
    %v1343 = vpop.f32.mrf.mxu0
    %v1344 = vpop.f32.mrf.mxu0
    %v1345 = vadd.f32 0.0, %v1344
    %v1346 = vpop.f32.mrf.mxu0
    %1347 = vmatprep.mubr.bf16.mxu0 0
    %1348 = vmatmul.mubr.bf16.gmra.mxu0 %v783
    %v1349 = vpop.f32.mrf.mxu0
    %v1350 = vadd.f32 0.0, %v1349
    %v1351 = vpop.f32.mrf.mxu0
    %v1352 = vpop.f32.mrf.mxu0
    %v1353 = vadd.f32 0.0, %v1352
    %v1354 = vpop.f32.mrf.mxu0
    %1355 = vmatprep.mubr.bf16.mxu0 0
    %1356 = vmatmul.mubr.bf16.gmra.mxu0 %v784
    %v1357 = vpop.f32.mrf.mxu0
    %v1358 = vadd.f32 0.0, %v1357
    %v1359 = vpop.f32.mrf.mxu0
    %v1360 = vpop.f32.mrf.mxu0
    %v1361 = vadd.f32 0.0, %v1360
    %v1362 = vpop.f32.mrf.mxu0
    %1363 = vmatprep.mubr.bf16.mxu0 0
    %1364 = vmatmul.mubr.bf16.gmra.mxu0 %v785
    %v1365 = vpop.f32.mrf.mxu0
    %v1366 = vadd.f32 0.0, %v1365
    %v1367 = vpop.f32.mrf.mxu0
    %v1368 = vpop.f32.mrf.mxu0
    %v1369 = vadd.f32 0.0, %v1368
    %v1370 = vpop.f32.mrf.mxu0
    %1371 = vmatprep.mubr.bf16.mxu0 0
    %1372 = vmatmul.mubr.bf16.gmra.mxu0 %v786
    %v1373 = vpop.f32.mrf.mxu0
    %v1374 = vadd.f32 0.0, %v1373
    %v1375 = vpop.f32.mrf.mxu0
    %v1376 = vpop.f32.mrf.mxu0
    %v1377 = vadd.f32 0.0, %v1376
    %v1378 = vpop.f32.mrf.mxu0
    %1379 = vmatprep.mubr.bf16.mxu0 0
    %1380 = vmatmul.mubr.bf16.gmra.mxu0 %v787
    %v1381 = vpop.f32.mrf.mxu0
    %v1382 = vadd.f32 0.0, %v1381
    %v1383 = vpop.f32.mrf.mxu0
    %v1384 = vpop.f32.mrf.mxu0
    %v1385 = vadd.f32 0.0, %v1384
    %v1386 = vpop.f32.mrf.mxu0
    %1387 = vmatprep.mubr.bf16.mxu0 0
    %1388 = vmatmul.mubr.bf16.gmra.mxu0 %v788
    %v1389 = vpop.f32.mrf.mxu0
    %v1390 = vadd.f32 0.0, %v1389
    %v1391 = vpop.f32.mrf.mxu0
    %v1392 = vpop.f32.mrf.mxu0
    %v1393 = vadd.f32 0.0, %v1392
    %v1394 = vpop.f32.mrf.mxu0
    %1395 = vmatprep.mubr.bf16.mxu0 0
    %1396 = vmatmul.mubr.bf16.gmra.mxu0 %v789
    %v1397 = vpop.f32.mrf.mxu0
    %v1398 = vadd.f32 0.0, %v1397
    %v1399 = vpop.f32.mrf.mxu0
    %v1400 = vpop.f32.mrf.mxu0
    %v1401 = vadd.f32 0.0, %v1400
    %v1402 = vpop.f32.mrf.mxu0
    %1403 = vmatprep.mubr.bf16.mxu0 0
    %1404 = vmatmul.mubr.bf16.gmra.mxu0 %v790
    %v1405 = vpop.f32.mrf.mxu0
    %v1406 = vadd.f32 0.0, %v1405
    %v1407 = vpop.f32.mrf.mxu0
    %v1408 = vpop.f32.mrf.mxu0
    %v1409 = vadd.f32 0.0, %v1408
    %v1410 = vpop.f32.mrf.mxu0
    %1411 = vmatprep.mubr.bf16.mxu0 0
    %1412 = vmatmul.mubr.bf16.gmra.mxu0 %v791
    %v1413 = vpop.f32.mrf.mxu0
    %v1414 = vadd.f32 0.0, %v1413
    %v1415 = vpop.f32.mrf.mxu0
    %v1416 = vpop.f32.mrf.mxu0
    %v1417 = vadd.f32 0.0, %v1416
    %v1418 = vpop.f32.mrf.mxu0
    %1419 = vmatprep.mubr.bf16.mxu0 0
    %1420 = vmatmul.mubr.bf16.gmra.mxu0 %v792
    %v1421 = vpop.f32.mrf.mxu0
    %v1422 = vadd.f32 0.0, %v1421
    %v1423 = vpop.f32.mrf.mxu0
    %v1424 = vpop.f32.mrf.mxu0
    %v1425 = vadd.f32 0.0, %v1424
    %v1426 = vpop.f32.mrf.mxu0
    %1427 = vdwg.mxu0
    %v1428 = vpack.c.bf16 %v1305, %v1302
    %v1429 = vpack.c.bf16 %v1313, %v1310
    %v1430 = vpack.c.bf16 %v1321, %v1318
    %v1431 = vpack.c.bf16 %v1329, %v1326
    %v1432 = vpack.c.bf16 %v1337, %v1334
    %v1433 = vpack.c.bf16 %v1345, %v1342
    %v1434 = vpack.c.bf16 %v1353, %v1350
    %v1435 = vpack.c.bf16 %v1361, %v1358
    %v1436 = vpack.c.bf16 %v1369, %v1366
    %v1437 = vpack.c.bf16 %v1377, %v1374
    %v1438 = vpack.c.bf16 %v1385, %v1382
    %v1439 = vpack.c.bf16 %v1393, %v1390
    %v1440 = vpack.c.bf16 %v1401, %v1398
    %v1441 = vpack.c.bf16 %v1409, %v1406
    %v1442 = vpack.c.bf16 %v1417, %v1414
    %v1443 = vpack.c.bf16 %v1425, %v1422
    %1448 = vrot.lane.b32.xlu0 %v954, 96
    %v1449 = vpop.permute.xlu0 %1448
    %1450 = vrot.lane.b32.xlu0 %v955, 96
    %v1451 = vpop.permute.xlu0 %1450
    %1452 = vrot.lane.b32.xlu0 %v956, 96
    %v1453 = vpop.permute.xlu0 %1452
    %1454 = vrot.lane.b32.xlu0 %v957, 96
    %v1455 = vpop.permute.xlu0 %1454
    %1456 = vrot.lane.b32.xlu0 %v954, 64
    %v1457 = vpop.permute.xlu0 %1456
    %1458 = vrot.lane.b32.xlu0 %v955, 64
    %v1459 = vpop.permute.xlu0 %1458
    %1460 = vrot.lane.b32.xlu0 %v956, 64
    %v1461 = vpop.permute.xlu0 %1460
    %1462 = vrot.lane.b32.xlu0 %v957, 64
    %v1463 = vpop.permute.xlu0 %1462
    %1464 = vrot.lane.b32.xlu0 %v954, 32
    %v1465 = vpop.permute.xlu0 %1464
    %1466 = vrot.lane.b32.xlu0 %v955, 32
    %v1467 = vpop.permute.xlu0 %1466
    %1468 = vrot.lane.b32.xlu0 %v956, 32
    %v1469 = vpop.permute.xlu0 %1468
    %1470 = vrot.lane.b32.xlu0 %v957, 32
    %v1471 = vpop.permute.xlu0 %1470
    %1476 = vrot.lane.b32.xlu0 %v958, 96
    %v1477 = vpop.permute.xlu0 %1476
    %1478 = vrot.lane.b32.xlu0 %v959, 96
    %v1479 = vpop.permute.xlu0 %1478
    %1480 = vrot.lane.b32.xlu0 %v960, 96
    %v1481 = vpop.permute.xlu0 %1480
    %1482 = vrot.lane.b32.xlu0 %v961, 96
    %v1483 = vpop.permute.xlu0 %1482
    %1484 = vrot.lane.b32.xlu0 %v958, 64
    %v1485 = vpop.permute.xlu0 %1484
    %1486 = vrot.lane.b32.xlu0 %v959, 64
    %v1487 = vpop.permute.xlu0 %1486
    %1488 = vrot.lane.b32.xlu0 %v960, 64
    %v1489 = vpop.permute.xlu0 %1488
    %1490 = vrot.lane.b32.xlu0 %v961, 64
    %v1491 = vpop.permute.xlu0 %1490
    %1492 = vrot.lane.b32.xlu0 %v958, 32
    %v1493 = vpop.permute.xlu0 %1492
    %1494 = vrot.lane.b32.xlu0 %v959, 32
    %v1495 = vpop.permute.xlu0 %1494
    %1496 = vrot.lane.b32.xlu0 %v960, 32
    %v1497 = vpop.permute.xlu0 %1496
    %1498 = vrot.lane.b32.xlu0 %v961, 32
    %v1499 = vpop.permute.xlu0 %1498
    %1508 = vrot.lane.b32.xlu0 %v1187, 96
    %v1509 = vpop.permute.xlu0 %1508
    %1510 = vrot.lane.b32.xlu0 %v1188, 96
    %v1511 = vpop.permute.xlu0 %1510
    %1512 = vrot.lane.b32.xlu0 %v1189, 96
    %v1513 = vpop.permute.xlu0 %1512
    %1514 = vrot.lane.b32.xlu0 %v1190, 96
    %v1515 = vpop.permute.xlu0 %1514
    %1516 = vrot.lane.b32.xlu0 %v1191, 96
    %v1517 = vpop.permute.xlu0 %1516
    %1518 = vrot.lane.b32.xlu0 %v1192, 96
    %v1519 = vpop.permute.xlu0 %1518
    %1520 = vrot.lane.b32.xlu0 %v1193, 96
    %v1521 = vpop.permute.xlu0 %1520
    %1522 = vrot.lane.b32.xlu0 %v1194, 96
    %v1523 = vpop.permute.xlu0 %1522
    %1524 = vrot.lane.b32.xlu0 %v1187, 64
    %v1525 = vpop.permute.xlu0 %1524
    %1526 = vrot.lane.b32.xlu0 %v1188, 64
    %v1527 = vpop.permute.xlu0 %1526
    %1528 = vrot.lane.b32.xlu0 %v1189, 64
    %v1529 = vpop.permute.xlu0 %1528
    %1530 = vrot.lane.b32.xlu0 %v1190, 64
    %v1531 = vpop.permute.xlu0 %1530
    %1532 = vrot.lane.b32.xlu0 %v1191, 64
    %v1533 = vpop.permute.xlu0 %1532
    %1534 = vrot.lane.b32.xlu0 %v1192, 64
    %v1535 = vpop.permute.xlu0 %1534
    %1536 = vrot.lane.b32.xlu0 %v1193, 64
    %v1537 = vpop.permute.xlu0 %1536
    %1538 = vrot.lane.b32.xlu0 %v1194, 64
    %v1539 = vpop.permute.xlu0 %1538
    %1540 = vrot.lane.b32.xlu0 %v1187, 32
    %v1541 = vpop.permute.xlu0 %1540
    %1542 = vrot.lane.b32.xlu0 %v1188, 32
    %v1543 = vpop.permute.xlu0 %1542
    %1544 = vrot.lane.b32.xlu0 %v1189, 32
    %v1545 = vpop.permute.xlu0 %1544
    %1546 = vrot.lane.b32.xlu0 %v1190, 32
    %v1547 = vpop.permute.xlu0 %1546
    %1548 = vrot.lane.b32.xlu0 %v1191, 32
    %v1549 = vpop.permute.xlu0 %1548
    %1550 = vrot.lane.b32.xlu0 %v1192, 32
    %v1551 = vpop.permute.xlu0 %1550
    %1552 = vrot.lane.b32.xlu0 %v1193, 32
    %v1553 = vpop.permute.xlu0 %1552
    %1554 = vrot.lane.b32.xlu0 %v1194, 32
    %v1555 = vpop.permute.xlu0 %1554
    %1564 = vrot.lane.b32.xlu0 %v1195, 96
    %v1565 = vpop.permute.xlu0 %1564
    %1566 = vrot.lane.b32.xlu0 %v1196, 96
    %v1567 = vpop.permute.xlu0 %1566
    %1568 = vrot.lane.b32.xlu0 %v1197, 96
    %v1569 = vpop.permute.xlu0 %1568
    %1570 = vrot.lane.b32.xlu0 %v1198, 96
    %v1571 = vpop.permute.xlu0 %1570
    %1572 = vrot.lane.b32.xlu0 %v1199, 96
    %v1573 = vpop.permute.xlu0 %1572
    %1574 = vrot.lane.b32.xlu0 %v1200, 96
    %v1575 = vpop.permute.xlu0 %1574
    %1576 = vrot.lane.b32.xlu0 %v1201, 96
    %v1577 = vpop.permute.xlu0 %1576
    %1578 = vrot.lane.b32.xlu0 %v1202, 96
    %v1579 = vpop.permute.xlu0 %1578
    %1580 = vrot.lane.b32.xlu0 %v1195, 64
    %v1581 = vpop.permute.xlu0 %1580
    %1582 = vrot.lane.b32.xlu0 %v1196, 64
    %v1583 = vpop.permute.xlu0 %1582
    %1584 = vrot.lane.b32.xlu0 %v1197, 64
    %v1585 = vpop.permute.xlu0 %1584
    %1586 = vrot.lane.b32.xlu0 %v1198, 64
    %v1587 = vpop.permute.xlu0 %1586
    %1588 = vrot.lane.b32.xlu0 %v1199, 64
    %v1589 = vpop.permute.xlu0 %1588
    %1590 = vrot.lane.b32.xlu0 %v1200, 64
    %v1591 = vpop.permute.xlu0 %1590
    %1592 = vrot.lane.b32.xlu0 %v1201, 64
    %v1593 = vpop.permute.xlu0 %1592
    %1594 = vrot.lane.b32.xlu0 %v1202, 64
    %v1595 = vpop.permute.xlu0 %1594
    %1596 = vrot.lane.b32.xlu0 %v1195, 32
    %v1597 = vpop.permute.xlu0 %1596
    %1598 = vrot.lane.b32.xlu0 %v1196, 32
    %v1599 = vpop.permute.xlu0 %1598
    %1600 = vrot.lane.b32.xlu0 %v1197, 32
    %v1601 = vpop.permute.xlu0 %1600
    %1602 = vrot.lane.b32.xlu0 %v1198, 32
    %v1603 = vpop.permute.xlu0 %1602
    %1604 = vrot.lane.b32.xlu0 %v1199, 32
    %v1605 = vpop.permute.xlu0 %1604
    %1606 = vrot.lane.b32.xlu0 %v1200, 32
    %v1607 = vpop.permute.xlu0 %1606
    %1608 = vrot.lane.b32.xlu0 %v1201, 32
    %v1609 = vpop.permute.xlu0 %1608
    %1610 = vrot.lane.b32.xlu0 %v1202, 32
    %v1611 = vpop.permute.xlu0 %1610
    %1620 = vrot.lane.b32.xlu0 %v1428, 96
    %v1621 = vpop.permute.xlu0 %1620
    %1622 = vrot.lane.b32.xlu0 %v1429, 96
    %v1623 = vpop.permute.xlu0 %1622
    %1624 = vrot.lane.b32.xlu0 %v1430, 96
    %v1625 = vpop.permute.xlu0 %1624
    %1626 = vrot.lane.b32.xlu0 %v1431, 96
    %v1627 = vpop.permute.xlu0 %1626
    %1628 = vrot.lane.b32.xlu0 %v1432, 96
    %v1629 = vpop.permute.xlu0 %1628
    %1630 = vrot.lane.b32.xlu0 %v1433, 96
    %v1631 = vpop.permute.xlu0 %1630
    %1632 = vrot.lane.b32.xlu0 %v1434, 96
    %v1633 = vpop.permute.xlu0 %1632
    %1634 = vrot.lane.b32.xlu0 %v1435, 96
    %v1635 = vpop.permute.xlu0 %1634
    %1644 = vrot.lane.b32.xlu0 %v1428, 64
    %v1645 = vpop.permute.xlu0 %1644
    %1646 = vrot.lane.b32.xlu0 %v1429, 64
    %v1647 = vpop.permute.xlu0 %1646
    %1648 = vrot.lane.b32.xlu0 %v1430, 64
    %v1649 = vpop.permute.xlu0 %1648
    %1650 = vrot.lane.b32.xlu0 %v1431, 64
    %v1651 = vpop.permute.xlu0 %1650
    %1652 = vrot.lane.b32.xlu0 %v1432, 64
    %v1653 = vpop.permute.xlu0 %1652
    %1654 = vrot.lane.b32.xlu0 %v1433, 64
    %v1655 = vpop.permute.xlu0 %1654
    %1656 = vrot.lane.b32.xlu0 %v1434, 64
    %v1657 = vpop.permute.xlu0 %1656
    %1658 = vrot.lane.b32.xlu0 %v1435, 64
    %v1659 = vpop.permute.xlu0 %1658
    %1668 = vrot.lane.b32.xlu0 %v1428, 32
    %v1669 = vpop.permute.xlu0 %1668
    %1670 = vrot.lane.b32.xlu0 %v1429, 32
    %v1671 = vpop.permute.xlu0 %1670
    %1672 = vrot.lane.b32.xlu0 %v1430, 32
    %v1673 = vpop.permute.xlu0 %1672
    %1674 = vrot.lane.b32.xlu0 %v1431, 32
    %v1675 = vpop.permute.xlu0 %1674
    %1676 = vrot.lane.b32.xlu0 %v1432, 32
    %v1677 = vpop.permute.xlu0 %1676
    %1678 = vrot.lane.b32.xlu0 %v1433, 32
    %v1679 = vpop.permute.xlu0 %1678
    %1680 = vrot.lane.b32.xlu0 %v1434, 32
    %v1681 = vpop.permute.xlu0 %1680
    %1682 = vrot.lane.b32.xlu0 %v1435, 32
    %v1683 = vpop.permute.xlu0 %1682
    %1700 = vrot.lane.b32.xlu0 %v1436, 96
    %v1701 = vpop.permute.xlu0 %1700
    %1702 = vrot.lane.b32.xlu0 %v1437, 96
    %v1703 = vpop.permute.xlu0 %1702
    %1704 = vrot.lane.b32.xlu0 %v1438, 96
    %v1705 = vpop.permute.xlu0 %1704
    %1706 = vrot.lane.b32.xlu0 %v1439, 96
    %v1707 = vpop.permute.xlu0 %1706
    %1708 = vrot.lane.b32.xlu0 %v1440, 96
    %v1709 = vpop.permute.xlu0 %1708
    %1710 = vrot.lane.b32.xlu0 %v1441, 96
    %v1711 = vpop.permute.xlu0 %1710
    %1712 = vrot.lane.b32.xlu0 %v1442, 96
    %v1713 = vpop.permute.xlu0 %1712
    %1714 = vrot.lane.b32.xlu0 %v1443, 96
    %v1715 = vpop.permute.xlu0 %1714
    %1724 = vrot.lane.b32.xlu0 %v1436, 64
    %v1725 = vpop.permute.xlu0 %1724
    %1726 = vrot.lane.b32.xlu0 %v1437, 64
    %v1727 = vpop.permute.xlu0 %1726
    %1728 = vrot.lane.b32.xlu0 %v1438, 64
    %v1729 = vpop.permute.xlu0 %1728
    %1730 = vrot.lane.b32.xlu0 %v1439, 64
    %v1731 = vpop.permute.xlu0 %1730
    %1732 = vrot.lane.b32.xlu0 %v1440, 64
    %v1733 = vpop.permute.xlu0 %1732
    %1734 = vrot.lane.b32.xlu0 %v1441, 64
    %v1735 = vpop.permute.xlu0 %1734
    %1736 = vrot.lane.b32.xlu0 %v1442, 64
    %v1737 = vpop.permute.xlu0 %1736
    %1738 = vrot.lane.b32.xlu0 %v1443, 64
    %v1739 = vpop.permute.xlu0 %1738
    %1748 = vrot.lane.b32.xlu0 %v1436, 32
    %v1749 = vpop.permute.xlu0 %1748
    %1750 = vrot.lane.b32.xlu0 %v1437, 32
    %v1751 = vpop.permute.xlu0 %1750
    %1752 = vrot.lane.b32.xlu0 %v1438, 32
    %v1753 = vpop.permute.xlu0 %1752
    %1754 = vrot.lane.b32.xlu0 %v1439, 32
    %v1755 = vpop.permute.xlu0 %1754
    %1756 = vrot.lane.b32.xlu0 %v1440, 32
    %v1757 = vpop.permute.xlu0 %1756
    %1758 = vrot.lane.b32.xlu0 %v1441, 32
    %v1759 = vpop.permute.xlu0 %1758
    %1760 = vrot.lane.b32.xlu0 %v1442, 32
    %v1761 = vpop.permute.xlu0 %1760
    %1762 = vrot.lane.b32.xlu0 %v1443, 32
    %v1763 = vpop.permute.xlu0 %1762
    %vm1772 = vcmask 261120
    %v1774 = vsel %vm1772, %v954, 0
    %v1777 = vsel %vm1772, %v955, 0
    %v1780 = vsel %vm1772, %v956, 0
    %v1783 = vsel %vm1772, %v957, 0
    %v1786 = vsel %vm1772, %v1187, 0
    %v1789 = vsel %vm1772, %v1188, 0
    %v1792 = vsel %vm1772, %v1189, 0
    %v1795 = vsel %vm1772, %v1190, 0
    %v1798 = vsel %vm1772, %v1191, 0
    %v1801 = vsel %vm1772, %v1192, 0
    %v1804 = vsel %vm1772, %v1193, 0
    %v1807 = vsel %vm1772, %v1194, 0
    %1809 = vmatprep.subr.bf16.mxu0 0
    %1810 = vmatpush1.bf16.xpose.msra.mxu0 %v1807
    %1811 = vmatprep.subr.bf16.mxu0 0
    %1812 = vmatpush1.bf16.xpose.msra.mxu0 %v1804
    %1813 = vmatprep.subr.bf16.mxu0 0
    %1814 = vmatpush1.bf16.xpose.msra.mxu0 %v1801
    %1815 = vmatprep.subr.bf16.mxu0 0
    %1816 = vmatpush1.bf16.xpose.msra.mxu0 %v1798
    %1817 = vmatprep.subr.bf16.mxu0 0
    %1818 = vmatpush1.bf16.xpose.msra.mxu0 %v1795
    %1819 = vmatprep.subr.bf16.mxu0 0
    %1820 = vmatpush1.bf16.xpose.msra.mxu0 %v1792
    %1821 = vmatprep.subr.bf16.mxu0 0
    %1822 = vmatpush1.bf16.xpose.msra.mxu0 %v1789
    %1823 = vmatprep.subr.bf16.mxu0 0
    %1824 = vmatpush1.bf16.xpose.msra.mxu0 %v1786
    %1825 = vmatprep.subr.bf16.mxu0 0
    %1826 = vmatpush2.bf16.xpose.msra.mxu0 0
    %1827 = vmatprep.subr.bf16.mxu0 0
    %1828 = vmatpush2.bf16.xpose.msra.mxu0 0
    %1829 = vmatprep.subr.bf16.mxu0 0
    %1830 = vmatpush2.bf16.xpose.msra.mxu0 0
    %1831 = vmatprep.subr.bf16.mxu0 0
    %1832 = vmatpush2.bf16.xpose.msra.mxu0 0
    %1833 = vmatprep.subr.bf16.mxu0 0
    %1834 = vmatpush2.bf16.xpose.msra.mxu0 0
    %1835 = vmatprep.subr.bf16.mxu0 0
    %1836 = vmatpush2.bf16.xpose.msra.mxu0 0
    %1837 = vmatprep.subr.bf16.mxu0 0
    %1838 = vmatpush2.bf16.xpose.msra.mxu0 0
    %1839 = vmatprep.subr.bf16.mxu0 0
    %1840 = vmatpush2.bf16.xpose.msra.mxu0 0
    %1841 = vmatprep.mubr.bf16.mxu0 0
    %1842 = vmatmul.mubr.bf16.gmra.mxu0 %v1774
    %v1843 = vpop.f32.mrf.mxu0
    %v1844 = vadd.f32 0.0, %v1843
    %v1845 = vpop.f32.mrf.mxu0
    %v1846 = vpop.f32.mrf.mxu0
    %v1847 = vadd.f32 0.0, %v1846
    %v1848 = vpop.f32.mrf.mxu0
    %1849 = vmatprep.mubr.bf16.mxu0 0
    %1850 = vmatmul.mubr.bf16.gmra.mxu0 %v1777
    %v1851 = vpop.f32.mrf.mxu0
    %v1852 = vadd.f32 0.0, %v1851
    %v1853 = vpop.f32.mrf.mxu0
    %v1854 = vpop.f32.mrf.mxu0
    %v1855 = vadd.f32 0.0, %v1854
    %v1856 = vpop.f32.mrf.mxu0
    %1857 = vmatprep.mubr.bf16.mxu0 0
    %1858 = vmatmul.mubr.bf16.gmra.mxu0 %v1780
    %v1859 = vpop.f32.mrf.mxu0
    %v1860 = vadd.f32 0.0, %v1859
    %v1861 = vpop.f32.mrf.mxu0
    %v1862 = vpop.f32.mrf.mxu0
    %v1863 = vadd.f32 0.0, %v1862
    %v1864 = vpop.f32.mrf.mxu0
    %1865 = vmatprep.mubr.bf16.mxu0 0
    %1866 = vmatmul.mubr.bf16.gmra.mxu0 %v1783
    %v1867 = vpop.f32.mrf.mxu0
    %v1868 = vadd.f32 0.0, %v1867
    %v1869 = vpop.f32.mrf.mxu0
    %v1870 = vpop.f32.mrf.mxu0
    %v1871 = vadd.f32 0.0, %v1870
    %v1872 = vpop.f32.mrf.mxu0
    %1873 = vdwg.mxu0
    %v1875 = vsel %vm1772, %v1449, 0
    %v1878 = vsel %vm1772, %v1451, 0
    %v1881 = vsel %vm1772, %v1453, 0
    %v1884 = vsel %vm1772, %v1455, 0
    %v1887 = vsel %vm1772, %v1509, 0
    %v1890 = vsel %vm1772, %v1511, 0
    %v1893 = vsel %vm1772, %v1513, 0
    %v1896 = vsel %vm1772, %v1515, 0
    %v1899 = vsel %vm1772, %v1517, 0
    %v1902 = vsel %vm1772, %v1519, 0
    %v1905 = vsel %vm1772, %v1521, 0
    %v1908 = vsel %vm1772, %v1523, 0
    %1910 = vmatprep.subr.bf16.mxu0 0
    %1911 = vmatpush1.bf16.xpose.msra.mxu0 %v1908
    %1912 = vmatprep.subr.bf16.mxu0 0
    %1913 = vmatpush1.bf16.xpose.msra.mxu0 %v1905
    %1914 = vmatprep.subr.bf16.mxu0 0
    %1915 = vmatpush1.bf16.xpose.msra.mxu0 %v1902
    %1916 = vmatprep.subr.bf16.mxu0 0
    %1917 = vmatpush1.bf16.xpose.msra.mxu0 %v1899
    %1918 = vmatprep.subr.bf16.mxu0 0
    %1919 = vmatpush1.bf16.xpose.msra.mxu0 %v1896
    %1920 = vmatprep.subr.bf16.mxu0 0
    %1921 = vmatpush1.bf16.xpose.msra.mxu0 %v1893
    %1922 = vmatprep.subr.bf16.mxu0 0
    %1923 = vmatpush1.bf16.xpose.msra.mxu0 %v1890
    %1924 = vmatprep.subr.bf16.mxu0 0
    %1925 = vmatpush1.bf16.xpose.msra.mxu0 %v1887
    %1926 = vmatprep.subr.bf16.mxu0 0
    %1927 = vmatpush2.bf16.xpose.msra.mxu0 0
    %1928 = vmatprep.subr.bf16.mxu0 0
    %1929 = vmatpush2.bf16.xpose.msra.mxu0 0
    %1930 = vmatprep.subr.bf16.mxu0 0
    %1931 = vmatpush2.bf16.xpose.msra.mxu0 0
    %1932 = vmatprep.subr.bf16.mxu0 0
    %1933 = vmatpush2.bf16.xpose.msra.mxu0 0
    %1934 = vmatprep.subr.bf16.mxu0 0
    %1935 = vmatpush2.bf16.xpose.msra.mxu0 0
    %1936 = vmatprep.subr.bf16.mxu0 0
    %1937 = vmatpush2.bf16.xpose.msra.mxu0 0
    %1938 = vmatprep.subr.bf16.mxu0 0
    %1939 = vmatpush2.bf16.xpose.msra.mxu0 0
    %1940 = vmatprep.subr.bf16.mxu0 0
    %1941 = vmatpush2.bf16.xpose.msra.mxu0 0
    %1942 = vmatprep.mubr.bf16.mxu0 0
    %1943 = vmatmul.mubr.bf16.gmra.mxu0 %v1875
    %v1944 = vpop.f32.mrf.mxu0
    %v1945 = vadd.f32 0.0, %v1944
    %v1946 = vpop.f32.mrf.mxu0
    %v1947 = vpop.f32.mrf.mxu0
    %v1948 = vadd.f32 0.0, %v1947
    %v1949 = vpop.f32.mrf.mxu0
    %1950 = vmatprep.mubr.bf16.mxu0 0
    %1951 = vmatmul.mubr.bf16.gmra.mxu0 %v1878
    %v1952 = vpop.f32.mrf.mxu0
    %v1953 = vadd.f32 0.0, %v1952
    %v1954 = vpop.f32.mrf.mxu0
    %v1955 = vpop.f32.mrf.mxu0
    %v1956 = vadd.f32 0.0, %v1955
    %v1957 = vpop.f32.mrf.mxu0
    %1958 = vmatprep.mubr.bf16.mxu0 0
    %1959 = vmatmul.mubr.bf16.gmra.mxu0 %v1881
    %v1960 = vpop.f32.mrf.mxu0
    %v1961 = vadd.f32 0.0, %v1960
    %v1962 = vpop.f32.mrf.mxu0
    %v1963 = vpop.f32.mrf.mxu0
    %v1964 = vadd.f32 0.0, %v1963
    %v1965 = vpop.f32.mrf.mxu0
    %1966 = vmatprep.mubr.bf16.mxu0 0
    %1967 = vmatmul.mubr.bf16.gmra.mxu0 %v1884
    %v1968 = vpop.f32.mrf.mxu0
    %v1969 = vadd.f32 0.0, %v1968
    %v1970 = vpop.f32.mrf.mxu0
    %v1971 = vpop.f32.mrf.mxu0
    %v1972 = vadd.f32 0.0, %v1971
    %v1973 = vpop.f32.mrf.mxu0
    %1974 = vdwg.mxu0
    %v1976 = vsel %vm1772, %v1457, 0
    %v1979 = vsel %vm1772, %v1459, 0
    %v1982 = vsel %vm1772, %v1461, 0
    %v1985 = vsel %vm1772, %v1463, 0
    %v1988 = vsel %vm1772, %v1525, 0
    %v1991 = vsel %vm1772, %v1527, 0
    %v1994 = vsel %vm1772, %v1529, 0
    %v1997 = vsel %vm1772, %v1531, 0
    %v2000 = vsel %vm1772, %v1533, 0
    %v2003 = vsel %vm1772, %v1535, 0
    %v2006 = vsel %vm1772, %v1537, 0
    %v2009 = vsel %vm1772, %v1539, 0
    %2011 = vmatprep.subr.bf16.mxu0 0
    %2012 = vmatpush1.bf16.xpose.msra.mxu0 %v2009
    %2013 = vmatprep.subr.bf16.mxu0 0
    %2014 = vmatpush1.bf16.xpose.msra.mxu0 %v2006
    %2015 = vmatprep.subr.bf16.mxu0 0
    %2016 = vmatpush1.bf16.xpose.msra.mxu0 %v2003
    %2017 = vmatprep.subr.bf16.mxu0 0
    %2018 = vmatpush1.bf16.xpose.msra.mxu0 %v2000
    %2019 = vmatprep.subr.bf16.mxu0 0
    %2020 = vmatpush1.bf16.xpose.msra.mxu0 %v1997
    %2021 = vmatprep.subr.bf16.mxu0 0
    %2022 = vmatpush1.bf16.xpose.msra.mxu0 %v1994
    %2023 = vmatprep.subr.bf16.mxu0 0
    %2024 = vmatpush1.bf16.xpose.msra.mxu0 %v1991
    %2025 = vmatprep.subr.bf16.mxu0 0
    %2026 = vmatpush1.bf16.xpose.msra.mxu0 %v1988
    %2027 = vmatprep.subr.bf16.mxu0 0
    %2028 = vmatpush2.bf16.xpose.msra.mxu0 0
    %2029 = vmatprep.subr.bf16.mxu0 0
    %2030 = vmatpush2.bf16.xpose.msra.mxu0 0
    %2031 = vmatprep.subr.bf16.mxu0 0
    %2032 = vmatpush2.bf16.xpose.msra.mxu0 0
    %2033 = vmatprep.subr.bf16.mxu0 0
    %2034 = vmatpush2.bf16.xpose.msra.mxu0 0
    %2035 = vmatprep.subr.bf16.mxu0 0
    %2036 = vmatpush2.bf16.xpose.msra.mxu0 0
    %2037 = vmatprep.subr.bf16.mxu0 0
    %2038 = vmatpush2.bf16.xpose.msra.mxu0 0
    %2039 = vmatprep.subr.bf16.mxu0 0
    %2040 = vmatpush2.bf16.xpose.msra.mxu0 0
    %2041 = vmatprep.subr.bf16.mxu0 0
    %2042 = vmatpush2.bf16.xpose.msra.mxu0 0
    %2043 = vmatprep.mubr.bf16.mxu0 0
    %2044 = vmatmul.mubr.bf16.gmra.mxu0 %v1976
    %v2045 = vpop.f32.mrf.mxu0
    %v2046 = vadd.f32 0.0, %v2045
    %v2047 = vpop.f32.mrf.mxu0
    %v2048 = vpop.f32.mrf.mxu0
    %v2049 = vadd.f32 0.0, %v2048
    %v2050 = vpop.f32.mrf.mxu0
    %2051 = vmatprep.mubr.bf16.mxu0 0
    %2052 = vmatmul.mubr.bf16.gmra.mxu0 %v1979
    %v2053 = vpop.f32.mrf.mxu0
    %v2054 = vadd.f32 0.0, %v2053
    %v2055 = vpop.f32.mrf.mxu0
    %v2056 = vpop.f32.mrf.mxu0
    %v2057 = vadd.f32 0.0, %v2056
    %v2058 = vpop.f32.mrf.mxu0
    %2059 = vmatprep.mubr.bf16.mxu0 0
    %2060 = vmatmul.mubr.bf16.gmra.mxu0 %v1982
    %v2061 = vpop.f32.mrf.mxu0
    %v2062 = vadd.f32 0.0, %v2061
    %v2063 = vpop.f32.mrf.mxu0
    %v2064 = vpop.f32.mrf.mxu0
    %v2065 = vadd.f32 0.0, %v2064
    %v2066 = vpop.f32.mrf.mxu0
    %2067 = vmatprep.mubr.bf16.mxu0 0
    %2068 = vmatmul.mubr.bf16.gmra.mxu0 %v1985
    %v2069 = vpop.f32.mrf.mxu0
    %v2070 = vadd.f32 0.0, %v2069
    %v2071 = vpop.f32.mrf.mxu0
    %v2072 = vpop.f32.mrf.mxu0
    %v2073 = vadd.f32 0.0, %v2072
    %v2074 = vpop.f32.mrf.mxu0
    %2075 = vdwg.mxu0
    %v2077 = vsel %vm1772, %v1465, 0
    %v2080 = vsel %vm1772, %v1467, 0
    %v2083 = vsel %vm1772, %v1469, 0
    %v2086 = vsel %vm1772, %v1471, 0
    %v2089 = vsel %vm1772, %v1541, 0
    %v2092 = vsel %vm1772, %v1543, 0
    %v2095 = vsel %vm1772, %v1545, 0
    %v2098 = vsel %vm1772, %v1547, 0
    %v2101 = vsel %vm1772, %v1549, 0
    %v2104 = vsel %vm1772, %v1551, 0
    %v2107 = vsel %vm1772, %v1553, 0
    %v2110 = vsel %vm1772, %v1555, 0
    %2112 = vmatprep.subr.bf16.mxu0 0
    %2113 = vmatpush1.bf16.xpose.msra.mxu0 %v2110
    %2114 = vmatprep.subr.bf16.mxu0 0
    %2115 = vmatpush1.bf16.xpose.msra.mxu0 %v2107
    %2116 = vmatprep.subr.bf16.mxu0 0
    %2117 = vmatpush1.bf16.xpose.msra.mxu0 %v2104
    %2118 = vmatprep.subr.bf16.mxu0 0
    %2119 = vmatpush1.bf16.xpose.msra.mxu0 %v2101
    %2120 = vmatprep.subr.bf16.mxu0 0
    %2121 = vmatpush1.bf16.xpose.msra.mxu0 %v2098
    %2122 = vmatprep.subr.bf16.mxu0 0
    %2123 = vmatpush1.bf16.xpose.msra.mxu0 %v2095
    %2124 = vmatprep.subr.bf16.mxu0 0
    %2125 = vmatpush1.bf16.xpose.msra.mxu0 %v2092
    %2126 = vmatprep.subr.bf16.mxu0 0
    %2127 = vmatpush1.bf16.xpose.msra.mxu0 %v2089
    %2128 = vmatprep.subr.bf16.mxu0 0
    %2129 = vmatpush2.bf16.xpose.msra.mxu0 0
    %2130 = vmatprep.subr.bf16.mxu0 0
    %2131 = vmatpush2.bf16.xpose.msra.mxu0 0
    %2132 = vmatprep.subr.bf16.mxu0 0
    %2133 = vmatpush2.bf16.xpose.msra.mxu0 0
    %2134 = vmatprep.subr.bf16.mxu0 0
    %2135 = vmatpush2.bf16.xpose.msra.mxu0 0
    %2136 = vmatprep.subr.bf16.mxu0 0
    %2137 = vmatpush2.bf16.xpose.msra.mxu0 0
    %2138 = vmatprep.subr.bf16.mxu0 0
    %2139 = vmatpush2.bf16.xpose.msra.mxu0 0
    %2140 = vmatprep.subr.bf16.mxu0 0
    %2141 = vmatpush2.bf16.xpose.msra.mxu0 0
    %2142 = vmatprep.subr.bf16.mxu0 0
    %2143 = vmatpush2.bf16.xpose.msra.mxu0 0
    %2144 = vmatprep.mubr.bf16.mxu0 0
    %2145 = vmatmul.mubr.bf16.gmra.mxu0 %v2077
    %v2146 = vpop.f32.mrf.mxu0
    %v2147 = vadd.f32 0.0, %v2146
    %v2148 = vpop.f32.mrf.mxu0
    %v2149 = vpop.f32.mrf.mxu0
    %v2150 = vadd.f32 0.0, %v2149
    %v2151 = vpop.f32.mrf.mxu0
    %2152 = vmatprep.mubr.bf16.mxu0 0
    %2153 = vmatmul.mubr.bf16.gmra.mxu0 %v2080
    %v2154 = vpop.f32.mrf.mxu0
    %v2155 = vadd.f32 0.0, %v2154
    %v2156 = vpop.f32.mrf.mxu0
    %v2157 = vpop.f32.mrf.mxu0
    %v2158 = vadd.f32 0.0, %v2157
    %v2159 = vpop.f32.mrf.mxu0
    %2160 = vmatprep.mubr.bf16.mxu0 0
    %2161 = vmatmul.mubr.bf16.gmra.mxu0 %v2083
    %v2162 = vpop.f32.mrf.mxu0
    %v2163 = vadd.f32 0.0, %v2162
    %v2164 = vpop.f32.mrf.mxu0
    %v2165 = vpop.f32.mrf.mxu0
    %v2166 = vadd.f32 0.0, %v2165
    %v2167 = vpop.f32.mrf.mxu0
    %2168 = vmatprep.mubr.bf16.mxu0 0
    %2169 = vmatmul.mubr.bf16.gmra.mxu0 %v2086
    %v2170 = vpop.f32.mrf.mxu0
    %v2171 = vadd.f32 0.0, %v2170
    %v2172 = vpop.f32.mrf.mxu0
    %v2173 = vpop.f32.mrf.mxu0
    %v2174 = vadd.f32 0.0, %v2173
    %v2175 = vpop.f32.mrf.mxu0
    %2176 = vdwg.mxu0
    %v2178 = vsel %vm1772, %v958, 0
    %v2181 = vsel %vm1772, %v959, 0
    %v2184 = vsel %vm1772, %v960, 0
    %v2187 = vsel %vm1772, %v961, 0
    %v2190 = vsel %vm1772, %v1195, 0
    %v2193 = vsel %vm1772, %v1196, 0
    %v2196 = vsel %vm1772, %v1197, 0
    %v2199 = vsel %vm1772, %v1198, 0
    %v2202 = vsel %vm1772, %v1199, 0
    %v2205 = vsel %vm1772, %v1200, 0
    %v2208 = vsel %vm1772, %v1201, 0
    %v2211 = vsel %vm1772, %v1202, 0
    %2213 = vmatprep.subr.bf16.mxu0 0
    %2214 = vmatpush1.bf16.xpose.msra.mxu0 %v2211
    %2215 = vmatprep.subr.bf16.mxu0 0
    %2216 = vmatpush1.bf16.xpose.msra.mxu0 %v2208
    %2217 = vmatprep.subr.bf16.mxu0 0
    %2218 = vmatpush1.bf16.xpose.msra.mxu0 %v2205
    %2219 = vmatprep.subr.bf16.mxu0 0
    %2220 = vmatpush1.bf16.xpose.msra.mxu0 %v2202
    %2221 = vmatprep.subr.bf16.mxu0 0
    %2222 = vmatpush1.bf16.xpose.msra.mxu0 %v2199
    %2223 = vmatprep.subr.bf16.mxu0 0
    %2224 = vmatpush1.bf16.xpose.msra.mxu0 %v2196
    %2225 = vmatprep.subr.bf16.mxu0 0
    %2226 = vmatpush1.bf16.xpose.msra.mxu0 %v2193
    %2227 = vmatprep.subr.bf16.mxu0 0
    %2228 = vmatpush1.bf16.xpose.msra.mxu0 %v2190
    %2229 = vmatprep.subr.bf16.mxu0 0
    %2230 = vmatpush2.bf16.xpose.msra.mxu0 0
    %2231 = vmatprep.subr.bf16.mxu0 0
    %2232 = vmatpush2.bf16.xpose.msra.mxu0 0
    %2233 = vmatprep.subr.bf16.mxu0 0
    %2234 = vmatpush2.bf16.xpose.msra.mxu0 0
    %2235 = vmatprep.subr.bf16.mxu0 0
    %2236 = vmatpush2.bf16.xpose.msra.mxu0 0
    %2237 = vmatprep.subr.bf16.mxu0 0
    %2238 = vmatpush2.bf16.xpose.msra.mxu0 0
    %2239 = vmatprep.subr.bf16.mxu0 0
    %2240 = vmatpush2.bf16.xpose.msra.mxu0 0
    %2241 = vmatprep.subr.bf16.mxu0 0
    %2242 = vmatpush2.bf16.xpose.msra.mxu0 0
    %2243 = vmatprep.subr.bf16.mxu0 0
    %2244 = vmatpush2.bf16.xpose.msra.mxu0 0
    %2245 = vmatprep.mubr.bf16.mxu0 0
    %2246 = vmatmul.mubr.bf16.gmra.mxu0 %v2178
    %v2247 = vpop.f32.mrf.mxu0
    %v2248 = vadd.f32 0.0, %v2247
    %v2249 = vpop.f32.mrf.mxu0
    %v2250 = vpop.f32.mrf.mxu0
    %v2251 = vadd.f32 0.0, %v2250
    %v2252 = vpop.f32.mrf.mxu0
    %2253 = vmatprep.mubr.bf16.mxu0 0
    %2254 = vmatmul.mubr.bf16.gmra.mxu0 %v2181
    %v2255 = vpop.f32.mrf.mxu0
    %v2256 = vadd.f32 0.0, %v2255
    %v2257 = vpop.f32.mrf.mxu0
    %v2258 = vpop.f32.mrf.mxu0
    %v2259 = vadd.f32 0.0, %v2258
    %v2260 = vpop.f32.mrf.mxu0
    %2261 = vmatprep.mubr.bf16.mxu0 0
    %2262 = vmatmul.mubr.bf16.gmra.mxu0 %v2184
    %v2263 = vpop.f32.mrf.mxu0
    %v2264 = vadd.f32 0.0, %v2263
    %v2265 = vpop.f32.mrf.mxu0
    %v2266 = vpop.f32.mrf.mxu0
    %v2267 = vadd.f32 0.0, %v2266
    %v2268 = vpop.f32.mrf.mxu0
    %2269 = vmatprep.mubr.bf16.mxu0 0
    %2270 = vmatmul.mubr.bf16.gmra.mxu0 %v2187
    %v2271 = vpop.f32.mrf.mxu0
    %v2272 = vadd.f32 0.0, %v2271
    %v2273 = vpop.f32.mrf.mxu0
    %v2274 = vpop.f32.mrf.mxu0
    %v2275 = vadd.f32 0.0, %v2274
    %v2276 = vpop.f32.mrf.mxu0
    %2277 = vdwg.mxu0
    %v2279 = vsel %vm1772, %v1477, 0
    %v2282 = vsel %vm1772, %v1479, 0
    %v2285 = vsel %vm1772, %v1481, 0
    %v2288 = vsel %vm1772, %v1483, 0
    %v2291 = vsel %vm1772, %v1565, 0
    %v2294 = vsel %vm1772, %v1567, 0
    %v2297 = vsel %vm1772, %v1569, 0
    %v2300 = vsel %vm1772, %v1571, 0
    %v2303 = vsel %vm1772, %v1573, 0
    %v2306 = vsel %vm1772, %v1575, 0
    %v2309 = vsel %vm1772, %v1577, 0
    %v2312 = vsel %vm1772, %v1579, 0
    %2314 = vmatprep.subr.bf16.mxu0 0
    %2315 = vmatpush1.bf16.xpose.msra.mxu0 %v2312
    %2316 = vmatprep.subr.bf16.mxu0 0
    %2317 = vmatpush1.bf16.xpose.msra.mxu0 %v2309
    %2318 = vmatprep.subr.bf16.mxu0 0
    %2319 = vmatpush1.bf16.xpose.msra.mxu0 %v2306
    %2320 = vmatprep.subr.bf16.mxu0 0
    %2321 = vmatpush1.bf16.xpose.msra.mxu0 %v2303
    %2322 = vmatprep.subr.bf16.mxu0 0
    %2323 = vmatpush1.bf16.xpose.msra.mxu0 %v2300
    %2324 = vmatprep.subr.bf16.mxu0 0
    %2325 = vmatpush1.bf16.xpose.msra.mxu0 %v2297
    %2326 = vmatprep.subr.bf16.mxu0 0
    %2327 = vmatpush1.bf16.xpose.msra.mxu0 %v2294
    %2328 = vmatprep.subr.bf16.mxu0 0
    %2329 = vmatpush1.bf16.xpose.msra.mxu0 %v2291
    %2330 = vmatprep.subr.bf16.mxu0 0
    %2331 = vmatpush2.bf16.xpose.msra.mxu0 0
    %2332 = vmatprep.subr.bf16.mxu0 0
    %2333 = vmatpush2.bf16.xpose.msra.mxu0 0
    %2334 = vmatprep.subr.bf16.mxu0 0
    %2335 = vmatpush2.bf16.xpose.msra.mxu0 0
    %2336 = vmatprep.subr.bf16.mxu0 0
    %2337 = vmatpush2.bf16.xpose.msra.mxu0 0
    %2338 = vmatprep.subr.bf16.mxu0 0
    %2339 = vmatpush2.bf16.xpose.msra.mxu0 0
    %2340 = vmatprep.subr.bf16.mxu0 0
    %2341 = vmatpush2.bf16.xpose.msra.mxu0 0
    %2342 = vmatprep.subr.bf16.mxu0 0
    %2343 = vmatpush2.bf16.xpose.msra.mxu0 0
    %2344 = vmatprep.subr.bf16.mxu0 0
    %2345 = vmatpush2.bf16.xpose.msra.mxu0 0
    %2346 = vmatprep.mubr.bf16.mxu0 0
    %2347 = vmatmul.mubr.bf16.gmra.mxu0 %v2279
    %v2348 = vpop.f32.mrf.mxu0
    %v2349 = vadd.f32 0.0, %v2348
    %v2350 = vpop.f32.mrf.mxu0
    %v2351 = vpop.f32.mrf.mxu0
    %v2352 = vadd.f32 0.0, %v2351
    %v2353 = vpop.f32.mrf.mxu0
    %2354 = vmatprep.mubr.bf16.mxu0 0
    %2355 = vmatmul.mubr.bf16.gmra.mxu0 %v2282
    %v2356 = vpop.f32.mrf.mxu0
    %v2357 = vadd.f32 0.0, %v2356
    %v2358 = vpop.f32.mrf.mxu0
    %v2359 = vpop.f32.mrf.mxu0
    %v2360 = vadd.f32 0.0, %v2359
    %v2361 = vpop.f32.mrf.mxu0
    %2362 = vmatprep.mubr.bf16.mxu0 0
    %2363 = vmatmul.mubr.bf16.gmra.mxu0 %v2285
    %v2364 = vpop.f32.mrf.mxu0
    %v2365 = vadd.f32 0.0, %v2364
    %v2366 = vpop.f32.mrf.mxu0
    %v2367 = vpop.f32.mrf.mxu0
    %v2368 = vadd.f32 0.0, %v2367
    %v2369 = vpop.f32.mrf.mxu0
    %2370 = vmatprep.mubr.bf16.mxu0 0
    %2371 = vmatmul.mubr.bf16.gmra.mxu0 %v2288
    %v2372 = vpop.f32.mrf.mxu0
    %v2373 = vadd.f32 0.0, %v2372
    %v2374 = vpop.f32.mrf.mxu0
    %v2375 = vpop.f32.mrf.mxu0
    %v2376 = vadd.f32 0.0, %v2375
    %v2377 = vpop.f32.mrf.mxu0
    %2378 = vdwg.mxu0
    %v2380 = vsel %vm1772, %v1485, 0
    %v2383 = vsel %vm1772, %v1487, 0
    %v2386 = vsel %vm1772, %v1489, 0
    %v2389 = vsel %vm1772, %v1491, 0
    %v2392 = vsel %vm1772, %v1581, 0
    %v2395 = vsel %vm1772, %v1583, 0
    %v2398 = vsel %vm1772, %v1585, 0
    %v2401 = vsel %vm1772, %v1587, 0
    %v2404 = vsel %vm1772, %v1589, 0
    %v2407 = vsel %vm1772, %v1591, 0
    %v2410 = vsel %vm1772, %v1593, 0
    %v2413 = vsel %vm1772, %v1595, 0
    %2415 = vmatprep.subr.bf16.mxu0 0
    %2416 = vmatpush1.bf16.xpose.msra.mxu0 %v2413
    %2417 = vmatprep.subr.bf16.mxu0 0
    %2418 = vmatpush1.bf16.xpose.msra.mxu0 %v2410
    %2419 = vmatprep.subr.bf16.mxu0 0
    %2420 = vmatpush1.bf16.xpose.msra.mxu0 %v2407
    %2421 = vmatprep.subr.bf16.mxu0 0
    %2422 = vmatpush1.bf16.xpose.msra.mxu0 %v2404
    %2423 = vmatprep.subr.bf16.mxu0 0
    %2424 = vmatpush1.bf16.xpose.msra.mxu0 %v2401
    %2425 = vmatprep.subr.bf16.mxu0 0
    %2426 = vmatpush1.bf16.xpose.msra.mxu0 %v2398
    %2427 = vmatprep.subr.bf16.mxu0 0
    %2428 = vmatpush1.bf16.xpose.msra.mxu0 %v2395
    %2429 = vmatprep.subr.bf16.mxu0 0
    %2430 = vmatpush1.bf16.xpose.msra.mxu0 %v2392
    %2431 = vmatprep.subr.bf16.mxu0 0
    %2432 = vmatpush2.bf16.xpose.msra.mxu0 0
    %2433 = vmatprep.subr.bf16.mxu0 0
    %2434 = vmatpush2.bf16.xpose.msra.mxu0 0
    %2435 = vmatprep.subr.bf16.mxu0 0
    %2436 = vmatpush2.bf16.xpose.msra.mxu0 0
    %2437 = vmatprep.subr.bf16.mxu0 0
    %2438 = vmatpush2.bf16.xpose.msra.mxu0 0
    %2439 = vmatprep.subr.bf16.mxu0 0
    %2440 = vmatpush2.bf16.xpose.msra.mxu0 0
    %2441 = vmatprep.subr.bf16.mxu0 0
    %2442 = vmatpush2.bf16.xpose.msra.mxu0 0
    %2443 = vmatprep.subr.bf16.mxu0 0
    %2444 = vmatpush2.bf16.xpose.msra.mxu0 0
    %2445 = vmatprep.subr.bf16.mxu0 0
    %2446 = vmatpush2.bf16.xpose.msra.mxu0 0
    %2447 = vmatprep.mubr.bf16.mxu0 0
    %2448 = vmatmul.mubr.bf16.gmra.mxu0 %v2380
    %v2449 = vpop.f32.mrf.mxu0
    %v2450 = vadd.f32 0.0, %v2449
    %v2451 = vpop.f32.mrf.mxu0
    %v2452 = vpop.f32.mrf.mxu0
    %v2453 = vadd.f32 0.0, %v2452
    %v2454 = vpop.f32.mrf.mxu0
    %2455 = vmatprep.mubr.bf16.mxu0 0
    %2456 = vmatmul.mubr.bf16.gmra.mxu0 %v2383
    %v2457 = vpop.f32.mrf.mxu0
    %v2458 = vadd.f32 0.0, %v2457
    %v2459 = vpop.f32.mrf.mxu0
    %v2460 = vpop.f32.mrf.mxu0
    %v2461 = vadd.f32 0.0, %v2460
    %v2462 = vpop.f32.mrf.mxu0
    %2463 = vmatprep.mubr.bf16.mxu0 0
    %2464 = vmatmul.mubr.bf16.gmra.mxu0 %v2386
    %v2465 = vpop.f32.mrf.mxu0
    %v2466 = vadd.f32 0.0, %v2465
    %v2467 = vpop.f32.mrf.mxu0
    %v2468 = vpop.f32.mrf.mxu0
    %v2469 = vadd.f32 0.0, %v2468
    %v2470 = vpop.f32.mrf.mxu0
    %2471 = vmatprep.mubr.bf16.mxu0 0
    %2472 = vmatmul.mubr.bf16.gmra.mxu0 %v2389
    %v2473 = vpop.f32.mrf.mxu0
    %v2474 = vadd.f32 0.0, %v2473
    %v2475 = vpop.f32.mrf.mxu0
    %v2476 = vpop.f32.mrf.mxu0
    %v2477 = vadd.f32 0.0, %v2476
    %v2478 = vpop.f32.mrf.mxu0
    %2479 = vdwg.mxu0
    %v2481 = vsel %vm1772, %v1493, 0
    %v2484 = vsel %vm1772, %v1495, 0
    %v2487 = vsel %vm1772, %v1497, 0
    %v2490 = vsel %vm1772, %v1499, 0
    %v2493 = vsel %vm1772, %v1597, 0
    %v2496 = vsel %vm1772, %v1599, 0
    %v2499 = vsel %vm1772, %v1601, 0
    %v2502 = vsel %vm1772, %v1603, 0
    %v2505 = vsel %vm1772, %v1605, 0
    %v2508 = vsel %vm1772, %v1607, 0
    %v2511 = vsel %vm1772, %v1609, 0
    %v2514 = vsel %vm1772, %v1611, 0
    %2516 = vmatprep.subr.bf16.mxu0 0
    %2517 = vmatpush1.bf16.xpose.msra.mxu0 %v2514
    %2518 = vmatprep.subr.bf16.mxu0 0
    %2519 = vmatpush1.bf16.xpose.msra.mxu0 %v2511
    %2520 = vmatprep.subr.bf16.mxu0 0
    %2521 = vmatpush1.bf16.xpose.msra.mxu0 %v2508
    %2522 = vmatprep.subr.bf16.mxu0 0
    %2523 = vmatpush1.bf16.xpose.msra.mxu0 %v2505
    %2524 = vmatprep.subr.bf16.mxu0 0
    %2525 = vmatpush1.bf16.xpose.msra.mxu0 %v2502
    %2526 = vmatprep.subr.bf16.mxu0 0
    %2527 = vmatpush1.bf16.xpose.msra.mxu0 %v2499
    %2528 = vmatprep.subr.bf16.mxu0 0
    %2529 = vmatpush1.bf16.xpose.msra.mxu0 %v2496
    %2530 = vmatprep.subr.bf16.mxu0 0
    %2531 = vmatpush1.bf16.xpose.msra.mxu0 %v2493
    %2532 = vmatprep.subr.bf16.mxu0 0
    %2533 = vmatpush2.bf16.xpose.msra.mxu0 0
    %2534 = vmatprep.subr.bf16.mxu0 0
    %2535 = vmatpush2.bf16.xpose.msra.mxu0 0
    %2536 = vmatprep.subr.bf16.mxu0 0
    %2537 = vmatpush2.bf16.xpose.msra.mxu0 0
    %2538 = vmatprep.subr.bf16.mxu0 0
    %2539 = vmatpush2.bf16.xpose.msra.mxu0 0
    %2540 = vmatprep.subr.bf16.mxu0 0
    %2541 = vmatpush2.bf16.xpose.msra.mxu0 0
    %2542 = vmatprep.subr.bf16.mxu0 0
    %2543 = vmatpush2.bf16.xpose.msra.mxu0 0
    %2544 = vmatprep.subr.bf16.mxu0 0
    %2545 = vmatpush2.bf16.xpose.msra.mxu0 0
    %2546 = vmatprep.subr.bf16.mxu0 0
    %2547 = vmatpush2.bf16.xpose.msra.mxu0 0
    %2548 = vmatprep.mubr.bf16.mxu0 0
    %2549 = vmatmul.mubr.bf16.gmra.mxu0 %v2481
    %v2550 = vpop.f32.mrf.mxu0
    %v2551 = vadd.f32 0.0, %v2550
    %v2552 = vpop.f32.mrf.mxu0
    %v2553 = vpop.f32.mrf.mxu0
    %v2554 = vadd.f32 0.0, %v2553
    %v2555 = vpop.f32.mrf.mxu0
    %2556 = vmatprep.mubr.bf16.mxu0 0
    %2557 = vmatmul.mubr.bf16.gmra.mxu0 %v2484
    %v2558 = vpop.f32.mrf.mxu0
    %v2559 = vadd.f32 0.0, %v2558
    %v2560 = vpop.f32.mrf.mxu0
    %v2561 = vpop.f32.mrf.mxu0
    %v2562 = vadd.f32 0.0, %v2561
    %v2563 = vpop.f32.mrf.mxu0
    %2564 = vmatprep.mubr.bf16.mxu0 0
    %2565 = vmatmul.mubr.bf16.gmra.mxu0 %v2487
    %v2566 = vpop.f32.mrf.mxu0
    %v2567 = vadd.f32 0.0, %v2566
    %v2568 = vpop.f32.mrf.mxu0
    %v2569 = vpop.f32.mrf.mxu0
    %v2570 = vadd.f32 0.0, %v2569
    %v2571 = vpop.f32.mrf.mxu0
    %2572 = vmatprep.mubr.bf16.mxu0 0
    %2573 = vmatmul.mubr.bf16.gmra.mxu0 %v2490
    %v2574 = vpop.f32.mrf.mxu0
    %v2575 = vadd.f32 0.0, %v2574
    %v2576 = vpop.f32.mrf.mxu0
    %v2577 = vpop.f32.mrf.mxu0
    %v2578 = vadd.f32 0.0, %v2577
    %v2579 = vpop.f32.mrf.mxu0
    %2580 = vdwg.mxu0
    %v2581 = vlaneseq
    %v2582 = vand.u32 %v2581, 127
    %vm2583 = vcmp.lt.s32.totalorder %v2582, 80
    %v2584 = vsel %vm2583, 1, 0
    %vm2585 = vcmp.eq.s32.totalorder %v2584, 1
    %v2586 = vsel %vm2585, %v1844, -1e+30
    %v2587 = vsel %vm2585, %v1847, -1e+30
    %v2588 = vsel %vm2585, %v1852, -1e+30
    %v2589 = vsel %vm2585, %v1855, -1e+30
    %v2590 = vsel %vm2585, %v1860, -1e+30
    %v2591 = vsel %vm2585, %v1863, -1e+30
    %v2592 = vsel %vm2585, %v1868, -1e+30
    %v2593 = vsel %vm2585, %v1871, -1e+30
    %v2594 = vsel %vm2585, %v1945, -1e+30
    %v2595 = vsel %vm2585, %v1948, -1e+30
    %v2596 = vsel %vm2585, %v1953, -1e+30
    %v2597 = vsel %vm2585, %v1956, -1e+30
    %v2598 = vsel %vm2585, %v1961, -1e+30
    %v2599 = vsel %vm2585, %v1964, -1e+30
    %v2600 = vsel %vm2585, %v1969, -1e+30
    %v2601 = vsel %vm2585, %v1972, -1e+30
    %v2602 = vsel %vm2585, %v2046, -1e+30
    %v2603 = vsel %vm2585, %v2049, -1e+30
    %v2604 = vsel %vm2585, %v2054, -1e+30
    %v2605 = vsel %vm2585, %v2057, -1e+30
    %v2606 = vsel %vm2585, %v2062, -1e+30
    %v2607 = vsel %vm2585, %v2065, -1e+30
    %v2608 = vsel %vm2585, %v2070, -1e+30
    %v2609 = vsel %vm2585, %v2073, -1e+30
    %v2610 = vsel %vm2585, %v2147, -1e+30
    %v2611 = vsel %vm2585, %v2150, -1e+30
    %v2612 = vsel %vm2585, %v2155, -1e+30
    %v2613 = vsel %vm2585, %v2158, -1e+30
    %v2614 = vsel %vm2585, %v2163, -1e+30
    %v2615 = vsel %vm2585, %v2166, -1e+30
    %v2616 = vsel %vm2585, %v2171, -1e+30
    %v2617 = vsel %vm2585, %v2174, -1e+30
    %v2618 = vsel %vm2585, %v2248, -1e+30
    %v2619 = vsel %vm2585, %v2251, -1e+30
    %v2620 = vsel %vm2585, %v2256, -1e+30
    %v2621 = vsel %vm2585, %v2259, -1e+30
    %v2622 = vsel %vm2585, %v2264, -1e+30
    %v2623 = vsel %vm2585, %v2267, -1e+30
    %v2624 = vsel %vm2585, %v2272, -1e+30
    %v2625 = vsel %vm2585, %v2275, -1e+30
    %v2626 = vsel %vm2585, %v2349, -1e+30
    %v2627 = vsel %vm2585, %v2352, -1e+30
    %v2628 = vsel %vm2585, %v2357, -1e+30
    %v2629 = vsel %vm2585, %v2360, -1e+30
    %v2630 = vsel %vm2585, %v2365, -1e+30
    %v2631 = vsel %vm2585, %v2368, -1e+30
    %v2632 = vsel %vm2585, %v2373, -1e+30
    %v2633 = vsel %vm2585, %v2376, -1e+30
    %v2634 = vsel %vm2585, %v2450, -1e+30
    %v2635 = vsel %vm2585, %v2453, -1e+30
    %v2636 = vsel %vm2585, %v2458, -1e+30
    %v2637 = vsel %vm2585, %v2461, -1e+30
    %v2638 = vsel %vm2585, %v2466, -1e+30
    %v2639 = vsel %vm2585, %v2469, -1e+30
    %v2640 = vsel %vm2585, %v2474, -1e+30
    %v2641 = vsel %vm2585, %v2477, -1e+30
    %v2642 = vsel %vm2585, %v2551, -1e+30
    %v2643 = vsel %vm2585, %v2554, -1e+30
    %v2644 = vsel %vm2585, %v2559, -1e+30
    %v2645 = vsel %vm2585, %v2562, -1e+30
    %v2646 = vsel %vm2585, %v2567, -1e+30
    %v2647 = vsel %vm2585, %v2570, -1e+30
    %v2648 = vsel %vm2585, %v2575, -1e+30
    %v2649 = vsel %vm2585, %v2578, -1e+30
    %2650 = vmax.xlane.f32.xlu0 %v2586
    %v2651 = vpop.xlane.xlu0 %2650
    %2652 = vmax.xlane.f32.xlu0 %v2587
    %v2653 = vpop.xlane.xlu0 %2652
    %2654 = vmax.xlane.f32.xlu0 %v2588
    %v2655 = vpop.xlane.xlu0 %2654
    %2656 = vmax.xlane.f32.xlu0 %v2589
    %v2657 = vpop.xlane.xlu0 %2656
    %2658 = vmax.xlane.f32.xlu0 %v2590
    %v2659 = vpop.xlane.xlu0 %2658
    %2660 = vmax.xlane.f32.xlu0 %v2591
    %v2661 = vpop.xlane.xlu0 %2660
    %2662 = vmax.xlane.f32.xlu0 %v2592
    %v2663 = vpop.xlane.xlu0 %2662
    %2664 = vmax.xlane.f32.xlu0 %v2593
    %v2665 = vpop.xlane.xlu0 %2664
    %2666 = vmax.xlane.f32.xlu0 %v2594
    %v2667 = vpop.xlane.xlu0 %2666
    %2668 = vmax.xlane.f32.xlu0 %v2595
    %v2669 = vpop.xlane.xlu0 %2668
    %2670 = vmax.xlane.f32.xlu0 %v2596
    %v2671 = vpop.xlane.xlu0 %2670
    %2672 = vmax.xlane.f32.xlu0 %v2597
    %v2673 = vpop.xlane.xlu0 %2672
    %2674 = vmax.xlane.f32.xlu0 %v2598
    %v2675 = vpop.xlane.xlu0 %2674
    %2676 = vmax.xlane.f32.xlu0 %v2599
    %v2677 = vpop.xlane.xlu0 %2676
    %2678 = vmax.xlane.f32.xlu0 %v2600
    %v2679 = vpop.xlane.xlu0 %2678
    %2680 = vmax.xlane.f32.xlu0 %v2601
    %v2681 = vpop.xlane.xlu0 %2680
    %2682 = vmax.xlane.f32.xlu0 %v2602
    %v2683 = vpop.xlane.xlu0 %2682
    %2684 = vmax.xlane.f32.xlu0 %v2603
    %v2685 = vpop.xlane.xlu0 %2684
    %2686 = vmax.xlane.f32.xlu0 %v2604
    %v2687 = vpop.xlane.xlu0 %2686
    %2688 = vmax.xlane.f32.xlu0 %v2605
    %v2689 = vpop.xlane.xlu0 %2688
    %2690 = vmax.xlane.f32.xlu0 %v2606
    %v2691 = vpop.xlane.xlu0 %2690
    %2692 = vmax.xlane.f32.xlu0 %v2607
    %v2693 = vpop.xlane.xlu0 %2692
    %2694 = vmax.xlane.f32.xlu0 %v2608
    %v2695 = vpop.xlane.xlu0 %2694
    %2696 = vmax.xlane.f32.xlu0 %v2609
    %v2697 = vpop.xlane.xlu0 %2696
    %2698 = vmax.xlane.f32.xlu0 %v2610
    %v2699 = vpop.xlane.xlu0 %2698
    %2700 = vmax.xlane.f32.xlu0 %v2611
    %v2701 = vpop.xlane.xlu0 %2700
    %2702 = vmax.xlane.f32.xlu0 %v2612
    %v2703 = vpop.xlane.xlu0 %2702
    %2704 = vmax.xlane.f32.xlu0 %v2613
    %v2705 = vpop.xlane.xlu0 %2704
    %2706 = vmax.xlane.f32.xlu0 %v2614
    %v2707 = vpop.xlane.xlu0 %2706
    %2708 = vmax.xlane.f32.xlu0 %v2615
    %v2709 = vpop.xlane.xlu0 %2708
    %2710 = vmax.xlane.f32.xlu0 %v2616
    %v2711 = vpop.xlane.xlu0 %2710
    %2712 = vmax.xlane.f32.xlu0 %v2617
    %v2713 = vpop.xlane.xlu0 %2712
    %2714 = vmax.xlane.f32.xlu0 %v2618
    %v2715 = vpop.xlane.xlu0 %2714
    %2716 = vmax.xlane.f32.xlu0 %v2619
    %v2717 = vpop.xlane.xlu0 %2716
    %2718 = vmax.xlane.f32.xlu0 %v2620
    %v2719 = vpop.xlane.xlu0 %2718
    %2720 = vmax.xlane.f32.xlu0 %v2621
    %v2721 = vpop.xlane.xlu0 %2720
    %2722 = vmax.xlane.f32.xlu0 %v2622
    %v2723 = vpop.xlane.xlu0 %2722
    %2724 = vmax.xlane.f32.xlu0 %v2623
    %v2725 = vpop.xlane.xlu0 %2724
    %2726 = vmax.xlane.f32.xlu0 %v2624
    %v2727 = vpop.xlane.xlu0 %2726
    %2728 = vmax.xlane.f32.xlu0 %v2625
    %v2729 = vpop.xlane.xlu0 %2728
    %2730 = vmax.xlane.f32.xlu0 %v2626
    %v2731 = vpop.xlane.xlu0 %2730
    %2732 = vmax.xlane.f32.xlu0 %v2627
    %v2733 = vpop.xlane.xlu0 %2732
    %2734 = vmax.xlane.f32.xlu0 %v2628
    %v2735 = vpop.xlane.xlu0 %2734
    %2736 = vmax.xlane.f32.xlu0 %v2629
    %v2737 = vpop.xlane.xlu0 %2736
    %2738 = vmax.xlane.f32.xlu0 %v2630
    %v2739 = vpop.xlane.xlu0 %2738
    %2740 = vmax.xlane.f32.xlu0 %v2631
    %v2741 = vpop.xlane.xlu0 %2740
    %2742 = vmax.xlane.f32.xlu0 %v2632
    %v2743 = vpop.xlane.xlu0 %2742
    %2744 = vmax.xlane.f32.xlu0 %v2633
    %v2745 = vpop.xlane.xlu0 %2744
    %2746 = vmax.xlane.f32.xlu0 %v2634
    %v2747 = vpop.xlane.xlu0 %2746
    %2748 = vmax.xlane.f32.xlu0 %v2635
    %v2749 = vpop.xlane.xlu0 %2748
    %2750 = vmax.xlane.f32.xlu0 %v2636
    %v2751 = vpop.xlane.xlu0 %2750
    %2752 = vmax.xlane.f32.xlu0 %v2637
    %v2753 = vpop.xlane.xlu0 %2752
    %2754 = vmax.xlane.f32.xlu0 %v2638
    %v2755 = vpop.xlane.xlu0 %2754
    %2756 = vmax.xlane.f32.xlu0 %v2639
    %v2757 = vpop.xlane.xlu0 %2756
    %2758 = vmax.xlane.f32.xlu0 %v2640
    %v2759 = vpop.xlane.xlu0 %2758
    %2760 = vmax.xlane.f32.xlu0 %v2641
    %v2761 = vpop.xlane.xlu0 %2760
    %2762 = vmax.xlane.f32.xlu0 %v2642
    %v2763 = vpop.xlane.xlu0 %2762
    %2764 = vmax.xlane.f32.xlu0 %v2643
    %v2765 = vpop.xlane.xlu0 %2764
    %2766 = vmax.xlane.f32.xlu0 %v2644
    %v2767 = vpop.xlane.xlu0 %2766
    %2768 = vmax.xlane.f32.xlu0 %v2645
    %v2769 = vpop.xlane.xlu0 %2768
    %2770 = vmax.xlane.f32.xlu0 %v2646
    %v2771 = vpop.xlane.xlu0 %2770
    %2772 = vmax.xlane.f32.xlu0 %v2647
    %v2773 = vpop.xlane.xlu0 %2772
    %2774 = vmax.xlane.f32.xlu0 %v2648
    %v2775 = vpop.xlane.xlu0 %2774
    %2776 = vmax.xlane.f32.xlu0 %v2649
    %v2777 = vpop.xlane.xlu0 %2776
    %v2778 = vsub.f32 %v2586, %v2651
    %v2779 = vsub.f32 %v2587, %v2653
    %v2780 = vsub.f32 %v2588, %v2655
    %v2781 = vsub.f32 %v2589, %v2657
    %v2782 = vsub.f32 %v2590, %v2659
    %v2783 = vsub.f32 %v2591, %v2661
    %v2784 = vsub.f32 %v2592, %v2663
    %v2785 = vsub.f32 %v2593, %v2665
    %v2786 = vsub.f32 %v2594, %v2667
    %v2787 = vsub.f32 %v2595, %v2669
    %v2788 = vsub.f32 %v2596, %v2671
    %v2789 = vsub.f32 %v2597, %v2673
    %v2790 = vsub.f32 %v2598, %v2675
    %v2791 = vsub.f32 %v2599, %v2677
    %v2792 = vsub.f32 %v2600, %v2679
    %v2793 = vsub.f32 %v2601, %v2681
    %v2794 = vsub.f32 %v2602, %v2683
    %v2795 = vsub.f32 %v2603, %v2685
    %v2796 = vsub.f32 %v2604, %v2687
    %v2797 = vsub.f32 %v2605, %v2689
    %v2798 = vsub.f32 %v2606, %v2691
    %v2799 = vsub.f32 %v2607, %v2693
    %v2800 = vsub.f32 %v2608, %v2695
    %v2801 = vsub.f32 %v2609, %v2697
    %v2802 = vsub.f32 %v2610, %v2699
    %v2803 = vsub.f32 %v2611, %v2701
    %v2804 = vsub.f32 %v2612, %v2703
    %v2805 = vsub.f32 %v2613, %v2705
    %v2806 = vsub.f32 %v2614, %v2707
    %v2807 = vsub.f32 %v2615, %v2709
    %v2808 = vsub.f32 %v2616, %v2711
    %v2809 = vsub.f32 %v2617, %v2713
    %v2810 = vsub.f32 %v2618, %v2715
    %v2811 = vsub.f32 %v2619, %v2717
    %v2812 = vsub.f32 %v2620, %v2719
    %v2813 = vsub.f32 %v2621, %v2721
    %v2814 = vsub.f32 %v2622, %v2723
    %v2815 = vsub.f32 %v2623, %v2725
    %v2816 = vsub.f32 %v2624, %v2727
    %v2817 = vsub.f32 %v2625, %v2729
    %v2818 = vsub.f32 %v2626, %v2731
    %v2819 = vsub.f32 %v2627, %v2733
    %v2820 = vsub.f32 %v2628, %v2735
    %v2821 = vsub.f32 %v2629, %v2737
    %v2822 = vsub.f32 %v2630, %v2739
    %v2823 = vsub.f32 %v2631, %v2741
    %v2824 = vsub.f32 %v2632, %v2743
    %v2825 = vsub.f32 %v2633, %v2745
    %v2826 = vsub.f32 %v2634, %v2747
    %v2827 = vsub.f32 %v2635, %v2749
    %v2828 = vsub.f32 %v2636, %v2751
    %v2829 = vsub.f32 %v2637, %v2753
    %v2830 = vsub.f32 %v2638, %v2755
    %v2831 = vsub.f32 %v2639, %v2757
    %v2832 = vsub.f32 %v2640, %v2759
    %v2833 = vsub.f32 %v2641, %v2761
    %v2834 = vsub.f32 %v2642, %v2763
    %v2835 = vsub.f32 %v2643, %v2765
    %v2836 = vsub.f32 %v2644, %v2767
    %v2837 = vsub.f32 %v2645, %v2769
    %v2838 = vsub.f32 %v2646, %v2771
    %v2839 = vsub.f32 %v2647, %v2773
    %v2840 = vsub.f32 %v2648, %v2775
    %v2841 = vsub.f32 %v2649, %v2777
    %v2842 = vmul.f32 %v2778, 1.442695
    %v2843 = vpow.pop %v2842
    %v2844 = vmul.f32 %v2779, 1.442695
    %v2845 = vpow.pop %v2844
    %v2846 = vmul.f32 %v2780, 1.442695
    %v2847 = vpow.pop %v2846
    %v2848 = vmul.f32 %v2781, 1.442695
    %v2849 = vpow.pop %v2848
    %v2850 = vmul.f32 %v2782, 1.442695
    %v2851 = vpow.pop %v2850
    %v2852 = vmul.f32 %v2783, 1.442695
    %v2853 = vpow.pop %v2852
    %v2854 = vmul.f32 %v2784, 1.442695
    %v2855 = vpow.pop %v2854
    %v2856 = vmul.f32 %v2785, 1.442695
    %v2857 = vpow.pop %v2856
    %v2858 = vmul.f32 %v2786, 1.442695
    %v2859 = vpow.pop %v2858
    %v2860 = vmul.f32 %v2787, 1.442695
    %v2861 = vpow.pop %v2860
    %v2862 = vmul.f32 %v2788, 1.442695
    %v2863 = vpow.pop %v2862
    %v2864 = vmul.f32 %v2789, 1.442695
    %v2865 = vpow.pop %v2864
    %v2866 = vmul.f32 %v2790, 1.442695
    %v2867 = vpow.pop %v2866
    %v2868 = vmul.f32 %v2791, 1.442695
    %v2869 = vpow.pop %v2868
    %v2870 = vmul.f32 %v2792, 1.442695
    %v2871 = vpow.pop %v2870
    %v2872 = vmul.f32 %v2793, 1.442695
    %v2873 = vpow.pop %v2872
    %v2874 = vmul.f32 %v2794, 1.442695
    %v2875 = vpow.pop %v2874
    %v2876 = vmul.f32 %v2795, 1.442695
    %v2877 = vpow.pop %v2876
    %v2878 = vmul.f32 %v2796, 1.442695
    %v2879 = vpow.pop %v2878
    %v2880 = vmul.f32 %v2797, 1.442695
    %v2881 = vpow.pop %v2880
    %v2882 = vmul.f32 %v2798, 1.442695
    %v2883 = vpow.pop %v2882
    %v2884 = vmul.f32 %v2799, 1.442695
    %v2885 = vpow.pop %v2884
    %v2886 = vmul.f32 %v2800, 1.442695
    %v2887 = vpow.pop %v2886
    %v2888 = vmul.f32 %v2801, 1.442695
    %v2889 = vpow.pop %v2888
    %v2890 = vmul.f32 %v2802, 1.442695
    %v2891 = vpow.pop %v2890
    %v2892 = vmul.f32 %v2803, 1.442695
    %v2893 = vpow.pop %v2892
    %v2894 = vmul.f32 %v2804, 1.442695
    %v2895 = vpow.pop %v2894
    %v2896 = vmul.f32 %v2805, 1.442695
    %v2897 = vpow.pop %v2896
    %v2898 = vmul.f32 %v2806, 1.442695
    %v2899 = vpow.pop %v2898
    %v2900 = vmul.f32 %v2807, 1.442695
    %v2901 = vpow.pop %v2900
    %v2902 = vmul.f32 %v2808, 1.442695
    %v2903 = vpow.pop %v2902
    %v2904 = vmul.f32 %v2809, 1.442695
    %v2905 = vpow.pop %v2904
    %v2906 = vmul.f32 %v2810, 1.442695
    %v2907 = vpow.pop %v2906
    %v2908 = vmul.f32 %v2811, 1.442695
    %v2909 = vpow.pop %v2908
    %v2910 = vmul.f32 %v2812, 1.442695
    %v2911 = vpow.pop %v2910
    %v2912 = vmul.f32 %v2813, 1.442695
    %v2913 = vpow.pop %v2912
    %v2914 = vmul.f32 %v2814, 1.442695
    %v2915 = vpow.pop %v2914
    %v2916 = vmul.f32 %v2815, 1.442695
    %v2917 = vpow.pop %v2916
    %v2918 = vmul.f32 %v2816, 1.442695
    %v2919 = vpow.pop %v2918
    %v2920 = vmul.f32 %v2817, 1.442695
    %v2921 = vpow.pop %v2920
    %v2922 = vmul.f32 %v2818, 1.442695
    %v2923 = vpow.pop %v2922
    %v2924 = vmul.f32 %v2819, 1.442695
    %v2925 = vpow.pop %v2924
    %v2926 = vmul.f32 %v2820, 1.442695
    %v2927 = vpow.pop %v2926
    %v2928 = vmul.f32 %v2821, 1.442695
    %v2929 = vpow.pop %v2928
    %v2930 = vmul.f32 %v2822, 1.442695
    %v2931 = vpow.pop %v2930
    %v2932 = vmul.f32 %v2823, 1.442695
    %v2933 = vpow.pop %v2932
    %v2934 = vmul.f32 %v2824, 1.442695
    %v2935 = vpow.pop %v2934
    %v2936 = vmul.f32 %v2825, 1.442695
    %v2937 = vpow.pop %v2936
    %v2938 = vmul.f32 %v2826, 1.442695
    %v2939 = vpow.pop %v2938
    %v2940 = vmul.f32 %v2827, 1.442695
    %v2941 = vpow.pop %v2940
    %v2942 = vmul.f32 %v2828, 1.442695
    %v2943 = vpow.pop %v2942
    %v2944 = vmul.f32 %v2829, 1.442695
    %v2945 = vpow.pop %v2944
    %v2946 = vmul.f32 %v2830, 1.442695
    %v2947 = vpow.pop %v2946
    %v2948 = vmul.f32 %v2831, 1.442695
    %v2949 = vpow.pop %v2948
    %v2950 = vmul.f32 %v2832, 1.442695
    %v2951 = vpow.pop %v2950
    %v2952 = vmul.f32 %v2833, 1.442695
    %v2953 = vpow.pop %v2952
    %v2954 = vmul.f32 %v2834, 1.442695
    %v2955 = vpow.pop %v2954
    %v2956 = vmul.f32 %v2835, 1.442695
    %v2957 = vpow.pop %v2956
    %v2958 = vmul.f32 %v2836, 1.442695
    %v2959 = vpow.pop %v2958
    %v2960 = vmul.f32 %v2837, 1.442695
    %v2961 = vpow.pop %v2960
    %v2962 = vmul.f32 %v2838, 1.442695
    %v2963 = vpow.pop %v2962
    %v2964 = vmul.f32 %v2839, 1.442695
    %v2965 = vpow.pop %v2964
    %v2966 = vmul.f32 %v2840, 1.442695
    %v2967 = vpow.pop %v2966
    %v2968 = vmul.f32 %v2841, 1.442695
    %v2969 = vpow.pop %v2968
    %2970 = vadd.xlane.f32.xlu0 %v2843
    %v2971 = vpop.xlane.xlu0 %2970
    %2972 = vadd.xlane.f32.xlu0 %v2845
    %v2973 = vpop.xlane.xlu0 %2972
    %2974 = vadd.xlane.f32.xlu0 %v2847
    %v2975 = vpop.xlane.xlu0 %2974
    %2976 = vadd.xlane.f32.xlu0 %v2849
    %v2977 = vpop.xlane.xlu0 %2976
    %2978 = vadd.xlane.f32.xlu0 %v2851
    %v2979 = vpop.xlane.xlu0 %2978
    %2980 = vadd.xlane.f32.xlu0 %v2853
    %v2981 = vpop.xlane.xlu0 %2980
    %2982 = vadd.xlane.f32.xlu0 %v2855
    %v2983 = vpop.xlane.xlu0 %2982
    %2984 = vadd.xlane.f32.xlu0 %v2857
    %v2985 = vpop.xlane.xlu0 %2984
    %2986 = vadd.xlane.f32.xlu0 %v2859
    %v2987 = vpop.xlane.xlu0 %2986
    %2988 = vadd.xlane.f32.xlu0 %v2861
    %v2989 = vpop.xlane.xlu0 %2988
    %2990 = vadd.xlane.f32.xlu0 %v2863
    %v2991 = vpop.xlane.xlu0 %2990
    %2992 = vadd.xlane.f32.xlu0 %v2865
    %v2993 = vpop.xlane.xlu0 %2992
    %2994 = vadd.xlane.f32.xlu0 %v2867
    %v2995 = vpop.xlane.xlu0 %2994
    %2996 = vadd.xlane.f32.xlu0 %v2869
    %v2997 = vpop.xlane.xlu0 %2996
    %2998 = vadd.xlane.f32.xlu0 %v2871
    %v2999 = vpop.xlane.xlu0 %2998
    %3000 = vadd.xlane.f32.xlu0 %v2873
    %v3001 = vpop.xlane.xlu0 %3000
    %3002 = vadd.xlane.f32.xlu0 %v2875
    %v3003 = vpop.xlane.xlu0 %3002
    %3004 = vadd.xlane.f32.xlu0 %v2877
    %v3005 = vpop.xlane.xlu0 %3004
    %3006 = vadd.xlane.f32.xlu0 %v2879
    %v3007 = vpop.xlane.xlu0 %3006
    %3008 = vadd.xlane.f32.xlu0 %v2881
    %v3009 = vpop.xlane.xlu0 %3008
    %3010 = vadd.xlane.f32.xlu0 %v2883
    %v3011 = vpop.xlane.xlu0 %3010
    %3012 = vadd.xlane.f32.xlu0 %v2885
    %v3013 = vpop.xlane.xlu0 %3012
    %3014 = vadd.xlane.f32.xlu0 %v2887
    %v3015 = vpop.xlane.xlu0 %3014
    %3016 = vadd.xlane.f32.xlu0 %v2889
    %v3017 = vpop.xlane.xlu0 %3016
    %3018 = vadd.xlane.f32.xlu0 %v2891
    %v3019 = vpop.xlane.xlu0 %3018
    %3020 = vadd.xlane.f32.xlu0 %v2893
    %v3021 = vpop.xlane.xlu0 %3020
    %3022 = vadd.xlane.f32.xlu0 %v2895
    %v3023 = vpop.xlane.xlu0 %3022
    %3024 = vadd.xlane.f32.xlu0 %v2897
    %v3025 = vpop.xlane.xlu0 %3024
    %3026 = vadd.xlane.f32.xlu0 %v2899
    %v3027 = vpop.xlane.xlu0 %3026
    %3028 = vadd.xlane.f32.xlu0 %v2901
    %v3029 = vpop.xlane.xlu0 %3028
    %3030 = vadd.xlane.f32.xlu0 %v2903
    %v3031 = vpop.xlane.xlu0 %3030
    %3032 = vadd.xlane.f32.xlu0 %v2905
    %v3033 = vpop.xlane.xlu0 %3032
    %3034 = vadd.xlane.f32.xlu0 %v2907
    %v3035 = vpop.xlane.xlu0 %3034
    %3036 = vadd.xlane.f32.xlu0 %v2909
    %v3037 = vpop.xlane.xlu0 %3036
    %3038 = vadd.xlane.f32.xlu0 %v2911
    %v3039 = vpop.xlane.xlu0 %3038
    %3040 = vadd.xlane.f32.xlu0 %v2913
    %v3041 = vpop.xlane.xlu0 %3040
    %3042 = vadd.xlane.f32.xlu0 %v2915
    %v3043 = vpop.xlane.xlu0 %3042
    %3044 = vadd.xlane.f32.xlu0 %v2917
    %v3045 = vpop.xlane.xlu0 %3044
    %3046 = vadd.xlane.f32.xlu0 %v2919
    %v3047 = vpop.xlane.xlu0 %3046
    %3048 = vadd.xlane.f32.xlu0 %v2921
    %v3049 = vpop.xlane.xlu0 %3048
    %3050 = vadd.xlane.f32.xlu0 %v2923
    %v3051 = vpop.xlane.xlu0 %3050
    %3052 = vadd.xlane.f32.xlu0 %v2925
    %v3053 = vpop.xlane.xlu0 %3052
    %3054 = vadd.xlane.f32.xlu0 %v2927
    %v3055 = vpop.xlane.xlu0 %3054
    %3056 = vadd.xlane.f32.xlu0 %v2929
    %v3057 = vpop.xlane.xlu0 %3056
    %3058 = vadd.xlane.f32.xlu0 %v2931
    %v3059 = vpop.xlane.xlu0 %3058
    %3060 = vadd.xlane.f32.xlu0 %v2933
    %v3061 = vpop.xlane.xlu0 %3060
    %3062 = vadd.xlane.f32.xlu0 %v2935
    %v3063 = vpop.xlane.xlu0 %3062
    %3064 = vadd.xlane.f32.xlu0 %v2937
    %v3065 = vpop.xlane.xlu0 %3064
    %3066 = vadd.xlane.f32.xlu0 %v2939
    %v3067 = vpop.xlane.xlu0 %3066
    %3068 = vadd.xlane.f32.xlu0 %v2941
    %v3069 = vpop.xlane.xlu0 %3068
    %3070 = vadd.xlane.f32.xlu0 %v2943
    %v3071 = vpop.xlane.xlu0 %3070
    %3072 = vadd.xlane.f32.xlu0 %v2945
    %v3073 = vpop.xlane.xlu0 %3072
    %3074 = vadd.xlane.f32.xlu0 %v2947
    %v3075 = vpop.xlane.xlu0 %3074
    %3076 = vadd.xlane.f32.xlu0 %v2949
    %v3077 = vpop.xlane.xlu0 %3076
    %3078 = vadd.xlane.f32.xlu0 %v2951
    %v3079 = vpop.xlane.xlu0 %3078
    %3080 = vadd.xlane.f32.xlu0 %v2953
    %v3081 = vpop.xlane.xlu0 %3080
    %3082 = vadd.xlane.f32.xlu0 %v2955
    %v3083 = vpop.xlane.xlu0 %3082
    %3084 = vadd.xlane.f32.xlu0 %v2957
    %v3085 = vpop.xlane.xlu0 %3084
    %3086 = vadd.xlane.f32.xlu0 %v2959
    %v3087 = vpop.xlane.xlu0 %3086
    %3088 = vadd.xlane.f32.xlu0 %v2961
    %v3089 = vpop.xlane.xlu0 %3088
    %3090 = vadd.xlane.f32.xlu0 %v2963
    %v3091 = vpop.xlane.xlu0 %3090
    %3092 = vadd.xlane.f32.xlu0 %v2965
    %v3093 = vpop.xlane.xlu0 %3092
    %3094 = vadd.xlane.f32.xlu0 %v2967
    %v3095 = vpop.xlane.xlu0 %3094
    %3096 = vadd.xlane.f32.xlu0 %v2969
    %v3097 = vpop.xlane.xlu0 %3096
    %v3098 = vrcp.pop %v2971
    %v3099 = vrcp.pop %v2973
    %v3100 = vrcp.pop %v2975
    %v3101 = vrcp.pop %v2977
    %v3102 = vrcp.pop %v2979
    %v3103 = vrcp.pop %v2981
    %v3104 = vrcp.pop %v2983
    %v3105 = vrcp.pop %v2985
    %v3106 = vrcp.pop %v2987
    %v3107 = vrcp.pop %v2989
    %v3108 = vrcp.pop %v2991
    %v3109 = vrcp.pop %v2993
    %v3110 = vrcp.pop %v2995
    %v3111 = vrcp.pop %v2997
    %v3112 = vrcp.pop %v2999
    %v3113 = vrcp.pop %v3001
    %v3114 = vrcp.pop %v3003
    %v3115 = vrcp.pop %v3005
    %v3116 = vrcp.pop %v3007
    %v3117 = vrcp.pop %v3009
    %v3118 = vrcp.pop %v3011
    %v3119 = vrcp.pop %v3013
    %v3120 = vrcp.pop %v3015
    %v3121 = vrcp.pop %v3017
    %v3122 = vrcp.pop %v3019
    %v3123 = vrcp.pop %v3021
    %v3124 = vrcp.pop %v3023
    %v3125 = vrcp.pop %v3025
    %v3126 = vrcp.pop %v3027
    %v3127 = vrcp.pop %v3029
    %v3128 = vrcp.pop %v3031
    %v3129 = vrcp.pop %v3033
    %v3130 = vrcp.pop %v3035
    %v3131 = vrcp.pop %v3037
    %v3132 = vrcp.pop %v3039
    %v3133 = vrcp.pop %v3041
    %v3134 = vrcp.pop %v3043
    %v3135 = vrcp.pop %v3045
    %v3136 = vrcp.pop %v3047
    %v3137 = vrcp.pop %v3049
    %v3138 = vrcp.pop %v3051
    %v3139 = vrcp.pop %v3053
    %v3140 = vrcp.pop %v3055
    %v3141 = vrcp.pop %v3057
    %v3142 = vrcp.pop %v3059
    %v3143 = vrcp.pop %v3061
    %v3144 = vrcp.pop %v3063
    %v3145 = vrcp.pop %v3065
    %v3146 = vrcp.pop %v3067
    %v3147 = vrcp.pop %v3069
    %v3148 = vrcp.pop %v3071
    %v3149 = vrcp.pop %v3073
    %v3150 = vrcp.pop %v3075
    %v3151 = vrcp.pop %v3077
    %v3152 = vrcp.pop %v3079
    %v3153 = vrcp.pop %v3081
    %v3154 = vrcp.pop %v3083
    %v3155 = vrcp.pop %v3085
    %v3156 = vrcp.pop %v3087
    %v3157 = vrcp.pop %v3089
    %v3158 = vrcp.pop %v3091
    %v3159 = vrcp.pop %v3093
    %v3160 = vrcp.pop %v3095
    %v3161 = vrcp.pop %v3097
    %v3162 = vmul.f32 %v2843, %v3098
    %v3163 = vmul.f32 %v2845, %v3099
    %v3164 = vmul.f32 %v2847, %v3100
    %v3165 = vmul.f32 %v2849, %v3101
    %v3166 = vmul.f32 %v2851, %v3102
    %v3167 = vmul.f32 %v2853, %v3103
    %v3168 = vmul.f32 %v2855, %v3104
    %v3169 = vmul.f32 %v2857, %v3105
    %v3170 = vmul.f32 %v2859, %v3106
    %v3171 = vmul.f32 %v2861, %v3107
    %v3172 = vmul.f32 %v2863, %v3108
    %v3173 = vmul.f32 %v2865, %v3109
    %v3174 = vmul.f32 %v2867, %v3110
    %v3175 = vmul.f32 %v2869, %v3111
    %v3176 = vmul.f32 %v2871, %v3112
    %v3177 = vmul.f32 %v2873, %v3113
    %v3178 = vmul.f32 %v2875, %v3114
    %v3179 = vmul.f32 %v2877, %v3115
    %v3180 = vmul.f32 %v2879, %v3116
    %v3181 = vmul.f32 %v2881, %v3117
    %v3182 = vmul.f32 %v2883, %v3118
    %v3183 = vmul.f32 %v2885, %v3119
    %v3184 = vmul.f32 %v2887, %v3120
    %v3185 = vmul.f32 %v2889, %v3121
    %v3186 = vmul.f32 %v2891, %v3122
    %v3187 = vmul.f32 %v2893, %v3123
    %v3188 = vmul.f32 %v2895, %v3124
    %v3189 = vmul.f32 %v2897, %v3125
    %v3190 = vmul.f32 %v2899, %v3126
    %v3191 = vmul.f32 %v2901, %v3127
    %v3192 = vmul.f32 %v2903, %v3128
    %v3193 = vmul.f32 %v2905, %v3129
    %v3194 = vmul.f32 %v2907, %v3130
    %v3195 = vmul.f32 %v2909, %v3131
    %v3196 = vmul.f32 %v2911, %v3132
    %v3197 = vmul.f32 %v2913, %v3133
    %v3198 = vmul.f32 %v2915, %v3134
    %v3199 = vmul.f32 %v2917, %v3135
    %v3200 = vmul.f32 %v2919, %v3136
    %v3201 = vmul.f32 %v2921, %v3137
    %v3202 = vmul.f32 %v2923, %v3138
    %v3203 = vmul.f32 %v2925, %v3139
    %v3204 = vmul.f32 %v2927, %v3140
    %v3205 = vmul.f32 %v2929, %v3141
    %v3206 = vmul.f32 %v2931, %v3142
    %v3207 = vmul.f32 %v2933, %v3143
    %v3208 = vmul.f32 %v2935, %v3144
    %v3209 = vmul.f32 %v2937, %v3145
    %v3210 = vmul.f32 %v2939, %v3146
    %v3211 = vmul.f32 %v2941, %v3147
    %v3212 = vmul.f32 %v2943, %v3148
    %v3213 = vmul.f32 %v2945, %v3149
    %v3214 = vmul.f32 %v2947, %v3150
    %v3215 = vmul.f32 %v2949, %v3151
    %v3216 = vmul.f32 %v2951, %v3152
    %v3217 = vmul.f32 %v2953, %v3153
    %v3218 = vmul.f32 %v2955, %v3154
    %v3219 = vmul.f32 %v2957, %v3155
    %v3220 = vmul.f32 %v2959, %v3156
    %v3221 = vmul.f32 %v2961, %v3157
    %v3222 = vmul.f32 %v2963, %v3158
    %v3223 = vmul.f32 %v2965, %v3159
    %v3224 = vmul.f32 %v2967, %v3160
    %v3225 = vmul.f32 %v2969, %v3161
    %v3226 = vpack.c.bf16 %v3163, %v3162
    %v3227 = vpack.c.bf16 %v3165, %v3164
    %v3228 = vpack.c.bf16 %v3167, %v3166
    %v3229 = vpack.c.bf16 %v3169, %v3168
    %v3230 = vpack.c.bf16 %v3171, %v3170
    %v3231 = vpack.c.bf16 %v3173, %v3172
    %v3232 = vpack.c.bf16 %v3175, %v3174
    %v3233 = vpack.c.bf16 %v3177, %v3176
    %v3234 = vpack.c.bf16 %v3179, %v3178
    %v3235 = vpack.c.bf16 %v3181, %v3180
    %v3236 = vpack.c.bf16 %v3183, %v3182
    %v3237 = vpack.c.bf16 %v3185, %v3184
    %v3238 = vpack.c.bf16 %v3187, %v3186
    %v3239 = vpack.c.bf16 %v3189, %v3188
    %v3240 = vpack.c.bf16 %v3191, %v3190
    %v3241 = vpack.c.bf16 %v3193, %v3192
    %v3242 = vpack.c.bf16 %v3195, %v3194
    %v3243 = vpack.c.bf16 %v3197, %v3196
    %v3244 = vpack.c.bf16 %v3199, %v3198
    %v3245 = vpack.c.bf16 %v3201, %v3200
    %v3246 = vpack.c.bf16 %v3203, %v3202
    %v3247 = vpack.c.bf16 %v3205, %v3204
    %v3248 = vpack.c.bf16 %v3207, %v3206
    %v3249 = vpack.c.bf16 %v3209, %v3208
    %v3250 = vpack.c.bf16 %v3211, %v3210
    %v3251 = vpack.c.bf16 %v3213, %v3212
    %v3252 = vpack.c.bf16 %v3215, %v3214
    %v3253 = vpack.c.bf16 %v3217, %v3216
    %v3254 = vpack.c.bf16 %v3219, %v3218
    %v3255 = vpack.c.bf16 %v3221, %v3220
    %v3256 = vpack.c.bf16 %v3223, %v3222
    %v3257 = vpack.c.bf16 %v3225, %v3224
    %3258 = vmatprep.subr.bf16.mxu0 0
    %3259 = vmatpush1.bf16.msra.mxu0 %v1435
    %3260 = vmatprep.subr.bf16.mxu0 0
    %3261 = vmatpush1.bf16.msra.mxu0 %v1434
    %3262 = vmatprep.subr.bf16.mxu0 0
    %3263 = vmatpush1.bf16.msra.mxu0 %v1433
    %3264 = vmatprep.subr.bf16.mxu0 0
    %3265 = vmatpush1.bf16.msra.mxu0 %v1432
    %3266 = vmatprep.subr.bf16.mxu0 0
    %3267 = vmatpush1.bf16.msra.mxu0 %v1431
    %3268 = vmatprep.subr.bf16.mxu0 0
    %3269 = vmatpush1.bf16.msra.mxu0 %v1430
    %3270 = vmatprep.subr.bf16.mxu0 0
    %3271 = vmatpush1.bf16.msra.mxu0 %v1429
    %3272 = vmatprep.subr.bf16.mxu0 0
    %3273 = vmatpush1.bf16.msra.mxu0 %v1428
    %3274 = vmatprep.subr.bf16.mxu0 0
    %3275 = vmatpush2.bf16.msra.mxu0 0
    %3276 = vmatprep.subr.bf16.mxu0 0
    %3277 = vmatpush2.bf16.msra.mxu0 0
    %3278 = vmatprep.subr.bf16.mxu0 0
    %3279 = vmatpush2.bf16.msra.mxu0 0
    %3280 = vmatprep.subr.bf16.mxu0 0
    %3281 = vmatpush2.bf16.msra.mxu0 0
    %3282 = vmatprep.subr.bf16.mxu0 0
    %3283 = vmatpush2.bf16.msra.mxu0 0
    %3284 = vmatprep.subr.bf16.mxu0 0
    %3285 = vmatpush2.bf16.msra.mxu0 0
    %3286 = vmatprep.subr.bf16.mxu0 0
    %3287 = vmatpush2.bf16.msra.mxu0 0
    %3288 = vmatprep.subr.bf16.mxu0 0
    %3289 = vmatpush2.bf16.msra.mxu0 0
    %3290 = vmatprep.mubr.bf16.mxu0 0
    %3291 = vmatmul.mubr.bf16.gmra.mxu0 %v3226
    %v3292 = vpop.f32.mrf.mxu0
    %v3293 = vadd.f32 0.0, %v3292
    %v3294 = vpop.f32.mrf.mxu0
    %v3295 = vpop.f32.mrf.mxu0
    %v3296 = vadd.f32 0.0, %v3295
    %v3297 = vpop.f32.mrf.mxu0
    %3298 = vmatprep.mubr.bf16.mxu0 0
    %3299 = vmatmul.mubr.bf16.gmra.mxu0 %v3227
    %v3300 = vpop.f32.mrf.mxu0
    %v3301 = vadd.f32 0.0, %v3300
    %v3302 = vpop.f32.mrf.mxu0
    %v3303 = vpop.f32.mrf.mxu0
    %v3304 = vadd.f32 0.0, %v3303
    %v3305 = vpop.f32.mrf.mxu0
    %3306 = vmatprep.mubr.bf16.mxu0 0
    %3307 = vmatmul.mubr.bf16.gmra.mxu0 %v3228
    %v3308 = vpop.f32.mrf.mxu0
    %v3309 = vadd.f32 0.0, %v3308
    %v3310 = vpop.f32.mrf.mxu0
    %v3311 = vpop.f32.mrf.mxu0
    %v3312 = vadd.f32 0.0, %v3311
    %v3313 = vpop.f32.mrf.mxu0
    %3314 = vmatprep.mubr.bf16.mxu0 0
    %3315 = vmatmul.mubr.bf16.gmra.mxu0 %v3229
    %v3316 = vpop.f32.mrf.mxu0
    %v3317 = vadd.f32 0.0, %v3316
    %v3318 = vpop.f32.mrf.mxu0
    %v3319 = vpop.f32.mrf.mxu0
    %v3320 = vadd.f32 0.0, %v3319
    %v3321 = vpop.f32.mrf.mxu0
    %3322 = vdwg.mxu0
    %3323 = vmatprep.subr.bf16.mxu0 0
    %3324 = vmatpush1.bf16.msra.mxu0 %v1635
    %3325 = vmatprep.subr.bf16.mxu0 0
    %3326 = vmatpush1.bf16.msra.mxu0 %v1633
    %3327 = vmatprep.subr.bf16.mxu0 0
    %3328 = vmatpush1.bf16.msra.mxu0 %v1631
    %3329 = vmatprep.subr.bf16.mxu0 0
    %3330 = vmatpush1.bf16.msra.mxu0 %v1629
    %3331 = vmatprep.subr.bf16.mxu0 0
    %3332 = vmatpush1.bf16.msra.mxu0 %v1627
    %3333 = vmatprep.subr.bf16.mxu0 0
    %3334 = vmatpush1.bf16.msra.mxu0 %v1625
    %3335 = vmatprep.subr.bf16.mxu0 0
    %3336 = vmatpush1.bf16.msra.mxu0 %v1623
    %3337 = vmatprep.subr.bf16.mxu0 0
    %3338 = vmatpush1.bf16.msra.mxu0 %v1621
    %3339 = vmatprep.subr.bf16.mxu0 0
    %3340 = vmatpush2.bf16.msra.mxu0 0
    %3341 = vmatprep.subr.bf16.mxu0 0
    %3342 = vmatpush2.bf16.msra.mxu0 0
    %3343 = vmatprep.subr.bf16.mxu0 0
    %3344 = vmatpush2.bf16.msra.mxu0 0
    %3345 = vmatprep.subr.bf16.mxu0 0
    %3346 = vmatpush2.bf16.msra.mxu0 0
    %3347 = vmatprep.subr.bf16.mxu0 0
    %3348 = vmatpush2.bf16.msra.mxu0 0
    %3349 = vmatprep.subr.bf16.mxu0 0
    %3350 = vmatpush2.bf16.msra.mxu0 0
    %3351 = vmatprep.subr.bf16.mxu0 0
    %3352 = vmatpush2.bf16.msra.mxu0 0
    %3353 = vmatprep.subr.bf16.mxu0 0
    %3354 = vmatpush2.bf16.msra.mxu0 0
    %3355 = vmatprep.mubr.bf16.mxu0 0
    %3356 = vmatmul.mubr.bf16.gmra.mxu0 %v3230
    %v3357 = vpop.f32.mrf.mxu0
    %v3358 = vadd.f32 0.0, %v3357
    %v3359 = vpop.f32.mrf.mxu0
    %v3360 = vpop.f32.mrf.mxu0
    %v3361 = vadd.f32 0.0, %v3360
    %v3362 = vpop.f32.mrf.mxu0
    %3363 = vmatprep.mubr.bf16.mxu0 0
    %3364 = vmatmul.mubr.bf16.gmra.mxu0 %v3231
    %v3365 = vpop.f32.mrf.mxu0
    %v3366 = vadd.f32 0.0, %v3365
    %v3367 = vpop.f32.mrf.mxu0
    %v3368 = vpop.f32.mrf.mxu0
    %v3369 = vadd.f32 0.0, %v3368
    %v3370 = vpop.f32.mrf.mxu0
    %3371 = vmatprep.mubr.bf16.mxu0 0
    %3372 = vmatmul.mubr.bf16.gmra.mxu0 %v3232
    %v3373 = vpop.f32.mrf.mxu0
    %v3374 = vadd.f32 0.0, %v3373
    %v3375 = vpop.f32.mrf.mxu0
    %v3376 = vpop.f32.mrf.mxu0
    %v3377 = vadd.f32 0.0, %v3376
    %v3378 = vpop.f32.mrf.mxu0
    %3379 = vmatprep.mubr.bf16.mxu0 0
    %3380 = vmatmul.mubr.bf16.gmra.mxu0 %v3233
    %v3381 = vpop.f32.mrf.mxu0
    %v3382 = vadd.f32 0.0, %v3381
    %v3383 = vpop.f32.mrf.mxu0
    %v3384 = vpop.f32.mrf.mxu0
    %v3385 = vadd.f32 0.0, %v3384
    %v3386 = vpop.f32.mrf.mxu0
    %3387 = vdwg.mxu0
    %3388 = vmatprep.subr.bf16.mxu0 0
    %3389 = vmatpush1.bf16.msra.mxu0 %v1659
    %3390 = vmatprep.subr.bf16.mxu0 0
    %3391 = vmatpush1.bf16.msra.mxu0 %v1657
    %3392 = vmatprep.subr.bf16.mxu0 0
    %3393 = vmatpush1.bf16.msra.mxu0 %v1655
    %3394 = vmatprep.subr.bf16.mxu0 0
    %3395 = vmatpush1.bf16.msra.mxu0 %v1653
    %3396 = vmatprep.subr.bf16.mxu0 0
    %3397 = vmatpush1.bf16.msra.mxu0 %v1651
    %3398 = vmatprep.subr.bf16.mxu0 0
    %3399 = vmatpush1.bf16.msra.mxu0 %v1649
    %3400 = vmatprep.subr.bf16.mxu0 0
    %3401 = vmatpush1.bf16.msra.mxu0 %v1647
    %3402 = vmatprep.subr.bf16.mxu0 0
    %3403 = vmatpush1.bf16.msra.mxu0 %v1645
    %3404 = vmatprep.subr.bf16.mxu0 0
    %3405 = vmatpush2.bf16.msra.mxu0 0
    %3406 = vmatprep.subr.bf16.mxu0 0
    %3407 = vmatpush2.bf16.msra.mxu0 0
    %3408 = vmatprep.subr.bf16.mxu0 0
    %3409 = vmatpush2.bf16.msra.mxu0 0
    %3410 = vmatprep.subr.bf16.mxu0 0
    %3411 = vmatpush2.bf16.msra.mxu0 0
    %3412 = vmatprep.subr.bf16.mxu0 0
    %3413 = vmatpush2.bf16.msra.mxu0 0
    %3414 = vmatprep.subr.bf16.mxu0 0
    %3415 = vmatpush2.bf16.msra.mxu0 0
    %3416 = vmatprep.subr.bf16.mxu0 0
    %3417 = vmatpush2.bf16.msra.mxu0 0
    %3418 = vmatprep.subr.bf16.mxu0 0
    %3419 = vmatpush2.bf16.msra.mxu0 0
    %3420 = vmatprep.mubr.bf16.mxu0 0
    %3421 = vmatmul.mubr.bf16.gmra.mxu0 %v3234
    %v3422 = vpop.f32.mrf.mxu0
    %v3423 = vadd.f32 0.0, %v3422
    %v3424 = vpop.f32.mrf.mxu0
    %v3425 = vpop.f32.mrf.mxu0
    %v3426 = vadd.f32 0.0, %v3425
    %v3427 = vpop.f32.mrf.mxu0
    %3428 = vmatprep.mubr.bf16.mxu0 0
    %3429 = vmatmul.mubr.bf16.gmra.mxu0 %v3235
    %v3430 = vpop.f32.mrf.mxu0
    %v3431 = vadd.f32 0.0, %v3430
    %v3432 = vpop.f32.mrf.mxu0
    %v3433 = vpop.f32.mrf.mxu0
    %v3434 = vadd.f32 0.0, %v3433
    %v3435 = vpop.f32.mrf.mxu0
    %3436 = vmatprep.mubr.bf16.mxu0 0
    %3437 = vmatmul.mubr.bf16.gmra.mxu0 %v3236
    %v3438 = vpop.f32.mrf.mxu0
    %v3439 = vadd.f32 0.0, %v3438
    %v3440 = vpop.f32.mrf.mxu0
    %v3441 = vpop.f32.mrf.mxu0
    %v3442 = vadd.f32 0.0, %v3441
    %v3443 = vpop.f32.mrf.mxu0
    %3444 = vmatprep.mubr.bf16.mxu0 0
    %3445 = vmatmul.mubr.bf16.gmra.mxu0 %v3237
    %v3446 = vpop.f32.mrf.mxu0
    %v3447 = vadd.f32 0.0, %v3446
    %v3448 = vpop.f32.mrf.mxu0
    %v3449 = vpop.f32.mrf.mxu0
    %v3450 = vadd.f32 0.0, %v3449
    %v3451 = vpop.f32.mrf.mxu0
    %3452 = vdwg.mxu0
    %3453 = vmatprep.subr.bf16.mxu0 0
    %3454 = vmatpush1.bf16.msra.mxu0 %v1683
    %3455 = vmatprep.subr.bf16.mxu0 0
    %3456 = vmatpush1.bf16.msra.mxu0 %v1681
    %3457 = vmatprep.subr.bf16.mxu0 0
    %3458 = vmatpush1.bf16.msra.mxu0 %v1679
    %3459 = vmatprep.subr.bf16.mxu0 0
    %3460 = vmatpush1.bf16.msra.mxu0 %v1677
    %3461 = vmatprep.subr.bf16.mxu0 0
    %3462 = vmatpush1.bf16.msra.mxu0 %v1675
    %3463 = vmatprep.subr.bf16.mxu0 0
    %3464 = vmatpush1.bf16.msra.mxu0 %v1673
    %3465 = vmatprep.subr.bf16.mxu0 0
    %3466 = vmatpush1.bf16.msra.mxu0 %v1671
    %3467 = vmatprep.subr.bf16.mxu0 0
    %3468 = vmatpush1.bf16.msra.mxu0 %v1669
    %3469 = vmatprep.subr.bf16.mxu0 0
    %3470 = vmatpush2.bf16.msra.mxu0 0
    %3471 = vmatprep.subr.bf16.mxu0 0
    %3472 = vmatpush2.bf16.msra.mxu0 0
    %3473 = vmatprep.subr.bf16.mxu0 0
    %3474 = vmatpush2.bf16.msra.mxu0 0
    %3475 = vmatprep.subr.bf16.mxu0 0
    %3476 = vmatpush2.bf16.msra.mxu0 0
    %3477 = vmatprep.subr.bf16.mxu0 0
    %3478 = vmatpush2.bf16.msra.mxu0 0
    %3479 = vmatprep.subr.bf16.mxu0 0
    %3480 = vmatpush2.bf16.msra.mxu0 0
    %3481 = vmatprep.subr.bf16.mxu0 0
    %3482 = vmatpush2.bf16.msra.mxu0 0
    %3483 = vmatprep.subr.bf16.mxu0 0
    %3484 = vmatpush2.bf16.msra.mxu0 0
    %3485 = vmatprep.mubr.bf16.mxu0 0
    %3486 = vmatmul.mubr.bf16.gmra.mxu0 %v3238
    %v3487 = vpop.f32.mrf.mxu0
    %v3488 = vadd.f32 0.0, %v3487
    %v3489 = vpop.f32.mrf.mxu0
    %v3490 = vpop.f32.mrf.mxu0
    %v3491 = vadd.f32 0.0, %v3490
    %v3492 = vpop.f32.mrf.mxu0
    %3493 = vmatprep.mubr.bf16.mxu0 0
    %3494 = vmatmul.mubr.bf16.gmra.mxu0 %v3239
    %v3495 = vpop.f32.mrf.mxu0
    %v3496 = vadd.f32 0.0, %v3495
    %v3497 = vpop.f32.mrf.mxu0
    %v3498 = vpop.f32.mrf.mxu0
    %v3499 = vadd.f32 0.0, %v3498
    %v3500 = vpop.f32.mrf.mxu0
    %3501 = vmatprep.mubr.bf16.mxu0 0
    %3502 = vmatmul.mubr.bf16.gmra.mxu0 %v3240
    %v3503 = vpop.f32.mrf.mxu0
    %v3504 = vadd.f32 0.0, %v3503
    %v3505 = vpop.f32.mrf.mxu0
    %v3506 = vpop.f32.mrf.mxu0
    %v3507 = vadd.f32 0.0, %v3506
    %v3508 = vpop.f32.mrf.mxu0
    %3509 = vmatprep.mubr.bf16.mxu0 0
    %3510 = vmatmul.mubr.bf16.gmra.mxu0 %v3241
    %v3511 = vpop.f32.mrf.mxu0
    %v3512 = vadd.f32 0.0, %v3511
    %v3513 = vpop.f32.mrf.mxu0
    %v3514 = vpop.f32.mrf.mxu0
    %v3515 = vadd.f32 0.0, %v3514
    %v3516 = vpop.f32.mrf.mxu0
    %3517 = vdwg.mxu0
    %3518 = vmatprep.subr.bf16.mxu0 0
    %3519 = vmatpush1.bf16.msra.mxu0 %v1443
    %3520 = vmatprep.subr.bf16.mxu0 0
    %3521 = vmatpush1.bf16.msra.mxu0 %v1442
    %3522 = vmatprep.subr.bf16.mxu0 0
    %3523 = vmatpush1.bf16.msra.mxu0 %v1441
    %3524 = vmatprep.subr.bf16.mxu0 0
    %3525 = vmatpush1.bf16.msra.mxu0 %v1440
    %3526 = vmatprep.subr.bf16.mxu0 0
    %3527 = vmatpush1.bf16.msra.mxu0 %v1439
    %3528 = vmatprep.subr.bf16.mxu0 0
    %3529 = vmatpush1.bf16.msra.mxu0 %v1438
    %3530 = vmatprep.subr.bf16.mxu0 0
    %3531 = vmatpush1.bf16.msra.mxu0 %v1437
    %3532 = vmatprep.subr.bf16.mxu0 0
    %3533 = vmatpush1.bf16.msra.mxu0 %v1436
    %3534 = vmatprep.subr.bf16.mxu0 0
    %3535 = vmatpush2.bf16.msra.mxu0 0
    %3536 = vmatprep.subr.bf16.mxu0 0
    %3537 = vmatpush2.bf16.msra.mxu0 0
    %3538 = vmatprep.subr.bf16.mxu0 0
    %3539 = vmatpush2.bf16.msra.mxu0 0
    %3540 = vmatprep.subr.bf16.mxu0 0
    %3541 = vmatpush2.bf16.msra.mxu0 0
    %3542 = vmatprep.subr.bf16.mxu0 0
    %3543 = vmatpush2.bf16.msra.mxu0 0
    %3544 = vmatprep.subr.bf16.mxu0 0
    %3545 = vmatpush2.bf16.msra.mxu0 0
    %3546 = vmatprep.subr.bf16.mxu0 0
    %3547 = vmatpush2.bf16.msra.mxu0 0
    %3548 = vmatprep.subr.bf16.mxu0 0
    %3549 = vmatpush2.bf16.msra.mxu0 0
    %3550 = vmatprep.mubr.bf16.mxu0 0
    %3551 = vmatmul.mubr.bf16.gmra.mxu0 %v3242
    %v3552 = vpop.f32.mrf.mxu0
    %v3553 = vadd.f32 0.0, %v3552
    %v3554 = vpop.f32.mrf.mxu0
    %v3555 = vpop.f32.mrf.mxu0
    %v3556 = vadd.f32 0.0, %v3555
    %v3557 = vpop.f32.mrf.mxu0
    %3558 = vmatprep.mubr.bf16.mxu0 0
    %3559 = vmatmul.mubr.bf16.gmra.mxu0 %v3243
    %v3560 = vpop.f32.mrf.mxu0
    %v3561 = vadd.f32 0.0, %v3560
    %v3562 = vpop.f32.mrf.mxu0
    %v3563 = vpop.f32.mrf.mxu0
    %v3564 = vadd.f32 0.0, %v3563
    %v3565 = vpop.f32.mrf.mxu0
    %3566 = vmatprep.mubr.bf16.mxu0 0
    %3567 = vmatmul.mubr.bf16.gmra.mxu0 %v3244
    %v3568 = vpop.f32.mrf.mxu0
    %v3569 = vadd.f32 0.0, %v3568
    %v3570 = vpop.f32.mrf.mxu0
    %v3571 = vpop.f32.mrf.mxu0
    %v3572 = vadd.f32 0.0, %v3571
    %v3573 = vpop.f32.mrf.mxu0
    %3574 = vmatprep.mubr.bf16.mxu0 0
    %3575 = vmatmul.mubr.bf16.gmra.mxu0 %v3245
    %v3576 = vpop.f32.mrf.mxu0
    %v3577 = vadd.f32 0.0, %v3576
    %v3578 = vpop.f32.mrf.mxu0
    %v3579 = vpop.f32.mrf.mxu0
    %v3580 = vadd.f32 0.0, %v3579
    %v3581 = vpop.f32.mrf.mxu0
    %3582 = vdwg.mxu0
    %3583 = vmatprep.subr.bf16.mxu0 0
    %3584 = vmatpush1.bf16.msra.mxu0 %v1715
    %3585 = vmatprep.subr.bf16.mxu0 0
    %3586 = vmatpush1.bf16.msra.mxu0 %v1713
    %3587 = vmatprep.subr.bf16.mxu0 0
    %3588 = vmatpush1.bf16.msra.mxu0 %v1711
    %3589 = vmatprep.subr.bf16.mxu0 0
    %3590 = vmatpush1.bf16.msra.mxu0 %v1709
    %3591 = vmatprep.subr.bf16.mxu0 0
    %3592 = vmatpush1.bf16.msra.mxu0 %v1707
    %3593 = vmatprep.subr.bf16.mxu0 0
    %3594 = vmatpush1.bf16.msra.mxu0 %v1705
    %3595 = vmatprep.subr.bf16.mxu0 0
    %3596 = vmatpush1.bf16.msra.mxu0 %v1703
    %3597 = vmatprep.subr.bf16.mxu0 0
    %3598 = vmatpush1.bf16.msra.mxu0 %v1701
    %3599 = vmatprep.subr.bf16.mxu0 0
    %3600 = vmatpush2.bf16.msra.mxu0 0
    %3601 = vmatprep.subr.bf16.mxu0 0
    %3602 = vmatpush2.bf16.msra.mxu0 0
    %3603 = vmatprep.subr.bf16.mxu0 0
    %3604 = vmatpush2.bf16.msra.mxu0 0
    %3605 = vmatprep.subr.bf16.mxu0 0
    %3606 = vmatpush2.bf16.msra.mxu0 0
    %3607 = vmatprep.subr.bf16.mxu0 0
    %3608 = vmatpush2.bf16.msra.mxu0 0
    %3609 = vmatprep.subr.bf16.mxu0 0
    %3610 = vmatpush2.bf16.msra.mxu0 0
    %3611 = vmatprep.subr.bf16.mxu0 0
    %3612 = vmatpush2.bf16.msra.mxu0 0
    %3613 = vmatprep.subr.bf16.mxu0 0
    %3614 = vmatpush2.bf16.msra.mxu0 0
    %3615 = vmatprep.mubr.bf16.mxu0 0
    %3616 = vmatmul.mubr.bf16.gmra.mxu0 %v3246
    %v3617 = vpop.f32.mrf.mxu0
    %v3618 = vadd.f32 0.0, %v3617
    %v3619 = vpop.f32.mrf.mxu0
    %v3620 = vpop.f32.mrf.mxu0
    %v3621 = vadd.f32 0.0, %v3620
    %v3622 = vpop.f32.mrf.mxu0
    %3623 = vmatprep.mubr.bf16.mxu0 0
    %3624 = vmatmul.mubr.bf16.gmra.mxu0 %v3247
    %v3625 = vpop.f32.mrf.mxu0
    %v3626 = vadd.f32 0.0, %v3625
    %v3627 = vpop.f32.mrf.mxu0
    %v3628 = vpop.f32.mrf.mxu0
    %v3629 = vadd.f32 0.0, %v3628
    %v3630 = vpop.f32.mrf.mxu0
    %3631 = vmatprep.mubr.bf16.mxu0 0
    %3632 = vmatmul.mubr.bf16.gmra.mxu0 %v3248
    %v3633 = vpop.f32.mrf.mxu0
    %v3634 = vadd.f32 0.0, %v3633
    %v3635 = vpop.f32.mrf.mxu0
    %v3636 = vpop.f32.mrf.mxu0
    %v3637 = vadd.f32 0.0, %v3636
    %v3638 = vpop.f32.mrf.mxu0
    %3639 = vmatprep.mubr.bf16.mxu0 0
    %3640 = vmatmul.mubr.bf16.gmra.mxu0 %v3249
    %v3641 = vpop.f32.mrf.mxu0
    %v3642 = vadd.f32 0.0, %v3641
    %v3643 = vpop.f32.mrf.mxu0
    %v3644 = vpop.f32.mrf.mxu0
    %v3645 = vadd.f32 0.0, %v3644
    %v3646 = vpop.f32.mrf.mxu0
    %3647 = vdwg.mxu0
    %3648 = vmatprep.subr.bf16.mxu0 0
    %3649 = vmatpush1.bf16.msra.mxu0 %v1739
    %3650 = vmatprep.subr.bf16.mxu0 0
    %3651 = vmatpush1.bf16.msra.mxu0 %v1737
    %3652 = vmatprep.subr.bf16.mxu0 0
    %3653 = vmatpush1.bf16.msra.mxu0 %v1735
    %3654 = vmatprep.subr.bf16.mxu0 0
    %3655 = vmatpush1.bf16.msra.mxu0 %v1733
    %3656 = vmatprep.subr.bf16.mxu0 0
    %3657 = vmatpush1.bf16.msra.mxu0 %v1731
    %3658 = vmatprep.subr.bf16.mxu0 0
    %3659 = vmatpush1.bf16.msra.mxu0 %v1729
    %3660 = vmatprep.subr.bf16.mxu0 0
    %3661 = vmatpush1.bf16.msra.mxu0 %v1727
    %3662 = vmatprep.subr.bf16.mxu0 0
    %3663 = vmatpush1.bf16.msra.mxu0 %v1725
    %3664 = vmatprep.subr.bf16.mxu0 0
    %3665 = vmatpush2.bf16.msra.mxu0 0
    %3666 = vmatprep.subr.bf16.mxu0 0
    %3667 = vmatpush2.bf16.msra.mxu0 0
    %3668 = vmatprep.subr.bf16.mxu0 0
    %3669 = vmatpush2.bf16.msra.mxu0 0
    %3670 = vmatprep.subr.bf16.mxu0 0
    %3671 = vmatpush2.bf16.msra.mxu0 0
    %3672 = vmatprep.subr.bf16.mxu0 0
    %3673 = vmatpush2.bf16.msra.mxu0 0
    %3674 = vmatprep.subr.bf16.mxu0 0
    %3675 = vmatpush2.bf16.msra.mxu0 0
    %3676 = vmatprep.subr.bf16.mxu0 0
    %3677 = vmatpush2.bf16.msra.mxu0 0
    %3678 = vmatprep.subr.bf16.mxu0 0
    %3679 = vmatpush2.bf16.msra.mxu0 0
    %3680 = vmatprep.mubr.bf16.mxu0 0
    %3681 = vmatmul.mubr.bf16.gmra.mxu0 %v3250
    %v3682 = vpop.f32.mrf.mxu0
    %v3683 = vadd.f32 0.0, %v3682
    %v3684 = vpop.f32.mrf.mxu0
    %v3685 = vpop.f32.mrf.mxu0
    %v3686 = vadd.f32 0.0, %v3685
    %v3687 = vpop.f32.mrf.mxu0
    %3688 = vmatprep.mubr.bf16.mxu0 0
    %3689 = vmatmul.mubr.bf16.gmra.mxu0 %v3251
    %v3690 = vpop.f32.mrf.mxu0
    %v3691 = vadd.f32 0.0, %v3690
    %v3692 = vpop.f32.mrf.mxu0
    %v3693 = vpop.f32.mrf.mxu0
    %v3694 = vadd.f32 0.0, %v3693
    %v3695 = vpop.f32.mrf.mxu0
    %3696 = vmatprep.mubr.bf16.mxu0 0
    %3697 = vmatmul.mubr.bf16.gmra.mxu0 %v3252
    %v3698 = vpop.f32.mrf.mxu0
    %v3699 = vadd.f32 0.0, %v3698
    %v3700 = vpop.f32.mrf.mxu0
    %v3701 = vpop.f32.mrf.mxu0
    %v3702 = vadd.f32 0.0, %v3701
    %v3703 = vpop.f32.mrf.mxu0
    %3704 = vmatprep.mubr.bf16.mxu0 0
    %3705 = vmatmul.mubr.bf16.gmra.mxu0 %v3253
    %v3706 = vpop.f32.mrf.mxu0
    %v3707 = vadd.f32 0.0, %v3706
    %v3708 = vpop.f32.mrf.mxu0
    %v3709 = vpop.f32.mrf.mxu0
    %v3710 = vadd.f32 0.0, %v3709
    %v3711 = vpop.f32.mrf.mxu0
    %3712 = vdwg.mxu0
    %3713 = vmatprep.subr.bf16.mxu0 0
    %3714 = vmatpush1.bf16.msra.mxu0 %v1763
    %3715 = vmatprep.subr.bf16.mxu0 0
    %3716 = vmatpush1.bf16.msra.mxu0 %v1761
    %3717 = vmatprep.subr.bf16.mxu0 0
    %3718 = vmatpush1.bf16.msra.mxu0 %v1759
    %3719 = vmatprep.subr.bf16.mxu0 0
    %3720 = vmatpush1.bf16.msra.mxu0 %v1757
    %3721 = vmatprep.subr.bf16.mxu0 0
    %3722 = vmatpush1.bf16.msra.mxu0 %v1755
    %3723 = vmatprep.subr.bf16.mxu0 0
    %3724 = vmatpush1.bf16.msra.mxu0 %v1753
    %3725 = vmatprep.subr.bf16.mxu0 0
    %3726 = vmatpush1.bf16.msra.mxu0 %v1751
    %3727 = vmatprep.subr.bf16.mxu0 0
    %3728 = vmatpush1.bf16.msra.mxu0 %v1749
    %3729 = vmatprep.subr.bf16.mxu0 0
    %3730 = vmatpush2.bf16.msra.mxu0 0
    %3731 = vmatprep.subr.bf16.mxu0 0
    %3732 = vmatpush2.bf16.msra.mxu0 0
    %3733 = vmatprep.subr.bf16.mxu0 0
    %3734 = vmatpush2.bf16.msra.mxu0 0
    %3735 = vmatprep.subr.bf16.mxu0 0
    %3736 = vmatpush2.bf16.msra.mxu0 0
    %3737 = vmatprep.subr.bf16.mxu0 0
    %3738 = vmatpush2.bf16.msra.mxu0 0
    %3739 = vmatprep.subr.bf16.mxu0 0
    %3740 = vmatpush2.bf16.msra.mxu0 0
    %3741 = vmatprep.subr.bf16.mxu0 0
    %3742 = vmatpush2.bf16.msra.mxu0 0
    %3743 = vmatprep.subr.bf16.mxu0 0
    %3744 = vmatpush2.bf16.msra.mxu0 0
    %3745 = vmatprep.mubr.bf16.mxu0 0
    %3746 = vmatmul.mubr.bf16.gmra.mxu0 %v3254
    %v3747 = vpop.f32.mrf.mxu0
    %v3748 = vadd.f32 0.0, %v3747
    %v3749 = vpop.f32.mrf.mxu0
    %v3750 = vpop.f32.mrf.mxu0
    %v3751 = vadd.f32 0.0, %v3750
    %v3752 = vpop.f32.mrf.mxu0
    %3753 = vmatprep.mubr.bf16.mxu0 0
    %3754 = vmatmul.mubr.bf16.gmra.mxu0 %v3255
    %v3755 = vpop.f32.mrf.mxu0
    %v3756 = vadd.f32 0.0, %v3755
    %v3757 = vpop.f32.mrf.mxu0
    %v3758 = vpop.f32.mrf.mxu0
    %v3759 = vadd.f32 0.0, %v3758
    %v3760 = vpop.f32.mrf.mxu0
    %3761 = vmatprep.mubr.bf16.mxu0 0
    %3762 = vmatmul.mubr.bf16.gmra.mxu0 %v3256
    %v3763 = vpop.f32.mrf.mxu0
    %v3764 = vadd.f32 0.0, %v3763
    %v3765 = vpop.f32.mrf.mxu0
    %v3766 = vpop.f32.mrf.mxu0
    %v3767 = vadd.f32 0.0, %v3766
    %v3768 = vpop.f32.mrf.mxu0
    %3769 = vmatprep.mubr.bf16.mxu0 0
    %3770 = vmatmul.mubr.bf16.gmra.mxu0 %v3257
    %v3771 = vpop.f32.mrf.mxu0
    %v3772 = vadd.f32 0.0, %v3771
    %v3773 = vpop.f32.mrf.mxu0
    %v3774 = vpop.f32.mrf.mxu0
    %v3775 = vadd.f32 0.0, %v3774
    %v3776 = vpop.f32.mrf.mxu0
    %3777 = vdwg.mxu0
    %v3778 = vpack.c.bf16 %v3296, %v3293
    %v3779 = vpack.c.bf16 %v3304, %v3301
    %v3780 = vpack.c.bf16 %v3312, %v3309
    %v3781 = vpack.c.bf16 %v3320, %v3317
    %v3782 = vpack.c.bf16 %v3361, %v3358
    %v3783 = vpack.c.bf16 %v3369, %v3366
    %v3784 = vpack.c.bf16 %v3377, %v3374
    %v3785 = vpack.c.bf16 %v3385, %v3382
    %v3786 = vpack.c.bf16 %v3426, %v3423
    %v3787 = vpack.c.bf16 %v3434, %v3431
    %v3788 = vpack.c.bf16 %v3442, %v3439
    %v3789 = vpack.c.bf16 %v3450, %v3447
    %v3790 = vpack.c.bf16 %v3491, %v3488
    %v3791 = vpack.c.bf16 %v3499, %v3496
    %v3792 = vpack.c.bf16 %v3507, %v3504
    %v3793 = vpack.c.bf16 %v3515, %v3512
    %v3794 = vpack.c.bf16 %v3556, %v3553
    %v3795 = vpack.c.bf16 %v3564, %v3561
    %v3796 = vpack.c.bf16 %v3572, %v3569
    %v3797 = vpack.c.bf16 %v3580, %v3577
    %v3798 = vpack.c.bf16 %v3621, %v3618
    %v3799 = vpack.c.bf16 %v3629, %v3626
    %v3800 = vpack.c.bf16 %v3637, %v3634
    %v3801 = vpack.c.bf16 %v3645, %v3642
    %v3802 = vpack.c.bf16 %v3686, %v3683
    %v3803 = vpack.c.bf16 %v3694, %v3691
    %v3804 = vpack.c.bf16 %v3702, %v3699
    %v3805 = vpack.c.bf16 %v3710, %v3707
    %v3806 = vpack.c.bf16 %v3751, %v3748
    %v3807 = vpack.c.bf16 %v3759, %v3756
    %v3808 = vpack.c.bf16 %v3767, %v3764
    %v3809 = vpack.c.bf16 %v3775, %v3772
    %3814 = vrot.lane.b32.xlu0 %v3782, 32
    %v3815 = vpop.permute.xlu0 %3814
    %3816 = vrot.lane.b32.xlu0 %v3783, 32
    %v3817 = vpop.permute.xlu0 %3816
    %3818 = vrot.lane.b32.xlu0 %v3784, 32
    %v3819 = vpop.permute.xlu0 %3818
    %3820 = vrot.lane.b32.xlu0 %v3785, 32
    %v3821 = vpop.permute.xlu0 %3820
    %3826 = vrot.lane.b32.xlu0 %v3786, 64
    %v3827 = vpop.permute.xlu0 %3826
    %3828 = vrot.lane.b32.xlu0 %v3787, 64
    %v3829 = vpop.permute.xlu0 %3828
    %3830 = vrot.lane.b32.xlu0 %v3788, 64
    %v3831 = vpop.permute.xlu0 %3830
    %3832 = vrot.lane.b32.xlu0 %v3789, 64
    %v3833 = vpop.permute.xlu0 %3832
    %3838 = vrot.lane.b32.xlu0 %v3790, 96
    %v3839 = vpop.permute.xlu0 %3838
    %3840 = vrot.lane.b32.xlu0 %v3791, 96
    %v3841 = vpop.permute.xlu0 %3840
    %3842 = vrot.lane.b32.xlu0 %v3792, 96
    %v3843 = vpop.permute.xlu0 %3842
    %3844 = vrot.lane.b32.xlu0 %v3793, 96
    %v3845 = vpop.permute.xlu0 %3844
    %v3848 = vsel %vm1772, %v3778, %v3815
    %v3851 = vsel %vm1772, %v3779, %v3817
    %v3854 = vsel %vm1772, %v3780, %v3819
    %v3857 = vsel %vm1772, %v3781, %v3821
    %vm3858 = vcmask 523264
    %v3860 = vsel %vm3858, %v3848, %v3827
    %v3862 = vsel %vm3858, %v3851, %v3829
    %v3864 = vsel %vm3858, %v3854, %v3831
    %v3866 = vsel %vm3858, %v3857, %v3833
    %vm3867 = vcmask 785408
    %v3869 = vsel %vm3867, %v3860, %v3839
    %v3872 = vsel %vm3867, %v3862, %v3841
    %v3875 = vsel %vm3867, %v3864, %v3843
    %v3878 = vsel %vm3867, %v3866, %v3845
    %3884 = vrot.lane.b32.xlu0 %v3798, 32
    %v3885 = vpop.permute.xlu0 %3884
    %3886 = vrot.lane.b32.xlu0 %v3799, 32
    %v3887 = vpop.permute.xlu0 %3886
    %3888 = vrot.lane.b32.xlu0 %v3800, 32
    %v3889 = vpop.permute.xlu0 %3888
    %3890 = vrot.lane.b32.xlu0 %v3801, 32
    %v3891 = vpop.permute.xlu0 %3890
    %3896 = vrot.lane.b32.xlu0 %v3802, 64
    %v3897 = vpop.permute.xlu0 %3896
    %3898 = vrot.lane.b32.xlu0 %v3803, 64
    %v3899 = vpop.permute.xlu0 %3898
    %3900 = vrot.lane.b32.xlu0 %v3804, 64
    %v3901 = vpop.permute.xlu0 %3900
    %3902 = vrot.lane.b32.xlu0 %v3805, 64
    %v3903 = vpop.permute.xlu0 %3902
    %3908 = vrot.lane.b32.xlu0 %v3806, 96
    %v3909 = vpop.permute.xlu0 %3908
    %3910 = vrot.lane.b32.xlu0 %v3807, 96
    %v3911 = vpop.permute.xlu0 %3910
    %3912 = vrot.lane.b32.xlu0 %v3808, 96
    %v3913 = vpop.permute.xlu0 %3912
    %3914 = vrot.lane.b32.xlu0 %v3809, 96
    %v3915 = vpop.permute.xlu0 %3914
    %v3918 = vsel %vm1772, %v3794, %v3885
    %v3921 = vsel %vm1772, %v3795, %v3887
    %v3924 = vsel %vm1772, %v3796, %v3889
    %v3927 = vsel %vm1772, %v3797, %v3891
    %v3929 = vsel %vm3858, %v3918, %v3897
    %v3931 = vsel %vm3858, %v3921, %v3899
    %v3933 = vsel %vm3858, %v3924, %v3901
    %v3935 = vsel %vm3858, %v3927, %v3903
    %v3937 = vsel %vm3867, %v3929, %v3909
    %v3940 = vsel %vm3867, %v3931, %v3911
    %v3943 = vsel %vm3867, %v3933, %v3913
    %v3946 = vsel %vm3867, %v3935, %v3915
    %v3948 = vld [vmem:[#allocation14] sm:$0xf]
    %v3949 = vld [vmem:[#allocation14 + $0x4] sm:$0xf]
    %v3950 = vld [vmem:[#allocation14 + $0x8] sm:$0xf]
    %v3951 = vld [vmem:[#allocation14 + $0xc] sm:$0xf]
    %v3952 = vld [vmem:[#allocation14 + $0x10] sm:$0xf]
    %v3953 = vld [vmem:[#allocation14 + $0x14] sm:$0xf]
    %v3954 = vld [vmem:[#allocation14 + $0x18] sm:$0xf]
    %v3955 = vld [vmem:[#allocation14 + $0x1c] sm:$0xf]
    %v3956 = vld [vmem:[#allocation14 + $0x20] sm:$0xf]
    %v3957 = vld [vmem:[#allocation14 + $0x24] sm:$0xf]
    %v3958 = vld [vmem:[#allocation14 + $0x28] sm:$0xf]
    %v3959 = vld [vmem:[#allocation14 + $0x2c] sm:$0xf]
    %v3960 = vld [vmem:[#allocation14 + $0x30] sm:$0xf]
    %v3961 = vld [vmem:[#allocation14 + $0x34] sm:$0xf]
    %v3962 = vld [vmem:[#allocation14 + $0x38] sm:$0xf]
    %v3963 = vld [vmem:[#allocation14 + $0x3c] sm:$0xf]
    %v3964 = vld [vmem:[%s10] sm:$0x1]
    %v3966 = vlaneseq
    %v3967 = vshrl.u32 %v3966, 7
    %v3968 = vsub.s32 0, %v3967
    %v3969 = vrot.slane %v3964, %v3968
    %v3987 = vunpack.c.l.b16 %v3948
    %v3988 = vunpack.c.l.b16 %v3949
    %v3989 = vunpack.c.l.b16 %v3950
    %v3990 = vunpack.c.l.b16 %v3951
    %v3991 = vunpack.c.l.b16 %v3952
    %v3992 = vunpack.c.l.b16 %v3953
    %v3993 = vunpack.c.l.b16 %v3954
    %v3994 = vunpack.c.l.b16 %v3955
    %v3995 = vunpack.c.l.b16 %v3956
    %v3996 = vunpack.c.l.b16 %v3957
    %v3997 = vunpack.c.l.b16 %v3958
    %v3998 = vunpack.c.l.b16 %v3959
    %v3999 = vunpack.c.l.b16 %v3960
    %v4000 = vunpack.c.l.b16 %v3961
    %v4001 = vunpack.c.l.b16 %v3962
    %v4002 = vunpack.c.l.b16 %v3963
    %v4003 = vpack.c.b16 %v3988, %v3987
    %v4004 = vpack.c.b16 %v3990, %v3989
    %v4005 = vpack.c.b16 %v3992, %v3991
    %v4006 = vpack.c.b16 %v3994, %v3993
    %v4007 = vpack.c.b16 %v3996, %v3995
    %v4008 = vpack.c.b16 %v3998, %v3997
    %v4009 = vpack.c.b16 %v4000, %v3999
    %v4010 = vpack.c.b16 %v4002, %v4001
    %4019 = vmatprep.subr.bf16.mxu0 0
    %4020 = vmatpush1.bf16.msra.mxu0 %v4010
    %4021 = vmatprep.subr.bf16.mxu0 0
    %4022 = vmatpush1.bf16.msra.mxu0 %v4009
    %4023 = vmatprep.subr.bf16.mxu0 0
    %4024 = vmatpush1.bf16.msra.mxu0 %v4008
    %4025 = vmatprep.subr.bf16.mxu0 0
    %4026 = vmatpush1.bf16.msra.mxu0 %v4007
    %4027 = vmatprep.subr.bf16.mxu0 0
    %4028 = vmatpush1.bf16.msra.mxu0 %v4006
    %4029 = vmatprep.subr.bf16.mxu0 0
    %4030 = vmatpush1.bf16.msra.mxu0 %v4005
    %4031 = vmatprep.subr.bf16.mxu0 0
    %4032 = vmatpush1.bf16.msra.mxu0 %v4004
    %4033 = vmatprep.subr.bf16.mxu0 0
    %4034 = vmatpush1.bf16.msra.mxu0 %v4003
    %4035 = vmatprep.subr.bf16.mxu0 0
    %4036 = vmatpush2.bf16.msra.mxu0 0
    %4037 = vmatprep.subr.bf16.mxu0 0
    %4038 = vmatpush2.bf16.msra.mxu0 0
    %4039 = vmatprep.subr.bf16.mxu0 0
    %4040 = vmatpush2.bf16.msra.mxu0 0
    %4041 = vmatprep.subr.bf16.mxu0 0
    %4042 = vmatpush2.bf16.msra.mxu0 0
    %4043 = vmatprep.subr.bf16.mxu0 0
    %4044 = vmatpush2.bf16.msra.mxu0 0
    %4045 = vmatprep.subr.bf16.mxu0 0
    %4046 = vmatpush2.bf16.msra.mxu0 0
    %4047 = vmatprep.subr.bf16.mxu0 0
    %4048 = vmatpush2.bf16.msra.mxu0 0
    %4049 = vmatprep.subr.bf16.mxu0 0
    %4050 = vmatpush2.bf16.msra.mxu0 0
    %4051 = vmatprep.mubr.bf16.mxu0 0
    %4052 = vmatmul.mubr.bf16.gmra.mxu0 %v3869
    %v4053 = vpop.f32.mrf.mxu0
    %v4054 = vadd.f32 %v3969, %v4053
    %v4055 = vpop.f32.mrf.mxu0
    %v4056 = vpop.f32.mrf.mxu0
    %v4057 = vadd.f32 %v3969, %v4056
    %v4058 = vpop.f32.mrf.mxu0
    %4059 = vmatprep.mubr.bf16.mxu0 0
    %4060 = vmatmul.mubr.bf16.gmra.mxu0 %v3872
    %v4061 = vpop.f32.mrf.mxu0
    %v4062 = vadd.f32 %v3969, %v4061
    %v4063 = vpop.f32.mrf.mxu0
    %v4064 = vpop.f32.mrf.mxu0
    %v4065 = vadd.f32 %v3969, %v4064
    %v4066 = vpop.f32.mrf.mxu0
    %4067 = vmatprep.mubr.bf16.mxu0 0
    %4068 = vmatmul.mubr.bf16.gmra.mxu0 %v3875
    %v4069 = vpop.f32.mrf.mxu0
    %v4070 = vadd.f32 %v3969, %v4069
    %v4071 = vpop.f32.mrf.mxu0
    %v4072 = vpop.f32.mrf.mxu0
    %v4073 = vadd.f32 %v3969, %v4072
    %v4074 = vpop.f32.mrf.mxu0
    %4075 = vmatprep.mubr.bf16.mxu0 0
    %4076 = vmatmul.mubr.bf16.gmra.mxu0 %v3878
    %v4077 = vpop.f32.mrf.mxu0
    %v4078 = vadd.f32 %v3969, %v4077
    %v4079 = vpop.f32.mrf.mxu0
    %v4080 = vpop.f32.mrf.mxu0
    %v4081 = vadd.f32 %v3969, %v4080
    %v4082 = vpop.f32.mrf.mxu0
    %4083 = vmatprep.mubr.bf16.mxu0 0
    %4084 = vmatmul.mubr.bf16.gmra.mxu0 %v3937
    %v4085 = vpop.f32.mrf.mxu0
    %v4086 = vadd.f32 %v3969, %v4085
    %v4087 = vpop.f32.mrf.mxu0
    %v4088 = vpop.f32.mrf.mxu0
    %v4089 = vadd.f32 %v3969, %v4088
    %v4090 = vpop.f32.mrf.mxu0
    %4091 = vmatprep.mubr.bf16.mxu0 0
    %4092 = vmatmul.mubr.bf16.gmra.mxu0 %v3940
    %v4093 = vpop.f32.mrf.mxu0
    %v4094 = vadd.f32 %v3969, %v4093
    %v4095 = vpop.f32.mrf.mxu0
    %v4096 = vpop.f32.mrf.mxu0
    %v4097 = vadd.f32 %v3969, %v4096
    %v4098 = vpop.f32.mrf.mxu0
    %4099 = vmatprep.mubr.bf16.mxu0 0
    %4100 = vmatmul.mubr.bf16.gmra.mxu0 %v3943
    %v4101 = vpop.f32.mrf.mxu0
    %v4102 = vadd.f32 %v3969, %v4101
    %v4103 = vpop.f32.mrf.mxu0
    %v4104 = vpop.f32.mrf.mxu0
    %v4105 = vadd.f32 %v3969, %v4104
    %v4106 = vpop.f32.mrf.mxu0
    %4107 = vmatprep.mubr.bf16.mxu0 0
    %4108 = vmatmul.mubr.bf16.gmra.mxu0 %v3946
    %v4109 = vpop.f32.mrf.mxu0
    %v4110 = vadd.f32 %v3969, %v4109
    %v4111 = vpop.f32.mrf.mxu0
    %v4112 = vpop.f32.mrf.mxu0
    %v4113 = vadd.f32 %v3969, %v4112
    %v4114 = vpop.f32.mrf.mxu0
    %4115 = vdwg.mxu0
    %v4116 = vld [vmem:[#allocation2] sm:$0xff]
    %v4117 = vld [vmem:[#allocation2 + $0x8] sm:$0xff]
    %v4118 = vld [vmem:[#allocation2 + $0x10] sm:$0xff]
    %v4119 = vld [vmem:[#allocation2 + $0x18] sm:$0xff]
    %v4120 = vld [vmem:[#allocation2 + $0x20] sm:$0xff]
    %v4121 = vld [vmem:[#allocation2 + $0x28] sm:$0xff]
    %v4122 = vld [vmem:[#allocation2 + $0x30] sm:$0xff]
    %v4123 = vld [vmem:[#allocation2 + $0x38] sm:$0xff]
    %v4124 = vld [vmem:[#allocation2 + $0x40] sm:$0xff]
    %v4125 = vld [vmem:[#allocation2 + $0x48] sm:$0xff]
    %v4126 = vld [vmem:[#allocation2 + $0x50] sm:$0xff]
    %v4127 = vld [vmem:[#allocation2 + $0x58] sm:$0xff]
    %v4128 = vld [vmem:[#allocation2 + $0x60] sm:$0xff]
    %v4129 = vld [vmem:[#allocation2 + $0x68] sm:$0xff]
    %v4130 = vld [vmem:[#allocation2 + $0x70] sm:$0xff]
    %v4131 = vld [vmem:[#allocation2 + $0x78] sm:$0xff]
    %v4132 = vadd.f32 %v4116, %v4054
    %v4133 = vadd.f32 %v4117, %v4057
    %v4134 = vadd.f32 %v4118, %v4062
    %v4135 = vadd.f32 %v4119, %v4065
    %v4136 = vadd.f32 %v4120, %v4070
    %v4137 = vadd.f32 %v4121, %v4073
    %v4138 = vadd.f32 %v4122, %v4078
    %v4139 = vadd.f32 %v4123, %v4081
    %v4140 = vadd.f32 %v4124, %v4086
    %v4141 = vadd.f32 %v4125, %v4089
    %v4142 = vadd.f32 %v4126, %v4094
    %v4143 = vadd.f32 %v4127, %v4097
    %v4144 = vadd.f32 %v4128, %v4102
    %v4145 = vadd.f32 %v4129, %v4105
    %v4146 = vadd.f32 %v4130, %v4110
    %v4147 = vadd.f32 %v4131, %v4113
    %v4148 = vld [vmem:[%s11] sm:$0x1]
    %v4149 = vld [vmem:[%s12] sm:$0x1]
    %4150 = vadd.xlane.f32.xlu0 %v4132
    %v4151 = vpop.xlane.xlu0 %4150
    %4152 = vadd.xlane.f32.xlu0 %v4133
    %v4153 = vpop.xlane.xlu0 %4152
    %4154 = vadd.xlane.f32.xlu0 %v4134
    %v4155 = vpop.xlane.xlu0 %4154
    %4156 = vadd.xlane.f32.xlu0 %v4135
    %v4157 = vpop.xlane.xlu0 %4156
    %4158 = vadd.xlane.f32.xlu0 %v4136
    %v4159 = vpop.xlane.xlu0 %4158
    %4160 = vadd.xlane.f32.xlu0 %v4137
    %v4161 = vpop.xlane.xlu0 %4160
    %4162 = vadd.xlane.f32.xlu0 %v4138
    %v4163 = vpop.xlane.xlu0 %4162
    %4164 = vadd.xlane.f32.xlu0 %v4139
    %v4165 = vpop.xlane.xlu0 %4164
    %4166 = vadd.xlane.f32.xlu0 %v4140
    %v4167 = vpop.xlane.xlu0 %4166
    %4168 = vadd.xlane.f32.xlu0 %v4141
    %v4169 = vpop.xlane.xlu0 %4168
    %4170 = vadd.xlane.f32.xlu0 %v4142
    %v4171 = vpop.xlane.xlu0 %4170
    %4172 = vadd.xlane.f32.xlu0 %v4143
    %v4173 = vpop.xlane.xlu0 %4172
    %4174 = vadd.xlane.f32.xlu0 %v4144
    %v4175 = vpop.xlane.xlu0 %4174
    %4176 = vadd.xlane.f32.xlu0 %v4145
    %v4177 = vpop.xlane.xlu0 %4176
    %4178 = vadd.xlane.f32.xlu0 %v4146
    %v4179 = vpop.xlane.xlu0 %4178
    %4180 = vadd.xlane.f32.xlu0 %v4147
    %v4181 = vpop.xlane.xlu0 %4180
    %v4182 = vmul.f32 %v4151, %v292
    %v4183 = vmul.f32 %v4153, %v292
    %v4184 = vmul.f32 %v4155, %v292
    %v4185 = vmul.f32 %v4157, %v292
    %v4186 = vmul.f32 %v4159, %v292
    %v4187 = vmul.f32 %v4161, %v292
    %v4188 = vmul.f32 %v4163, %v292
    %v4189 = vmul.f32 %v4165, %v292
    %v4190 = vmul.f32 %v4167, %v292
    %v4191 = vmul.f32 %v4169, %v292
    %v4192 = vmul.f32 %v4171, %v292
    %v4193 = vmul.f32 %v4173, %v292
    %v4194 = vmul.f32 %v4175, %v292
    %v4195 = vmul.f32 %v4177, %v292
    %v4196 = vmul.f32 %v4179, %v292
    %v4197 = vmul.f32 %v4181, %v292
    %v4198 = vsub.f32 %v4132, %v4182
    %v4199 = vsub.f32 %v4133, %v4183
    %v4200 = vsub.f32 %v4134, %v4184
    %v4201 = vsub.f32 %v4135, %v4185
    %v4202 = vsub.f32 %v4136, %v4186
    %v4203 = vsub.f32 %v4137, %v4187
    %v4204 = vsub.f32 %v4138, %v4188
    %v4205 = vsub.f32 %v4139, %v4189
    %v4206 = vsub.f32 %v4140, %v4190
    %v4207 = vsub.f32 %v4141, %v4191
    %v4208 = vsub.f32 %v4142, %v4192
    %v4209 = vsub.f32 %v4143, %v4193
    %v4210 = vsub.f32 %v4144, %v4194
    %v4211 = vsub.f32 %v4145, %v4195
    %v4212 = vsub.f32 %v4146, %v4196
    %v4213 = vsub.f32 %v4147, %v4197
    %v4214 = vmul.f32 %v4198, %v4198
    %v4215 = vmul.f32 %v4199, %v4199
    %v4216 = vmul.f32 %v4200, %v4200
    %v4217 = vmul.f32 %v4201, %v4201
    %v4218 = vmul.f32 %v4202, %v4202
    %v4219 = vmul.f32 %v4203, %v4203
    %v4220 = vmul.f32 %v4204, %v4204
    %v4221 = vmul.f32 %v4205, %v4205
    %v4222 = vmul.f32 %v4206, %v4206
    %v4223 = vmul.f32 %v4207, %v4207
    %v4224 = vmul.f32 %v4208, %v4208
    %v4225 = vmul.f32 %v4209, %v4209
    %v4226 = vmul.f32 %v4210, %v4210
    %v4227 = vmul.f32 %v4211, %v4211
    %v4228 = vmul.f32 %v4212, %v4212
    %v4229 = vmul.f32 %v4213, %v4213
    %4230 = vadd.xlane.f32.xlu0 %v4214
    %v4231 = vpop.xlane.xlu0 %4230
    %4232 = vadd.xlane.f32.xlu0 %v4215
    %v4233 = vpop.xlane.xlu0 %4232
    %4234 = vadd.xlane.f32.xlu0 %v4216
    %v4235 = vpop.xlane.xlu0 %4234
    %4236 = vadd.xlane.f32.xlu0 %v4217
    %v4237 = vpop.xlane.xlu0 %4236
    %4238 = vadd.xlane.f32.xlu0 %v4218
    %v4239 = vpop.xlane.xlu0 %4238
    %4240 = vadd.xlane.f32.xlu0 %v4219
    %v4241 = vpop.xlane.xlu0 %4240
    %4242 = vadd.xlane.f32.xlu0 %v4220
    %v4243 = vpop.xlane.xlu0 %4242
    %4244 = vadd.xlane.f32.xlu0 %v4221
    %v4245 = vpop.xlane.xlu0 %4244
    %4246 = vadd.xlane.f32.xlu0 %v4222
    %v4247 = vpop.xlane.xlu0 %4246
    %4248 = vadd.xlane.f32.xlu0 %v4223
    %v4249 = vpop.xlane.xlu0 %4248
    %4250 = vadd.xlane.f32.xlu0 %v4224
    %v4251 = vpop.xlane.xlu0 %4250
    %4252 = vadd.xlane.f32.xlu0 %v4225
    %v4253 = vpop.xlane.xlu0 %4252
    %4254 = vadd.xlane.f32.xlu0 %v4226
    %v4255 = vpop.xlane.xlu0 %4254
    %4256 = vadd.xlane.f32.xlu0 %v4227
    %v4257 = vpop.xlane.xlu0 %4256
    %4258 = vadd.xlane.f32.xlu0 %v4228
    %v4259 = vpop.xlane.xlu0 %4258
    %4260 = vadd.xlane.f32.xlu0 %v4229
    %v4261 = vpop.xlane.xlu0 %4260
    %v4262 = vmul.f32 %v4231, %v292
    %v4263 = vmul.f32 %v4233, %v292
    %v4264 = vmul.f32 %v4235, %v292
    %v4265 = vmul.f32 %v4237, %v292
    %v4266 = vmul.f32 %v4239, %v292
    %v4267 = vmul.f32 %v4241, %v292
    %v4268 = vmul.f32 %v4243, %v292
    %v4269 = vmul.f32 %v4245, %v292
    %v4270 = vmul.f32 %v4247, %v292
    %v4271 = vmul.f32 %v4249, %v292
    %v4272 = vmul.f32 %v4251, %v292
    %v4273 = vmul.f32 %v4253, %v292
    %v4274 = vmul.f32 %v4255, %v292
    %v4275 = vmul.f32 %v4257, %v292
    %v4276 = vmul.f32 %v4259, %v292
    %v4277 = vmul.f32 %v4261, %v292
    %v4278 = vadd.f32 %v4262, 1e-05
    %v4279 = vadd.f32 %v4263, 1e-05
    %v4280 = vadd.f32 %v4264, 1e-05
    %v4281 = vadd.f32 %v4265, 1e-05
    %v4282 = vadd.f32 %v4266, 1e-05
    %v4283 = vadd.f32 %v4267, 1e-05
    %v4284 = vadd.f32 %v4268, 1e-05
    %v4285 = vadd.f32 %v4269, 1e-05
    %v4286 = vadd.f32 %v4270, 1e-05
    %v4287 = vadd.f32 %v4271, 1e-05
    %v4288 = vadd.f32 %v4272, 1e-05
    %v4289 = vadd.f32 %v4273, 1e-05
    %v4290 = vadd.f32 %v4274, 1e-05
    %v4291 = vadd.f32 %v4275, 1e-05
    %v4292 = vadd.f32 %v4276, 1e-05
    %v4293 = vadd.f32 %v4277, 1e-05
    %v4294 = vrsqrt.pop %v4278
    %v4295 = vrsqrt.pop %v4279
    %v4296 = vrsqrt.pop %v4280
    %v4297 = vrsqrt.pop %v4281
    %v4298 = vrsqrt.pop %v4282
    %v4299 = vrsqrt.pop %v4283
    %v4300 = vrsqrt.pop %v4284
    %v4301 = vrsqrt.pop %v4285
    %v4302 = vrsqrt.pop %v4286
    %v4303 = vrsqrt.pop %v4287
    %v4304 = vrsqrt.pop %v4288
    %v4305 = vrsqrt.pop %v4289
    %v4306 = vrsqrt.pop %v4290
    %v4307 = vrsqrt.pop %v4291
    %v4308 = vrsqrt.pop %v4292
    %v4309 = vrsqrt.pop %v4293
    %v4310 = vmul.f32 %v4198, %v4294
    %v4311 = vmul.f32 %v4199, %v4295
    %v4312 = vmul.f32 %v4200, %v4296
    %v4313 = vmul.f32 %v4201, %v4297
    %v4314 = vmul.f32 %v4202, %v4298
    %v4315 = vmul.f32 %v4203, %v4299
    %v4316 = vmul.f32 %v4204, %v4300
    %v4317 = vmul.f32 %v4205, %v4301
    %v4318 = vmul.f32 %v4206, %v4302
    %v4319 = vmul.f32 %v4207, %v4303
    %v4320 = vmul.f32 %v4208, %v4304
    %v4321 = vmul.f32 %v4209, %v4305
    %v4322 = vmul.f32 %v4210, %v4306
    %v4323 = vmul.f32 %v4211, %v4307
    %v4324 = vmul.f32 %v4212, %v4308
    %v4325 = vmul.f32 %v4213, %v4309
    %v4327 = vlaneseq
    %v4328 = vshrl.u32 %v4327, 7
    %v4329 = vsub.s32 0, %v4328
    %v4330 = vrot.slane %v4148, %v4329
    %v4332 = vmul.f32 %v4310, %v4330
    %v4333 = vmul.f32 %v4311, %v4330
    %v4334 = vmul.f32 %v4312, %v4330
    %v4335 = vmul.f32 %v4313, %v4330
    %v4336 = vmul.f32 %v4314, %v4330
    %v4337 = vmul.f32 %v4315, %v4330
    %v4338 = vmul.f32 %v4316, %v4330
    %v4339 = vmul.f32 %v4317, %v4330
    %v4340 = vmul.f32 %v4318, %v4330
    %v4341 = vmul.f32 %v4319, %v4330
    %v4342 = vmul.f32 %v4320, %v4330
    %v4343 = vmul.f32 %v4321, %v4330
    %v4344 = vmul.f32 %v4322, %v4330
    %v4345 = vmul.f32 %v4323, %v4330
    %v4346 = vmul.f32 %v4324, %v4330
    %v4347 = vmul.f32 %v4325, %v4330
    %v4349 = vlaneseq
    %v4350 = vshrl.u32 %v4349, 7
    %v4351 = vsub.s32 0, %v4350
    %v4352 = vrot.slane %v4149, %v4351
    %v4354 = vadd.f32 %v4332, %v4352
    %v4355 = vadd.f32 %v4333, %v4352
    %v4356 = vadd.f32 %v4334, %v4352
    %v4357 = vadd.f32 %v4335, %v4352
    %v4358 = vadd.f32 %v4336, %v4352
    %v4359 = vadd.f32 %v4337, %v4352
    %v4360 = vadd.f32 %v4338, %v4352
    %v4361 = vadd.f32 %v4339, %v4352
    %v4362 = vadd.f32 %v4340, %v4352
    %v4363 = vadd.f32 %v4341, %v4352
    %v4364 = vadd.f32 %v4342, %v4352
    %v4365 = vadd.f32 %v4343, %v4352
    %v4366 = vadd.f32 %v4344, %v4352
    %v4367 = vadd.f32 %v4345, %v4352
    %v4368 = vadd.f32 %v4346, %v4352
    %v4369 = vadd.f32 %v4347, %v4352
    %v4370 = vpack.c.bf16 %v4355, %v4354
    %v4371 = vpack.c.bf16 %v4357, %v4356
    %v4372 = vpack.c.bf16 %v4359, %v4358
    %v4373 = vpack.c.bf16 %v4361, %v4360
    %v4374 = vpack.c.bf16 %v4363, %v4362
    %v4375 = vpack.c.bf16 %v4365, %v4364
    %v4376 = vpack.c.bf16 %v4367, %v4366
    %v4377 = vpack.c.bf16 %v4369, %v4368
    %v4378 = vld [vmem:[#allocation16] sm:$0xff]
    %v4379 = vld [vmem:[#allocation16 + $0x8] sm:$0xff]
    %v4380 = vld [vmem:[#allocation16 + $0x10] sm:$0xff]
    %v4381 = vld [vmem:[#allocation16 + $0x18] sm:$0xff]
    %v4382 = vld [vmem:[#allocation16 + $0x20] sm:$0xff]
    %v4383 = vld [vmem:[#allocation16 + $0x28] sm:$0xff]
    %v4384 = vld [vmem:[#allocation16 + $0x30] sm:$0xff]
    %v4385 = vld [vmem:[#allocation16 + $0x38] sm:$0xff]
    %v4386 = vld [vmem:[#allocation16 + $0x40] sm:$0xff]
    %v4387 = vld [vmem:[#allocation16 + $0x48] sm:$0xff]
    %v4388 = vld [vmem:[#allocation16 + $0x50] sm:$0xff]
    %v4389 = vld [vmem:[#allocation16 + $0x58] sm:$0xff]
    %v4390 = vld [vmem:[#allocation16 + $0x60] sm:$0xff]
    %v4391 = vld [vmem:[#allocation16 + $0x68] sm:$0xff]
    %v4392 = vld [vmem:[#allocation16 + $0x70] sm:$0xff]
    %v4393 = vld [vmem:[#allocation16 + $0x78] sm:$0xff]
    %v4394 = vld [vmem:[#allocation16 + $0x80] sm:$0xff]
    %v4395 = vld [vmem:[#allocation16 + $0x88] sm:$0xff]
    %v4396 = vld [vmem:[#allocation16 + $0x90] sm:$0xff]
    %v4397 = vld [vmem:[#allocation16 + $0x98] sm:$0xff]
    %v4398 = vld [vmem:[#allocation16 + $0xa0] sm:$0xff]
    %v4399 = vld [vmem:[#allocation16 + $0xa8] sm:$0xff]
    %v4400 = vld [vmem:[#allocation16 + $0xb0] sm:$0xff]
    %v4401 = vld [vmem:[#allocation16 + $0xb8] sm:$0xff]
    %v4402 = vld [vmem:[#allocation16 + $0xc0] sm:$0xff]
    %v4403 = vld [vmem:[#allocation16 + $0xc8] sm:$0xff]
    %v4404 = vld [vmem:[#allocation16 + $0xd0] sm:$0xff]
    %v4405 = vld [vmem:[#allocation16 + $0xd8] sm:$0xff]
    %v4406 = vld [vmem:[#allocation16 + $0xe0] sm:$0xff]
    %v4407 = vld [vmem:[#allocation16 + $0xe8] sm:$0xff]
    %v4408 = vld [vmem:[#allocation16 + $0xf0] sm:$0xff]
    %v4409 = vld [vmem:[#allocation16 + $0xf8] sm:$0xff]
    %v4410 = vld [vmem:[%s14] sm:$0xf]
    %v4412 = vlaneseq
    %v4413 = vshrl.u32 %v4412, 7
    %v4414 = vsub.s32 0, %v4413
    %v4415 = vrot.slane %v4410, %v4414
    %v4416 = vlaneseq
    %v4417 = vshrl.u32 %v4416, 7
    %v4418 = vsub.s32 1, %v4417
    %v4419 = vrot.slane %v4410, %v4418
    %v4420 = vlaneseq
    %v4421 = vshrl.u32 %v4420, 7
    %v4422 = vsub.s32 2, %v4421
    %v4423 = vrot.slane %v4410, %v4422
    %v4424 = vlaneseq
    %v4425 = vshrl.u32 %v4424, 7
    %v4426 = vsub.s32 3, %v4425
    %v4427 = vrot.slane %v4410, %v4426
    %v4464 = vunpack.c.l.b16 %v4378
    %v4465 = vunpack.c.h.b16 %v4378
    %v4466 = vunpack.c.l.b16 %v4379
    %v4467 = vunpack.c.h.b16 %v4379
    %v4468 = vunpack.c.l.b16 %v4380
    %v4469 = vunpack.c.h.b16 %v4380
    %v4470 = vunpack.c.l.b16 %v4381
    %v4471 = vunpack.c.h.b16 %v4381
    %v4472 = vunpack.c.l.b16 %v4382
    %v4473 = vunpack.c.h.b16 %v4382
    %v4474 = vunpack.c.l.b16 %v4383
    %v4475 = vunpack.c.h.b16 %v4383
    %v4476 = vunpack.c.l.b16 %v4384
    %v4477 = vunpack.c.h.b16 %v4384
    %v4478 = vunpack.c.l.b16 %v4385
    %v4479 = vunpack.c.h.b16 %v4385
    %v4480 = vunpack.c.l.b16 %v4386
    %v4481 = vunpack.c.h.b16 %v4386
    %v4482 = vunpack.c.l.b16 %v4387
    %v4483 = vunpack.c.h.b16 %v4387
    %v4484 = vunpack.c.l.b16 %v4388
    %v4485 = vunpack.c.h.b16 %v4388
    %v4486 = vunpack.c.l.b16 %v4389
    %v4487 = vunpack.c.h.b16 %v4389
    %v4488 = vunpack.c.l.b16 %v4390
    %v4489 = vunpack.c.h.b16 %v4390
    %v4490 = vunpack.c.l.b16 %v4391
    %v4491 = vunpack.c.h.b16 %v4391
    %v4492 = vunpack.c.l.b16 %v4392
    %v4493 = vunpack.c.h.b16 %v4392
    %v4494 = vunpack.c.l.b16 %v4393
    %v4495 = vunpack.c.h.b16 %v4393
    %v4496 = vunpack.c.l.b16 %v4394
    %v4497 = vunpack.c.h.b16 %v4394
    %v4498 = vunpack.c.l.b16 %v4395
    %v4499 = vunpack.c.h.b16 %v4395
    %v4500 = vunpack.c.l.b16 %v4396
    %v4501 = vunpack.c.h.b16 %v4396
    %v4502 = vunpack.c.l.b16 %v4397
    %v4503 = vunpack.c.h.b16 %v4397
    %v4504 = vunpack.c.l.b16 %v4398
    %v4505 = vunpack.c.h.b16 %v4398
    %v4506 = vunpack.c.l.b16 %v4399
    %v4507 = vunpack.c.h.b16 %v4399
    %v4508 = vunpack.c.l.b16 %v4400
    %v4509 = vunpack.c.h.b16 %v4400
    %v4510 = vunpack.c.l.b16 %v4401
    %v4511 = vunpack.c.h.b16 %v4401
    %v4512 = vunpack.c.l.b16 %v4402
    %v4513 = vunpack.c.h.b16 %v4402
    %v4514 = vunpack.c.l.b16 %v4403
    %v4515 = vunpack.c.h.b16 %v4403
    %v4516 = vunpack.c.l.b16 %v4404
    %v4517 = vunpack.c.h.b16 %v4404
    %v4518 = vunpack.c.l.b16 %v4405
    %v4519 = vunpack.c.h.b16 %v4405
    %v4520 = vunpack.c.l.b16 %v4406
    %v4521 = vunpack.c.h.b16 %v4406
    %v4522 = vunpack.c.l.b16 %v4407
    %v4523 = vunpack.c.h.b16 %v4407
    %v4524 = vunpack.c.l.b16 %v4408
    %v4525 = vunpack.c.h.b16 %v4408
    %v4526 = vunpack.c.l.b16 %v4409
    %v4527 = vunpack.c.h.b16 %v4409
    %v4528 = vpack.c.b16 %v4468, %v4464
    %v4529 = vpack.c.b16 %v4469, %v4465
    %v4530 = vpack.c.b16 %v4470, %v4466
    %v4531 = vpack.c.b16 %v4471, %v4467
    %v4532 = vpack.c.b16 %v4476, %v4472
    %v4533 = vpack.c.b16 %v4477, %v4473
    %v4534 = vpack.c.b16 %v4478, %v4474
    %v4535 = vpack.c.b16 %v4479, %v4475
    %v4536 = vpack.c.b16 %v4484, %v4480
    %v4537 = vpack.c.b16 %v4485, %v4481
    %v4538 = vpack.c.b16 %v4486, %v4482
    %v4539 = vpack.c.b16 %v4487, %v4483
    %v4540 = vpack.c.b16 %v4492, %v4488
    %v4541 = vpack.c.b16 %v4493, %v4489
    %v4542 = vpack.c.b16 %v4494, %v4490
    %v4543 = vpack.c.b16 %v4495, %v4491
    %v4544 = vpack.c.b16 %v4500, %v4496
    %v4545 = vpack.c.b16 %v4501, %v4497
    %v4546 = vpack.c.b16 %v4502, %v4498
    %v4547 = vpack.c.b16 %v4503, %v4499
    %v4548 = vpack.c.b16 %v4508, %v4504
    %v4549 = vpack.c.b16 %v4509, %v4505
    %v4550 = vpack.c.b16 %v4510, %v4506
    %v4551 = vpack.c.b16 %v4511, %v4507
    %v4552 = vpack.c.b16 %v4516, %v4512
    %v4553 = vpack.c.b16 %v4517, %v4513
    %v4554 = vpack.c.b16 %v4518, %v4514
    %v4555 = vpack.c.b16 %v4519, %v4515
    %v4556 = vpack.c.b16 %v4524, %v4520
    %v4557 = vpack.c.b16 %v4525, %v4521
    %v4558 = vpack.c.b16 %v4526, %v4522
    %v4559 = vpack.c.b16 %v4527, %v4523
    %4592 = vmatprep.subr.bf16.mxu0 %v4557
    %4593 = vmatpush1.bf16.msra.mxu0 %v4556
    %4594 = vmatprep.subr.bf16.mxu0 %v4553
    %4595 = vmatpush1.bf16.msra.mxu0 %v4552
    %4596 = vmatprep.subr.bf16.mxu0 %v4549
    %4597 = vmatpush1.bf16.msra.mxu0 %v4548
    %4598 = vmatprep.subr.bf16.mxu0 %v4545
    %4599 = vmatpush1.bf16.msra.mxu0 %v4544
    %4600 = vmatprep.subr.bf16.mxu0 %v4541
    %4601 = vmatpush1.bf16.msra.mxu0 %v4540
    %4602 = vmatprep.subr.bf16.mxu0 %v4537
    %4603 = vmatpush1.bf16.msra.mxu0 %v4536
    %4604 = vmatprep.subr.bf16.mxu0 %v4533
    %4605 = vmatpush1.bf16.msra.mxu0 %v4532
    %4606 = vmatprep.subr.bf16.mxu0 %v4529
    %4607 = vmatpush1.bf16.msra.mxu0 %v4528
    %4608 = vmatprep.subr.bf16.mxu0 0
    %4609 = vmatpush2.bf16.msra.mxu0 0
    %4610 = vmatprep.subr.bf16.mxu0 0
    %4611 = vmatpush2.bf16.msra.mxu0 0
    %4612 = vmatprep.subr.bf16.mxu0 0
    %4613 = vmatpush2.bf16.msra.mxu0 0
    %4614 = vmatprep.subr.bf16.mxu0 0
    %4615 = vmatpush2.bf16.msra.mxu0 0
    %4616 = vmatprep.subr.bf16.mxu0 0
    %4617 = vmatpush2.bf16.msra.mxu0 0
    %4618 = vmatprep.subr.bf16.mxu0 0
    %4619 = vmatpush2.bf16.msra.mxu0 0
    %4620 = vmatprep.subr.bf16.mxu0 0
    %4621 = vmatpush2.bf16.msra.mxu0 0
    %4622 = vmatprep.subr.bf16.mxu0 0
    %4623 = vmatpush2.bf16.msra.mxu0 0
    %4624 = vmatprep.mubr.bf16.mxu0 0
    %4625 = vmatmul.mubr.bf16.gmra.mxu0 %v4370
    %v4626 = vpop.f32.mrf.mxu0
    %v4627 = vadd.f32 %v4415, %v4626
    %v4628 = vpop.f32.mrf.mxu0
    %v4629 = vadd.f32 %v4419, %v4628
    %v4630 = vpop.f32.mrf.mxu0
    %v4631 = vadd.f32 %v4415, %v4630
    %v4632 = vpop.f32.mrf.mxu0
    %v4633 = vadd.f32 %v4419, %v4632
    %4634 = vmatprep.mubr.bf16.mxu0 0
    %4635 = vmatmul.mubr.bf16.gmra.mxu0 %v4371
    %v4636 = vpop.f32.mrf.mxu0
    %v4637 = vadd.f32 %v4415, %v4636
    %v4638 = vpop.f32.mrf.mxu0
    %v4639 = vadd.f32 %v4419, %v4638
    %v4640 = vpop.f32.mrf.mxu0
    %v4641 = vadd.f32 %v4415, %v4640
    %v4642 = vpop.f32.mrf.mxu0
    %v4643 = vadd.f32 %v4419, %v4642
    %4644 = vmatprep.mubr.bf16.mxu0 0
    %4645 = vmatmul.mubr.bf16.gmra.mxu0 %v4372
    %v4646 = vpop.f32.mrf.mxu0
    %v4647 = vadd.f32 %v4415, %v4646
    %v4648 = vpop.f32.mrf.mxu0
    %v4649 = vadd.f32 %v4419, %v4648
    %v4650 = vpop.f32.mrf.mxu0
    %v4651 = vadd.f32 %v4415, %v4650
    %v4652 = vpop.f32.mrf.mxu0
    %v4653 = vadd.f32 %v4419, %v4652
    %4654 = vmatprep.mubr.bf16.mxu0 0
    %4655 = vmatmul.mubr.bf16.gmra.mxu0 %v4373
    %v4656 = vpop.f32.mrf.mxu0
    %v4657 = vadd.f32 %v4415, %v4656
    %v4658 = vpop.f32.mrf.mxu0
    %v4659 = vadd.f32 %v4419, %v4658
    %v4660 = vpop.f32.mrf.mxu0
    %v4661 = vadd.f32 %v4415, %v4660
    %v4662 = vpop.f32.mrf.mxu0
    %v4663 = vadd.f32 %v4419, %v4662
    %4664 = vmatprep.mubr.bf16.mxu0 0
    %4665 = vmatmul.mubr.bf16.gmra.mxu0 %v4374
    %v4666 = vpop.f32.mrf.mxu0
    %v4667 = vadd.f32 %v4415, %v4666
    %v4668 = vpop.f32.mrf.mxu0
    %v4669 = vadd.f32 %v4419, %v4668
    %v4670 = vpop.f32.mrf.mxu0
    %v4671 = vadd.f32 %v4415, %v4670
    %v4672 = vpop.f32.mrf.mxu0
    %v4673 = vadd.f32 %v4419, %v4672
    %4674 = vmatprep.mubr.bf16.mxu0 0
    %4675 = vmatmul.mubr.bf16.gmra.mxu0 %v4375
    %v4676 = vpop.f32.mrf.mxu0
    %v4677 = vadd.f32 %v4415, %v4676
    %v4678 = vpop.f32.mrf.mxu0
    %v4679 = vadd.f32 %v4419, %v4678
    %v4680 = vpop.f32.mrf.mxu0
    %v4681 = vadd.f32 %v4415, %v4680
    %v4682 = vpop.f32.mrf.mxu0
    %v4683 = vadd.f32 %v4419, %v4682
    %4684 = vmatprep.mubr.bf16.mxu0 0
    %4685 = vmatmul.mubr.bf16.gmra.mxu0 %v4376
    %v4686 = vpop.f32.mrf.mxu0
    %v4687 = vadd.f32 %v4415, %v4686
    %v4688 = vpop.f32.mrf.mxu0
    %v4689 = vadd.f32 %v4419, %v4688
    %v4690 = vpop.f32.mrf.mxu0
    %v4691 = vadd.f32 %v4415, %v4690
    %v4692 = vpop.f32.mrf.mxu0
    %v4693 = vadd.f32 %v4419, %v4692
    %4694 = vmatprep.mubr.bf16.mxu0 0
    %4695 = vmatmul.mubr.bf16.gmra.mxu0 %v4377
    %v4696 = vpop.f32.mrf.mxu0
    %v4697 = vadd.f32 %v4415, %v4696
    %v4698 = vpop.f32.mrf.mxu0
    %v4699 = vadd.f32 %v4419, %v4698
    %v4700 = vpop.f32.mrf.mxu0
    %v4701 = vadd.f32 %v4415, %v4700
    %v4702 = vpop.f32.mrf.mxu0
    %v4703 = vadd.f32 %v4419, %v4702
    %4704 = vdwg.mxu0
    %4705 = vmatprep.subr.bf16.mxu0 %v4559
    %4706 = vmatpush1.bf16.msra.mxu0 %v4558
    %4707 = vmatprep.subr.bf16.mxu0 %v4555
    %4708 = vmatpush1.bf16.msra.mxu0 %v4554
    %4709 = vmatprep.subr.bf16.mxu0 %v4551
    %4710 = vmatpush1.bf16.msra.mxu0 %v4550
    %4711 = vmatprep.subr.bf16.mxu0 %v4547
    %4712 = vmatpush1.bf16.msra.mxu0 %v4546
    %4713 = vmatprep.subr.bf16.mxu0 %v4543
    %4714 = vmatpush1.bf16.msra.mxu0 %v4542
    %4715 = vmatprep.subr.bf16.mxu0 %v4539
    %4716 = vmatpush1.bf16.msra.mxu0 %v4538
    %4717 = vmatprep.subr.bf16.mxu0 %v4535
    %4718 = vmatpush1.bf16.msra.mxu0 %v4534
    %4719 = vmatprep.subr.bf16.mxu0 %v4531
    %4720 = vmatpush1.bf16.msra.mxu0 %v4530
    %4721 = vmatprep.subr.bf16.mxu0 0
    %4722 = vmatpush2.bf16.msra.mxu0 0
    %4723 = vmatprep.subr.bf16.mxu0 0
    %4724 = vmatpush2.bf16.msra.mxu0 0
    %4725 = vmatprep.subr.bf16.mxu0 0
    %4726 = vmatpush2.bf16.msra.mxu0 0
    %4727 = vmatprep.subr.bf16.mxu0 0
    %4728 = vmatpush2.bf16.msra.mxu0 0
    %4729 = vmatprep.subr.bf16.mxu0 0
    %4730 = vmatpush2.bf16.msra.mxu0 0
    %4731 = vmatprep.subr.bf16.mxu0 0
    %4732 = vmatpush2.bf16.msra.mxu0 0
    %4733 = vmatprep.subr.bf16.mxu0 0
    %4734 = vmatpush2.bf16.msra.mxu0 0
    %4735 = vmatprep.subr.bf16.mxu0 0
    %4736 = vmatpush2.bf16.msra.mxu0 0
    %4737 = vmatprep.mubr.bf16.mxu0 0
    %4738 = vmatmul.mubr.bf16.gmra.mxu0 %v4370
    %v4739 = vpop.f32.mrf.mxu0
    %v4740 = vadd.f32 %v4423, %v4739
    %v4741 = vpop.f32.mrf.mxu0
    %v4742 = vadd.f32 %v4427, %v4741
    %v4743 = vpop.f32.mrf.mxu0
    %v4744 = vadd.f32 %v4423, %v4743
    %v4745 = vpop.f32.mrf.mxu0
    %v4746 = vadd.f32 %v4427, %v4745
    %4747 = vmatprep.mubr.bf16.mxu0 0
    %4748 = vmatmul.mubr.bf16.gmra.mxu0 %v4371
    %v4749 = vpop.f32.mrf.mxu0
    %v4750 = vadd.f32 %v4423, %v4749
    %v4751 = vpop.f32.mrf.mxu0
    %v4752 = vadd.f32 %v4427, %v4751
    %v4753 = vpop.f32.mrf.mxu0
    %v4754 = vadd.f32 %v4423, %v4753
    %v4755 = vpop.f32.mrf.mxu0
    %v4756 = vadd.f32 %v4427, %v4755
    %4757 = vmatprep.mubr.bf16.mxu0 0
    %4758 = vmatmul.mubr.bf16.gmra.mxu0 %v4372
    %v4759 = vpop.f32.mrf.mxu0
    %v4760 = vadd.f32 %v4423, %v4759
    %v4761 = vpop.f32.mrf.mxu0
    %v4762 = vadd.f32 %v4427, %v4761
    %v4763 = vpop.f32.mrf.mxu0
    %v4764 = vadd.f32 %v4423, %v4763
    %v4765 = vpop.f32.mrf.mxu0
    %v4766 = vadd.f32 %v4427, %v4765
    %4767 = vmatprep.mubr.bf16.mxu0 0
    %4768 = vmatmul.mubr.bf16.gmra.mxu0 %v4373
    %v4769 = vpop.f32.mrf.mxu0
    %v4770 = vadd.f32 %v4423, %v4769
    %v4771 = vpop.f32.mrf.mxu0
    %v4772 = vadd.f32 %v4427, %v4771
    %v4773 = vpop.f32.mrf.mxu0
    %v4774 = vadd.f32 %v4423, %v4773
    %v4775 = vpop.f32.mrf.mxu0
    %v4776 = vadd.f32 %v4427, %v4775
    %4777 = vmatprep.mubr.bf16.mxu0 0
    %4778 = vmatmul.mubr.bf16.gmra.mxu0 %v4374
    %v4779 = vpop.f32.mrf.mxu0
    %v4780 = vadd.f32 %v4423, %v4779
    %v4781 = vpop.f32.mrf.mxu0
    %v4782 = vadd.f32 %v4427, %v4781
    %v4783 = vpop.f32.mrf.mxu0
    %v4784 = vadd.f32 %v4423, %v4783
    %v4785 = vpop.f32.mrf.mxu0
    %v4786 = vadd.f32 %v4427, %v4785
    %4787 = vmatprep.mubr.bf16.mxu0 0
    %4788 = vmatmul.mubr.bf16.gmra.mxu0 %v4375
    %v4789 = vpop.f32.mrf.mxu0
    %v4790 = vadd.f32 %v4423, %v4789
    %v4791 = vpop.f32.mrf.mxu0
    %v4792 = vadd.f32 %v4427, %v4791
    %v4793 = vpop.f32.mrf.mxu0
    %v4794 = vadd.f32 %v4423, %v4793
    %v4795 = vpop.f32.mrf.mxu0
    %v4796 = vadd.f32 %v4427, %v4795
    %4797 = vmatprep.mubr.bf16.mxu0 0
    %4798 = vmatmul.mubr.bf16.gmra.mxu0 %v4376
    %v4799 = vpop.f32.mrf.mxu0
    %v4800 = vadd.f32 %v4423, %v4799
    %v4801 = vpop.f32.mrf.mxu0
    %v4802 = vadd.f32 %v4427, %v4801
    %v4803 = vpop.f32.mrf.mxu0
    %v4804 = vadd.f32 %v4423, %v4803
    %v4805 = vpop.f32.mrf.mxu0
    %v4806 = vadd.f32 %v4427, %v4805
    %4807 = vmatprep.mubr.bf16.mxu0 0
    %4808 = vmatmul.mubr.bf16.gmra.mxu0 %v4377
    %v4809 = vpop.f32.mrf.mxu0
    %v4810 = vadd.f32 %v4423, %v4809
    %v4811 = vpop.f32.mrf.mxu0
    %v4812 = vadd.f32 %v4427, %v4811
    %v4813 = vpop.f32.mrf.mxu0
    %v4814 = vadd.f32 %v4423, %v4813
    %v4815 = vpop.f32.mrf.mxu0
    %v4816 = vadd.f32 %v4427, %v4815
    %4817 = vdwg.mxu0
    %v4818 = vmul.f32 %v4627, 0.5
    %v4819 = vmul.f32 %v4629, 0.5
    %v4820 = vmul.f32 %v4740, 0.5
    %v4821 = vmul.f32 %v4742, 0.5
    %v4822 = vmul.f32 %v4631, 0.5
    %v4823 = vmul.f32 %v4633, 0.5
    %v4824 = vmul.f32 %v4744, 0.5
    %v4825 = vmul.f32 %v4746, 0.5
    %v4826 = vmul.f32 %v4637, 0.5
    %v4827 = vmul.f32 %v4639, 0.5
    %v4828 = vmul.f32 %v4750, 0.5
    %v4829 = vmul.f32 %v4752, 0.5
    %v4830 = vmul.f32 %v4641, 0.5
    %v4831 = vmul.f32 %v4643, 0.5
    %v4832 = vmul.f32 %v4754, 0.5
    %v4833 = vmul.f32 %v4756, 0.5
    %v4834 = vmul.f32 %v4647, 0.5
    %v4835 = vmul.f32 %v4649, 0.5
    %v4836 = vmul.f32 %v4760, 0.5
    %v4837 = vmul.f32 %v4762, 0.5
    %v4838 = vmul.f32 %v4651, 0.5
    %v4839 = vmul.f32 %v4653, 0.5
    %v4840 = vmul.f32 %v4764, 0.5
    %v4841 = vmul.f32 %v4766, 0.5
    %v4842 = vmul.f32 %v4657, 0.5
    %v4843 = vmul.f32 %v4659, 0.5
    %v4844 = vmul.f32 %v4770, 0.5
    %v4845 = vmul.f32 %v4772, 0.5
    %v4846 = vmul.f32 %v4661, 0.5
    %v4847 = vmul.f32 %v4663, 0.5
    %v4848 = vmul.f32 %v4774, 0.5
    %v4849 = vmul.f32 %v4776, 0.5
    %v4850 = vmul.f32 %v4667, 0.5
    %v4851 = vmul.f32 %v4669, 0.5
    %v4852 = vmul.f32 %v4780, 0.5
    %v4853 = vmul.f32 %v4782, 0.5
    %v4854 = vmul.f32 %v4671, 0.5
    %v4855 = vmul.f32 %v4673, 0.5
    %v4856 = vmul.f32 %v4784, 0.5
    %v4857 = vmul.f32 %v4786, 0.5
    %v4858 = vmul.f32 %v4677, 0.5
    %v4859 = vmul.f32 %v4679, 0.5
    %v4860 = vmul.f32 %v4790, 0.5
    %v4861 = vmul.f32 %v4792, 0.5
    %v4862 = vmul.f32 %v4681, 0.5
    %v4863 = vmul.f32 %v4683, 0.5
    %v4864 = vmul.f32 %v4794, 0.5
    %v4865 = vmul.f32 %v4796, 0.5
    %v4866 = vmul.f32 %v4687, 0.5
    %v4867 = vmul.f32 %v4689, 0.5
    %v4868 = vmul.f32 %v4800, 0.5
    %v4869 = vmul.f32 %v4802, 0.5
    %v4870 = vmul.f32 %v4691, 0.5
    %v4871 = vmul.f32 %v4693, 0.5
    %v4872 = vmul.f32 %v4804, 0.5
    %v4873 = vmul.f32 %v4806, 0.5
    %v4874 = vmul.f32 %v4697, 0.5
    %v4875 = vmul.f32 %v4699, 0.5
    %v4876 = vmul.f32 %v4810, 0.5
    %v4877 = vmul.f32 %v4812, 0.5
    %v4878 = vmul.f32 %v4701, 0.5
    %v4879 = vmul.f32 %v4703, 0.5
    %v4880 = vmul.f32 %v4814, 0.5
    %v4881 = vmul.f32 %v4816, 0.5
    %v4882 = vmul.f32 %v4627, 0.70710677
    %v4883 = vmul.f32 %v4629, 0.70710677
    %v4884 = vmul.f32 %v4740, 0.70710677
    %v4885 = vmul.f32 %v4742, 0.70710677
    %v4886 = vmul.f32 %v4631, 0.70710677
    %v4887 = vmul.f32 %v4633, 0.70710677
    %v4888 = vmul.f32 %v4744, 0.70710677
    %v4889 = vmul.f32 %v4746, 0.70710677
    %v4890 = vmul.f32 %v4637, 0.70710677
    %v4891 = vmul.f32 %v4639, 0.70710677
    %v4892 = vmul.f32 %v4750, 0.70710677
    %v4893 = vmul.f32 %v4752, 0.70710677
    %v4894 = vmul.f32 %v4641, 0.70710677
    %v4895 = vmul.f32 %v4643, 0.70710677
    %v4896 = vmul.f32 %v4754, 0.70710677
    %v4897 = vmul.f32 %v4756, 0.70710677
    %v4898 = vmul.f32 %v4647, 0.70710677
    %v4899 = vmul.f32 %v4649, 0.70710677
    %v4900 = vmul.f32 %v4760, 0.70710677
    %v4901 = vmul.f32 %v4762, 0.70710677
    %v4902 = vmul.f32 %v4651, 0.70710677
    %v4903 = vmul.f32 %v4653, 0.70710677
    %v4904 = vmul.f32 %v4764, 0.70710677
    %v4905 = vmul.f32 %v4766, 0.70710677
    %v4906 = vmul.f32 %v4657, 0.70710677
    %v4907 = vmul.f32 %v4659, 0.70710677
    %v4908 = vmul.f32 %v4770, 0.70710677
    %v4909 = vmul.f32 %v4772, 0.70710677
    %v4910 = vmul.f32 %v4661, 0.70710677
    %v4911 = vmul.f32 %v4663, 0.70710677
    %v4912 = vmul.f32 %v4774, 0.70710677
    %v4913 = vmul.f32 %v4776, 0.70710677
    %v4914 = vmul.f32 %v4667, 0.70710677
    %v4915 = vmul.f32 %v4669, 0.70710677
    %v4916 = vmul.f32 %v4780, 0.70710677
    %v4917 = vmul.f32 %v4782, 0.70710677
    %v4918 = vmul.f32 %v4671, 0.70710677
    %v4919 = vmul.f32 %v4673, 0.70710677
    %v4920 = vmul.f32 %v4784, 0.70710677
    %v4921 = vmul.f32 %v4786, 0.70710677
    %v4922 = vmul.f32 %v4677, 0.70710677
    %v4923 = vmul.f32 %v4679, 0.70710677
    %v4924 = vmul.f32 %v4790, 0.70710677
    %v4925 = vmul.f32 %v4792, 0.70710677
    %v4926 = vmul.f32 %v4681, 0.70710677
    %v4927 = vmul.f32 %v4683, 0.70710677
    %v4928 = vmul.f32 %v4794, 0.70710677
    %v4929 = vmul.f32 %v4796, 0.70710677
    %v4930 = vmul.f32 %v4687, 0.70710677
    %v4931 = vmul.f32 %v4689, 0.70710677
    %v4932 = vmul.f32 %v4800, 0.70710677
    %v4933 = vmul.f32 %v4802, 0.70710677
    %v4934 = vmul.f32 %v4691, 0.70710677
    %v4935 = vmul.f32 %v4693, 0.70710677
    %v4936 = vmul.f32 %v4804, 0.70710677
    %v4937 = vmul.f32 %v4806, 0.70710677
    %v4938 = vmul.f32 %v4697, 0.70710677
    %v4939 = vmul.f32 %v4699, 0.70710677
    %v4940 = vmul.f32 %v4810, 0.70710677
    %v4941 = vmul.f32 %v4812, 0.70710677
    %v4942 = vmul.f32 %v4701, 0.70710677
    %v4943 = vmul.f32 %v4703, 0.70710677
    %v4944 = vmul.f32 %v4814, 0.70710677
    %v4945 = vmul.f32 %v4816, 0.70710677
    %v4946 = verf.f32.pop %v4882
    %v4947 = verf.f32.pop %v4883
    %v4948 = verf.f32.pop %v4884
    %v4949 = verf.f32.pop %v4885
    %v4950 = verf.f32.pop %v4886
    %v4951 = verf.f32.pop %v4887
    %v4952 = verf.f32.pop %v4888
    %v4953 = verf.f32.pop %v4889
    %v4954 = verf.f32.pop %v4890
    %v4955 = verf.f32.pop %v4891
    %v4956 = verf.f32.pop %v4892
    %v4957 = verf.f32.pop %v4893
    %v4958 = verf.f32.pop %v4894
    %v4959 = verf.f32.pop %v4895
    %v4960 = verf.f32.pop %v4896
    %v4961 = verf.f32.pop %v4897
    %v4962 = verf.f32.pop %v4898
    %v4963 = verf.f32.pop %v4899
    %v4964 = verf.f32.pop %v4900
    %v4965 = verf.f32.pop %v4901
    %v4966 = verf.f32.pop %v4902
    %v4967 = verf.f32.pop %v4903
    %v4968 = verf.f32.pop %v4904
    %v4969 = verf.f32.pop %v4905
    %v4970 = verf.f32.pop %v4906
    %v4971 = verf.f32.pop %v4907
    %v4972 = verf.f32.pop %v4908
    %v4973 = verf.f32.pop %v4909
    %v4974 = verf.f32.pop %v4910
    %v4975 = verf.f32.pop %v4911
    %v4976 = verf.f32.pop %v4912
    %v4977 = verf.f32.pop %v4913
    %v4978 = verf.f32.pop %v4914
    %v4979 = verf.f32.pop %v4915
    %v4980 = verf.f32.pop %v4916
    %v4981 = verf.f32.pop %v4917
    %v4982 = verf.f32.pop %v4918
    %v4983 = verf.f32.pop %v4919
    %v4984 = verf.f32.pop %v4920
    %v4985 = verf.f32.pop %v4921
    %v4986 = verf.f32.pop %v4922
    %v4987 = verf.f32.pop %v4923
    %v4988 = verf.f32.pop %v4924
    %v4989 = verf.f32.pop %v4925
    %v4990 = verf.f32.pop %v4926
    %v4991 = verf.f32.pop %v4927
    %v4992 = verf.f32.pop %v4928
    %v4993 = verf.f32.pop %v4929
    %v4994 = verf.f32.pop %v4930
    %v4995 = verf.f32.pop %v4931
    %v4996 = verf.f32.pop %v4932
    %v4997 = verf.f32.pop %v4933
    %v4998 = verf.f32.pop %v4934
    %v4999 = verf.f32.pop %v4935
    %v5000 = verf.f32.pop %v4936
    %v5001 = verf.f32.pop %v4937
    %v5002 = verf.f32.pop %v4938
    %v5003 = verf.f32.pop %v4939
    %v5004 = verf.f32.pop %v4940
    %v5005 = verf.f32.pop %v4941
    %v5006 = verf.f32.pop %v4942
    %v5007 = verf.f32.pop %v4943
    %v5008 = verf.f32.pop %v4944
    %v5009 = verf.f32.pop %v4945
    %v5010 = vadd.f32 %v4946, 1.0
    %v5011 = vadd.f32 %v4947, 1.0
    %v5012 = vadd.f32 %v4948, 1.0
    %v5013 = vadd.f32 %v4949, 1.0
    %v5014 = vadd.f32 %v4950, 1.0
    %v5015 = vadd.f32 %v4951, 1.0
    %v5016 = vadd.f32 %v4952, 1.0
    %v5017 = vadd.f32 %v4953, 1.0
    %v5018 = vadd.f32 %v4954, 1.0
    %v5019 = vadd.f32 %v4955, 1.0
    %v5020 = vadd.f32 %v4956, 1.0
    %v5021 = vadd.f32 %v4957, 1.0
    %v5022 = vadd.f32 %v4958, 1.0
    %v5023 = vadd.f32 %v4959, 1.0
    %v5024 = vadd.f32 %v4960, 1.0
    %v5025 = vadd.f32 %v4961, 1.0
    %v5026 = vadd.f32 %v4962, 1.0
    %v5027 = vadd.f32 %v4963, 1.0
    %v5028 = vadd.f32 %v4964, 1.0
    %v5029 = vadd.f32 %v4965, 1.0
    %v5030 = vadd.f32 %v4966, 1.0
    %v5031 = vadd.f32 %v4967, 1.0
    %v5032 = vadd.f32 %v4968, 1.0
    %v5033 = vadd.f32 %v4969, 1.0
    %v5034 = vadd.f32 %v4970, 1.0
    %v5035 = vadd.f32 %v4971, 1.0
    %v5036 = vadd.f32 %v4972, 1.0
    %v5037 = vadd.f32 %v4973, 1.0
    %v5038 = vadd.f32 %v4974, 1.0
    %v5039 = vadd.f32 %v4975, 1.0
    %v5040 = vadd.f32 %v4976, 1.0
    %v5041 = vadd.f32 %v4977, 1.0
    %v5042 = vadd.f32 %v4978, 1.0
    %v5043 = vadd.f32 %v4979, 1.0
    %v5044 = vadd.f32 %v4980, 1.0
    %v5045 = vadd.f32 %v4981, 1.0
    %v5046 = vadd.f32 %v4982, 1.0
    %v5047 = vadd.f32 %v4983, 1.0
    %v5048 = vadd.f32 %v4984, 1.0
    %v5049 = vadd.f32 %v4985, 1.0
    %v5050 = vadd.f32 %v4986, 1.0
    %v5051 = vadd.f32 %v4987, 1.0
    %v5052 = vadd.f32 %v4988, 1.0
    %v5053 = vadd.f32 %v4989, 1.0
    %v5054 = vadd.f32 %v4990, 1.0
    %v5055 = vadd.f32 %v4991, 1.0
    %v5056 = vadd.f32 %v4992, 1.0
    %v5057 = vadd.f32 %v4993, 1.0
    %v5058 = vadd.f32 %v4994, 1.0
    %v5059 = vadd.f32 %v4995, 1.0
    %v5060 = vadd.f32 %v4996, 1.0
    %v5061 = vadd.f32 %v4997, 1.0
    %v5062 = vadd.f32 %v4998, 1.0
    %v5063 = vadd.f32 %v4999, 1.0
    %v5064 = vadd.f32 %v5000, 1.0
    %v5065 = vadd.f32 %v5001, 1.0
    %v5066 = vadd.f32 %v5002, 1.0
    %v5067 = vadd.f32 %v5003, 1.0
    %v5068 = vadd.f32 %v5004, 1.0
    %v5069 = vadd.f32 %v5005, 1.0
    %v5070 = vadd.f32 %v5006, 1.0
    %v5071 = vadd.f32 %v5007, 1.0
    %v5072 = vadd.f32 %v5008, 1.0
    %v5073 = vadd.f32 %v5009, 1.0
    %v5074 = vmul.f32 %v4818, %v5010
    %v5075 = vmul.f32 %v4819, %v5011
    %v5076 = vmul.f32 %v4820, %v5012
    %v5077 = vmul.f32 %v4821, %v5013
    %v5078 = vmul.f32 %v4822, %v5014
    %v5079 = vmul.f32 %v4823, %v5015
    %v5080 = vmul.f32 %v4824, %v5016
    %v5081 = vmul.f32 %v4825, %v5017
    %v5082 = vmul.f32 %v4826, %v5018
    %v5083 = vmul.f32 %v4827, %v5019
    %v5084 = vmul.f32 %v4828, %v5020
    %v5085 = vmul.f32 %v4829, %v5021
    %v5086 = vmul.f32 %v4830, %v5022
    %v5087 = vmul.f32 %v4831, %v5023
    %v5088 = vmul.f32 %v4832, %v5024
    %v5089 = vmul.f32 %v4833, %v5025
    %v5090 = vmul.f32 %v4834, %v5026
    %v5091 = vmul.f32 %v4835, %v5027
    %v5092 = vmul.f32 %v4836, %v5028
    %v5093 = vmul.f32 %v4837, %v5029
    %v5094 = vmul.f32 %v4838, %v5030
    %v5095 = vmul.f32 %v4839, %v5031
    %v5096 = vmul.f32 %v4840, %v5032
    %v5097 = vmul.f32 %v4841, %v5033
    %v5098 = vmul.f32 %v4842, %v5034
    %v5099 = vmul.f32 %v4843, %v5035
    %v5100 = vmul.f32 %v4844, %v5036
    %v5101 = vmul.f32 %v4845, %v5037
    %v5102 = vmul.f32 %v4846, %v5038
    %v5103 = vmul.f32 %v4847, %v5039
    %v5104 = vmul.f32 %v4848, %v5040
    %v5105 = vmul.f32 %v4849, %v5041
    %v5106 = vmul.f32 %v4850, %v5042
    %v5107 = vmul.f32 %v4851, %v5043
    %v5108 = vmul.f32 %v4852, %v5044
    %v5109 = vmul.f32 %v4853, %v5045
    %v5110 = vmul.f32 %v4854, %v5046
    %v5111 = vmul.f32 %v4855, %v5047
    %v5112 = vmul.f32 %v4856, %v5048
    %v5113 = vmul.f32 %v4857, %v5049
    %v5114 = vmul.f32 %v4858, %v5050
    %v5115 = vmul.f32 %v4859, %v5051
    %v5116 = vmul.f32 %v4860, %v5052
    %v5117 = vmul.f32 %v4861, %v5053
    %v5118 = vmul.f32 %v4862, %v5054
    %v5119 = vmul.f32 %v4863, %v5055
    %v5120 = vmul.f32 %v4864, %v5056
    %v5121 = vmul.f32 %v4865, %v5057
    %v5122 = vmul.f32 %v4866, %v5058
    %v5123 = vmul.f32 %v4867, %v5059
    %v5124 = vmul.f32 %v4868, %v5060
    %v5125 = vmul.f32 %v4869, %v5061
    %v5126 = vmul.f32 %v4870, %v5062
    %v5127 = vmul.f32 %v4871, %v5063
    %v5128 = vmul.f32 %v4872, %v5064
    %v5129 = vmul.f32 %v4873, %v5065
    %v5130 = vmul.f32 %v4874, %v5066
    %v5131 = vmul.f32 %v4875, %v5067
    %v5132 = vmul.f32 %v4876, %v5068
    %v5133 = vmul.f32 %v4877, %v5069
    %v5134 = vmul.f32 %v4878, %v5070
    %v5135 = vmul.f32 %v4879, %v5071
    %v5136 = vmul.f32 %v4880, %v5072
    %v5137 = vmul.f32 %v4881, %v5073
    %v5138 = vpack.c.bf16 %v5078, %v5074
    %v5139 = vpack.c.bf16 %v5079, %v5075
    %v5140 = vpack.c.bf16 %v5080, %v5076
    %v5141 = vpack.c.bf16 %v5081, %v5077
    %v5142 = vpack.c.bf16 %v5086, %v5082
    %v5143 = vpack.c.bf16 %v5087, %v5083
    %v5144 = vpack.c.bf16 %v5088, %v5084
    %v5145 = vpack.c.bf16 %v5089, %v5085
    %v5146 = vpack.c.bf16 %v5094, %v5090
    %v5147 = vpack.c.bf16 %v5095, %v5091
    %v5148 = vpack.c.bf16 %v5096, %v5092
    %v5149 = vpack.c.bf16 %v5097, %v5093
    %v5150 = vpack.c.bf16 %v5102, %v5098
    %v5151 = vpack.c.bf16 %v5103, %v5099
    %v5152 = vpack.c.bf16 %v5104, %v5100
    %v5153 = vpack.c.bf16 %v5105, %v5101
    %v5154 = vpack.c.bf16 %v5110, %v5106
    %v5155 = vpack.c.bf16 %v5111, %v5107
    %v5156 = vpack.c.bf16 %v5112, %v5108
    %v5157 = vpack.c.bf16 %v5113, %v5109
    %v5158 = vpack.c.bf16 %v5118, %v5114
    %v5159 = vpack.c.bf16 %v5119, %v5115
    %v5160 = vpack.c.bf16 %v5120, %v5116
    %v5161 = vpack.c.bf16 %v5121, %v5117
    %v5162 = vpack.c.bf16 %v5126, %v5122
    %v5163 = vpack.c.bf16 %v5127, %v5123
    %v5164 = vpack.c.bf16 %v5128, %v5124
    %v5165 = vpack.c.bf16 %v5129, %v5125
    %v5166 = vpack.c.bf16 %v5134, %v5130
    %v5167 = vpack.c.bf16 %v5135, %v5131
    %v5168 = vpack.c.bf16 %v5136, %v5132
    %v5169 = vpack.c.bf16 %v5137, %v5133
    %v5170 = vld [vmem:[#allocation17] sm:$0xf]
    %v5171 = vld [vmem:[#allocation17 + $0x4] sm:$0xf]
    %v5172 = vld [vmem:[#allocation17 + $0x8] sm:$0xf]
    %v5173 = vld [vmem:[#allocation17 + $0xc] sm:$0xf]
    %v5174 = vld [vmem:[#allocation17 + $0x10] sm:$0xf]
    %v5175 = vld [vmem:[#allocation17 + $0x14] sm:$0xf]
    %v5176 = vld [vmem:[#allocation17 + $0x18] sm:$0xf]
    %v5177 = vld [vmem:[#allocation17 + $0x1c] sm:$0xf]
    %v5178 = vld [vmem:[#allocation17 + $0x20] sm:$0xf]
    %v5179 = vld [vmem:[#allocation17 + $0x24] sm:$0xf]
    %v5180 = vld [vmem:[#allocation17 + $0x28] sm:$0xf]
    %v5181 = vld [vmem:[#allocation17 + $0x2c] sm:$0xf]
    %v5182 = vld [vmem:[#allocation17 + $0x30] sm:$0xf]
    %v5183 = vld [vmem:[#allocation17 + $0x34] sm:$0xf]
    %v5184 = vld [vmem:[#allocation17 + $0x38] sm:$0xf]
    %v5185 = vld [vmem:[#allocation17 + $0x3c] sm:$0xf]
    %v5186 = vld [vmem:[#allocation17 + $0x40] sm:$0xf]
    %v5187 = vld [vmem:[#allocation17 + $0x44] sm:$0xf]
    %v5188 = vld [vmem:[#allocation17 + $0x48] sm:$0xf]
    %v5189 = vld [vmem:[#allocation17 + $0x4c] sm:$0xf]
    %v5190 = vld [vmem:[#allocation17 + $0x50] sm:$0xf]
    %v5191 = vld [vmem:[#allocation17 + $0x54] sm:$0xf]
    %v5192 = vld [vmem:[#allocation17 + $0x58] sm:$0xf]
    %v5193 = vld [vmem:[#allocation17 + $0x5c] sm:$0xf]
    %v5194 = vld [vmem:[#allocation17 + $0x60] sm:$0xf]
    %v5195 = vld [vmem:[#allocation17 + $0x64] sm:$0xf]
    %v5196 = vld [vmem:[#allocation17 + $0x68] sm:$0xf]
    %v5197 = vld [vmem:[#allocation17 + $0x6c] sm:$0xf]
    %v5198 = vld [vmem:[#allocation17 + $0x70] sm:$0xf]
    %v5199 = vld [vmem:[#allocation17 + $0x74] sm:$0xf]
    %v5200 = vld [vmem:[#allocation17 + $0x78] sm:$0xf]
    %v5201 = vld [vmem:[#allocation17 + $0x7c] sm:$0xf]
    %v5202 = vld [vmem:[#allocation17 + $0x80] sm:$0xf]
    %v5203 = vld [vmem:[#allocation17 + $0x84] sm:$0xf]
    %v5204 = vld [vmem:[#allocation17 + $0x88] sm:$0xf]
    %v5205 = vld [vmem:[#allocation17 + $0x8c] sm:$0xf]
    %v5206 = vld [vmem:[#allocation17 + $0x90] sm:$0xf]
    %v5207 = vld [vmem:[#allocation17 + $0x94] sm:$0xf]
    %v5208 = vld [vmem:[#allocation17 + $0x98] sm:$0xf]
    %v5209 = vld [vmem:[#allocation17 + $0x9c] sm:$0xf]
    %v5210 = vld [vmem:[#allocation17 + $0xa0] sm:$0xf]
    %v5211 = vld [vmem:[#allocation17 + $0xa4] sm:$0xf]
    %v5212 = vld [vmem:[#allocation17 + $0xa8] sm:$0xf]
    %v5213 = vld [vmem:[#allocation17 + $0xac] sm:$0xf]
    %v5214 = vld [vmem:[#allocation17 + $0xb0] sm:$0xf]
    %v5215 = vld [vmem:[#allocation17 + $0xb4] sm:$0xf]
    %v5216 = vld [vmem:[#allocation17 + $0xb8] sm:$0xf]
    %v5217 = vld [vmem:[#allocation17 + $0xbc] sm:$0xf]
    %v5218 = vld [vmem:[#allocation17 + $0xc0] sm:$0xf]
    %v5219 = vld [vmem:[#allocation17 + $0xc4] sm:$0xf]
    %v5220 = vld [vmem:[#allocation17 + $0xc8] sm:$0xf]
    %v5221 = vld [vmem:[#allocation17 + $0xcc] sm:$0xf]
    %v5222 = vld [vmem:[#allocation17 + $0xd0] sm:$0xf]
    %v5223 = vld [vmem:[#allocation17 + $0xd4] sm:$0xf]
    %v5224 = vld [vmem:[#allocation17 + $0xd8] sm:$0xf]
    %v5225 = vld [vmem:[#allocation17 + $0xdc] sm:$0xf]
    %v5226 = vld [vmem:[#allocation17 + $0xe0] sm:$0xf]
    %v5227 = vld [vmem:[#allocation17 + $0xe4] sm:$0xf]
    %v5228 = vld [vmem:[#allocation17 + $0xe8] sm:$0xf]
    %v5229 = vld [vmem:[#allocation17 + $0xec] sm:$0xf]
    %v5230 = vld [vmem:[#allocation17 + $0xf0] sm:$0xf]
    %v5231 = vld [vmem:[#allocation17 + $0xf4] sm:$0xf]
    %v5232 = vld [vmem:[#allocation17 + $0xf8] sm:$0xf]
    %v5233 = vld [vmem:[#allocation17 + $0xfc] sm:$0xf]
    %v5234 = vld [vmem:[%s16] sm:$0x1]
    %v5236 = vlaneseq
    %v5237 = vshrl.u32 %v5236, 7
    %v5238 = vsub.s32 0, %v5237
    %v5239 = vrot.slane %v5234, %v5238
    %v5305 = vunpack.c.l.b16 %v5170
    %v5306 = vunpack.c.l.b16 %v5171
    %v5307 = vunpack.c.l.b16 %v5172
    %v5308 = vunpack.c.l.b16 %v5173
    %v5309 = vunpack.c.l.b16 %v5174
    %v5310 = vunpack.c.l.b16 %v5175
    %v5311 = vunpack.c.l.b16 %v5176
    %v5312 = vunpack.c.l.b16 %v5177
    %v5313 = vunpack.c.l.b16 %v5178
    %v5314 = vunpack.c.l.b16 %v5179
    %v5315 = vunpack.c.l.b16 %v5180
    %v5316 = vunpack.c.l.b16 %v5181
    %v5317 = vunpack.c.l.b16 %v5182
    %v5318 = vunpack.c.l.b16 %v5183
    %v5319 = vunpack.c.l.b16 %v5184
    %v5320 = vunpack.c.l.b16 %v5185
    %v5321 = vunpack.c.l.b16 %v5186
    %v5322 = vunpack.c.l.b16 %v5187
    %v5323 = vunpack.c.l.b16 %v5188
    %v5324 = vunpack.c.l.b16 %v5189
    %v5325 = vunpack.c.l.b16 %v5190
    %v5326 = vunpack.c.l.b16 %v5191
    %v5327 = vunpack.c.l.b16 %v5192
    %v5328 = vunpack.c.l.b16 %v5193
    %v5329 = vunpack.c.l.b16 %v5194
    %v5330 = vunpack.c.l.b16 %v5195
    %v5331 = vunpack.c.l.b16 %v5196
    %v5332 = vunpack.c.l.b16 %v5197
    %v5333 = vunpack.c.l.b16 %v5198
    %v5334 = vunpack.c.l.b16 %v5199
    %v5335 = vunpack.c.l.b16 %v5200
    %v5336 = vunpack.c.l.b16 %v5201
    %v5337 = vunpack.c.l.b16 %v5202
    %v5338 = vunpack.c.l.b16 %v5203
    %v5339 = vunpack.c.l.b16 %v5204
    %v5340 = vunpack.c.l.b16 %v5205
    %v5341 = vunpack.c.l.b16 %v5206
    %v5342 = vunpack.c.l.b16 %v5207
    %v5343 = vunpack.c.l.b16 %v5208
    %v5344 = vunpack.c.l.b16 %v5209
    %v5345 = vunpack.c.l.b16 %v5210
    %v5346 = vunpack.c.l.b16 %v5211
    %v5347 = vunpack.c.l.b16 %v5212
    %v5348 = vunpack.c.l.b16 %v5213
    %v5349 = vunpack.c.l.b16 %v5214
    %v5350 = vunpack.c.l.b16 %v5215
    %v5351 = vunpack.c.l.b16 %v5216
    %v5352 = vunpack.c.l.b16 %v5217
    %v5353 = vunpack.c.l.b16 %v5218
    %v5354 = vunpack.c.l.b16 %v5219
    %v5355 = vunpack.c.l.b16 %v5220
    %v5356 = vunpack.c.l.b16 %v5221
    %v5357 = vunpack.c.l.b16 %v5222
    %v5358 = vunpack.c.l.b16 %v5223
    %v5359 = vunpack.c.l.b16 %v5224
    %v5360 = vunpack.c.l.b16 %v5225
    %v5361 = vunpack.c.l.b16 %v5226
    %v5362 = vunpack.c.l.b16 %v5227
    %v5363 = vunpack.c.l.b16 %v5228
    %v5364 = vunpack.c.l.b16 %v5229
    %v5365 = vunpack.c.l.b16 %v5230
    %v5366 = vunpack.c.l.b16 %v5231
    %v5367 = vunpack.c.l.b16 %v5232
    %v5368 = vunpack.c.l.b16 %v5233
    %v5369 = vpack.c.b16 %v5306, %v5305
    %v5370 = vpack.c.b16 %v5308, %v5307
    %v5371 = vpack.c.b16 %v5310, %v5309
    %v5372 = vpack.c.b16 %v5312, %v5311
    %v5373 = vpack.c.b16 %v5314, %v5313
    %v5374 = vpack.c.b16 %v5316, %v5315
    %v5375 = vpack.c.b16 %v5318, %v5317
    %v5376 = vpack.c.b16 %v5320, %v5319
    %v5377 = vpack.c.b16 %v5322, %v5321
    %v5378 = vpack.c.b16 %v5324, %v5323
    %v5379 = vpack.c.b16 %v5326, %v5325
    %v5380 = vpack.c.b16 %v5328, %v5327
    %v5381 = vpack.c.b16 %v5330, %v5329
    %v5382 = vpack.c.b16 %v5332, %v5331
    %v5383 = vpack.c.b16 %v5334, %v5333
    %v5384 = vpack.c.b16 %v5336, %v5335
    %v5385 = vpack.c.b16 %v5338, %v5337
    %v5386 = vpack.c.b16 %v5340, %v5339
    %v5387 = vpack.c.b16 %v5342, %v5341
    %v5388 = vpack.c.b16 %v5344, %v5343
    %v5389 = vpack.c.b16 %v5346, %v5345
    %v5390 = vpack.c.b16 %v5348, %v5347
    %v5391 = vpack.c.b16 %v5350, %v5349
    %v5392 = vpack.c.b16 %v5352, %v5351
    %v5393 = vpack.c.b16 %v5354, %v5353
    %v5394 = vpack.c.b16 %v5356, %v5355
    %v5395 = vpack.c.b16 %v5358, %v5357
    %v5396 = vpack.c.b16 %v5360, %v5359
    %v5397 = vpack.c.b16 %v5362, %v5361
    %v5398 = vpack.c.b16 %v5364, %v5363
    %v5399 = vpack.c.b16 %v5366, %v5365
    %v5400 = vpack.c.b16 %v5368, %v5367
    %5433 = vmatprep.subr.bf16.mxu0 0
    %5434 = vmatpush1.bf16.msra.mxu0 %v5376
    %5435 = vmatprep.subr.bf16.mxu0 0
    %5436 = vmatpush1.bf16.msra.mxu0 %v5375
    %5437 = vmatprep.subr.bf16.mxu0 0
    %5438 = vmatpush1.bf16.msra.mxu0 %v5374
    %5439 = vmatprep.subr.bf16.mxu0 0
    %5440 = vmatpush1.bf16.msra.mxu0 %v5373
    %5441 = vmatprep.subr.bf16.mxu0 0
    %5442 = vmatpush1.bf16.msra.mxu0 %v5372
    %5443 = vmatprep.subr.bf16.mxu0 0
    %5444 = vmatpush1.bf16.msra.mxu0 %v5371
    %5445 = vmatprep.subr.bf16.mxu0 0
    %5446 = vmatpush1.bf16.msra.mxu0 %v5370
    %5447 = vmatprep.subr.bf16.mxu0 0
    %5448 = vmatpush1.bf16.msra.mxu0 %v5369
    %5449 = vmatprep.subr.bf16.mxu0 0
    %5450 = vmatpush2.bf16.msra.mxu0 %v5384
    %5451 = vmatprep.subr.bf16.mxu0 0
    %5452 = vmatpush2.bf16.msra.mxu0 %v5383
    %5453 = vmatprep.subr.bf16.mxu0 0
    %5454 = vmatpush2.bf16.msra.mxu0 %v5382
    %5455 = vmatprep.subr.bf16.mxu0 0
    %5456 = vmatpush2.bf16.msra.mxu0 %v5381
    %5457 = vmatprep.subr.bf16.mxu0 0
    %5458 = vmatpush2.bf16.msra.mxu0 %v5380
    %5459 = vmatprep.subr.bf16.mxu0 0
    %5460 = vmatpush2.bf16.msra.mxu0 %v5379
    %5461 = vmatprep.subr.bf16.mxu0 0
    %5462 = vmatpush2.bf16.msra.mxu0 %v5378
    %5463 = vmatprep.subr.bf16.mxu0 0
    %5464 = vmatpush2.bf16.msra.mxu0 %v5377
    %5465 = vmatprep.mubr.bf16.mxu0 %v5139
    %5466 = vmatmul.mubr.bf16.gmra.mxu0 %v5138
    %v5467 = vpop.f32.mrf.mxu0
    %v5468 = vadd.f32 %v5239, %v5467
    %v5469 = vpop.f32.mrf.mxu0
    %v5470 = vpop.f32.mrf.mxu0
    %v5471 = vadd.f32 %v5239, %v5470
    %v5472 = vpop.f32.mrf.mxu0
    %5473 = vmatprep.mubr.bf16.mxu0 %v5143
    %5474 = vmatmul.mubr.bf16.gmra.mxu0 %v5142
    %v5475 = vpop.f32.mrf.mxu0
    %v5476 = vadd.f32 %v5239, %v5475
    %v5477 = vpop.f32.mrf.mxu0
    %v5478 = vpop.f32.mrf.mxu0
    %v5479 = vadd.f32 %v5239, %v5478
    %v5480 = vpop.f32.mrf.mxu0
    %5481 = vmatprep.mubr.bf16.mxu0 %v5147
    %5482 = vmatmul.mubr.bf16.gmra.mxu0 %v5146
    %v5483 = vpop.f32.mrf.mxu0
    %v5484 = vadd.f32 %v5239, %v5483
    %v5485 = vpop.f32.mrf.mxu0
    %v5486 = vpop.f32.mrf.mxu0
    %v5487 = vadd.f32 %v5239, %v5486
    %v5488 = vpop.f32.mrf.mxu0
    %5489 = vmatprep.mubr.bf16.mxu0 %v5151
    %5490 = vmatmul.mubr.bf16.gmra.mxu0 %v5150
    %v5491 = vpop.f32.mrf.mxu0
    %v5492 = vadd.f32 %v5239, %v5491
    %v5493 = vpop.f32.mrf.mxu0
    %v5494 = vpop.f32.mrf.mxu0
    %v5495 = vadd.f32 %v5239, %v5494
    %v5496 = vpop.f32.mrf.mxu0
    %5497 = vmatprep.mubr.bf16.mxu0 %v5155
    %5498 = vmatmul.mubr.bf16.gmra.mxu0 %v5154
    %v5499 = vpop.f32.mrf.mxu0
    %v5500 = vadd.f32 %v5239, %v5499
    %v5501 = vpop.f32.mrf.mxu0
    %v5502 = vpop.f32.mrf.mxu0
    %v5503 = vadd.f32 %v5239, %v5502
    %v5504 = vpop.f32.mrf.mxu0
    %5505 = vmatprep.mubr.bf16.mxu0 %v5159
    %5506 = vmatmul.mubr.bf16.gmra.mxu0 %v5158
    %v5507 = vpop.f32.mrf.mxu0
    %v5508 = vadd.f32 %v5239, %v5507
    %v5509 = vpop.f32.mrf.mxu0
    %v5510 = vpop.f32.mrf.mxu0
    %v5511 = vadd.f32 %v5239, %v5510
    %v5512 = vpop.f32.mrf.mxu0
    %5513 = vmatprep.mubr.bf16.mxu0 %v5163
    %5514 = vmatmul.mubr.bf16.gmra.mxu0 %v5162
    %v5515 = vpop.f32.mrf.mxu0
    %v5516 = vadd.f32 %v5239, %v5515
    %v5517 = vpop.f32.mrf.mxu0
    %v5518 = vpop.f32.mrf.mxu0
    %v5519 = vadd.f32 %v5239, %v5518
    %v5520 = vpop.f32.mrf.mxu0
    %5521 = vmatprep.mubr.bf16.mxu0 %v5167
    %5522 = vmatmul.mubr.bf16.gmra.mxu0 %v5166
    %v5523 = vpop.f32.mrf.mxu0
    %v5524 = vadd.f32 %v5239, %v5523
    %v5525 = vpop.f32.mrf.mxu0
    %v5526 = vpop.f32.mrf.mxu0
    %v5527 = vadd.f32 %v5239, %v5526
    %v5528 = vpop.f32.mrf.mxu0
    %5529 = vdwg.mxu0
    %5530 = vmatprep.subr.bf16.mxu0 0
    %5531 = vmatpush1.bf16.msra.mxu0 %v5392
    %5532 = vmatprep.subr.bf16.mxu0 0
    %5533 = vmatpush1.bf16.msra.mxu0 %v5391
    %5534 = vmatprep.subr.bf16.mxu0 0
    %5535 = vmatpush1.bf16.msra.mxu0 %v5390
    %5536 = vmatprep.subr.bf16.mxu0 0
    %5537 = vmatpush1.bf16.msra.mxu0 %v5389
    %5538 = vmatprep.subr.bf16.mxu0 0
    %5539 = vmatpush1.bf16.msra.mxu0 %v5388
    %5540 = vmatprep.subr.bf16.mxu0 0
    %5541 = vmatpush1.bf16.msra.mxu0 %v5387
    %5542 = vmatprep.subr.bf16.mxu0 0
    %5543 = vmatpush1.bf16.msra.mxu0 %v5386
    %5544 = vmatprep.subr.bf16.mxu0 0
    %5545 = vmatpush1.bf16.msra.mxu0 %v5385
    %5546 = vmatprep.subr.bf16.mxu0 0
    %5547 = vmatpush2.bf16.msra.mxu0 %v5400
    %5548 = vmatprep.subr.bf16.mxu0 0
    %5549 = vmatpush2.bf16.msra.mxu0 %v5399
    %5550 = vmatprep.subr.bf16.mxu0 0
    %5551 = vmatpush2.bf16.msra.mxu0 %v5398
    %5552 = vmatprep.subr.bf16.mxu0 0
    %5553 = vmatpush2.bf16.msra.mxu0 %v5397
    %5554 = vmatprep.subr.bf16.mxu0 0
    %5555 = vmatpush2.bf16.msra.mxu0 %v5396
    %5556 = vmatprep.subr.bf16.mxu0 0
    %5557 = vmatpush2.bf16.msra.mxu0 %v5395
    %5558 = vmatprep.subr.bf16.mxu0 0
    %5559 = vmatpush2.bf16.msra.mxu0 %v5394
    %5560 = vmatprep.subr.bf16.mxu0 0
    %5561 = vmatpush2.bf16.msra.mxu0 %v5393
    %5562 = vmatprep.mubr.bf16.mxu0 %v5141
    %5563 = vmatmul.mubr.bf16.gmra.mxu0 %v5140
    %v5564 = vpop.f32.mrf.mxu0
    %v5565 = vadd.f32 %v5468, %v5564
    %v5566 = vpop.f32.mrf.mxu0
    %v5567 = vpop.f32.mrf.mxu0
    %v5568 = vadd.f32 %v5471, %v5567
    %v5569 = vpop.f32.mrf.mxu0
    %5570 = vmatprep.mubr.bf16.mxu0 %v5145
    %5571 = vmatmul.mubr.bf16.gmra.mxu0 %v5144
    %v5572 = vpop.f32.mrf.mxu0
    %v5573 = vadd.f32 %v5476, %v5572
    %v5574 = vpop.f32.mrf.mxu0
    %v5575 = vpop.f32.mrf.mxu0
    %v5576 = vadd.f32 %v5479, %v5575
    %v5577 = vpop.f32.mrf.mxu0
    %5578 = vmatprep.mubr.bf16.mxu0 %v5149
    %5579 = vmatmul.mubr.bf16.gmra.mxu0 %v5148
    %v5580 = vpop.f32.mrf.mxu0
    %v5581 = vadd.f32 %v5484, %v5580
    %v5582 = vpop.f32.mrf.mxu0
    %v5583 = vpop.f32.mrf.mxu0
    %v5584 = vadd.f32 %v5487, %v5583
    %v5585 = vpop.f32.mrf.mxu0
    %5586 = vmatprep.mubr.bf16.mxu0 %v5153
    %5587 = vmatmul.mubr.bf16.gmra.mxu0 %v5152
    %v5588 = vpop.f32.mrf.mxu0
    %v5589 = vadd.f32 %v5492, %v5588
    %v5590 = vpop.f32.mrf.mxu0
    %v5591 = vpop.f32.mrf.mxu0
    %v5592 = vadd.f32 %v5495, %v5591
    %v5593 = vpop.f32.mrf.mxu0
    %5594 = vmatprep.mubr.bf16.mxu0 %v5157
    %5595 = vmatmul.mubr.bf16.gmra.mxu0 %v5156
    %v5596 = vpop.f32.mrf.mxu0
    %v5597 = vadd.f32 %v5500, %v5596
    %v5598 = vpop.f32.mrf.mxu0
    %v5599 = vpop.f32.mrf.mxu0
    %v5600 = vadd.f32 %v5503, %v5599
    %v5601 = vpop.f32.mrf.mxu0
    %5602 = vmatprep.mubr.bf16.mxu0 %v5161
    %5603 = vmatmul.mubr.bf16.gmra.mxu0 %v5160
    %v5604 = vpop.f32.mrf.mxu0
    %v5605 = vadd.f32 %v5508, %v5604
    %v5606 = vpop.f32.mrf.mxu0
    %v5607 = vpop.f32.mrf.mxu0
    %v5608 = vadd.f32 %v5511, %v5607
    %v5609 = vpop.f32.mrf.mxu0
    %5610 = vmatprep.mubr.bf16.mxu0 %v5165
    %5611 = vmatmul.mubr.bf16.gmra.mxu0 %v5164
    %v5612 = vpop.f32.mrf.mxu0
    %v5613 = vadd.f32 %v5516, %v5612
    %v5614 = vpop.f32.mrf.mxu0
    %v5615 = vpop.f32.mrf.mxu0
    %v5616 = vadd.f32 %v5519, %v5615
    %v5617 = vpop.f32.mrf.mxu0
    %5618 = vmatprep.mubr.bf16.mxu0 %v5169
    %5619 = vmatmul.mubr.bf16.gmra.mxu0 %v5168
    %v5620 = vpop.f32.mrf.mxu0
    %v5621 = vadd.f32 %v5524, %v5620
    %v5622 = vpop.f32.mrf.mxu0
    %v5623 = vpop.f32.mrf.mxu0
    %v5624 = vadd.f32 %v5527, %v5623
    %v5625 = vpop.f32.mrf.mxu0
    %5626 = vdwg.mxu0
    %v5627 = vadd.f32 %v4132, %v5565
    %v5628 = vadd.f32 %v4133, %v5568
    %v5629 = vadd.f32 %v4134, %v5573
    %v5630 = vadd.f32 %v4135, %v5576
    %v5631 = vadd.f32 %v4136, %v5581
    %v5632 = vadd.f32 %v4137, %v5584
    %v5633 = vadd.f32 %v4138, %v5589
    %v5634 = vadd.f32 %v4139, %v5592
    %v5635 = vadd.f32 %v4140, %v5597
    %v5636 = vadd.f32 %v4141, %v5600
    %v5637 = vadd.f32 %v4142, %v5605
    %v5638 = vadd.f32 %v4143, %v5608
    %v5639 = vadd.f32 %v4144, %v5613
    %v5640 = vadd.f32 %v4145, %v5616
    %v5641 = vadd.f32 %v4146, %v5621
    %v5642 = vadd.f32 %v4147, %v5624
    %5643 = vst [vmem:[#allocation19] sm:$0xff] %v5627
    %5644 = vst [vmem:[#allocation19 + $0x8] sm:$0xff] %v5628
    %5645 = vst [vmem:[#allocation19 + $0x10] sm:$0xff] %v5629
    %5646 = vst [vmem:[#allocation19 + $0x18] sm:$0xff] %v5630
    %5647 = vst [vmem:[#allocation19 + $0x20] sm:$0xff] %v5631
    %5648 = vst [vmem:[#allocation19 + $0x28] sm:$0xff] %v5632
    %5649 = vst [vmem:[#allocation19 + $0x30] sm:$0xff] %v5633
    %5650 = vst [vmem:[#allocation19 + $0x38] sm:$0xff] %v5634
    %5651 = vst [vmem:[#allocation19 + $0x40] sm:$0xff] %v5635
    %5652 = vst [vmem:[#allocation19 + $0x48] sm:$0xff] %v5636
    %5653 = vst [vmem:[#allocation19 + $0x50] sm:$0xff] %v5637
    %5654 = vst [vmem:[#allocation19 + $0x58] sm:$0xff] %v5638
    %5655 = vst [vmem:[#allocation19 + $0x60] sm:$0xff] %v5639
    %5656 = vst [vmem:[#allocation19 + $0x68] sm:$0xff] %v5640
    %5657 = vst [vmem:[#allocation19 + $0x70] sm:$0xff] %v5641
    %5658 = vst [vmem:[#allocation19 + $0x78] sm:$0xff] %v5642
    // Predicated region
    $region110: #{tpu_custom_call.1} parent=1 // pred_check
      _
    $region111: #{tpu_custom_call.1} parent=1 // pred_check_branch
      %5660 = sbr.rel (0) target = $region113
    $region112: #{tpu_custom_call.1} parent=1 // pred_region
      %s5662 = ssub.s32 2048, 2048
      %5663 = vsyncadd [#allocation4], %s5662
      %s5664 = sshll.u32 [#allocation19], 4
      %s5665 = int_to_ptr.vmem [resolvable:$true] %s5664
      %5670 = dma.vmem_to_hbm [thread:$0]  %s5665, 2048, %s17, [#allocation4], 128, 128, 8
    $region113: #{tpu_custom_call.1} parent=1 // pred_fallthru
      _
    // Predicated region
    $region114: #{tpu_custom_call.1} parent=1 // pred_check
      _
    $region115: #{tpu_custom_call.1} parent=1 // pred_check_branch
      %5672 = sbr.rel (0) target = $region117
    $region116: #{tpu_custom_call.1} parent=1 // pred_region
      %5673 = dma.done [#allocation4], 2048
    $region117: #{tpu_custom_call.1} parent=1 // pred_fallthru
      _
    %5674 = vsyncpa [#allocation3], 1
    %5675 = vsyncpa [#allocation6], 1
    %5676 = vsyncpa [#allocation9], 1
    %5677 = vsyncpa [#allocation12], 1
    %5678 = vsyncpa [#allocation15], 1
    %5679 = vsyncpa [#allocation18], 1
    %5680 = vsyncpa [#allocation4], 1

</llo_original>
